<compile_context>
chip_gen: v7x
topology: tpu7x:2x2x1
jax: 0.10.0
libtpu: 0.0.40
codegen_flags: <defaults>
</compile_context>

<pallas_src>
import jax
import jax.numpy as jnp
from jax import lax
from jax.experimental import pallas as pl
from jax.experimental.pallas import tpu as pltpu


# ----------------------------------------------------------------------------
# Fused Inception kernel (one grid step = NB batch elements).
# ----------------------------------------------------------------------------
def _make_inception_kernel(NB, H, W, Cin, ch1x1, ch3x3red, ch3x3,
                           ch5x5red, ch5x5, pool_proj):
    HW = H * W
    off2 = ch1x1
    off3 = ch1x1 + ch3x3
    off4 = ch1x1 + ch3x3 + ch5x5

    def kernel(pos_ref, x_ref, w1_ref, b1_ref, w3_ref, b3_ref,
               w5_ref, b5_ref, wp_ref, bp_ref, o_ref):
        # (row, col) of every lane position k = i*W + j (precomputed in the
        # wrapper — avoids in-kernel integer div/mod).
        row_ids = pos_ref[0:1, :]                       # (1, HW) int32  (= i)
        col_ids = pos_ref[1:2, :]                       # (1, HW) int32  (= j)

        def shift_spatial(v, dh, dw, fill):
            """v[..., k] -> value of v at (i+dh, j+dw); `fill` outside the map."""
            s = dh * W + dw
            shifted = v if s == 0 else pltpu.roll(v, shift=(-s) % HW, axis=1)
            conds = []
            if dh < 0:
                conds.append(row_ids >= -dh)
            if dh > 0:
                conds.append(row_ids < H - dh)
            if dw < 0:
                conds.append(col_ids >= -dw)
            if dw > 0:
                conds.append(col_ids < W - dw)
            if not conds:
                return shifted
            m = conds[0]
            for c in conds[1:]:
                m = jnp.logical_and(m, c)
            return jnp.where(m, shifted, fill)

        # Grid-invariant weights / biases: load once per step, reuse for all NB.
        w1 = w1_ref[...]          # (C1sum, Cin)       bf16
        b1 = b1_ref[...]          # (C1sum, 1)         f32
        w3 = w3_ref[...]          # (9,  ch3x3, c3r)   bf16
        b3 = b3_ref[...]          # (ch3x3, 1)         f32
        w5 = w5_ref[...]          # (25, ch5x5, c5r)   bf16
        b5 = b5_ref[...]          # (ch5x5, 1)         f32
        wp = wp_ref[...]          # (pool_proj, Cin)   bf16
        bp = bp_ref[...]          # (pool_proj, 1)     f32

        def conv_taps(r, w_taps, bias, ksize, cout):
            """k x k conv (stride 1, 'same' zero padding) via per-tap MXU dots."""
            pad = ksize // 2
            acc = jnp.zeros((cout, HW), jnp.float32)
            for kh in range(ksize):
                for kw in range(ksize):
                    win = shift_spatial(r, kh - pad, kw - pad, 0.0)
                    acc = acc + jnp.dot(w_taps[kh * ksize + kw],
                                        win.astype(jnp.bfloat16),
                                        preferred_element_type=jnp.float32)
            return jnp.maximum(acc + bias, 0.0)

        for b in range(NB):                              # NB is small & static
            x32 = x_ref[b]                               # (Cin, HW) f32
            xbf = x32.astype(jnp.bfloat16)

            # -- fused 1x1 convs: rows = [3x3-reduce | 5x5-reduce | branch1] --
            y1 = jnp.dot(w1, xbf, preferred_element_type=jnp.float32)
            y1 = jnp.maximum(y1 + b1, 0.0)               # (C1sum, HW) f32
            r3 = y1[0:ch3x3red, :]
            r5 = y1[ch3x3red:ch3x3red + ch5x5red, :]
            o_ref[b, 0:ch1x1, :] = y1[ch3x3red + ch5x5red:, :].astype(o_ref.dtype)

            # -- branch 2: 3x3 conv (padding=1) on the reduced map ------------
            y2 = conv_taps(r3, w3, b3, 3, ch3x3)
            o_ref[b, off2:off2 + ch3x3, :] = y2.astype(o_ref.dtype)

            # -- branch 3: 5x5 conv (padding=2) on the reduced map ------------
            y3 = conv_taps(r5, w5, b5, 5, ch5x5)
            o_ref[b, off3:off3 + ch5x5, :] = y3.astype(o_ref.dtype)

            # -- branch 4: 3x3/s1/p1 max-pool (separable) + fused 1x1 proj ----
            # Out-of-image neighbours are replaced by the centre value, which
            # is equivalent to PyTorch's -inf padding for max pooling.
            up = shift_spatial(x32, -1, 0, x32)
            dn = shift_spatial(x32, 1, 0, x32)
            rmax = jnp.maximum(x32, jnp.maximum(up, dn))
            lf = shift_spatial(rmax, 0, -1, rmax)
            rt = shift_spatial(rmax, 0, 1, rmax)
            pooled = jnp.maximum(rmax, jnp.maximum(lf, rt))
            y4 = jnp.dot(wp, pooled.astype(jnp.bfloat16),
                         preferred_element_type=jnp.float32)
            y4 = jnp.maximum(y4 + bp, 0.0)
            o_ref[b, off4:off4 + pool_proj, :] = y4.astype(o_ref.dtype)

    return kernel


# ----------------------------------------------------------------------------
# Parameter init (deterministic, PyTorch-like uniform(-1/sqrt(fan_in), ...)).
# Weights kept in PyTorch layout (Cout, Cin, KH, KW).
# ----------------------------------------------------------------------------
def init_inception_params(key, in_channels, ch1x1, ch3x3red, ch3x3,
                          ch5x5red, ch5x5, pool_proj):
    def conv_params(k, cin, cout, ksize):
        kw_, kb_ = jax.random.split(k)
        bound = 1.0 / float(cin * ksize * ksize) ** 0.5
        w = jax.random.uniform(kw_, (cout, cin, ksize, ksize), jnp.float32,
                               -bound, bound)
        b = jax.random.uniform(kb_, (cout,), jnp.float32, -bound, bound)
        return w, b

    keys = jax.random.split(key, 6)
    return {
        "b1":     conv_params(keys[0], in_channels, ch1x1, 1),
        "b2_red": conv_params(keys[1], in_channels, ch3x3red, 1),
        "b2":     conv_params(keys[2], ch3x3red, ch3x3, 3),
        "b3_red": conv_params(keys[3], in_channels, ch5x5red, 1),
        "b3":     conv_params(keys[4], ch5x5red, ch5x5, 5),
        "b4":     conv_params(keys[5], in_channels, pool_proj, 1),
    }


def _pick_batch_block(n, cap=4):
    nb = 1
    for d in range(1, min(n, cap) + 1):
        if n % d == 0:
            nb = d
    return nb


# ----------------------------------------------------------------------------
# Public wrapper: NCHW in -> NCHW out, matching Inception.forward.
# Only free metadata reshapes on the host side — no transpose passes over HBM.
# ----------------------------------------------------------------------------
def inception_forward(params, x_nchw, *, batch_block=None):
    N, Cin, H, W = x_nchw.shape
    HW = H * W
    w_b1, bb1 = params["b1"]
    w_b2r, bb2r = params["b2_red"]
    w_b2, bb2 = params["b2"]
    w_b3r, bb3r = params["b3_red"]
    w_b3, bb3 = params["b3"]
    w_b4, bb4 = params["b4"]

    ch1x1, ch3x3red, ch3x3 = w_b1.shape[0], w_b2r.shape[0], w_b2.shape[0]
    ch5x5red, ch5x5, pool_proj = w_b3r.shape[0], w_b3.shape[0], w_b4.shape[0]
    C1sum = ch1x1 + ch3x3red + ch5x5red
    Ctot = ch1x1 + ch3x3 + ch5x5 + pool_proj

    NB = batch_block if batch_block is not None else _pick_batch_block(N)
    assert N % NB == 0

    # NCHW -> (N, Cin, H*W): spatial axis stays innermost (lands on TPU lanes).
    x2 = x_nchw.reshape(N, Cin, HW).astype(jnp.float32)

    # Lane-position -> (row, col) lookup used for the edge masks in the kernel.
    row_ids = jnp.repeat(jnp.arange(H, dtype=jnp.int32), W)
    col_ids = jnp.tile(jnp.arange(W, dtype=jnp.int32), H)
    pos = jnp.stack([row_ids, col_ids], axis=0)          # (2, HW) int32

    def w_1x1(w):    # (Cout, Cin, 1, 1) -> (Cout, Cin)
        return w.reshape(w.shape[0], w.shape[1])

    def w_taps(w):   # (Cout, Cin, KH, KW) -> (KH*KW, Cout, Cin)
        Cout, Cc, KH, KW = w.shape
        return jnp.transpose(w, (2, 3, 0, 1)).reshape(KH * KW, Cout, Cc)

    # Fused 1x1 weights: rows = [3x3-reduce | 5x5-reduce | branch1].
    w1 = jnp.concatenate([w_1x1(w_b2r), w_1x1(w_b3r), w_1x1(w_b1)],
                         axis=0).astype(jnp.bfloat16)
    b1 = jnp.concatenate([bb2r, bb3r, bb1]).reshape(C1sum, 1).astype(jnp.float32)
    w3 = w_taps(w_b2).astype(jnp.bfloat16)
    b3 = bb2.reshape(ch3x3, 1).astype(jnp.float32)
    w5 = w_taps(w_b3).astype(jnp.bfloat16)
    b5 = bb3.reshape(ch5x5, 1).astype(jnp.float32)
    wp = w_1x1(w_b4).astype(jnp.bfloat16)
    bp = bb4.reshape(pool_proj, 1).astype(jnp.float32)

    kernel = _make_inception_kernel(NB, H, W, Cin, ch1x1, ch3x3red, ch3x3,
                                    ch5x5red, ch5x5, pool_proj)

    out = pl.pallas_call(
        kernel,
        out_shape=jax.ShapeDtypeStruct((N, Ctot, HW), jnp.float32),
        grid=(N // NB,),
        in_specs=[
            pl.BlockSpec((2, HW), lambda n: (0, 0)),
            pl.BlockSpec((NB, Cin, HW), lambda n: (n, 0, 0)),
            pl.BlockSpec((C1sum, Cin), lambda n: (0, 0)),
            pl.BlockSpec((C1sum, 1), lambda n: (0, 0)),
            pl.BlockSpec((9, ch3x3, ch3x3red), lambda n: (0, 0, 0)),
            pl.BlockSpec((ch3x3, 1), lambda n: (0, 0)),
            pl.BlockSpec((25, ch5x5, ch5x5red), lambda n: (0, 0, 0)),
            pl.BlockSpec((ch5x5, 1), lambda n: (0, 0)),
            pl.BlockSpec((Cin, pool_proj)[::-1], lambda n: (0, 0)),
            pl.BlockSpec((pool_proj, 1), lambda n: (0, 0)),
        ],
        out_specs=pl.BlockSpec((NB, Ctot, HW), lambda n: (n, 0, 0)),
        compiler_params=pltpu.CompilerParams(
            dimension_semantics=("parallel",),
            vmem_limit_bytes=48 * 1024 * 1024,
        ),
    )(pos, x2, w1, b1, w3, b3, w5, b5, wp, bp)

    # (N, Ctot, H*W) -> NCHW: a free metadata reshape (no transpose pass).
    return out.reshape(N, Ctot, H, W)


# ----------------------------------------------------------------------------
# Pure-JAX reference (for a correctness sanity check in __main__).
# ----------------------------------------------------------------------------
def _reference(params, x_nchw):
    x = jnp.transpose(x_nchw, (0, 2, 3, 1)).astype(jnp.float32)

    def conv_relu(xh, w, b, pad):
        wh = jnp.transpose(w, (2, 3, 1, 0))                # HWIO
        y = lax.conv_general_dilated(
            xh, wh, (1, 1), [(pad, pad), (pad, pad)],
            dimension_numbers=("NHWC", "HWIO", "NHWC"))
        return jnp.maximum(y + b, 0.0)

    b1 = conv_relu(x, *params["b1"], 0)
    b2 = conv_relu(conv_relu(x, *params["b2_red"], 0), *params["b2"], 1)
    b3 = conv_relu(conv_relu(x, *params["b3_red"], 0), *params["b3"], 2)
    pooled = lax.reduce_window(x, -jnp.inf, lax.max, (1, 3, 3, 1), (1, 1, 1, 1),
                               [(0, 0), (1, 1), (1, 1), (0, 0)])
    b4 = conv_relu(pooled, *params["b4"], 0)
    out = jnp.concatenate([b1, b2, b3, b4], axis=-1)
    return jnp.transpose(out, (0, 3, 1, 2))


if __name__ == "__main__":
    # Small shapes: batch=2, in_channels=4, spatial=16x16.
    in_channels, ch1x1, ch3x3red, ch3x3, ch5x5red, ch5x5, pool_proj = 4, 8, 4, 8, 4, 8, 8
    key = jax.random.PRNGKey(0)
    k_x, k_p = jax.random.split(key)
    x = jax.random.normal(k_x, (2, in_channels, 16, 16), dtype=jnp.float32)
    params = init_inception_params(k_p, in_channels, ch1x1, ch3x3red, ch3x3,
                                   ch5x5red, ch5x5, pool_proj)

    fwd = jax.jit(inception_forward)
    out = jax.block_until_ready(fwd(params, x))
    assert out.shape == (2, ch1x1 + ch3x3 + ch5x5 + pool_proj, 16, 16), out.shape

    ref = jax.block_until_ready(_reference(params, x))
    max_err = float(jnp.max(jnp.abs(out - ref)))
    assert max_err < 5e-2, f"max abs error vs reference: {max_err}"
    print("KERNEL_OK")
</pallas_src>

<mosaic_0001>
module attributes {stable_mosaic.version = 11 : i64} {
  func.func @kernel(%arg0: i32, %arg1: memref<2x256xi32, #tpu.memory_space<vmem>>, %arg2: memref<2x4x256xf32, #tpu.memory_space<vmem>>, %arg3: memref<16x4xbf16, #tpu.memory_space<vmem>>, %arg4: memref<16x1xf32, #tpu.memory_space<vmem>>, %arg5: memref<9x8x4xbf16, #tpu.memory_space<vmem>>, %arg6: memref<8x1xf32, #tpu.memory_space<vmem>>, %arg7: memref<25x8x4xbf16, #tpu.memory_space<vmem>>, %arg8: memref<8x1xf32, #tpu.memory_space<vmem>>, %arg9: memref<8x4xbf16, #tpu.memory_space<vmem>>, %arg10: memref<8x1xf32, #tpu.memory_space<vmem>>, %arg11: memref<2x32x256xf32, #tpu.memory_space<vmem>>) attributes {dimension_semantics = [#tpu.dimension_semantics<parallel>], iteration_bounds = array<i64: 1>, scalar_prefetch = 0 : i64, scratch_operands = 0 : i64, tpu.core_type = #tpu.core_type<tc>, window_params = [{pipeline_mode = #tpu.pipeline_mode<synchronous>, transform_indices = @transform_0, window_bounds = array<i64: 2, 256>}, {transform_indices = @transform_1, window_bounds = array<i64: 2, 4, 256>}, {pipeline_mode = #tpu.pipeline_mode<synchronous>, transform_indices = @transform_2, window_bounds = array<i64: 16, 4>}, {pipeline_mode = #tpu.pipeline_mode<synchronous>, transform_indices = @transform_3, window_bounds = array<i64: 16, 1>}, {pipeline_mode = #tpu.pipeline_mode<synchronous>, transform_indices = @transform_4, window_bounds = array<i64: 9, 8, 4>}, {pipeline_mode = #tpu.pipeline_mode<synchronous>, transform_indices = @transform_5, window_bounds = array<i64: 8, 1>}, {pipeline_mode = #tpu.pipeline_mode<synchronous>, transform_indices = @transform_6, window_bounds = array<i64: 25, 8, 4>}, {pipeline_mode = #tpu.pipeline_mode<synchronous>, transform_indices = @transform_7, window_bounds = array<i64: 8, 1>}, {pipeline_mode = #tpu.pipeline_mode<synchronous>, transform_indices = @transform_8, window_bounds = array<i64: 8, 4>}, {pipeline_mode = #tpu.pipeline_mode<synchronous>, transform_indices = @transform_9, window_bounds = array<i64: 8, 1>}, {transform_indices = @transform_10, window_bounds = array<i64: 2, 32, 256>}]} {
    %c0 = arith.constant 0 : index
    %c0_0 = arith.constant 0 : index
    %0 = vector.load %arg1[%c0, %c0_0] : memref<2x256xi32, #tpu.memory_space<vmem>>, vector<1x256xi32>
    %c1 = arith.constant 1 : index
    %c0_1 = arith.constant 0 : index
    %1 = vector.load %arg1[%c1, %c0_1] : memref<2x256xi32, #tpu.memory_space<vmem>>, vector<1x256xi32>
    %c0_2 = arith.constant 0 : index
    %c0_3 = arith.constant 0 : index
    %2 = vector.load %arg3[%c0_2, %c0_3] : memref<16x4xbf16, #tpu.memory_space<vmem>>, vector<16x4xbf16>
    %c0_4 = arith.constant 0 : index
    %c0_5 = arith.constant 0 : index
    %3 = vector.load %arg4[%c0_4, %c0_5] : memref<16x1xf32, #tpu.memory_space<vmem>>, vector<16x1xf32>
    %c0_6 = arith.constant 0 : index
    %c0_7 = arith.constant 0 : index
    %c0_8 = arith.constant 0 : index
    %4 = vector.load %arg5[%c0_6, %c0_7, %c0_8] : memref<9x8x4xbf16, #tpu.memory_space<vmem>>, vector<9x8x4xbf16>
    %c0_9 = arith.constant 0 : index
    %c0_10 = arith.constant 0 : index
    %5 = vector.load %arg6[%c0_9, %c0_10] : memref<8x1xf32, #tpu.memory_space<vmem>>, vector<8x1xf32>
    %c0_11 = arith.constant 0 : index
    %c0_12 = arith.constant 0 : index
    %c0_13 = arith.constant 0 : index
    %6 = vector.load %arg7[%c0_11, %c0_12, %c0_13] : memref<25x8x4xbf16, #tpu.memory_space<vmem>>, vector<25x8x4xbf16>
    %c0_14 = arith.constant 0 : index
    %c0_15 = arith.constant 0 : index
    %7 = vector.load %arg8[%c0_14, %c0_15] : memref<8x1xf32, #tpu.memory_space<vmem>>, vector<8x1xf32>
    %c0_16 = arith.constant 0 : index
    %c0_17 = arith.constant 0 : index
    %8 = vector.load %arg9[%c0_16, %c0_17] : memref<8x4xbf16, #tpu.memory_space<vmem>>, vector<8x4xbf16>
    %c0_18 = arith.constant 0 : index
    %c0_19 = arith.constant 0 : index
    %9 = vector.load %arg10[%c0_18, %c0_19] : memref<8x1xf32, #tpu.memory_space<vmem>>, vector<8x1xf32>
    %c0_20 = arith.constant 0 : index
    %c0_21 = arith.constant 0 : index
    %c0_22 = arith.constant 0 : index
    %10 = vector.load %arg2[%c0_20, %c0_21, %c0_22] : memref<2x4x256xf32, #tpu.memory_space<vmem>>, vector<1x4x256xf32>
    %11 = vector.shape_cast %10 : vector<1x4x256xf32> to vector<4x256xf32>
    %12 = arith.truncf %11 : vector<4x256xf32> to vector<4x256xbf16>
    %cst = arith.constant dense<0.000000e+00> : vector<16x256xf32>
    %13 = tpu.matmul %2, %12, %cst {dimension_numbers = #tpu.dot_dimension_numbers<[1], [0], [0], [1], [0, 0, 1, 1], [], []>} : vector<16x4xbf16>, vector<4x256xbf16>, vector<16x256xf32> -> vector<16x256xf32>
    %14 = vector.broadcast %3 : vector<16x1xf32> to vector<16x256xf32>
    %15 = arith.addf %13, %14 : vector<16x256xf32>
    %cst_23 = arith.constant 0.000000e+00 : f32
    %16 = vector.broadcast %cst_23 : f32 to vector<16x256xf32>
    %17 = arith.maximumf %15, %16 : vector<16x256xf32>
    %18 = vector.extract_strided_slice %17 {offsets = [0, 0], sizes = [4, 256], strides = [1, 1]} : vector<16x256xf32> to vector<4x256xf32>
    %19 = vector.extract_strided_slice %17 {offsets = [4, 0], sizes = [4, 256], strides = [1, 1]} : vector<16x256xf32> to vector<4x256xf32>
    %20 = vector.extract_strided_slice %17 {offsets = [8, 0], sizes = [8, 256], strides = [1, 1]} : vector<16x256xf32> to vector<8x256xf32>
    %c0_24 = arith.constant 0 : index
    %c0_25 = arith.constant 0 : index
    %c0_26 = arith.constant 0 : index
    %21 = vector.load %arg11[%c0_24, %c0_25, %c0_26] : memref<2x32x256xf32, #tpu.memory_space<vmem>>, vector<1x8x256xf32>
    %22 = vector.shape_cast %21 : vector<1x8x256xf32> to vector<8x256xf32>
    %23 = vector.shape_cast %20 : vector<8x256xf32> to vector<1x8x256xf32>
    tpu.vector_store %arg11[%c0_24, %c0_25, %c0_26], %23 {strides = array<i32>} : memref<2x32x256xf32, #tpu.memory_space<vmem>>, vector<1x8x256xf32>,
    %cst_27 = arith.constant 0.000000e+00 : f32
    %24 = vector.broadcast %cst_27 : f32 to vector<8x256xf32>
    %c17_i32 = arith.constant 17 : i32
    %25 = tpu.dynamic_rotate %18 by %c17_i32 dim 1 : vector<4x256xf32>, i32 -> vector<4x256xf32>
    %c1_i32 = arith.constant 1 : i32
    %26 = vector.broadcast %c1_i32 : i32 to vector<1x256xi32>
    %27 = arith.cmpi sge, %0, %26 : vector<1x256xi32>
    %c1_i32_28 = arith.constant 1 : i32
    %28 = vector.broadcast %c1_i32_28 : i32 to vector<1x256xi32>
    %29 = arith.cmpi sge, %1, %28 : vector<1x256xi32>
    %30 = arith.andi %27, %29 : vector<1x256xi1>
    %cst_29 = arith.constant 0.000000e+00 : f32
    %31 = vector.shape_cast %30 : vector<1x256xi1> to vector<1x256xi1>
    %32 = vector.broadcast %31 : vector<1x256xi1> to vector<4x256xi1>
    %33 = vector.broadcast %cst_29 : f32 to vector<4x256xf32>
    %34 = arith.select %32, %25, %33 : vector<4x256xi1>, vector<4x256xf32>
    %35 = vector.extract_strided_slice %4 {offsets = [0, 0, 0], sizes = [1, 8, 4], strides = [1, 1, 1]} : vector<9x8x4xbf16> to vector<1x8x4xbf16>
    %36 = vector.shape_cast %35 : vector<1x8x4xbf16> to vector<8x4xbf16>
    %37 = arith.truncf %34 : vector<4x256xf32> to vector<4x256xbf16>
    %cst_30 = arith.constant dense<0.000000e+00> : vector<8x256xf32>
    %38 = tpu.matmul %36, %37, %cst_30 {dimension_numbers = #tpu.dot_dimension_numbers<[1], [0], [0], [1], [0, 0, 1, 1], [], []>} : vector<8x4xbf16>, vector<4x256xbf16>, vector<8x256xf32> -> vector<8x256xf32>
    %39 = arith.addf %24, %38 : vector<8x256xf32>
    %c16_i32 = arith.constant 16 : i32
    %40 = tpu.dynamic_rotate %18 by %c16_i32 dim 1 : vector<4x256xf32>, i32 -> vector<4x256xf32>
    %c1_i32_31 = arith.constant 1 : i32
    %41 = vector.broadcast %c1_i32_31 : i32 to vector<1x256xi32>
    %42 = arith.cmpi sge, %0, %41 : vector<1x256xi32>
    %cst_32 = arith.constant 0.000000e+00 : f32
    %43 = vector.shape_cast %42 : vector<1x256xi1> to vector<1x256xi1>
    %44 = vector.broadcast %43 : vector<1x256xi1> to vector<4x256xi1>
    %45 = vector.broadcast %cst_32 : f32 to vector<4x256xf32>
    %46 = arith.select %44, %40, %45 : vector<4x256xi1>, vector<4x256xf32>
    %47 = vector.extract_strided_slice %4 {offsets = [1, 0, 0], sizes = [1, 8, 4], strides = [1, 1, 1]} : vector<9x8x4xbf16> to vector<1x8x4xbf16>
    %48 = vector.shape_cast %47 : vector<1x8x4xbf16> to vector<8x4xbf16>
    %49 = arith.truncf %46 : vector<4x256xf32> to vector<4x256xbf16>
    %cst_33 = arith.constant dense<0.000000e+00> : vector<8x256xf32>
    %50 = tpu.matmul %48, %49, %cst_33 {dimension_numbers = #tpu.dot_dimension_numbers<[1], [0], [0], [1], [0, 0, 1, 1], [], []>} : vector<8x4xbf16>, vector<4x256xbf16>, vector<8x256xf32> -> vector<8x256xf32>
    %51 = arith.addf %39, %50 : vector<8x256xf32>
    %c15_i32 = arith.constant 15 : i32
    %52 = tpu.dynamic_rotate %18 by %c15_i32 dim 1 : vector<4x256xf32>, i32 -> vector<4x256xf32>
    %c1_i32_34 = arith.constant 1 : i32
    %53 = vector.broadcast %c1_i32_34 : i32 to vector<1x256xi32>
    %54 = arith.cmpi sge, %0, %53 : vector<1x256xi32>
    %c15_i32_35 = arith.constant 15 : i32
    %55 = vector.broadcast %c15_i32_35 : i32 to vector<1x256xi32>
    %56 = arith.cmpi slt, %1, %55 : vector<1x256xi32>
    %57 = arith.andi %54, %56 : vector<1x256xi1>
    %cst_36 = arith.constant 0.000000e+00 : f32
    %58 = vector.shape_cast %57 : vector<1x256xi1> to vector<1x256xi1>
    %59 = vector.broadcast %58 : vector<1x256xi1> to vector<4x256xi1>
    %60 = vector.broadcast %cst_36 : f32 to vector<4x256xf32>
    %61 = arith.select %59, %52, %60 : vector<4x256xi1>, vector<4x256xf32>
    %62 = vector.extract_strided_slice %4 {offsets = [2, 0, 0], sizes = [1, 8, 4], strides = [1, 1, 1]} : vector<9x8x4xbf16> to vector<1x8x4xbf16>
    %63 = vector.shape_cast %62 : vector<1x8x4xbf16> to vector<8x4xbf16>
    %64 = arith.truncf %61 : vector<4x256xf32> to vector<4x256xbf16>
    %cst_37 = arith.constant dense<0.000000e+00> : vector<8x256xf32>
    %65 = tpu.matmul %63, %64, %cst_37 {dimension_numbers = #tpu.dot_dimension_numbers<[1], [0], [0], [1], [0, 0, 1, 1], [], []>} : vector<8x4xbf16>, vector<4x256xbf16>, vector<8x256xf32> -> vector<8x256xf32>
    %66 = arith.addf %51, %65 : vector<8x256xf32>
    %c1_i32_38 = arith.constant 1 : i32
    %67 = tpu.dynamic_rotate %18 by %c1_i32_38 dim 1 : vector<4x256xf32>, i32 -> vector<4x256xf32>
    %c1_i32_39 = arith.constant 1 : i32
    %68 = vector.broadcast %c1_i32_39 : i32 to vector<1x256xi32>
    %69 = arith.cmpi sge, %1, %68 : vector<1x256xi32>
    %cst_40 = arith.constant 0.000000e+00 : f32
    %70 = vector.shape_cast %69 : vector<1x256xi1> to vector<1x256xi1>
    %71 = vector.broadcast %70 : vector<1x256xi1> to vector<4x256xi1>
    %72 = vector.broadcast %cst_40 : f32 to vector<4x256xf32>
    %73 = arith.select %71, %67, %72 : vector<4x256xi1>, vector<4x256xf32>
    %74 = vector.extract_strided_slice %4 {offsets = [3, 0, 0], sizes = [1, 8, 4], strides = [1, 1, 1]} : vector<9x8x4xbf16> to vector<1x8x4xbf16>
    %75 = vector.shape_cast %74 : vector<1x8x4xbf16> to vector<8x4xbf16>
    %76 = arith.truncf %73 : vector<4x256xf32> to vector<4x256xbf16>
    %cst_41 = arith.constant dense<0.000000e+00> : vector<8x256xf32>
    %77 = tpu.matmul %75, %76, %cst_41 {dimension_numbers = #tpu.dot_dimension_numbers<[1], [0], [0], [1], [0, 0, 1, 1], [], []>} : vector<8x4xbf16>, vector<4x256xbf16>, vector<8x256xf32> -> vector<8x256xf32>
    %78 = arith.addf %66, %77 : vector<8x256xf32>
    %79 = vector.extract_strided_slice %4 {offsets = [4, 0, 0], sizes = [1, 8, 4], strides = [1, 1, 1]} : vector<9x8x4xbf16> to vector<1x8x4xbf16>
    %80 = vector.shape_cast %79 : vector<1x8x4xbf16> to vector<8x4xbf16>
    %81 = arith.truncf %18 : vector<4x256xf32> to vector<4x256xbf16>
    %cst_42 = arith.constant dense<0.000000e+00> : vector<8x256xf32>
    %82 = tpu.matmul %80, %81, %cst_42 {dimension_numbers = #tpu.dot_dimension_numbers<[1], [0], [0], [1], [0, 0, 1, 1], [], []>} : vector<8x4xbf16>, vector<4x256xbf16>, vector<8x256xf32> -> vector<8x256xf32>
    %83 = arith.addf %78, %82 : vector<8x256xf32>
    %c255_i32 = arith.constant 255 : i32
    %84 = tpu.dynamic_rotate %18 by %c255_i32 dim 1 : vector<4x256xf32>, i32 -> vector<4x256xf32>
    %c15_i32_43 = arith.constant 15 : i32
    %85 = vector.broadcast %c15_i32_43 : i32 to vector<1x256xi32>
    %86 = arith.cmpi slt, %1, %85 : vector<1x256xi32>
    %cst_44 = arith.constant 0.000000e+00 : f32
    %87 = vector.shape_cast %86 : vector<1x256xi1> to vector<1x256xi1>
    %88 = vector.broadcast %87 : vector<1x256xi1> to vector<4x256xi1>
    %89 = vector.broadcast %cst_44 : f32 to vector<4x256xf32>
    %90 = arith.select %88, %84, %89 : vector<4x256xi1>, vector<4x256xf32>
    %91 = vector.extract_strided_slice %4 {offsets = [5, 0, 0], sizes = [1, 8, 4], strides = [1, 1, 1]} : vector<9x8x4xbf16> to vector<1x8x4xbf16>
    %92 = vector.shape_cast %91 : vector<1x8x4xbf16> to vector<8x4xbf16>
    %93 = arith.truncf %90 : vector<4x256xf32> to vector<4x256xbf16>
    %cst_45 = arith.constant dense<0.000000e+00> : vector<8x256xf32>
    %94 = tpu.matmul %92, %93, %cst_45 {dimension_numbers = #tpu.dot_dimension_numbers<[1], [0], [0], [1], [0, 0, 1, 1], [], []>} : vector<8x4xbf16>, vector<4x256xbf16>, vector<8x256xf32> -> vector<8x256xf32>
    %95 = arith.addf %83, %94 : vector<8x256xf32>
    %c241_i32 = arith.constant 241 : i32
    %96 = tpu.dynamic_rotate %18 by %c241_i32 dim 1 : vector<4x256xf32>, i32 -> vector<4x256xf32>
    %c15_i32_46 = arith.constant 15 : i32
    %97 = vector.broadcast %c15_i32_46 : i32 to vector<1x256xi32>
    %98 = arith.cmpi slt, %0, %97 : vector<1x256xi32>
    %c1_i32_47 = arith.constant 1 : i32
    %99 = vector.broadcast %c1_i32_47 : i32 to vector<1x256xi32>
    %100 = arith.cmpi sge, %1, %99 : vector<1x256xi32>
    %101 = arith.andi %98, %100 : vector<1x256xi1>
    %cst_48 = arith.constant 0.000000e+00 : f32
    %102 = vector.shape_cast %101 : vector<1x256xi1> to vector<1x256xi1>
    %103 = vector.broadcast %102 : vector<1x256xi1> to vector<4x256xi1>
    %104 = vector.broadcast %cst_48 : f32 to vector<4x256xf32>
    %105 = arith.select %103, %96, %104 : vector<4x256xi1>, vector<4x256xf32>
    %106 = vector.extract_strided_slice %4 {offsets = [6, 0, 0], sizes = [1, 8, 4], strides = [1, 1, 1]} : vector<9x8x4xbf16> to vector<1x8x4xbf16>
    %107 = vector.shape_cast %106 : vector<1x8x4xbf16> to vector<8x4xbf16>
    %108 = arith.truncf %105 : vector<4x256xf32> to vector<4x256xbf16>
    %cst_49 = arith.constant dense<0.000000e+00> : vector<8x256xf32>
    %109 = tpu.matmul %107, %108, %cst_49 {dimension_numbers = #tpu.dot_dimension_numbers<[1], [0], [0], [1], [0, 0, 1, 1], [], []>} : vector<8x4xbf16>, vector<4x256xbf16>, vector<8x256xf32> -> vector<8x256xf32>
    %110 = arith.addf %95, %109 : vector<8x256xf32>
    %c240_i32 = arith.constant 240 : i32
    %111 = tpu.dynamic_rotate %18 by %c240_i32 dim 1 : vector<4x256xf32>, i32 -> vector<4x256xf32>
    %c15_i32_50 = arith.constant 15 : i32
    %112 = vector.broadcast %c15_i32_50 : i32 to vector<1x256xi32>
    %113 = arith.cmpi slt, %0, %112 : vector<1x256xi32>
    %cst_51 = arith.constant 0.000000e+00 : f32
    %114 = vector.shape_cast %113 : vector<1x256xi1> to vector<1x256xi1>
    %115 = vector.broadcast %114 : vector<1x256xi1> to vector<4x256xi1>
    %116 = vector.broadcast %cst_51 : f32 to vector<4x256xf32>
    %117 = arith.select %115, %111, %116 : vector<4x256xi1>, vector<4x256xf32>
    %118 = vector.extract_strided_slice %4 {offsets = [7, 0, 0], sizes = [1, 8, 4], strides = [1, 1, 1]} : vector<9x8x4xbf16> to vector<1x8x4xbf16>
    %119 = vector.shape_cast %118 : vector<1x8x4xbf16> to vector<8x4xbf16>
    %120 = arith.truncf %117 : vector<4x256xf32> to vector<4x256xbf16>
    %cst_52 = arith.constant dense<0.000000e+00> : vector<8x256xf32>
    %121 = tpu.matmul %119, %120, %cst_52 {dimension_numbers = #tpu.dot_dimension_numbers<[1], [0], [0], [1], [0, 0, 1, 1], [], []>} : vector<8x4xbf16>, vector<4x256xbf16>, vector<8x256xf32> -> vector<8x256xf32>
    %122 = arith.addf %110, %121 : vector<8x256xf32>
    %c239_i32 = arith.constant 239 : i32
    %123 = tpu.dynamic_rotate %18 by %c239_i32 dim 1 : vector<4x256xf32>, i32 -> vector<4x256xf32>
    %c15_i32_53 = arith.constant 15 : i32
    %124 = vector.broadcast %c15_i32_53 : i32 to vector<1x256xi32>
    %125 = arith.cmpi slt, %0, %124 : vector<1x256xi32>
    %c15_i32_54 = arith.constant 15 : i32
    %126 = vector.broadcast %c15_i32_54 : i32 to vector<1x256xi32>
    %127 = arith.cmpi slt, %1, %126 : vector<1x256xi32>
    %128 = arith.andi %125, %127 : vector<1x256xi1>
    %cst_55 = arith.constant 0.000000e+00 : f32
    %129 = vector.shape_cast %128 : vector<1x256xi1> to vector<1x256xi1>
    %130 = vector.broadcast %129 : vector<1x256xi1> to vector<4x256xi1>
    %131 = vector.broadcast %cst_55 : f32 to vector<4x256xf32>
    %132 = arith.select %130, %123, %131 : vector<4x256xi1>, vector<4x256xf32>
    %133 = vector.extract_strided_slice %4 {offsets = [8, 0, 0], sizes = [1, 8, 4], strides = [1, 1, 1]} : vector<9x8x4xbf16> to vector<1x8x4xbf16>
    %134 = vector.shape_cast %133 : vector<1x8x4xbf16> to vector<8x4xbf16>
    %135 = arith.truncf %132 : vector<4x256xf32> to vector<4x256xbf16>
    %cst_56 = arith.constant dense<0.000000e+00> : vector<8x256xf32>
    %136 = tpu.matmul %134, %135, %cst_56 {dimension_numbers = #tpu.dot_dimension_numbers<[1], [0], [0], [1], [0, 0, 1, 1], [], []>} : vector<8x4xbf16>, vector<4x256xbf16>, vector<8x256xf32> -> vector<8x256xf32>
    %137 = arith.addf %122, %136 : vector<8x256xf32>
    %138 = vector.broadcast %5 : vector<8x1xf32> to vector<8x256xf32>
    %139 = arith.addf %137, %138 : vector<8x256xf32>
    %cst_57 = arith.constant 0.000000e+00 : f32
    %140 = vector.broadcast %cst_57 : f32 to vector<8x256xf32>
    %141 = arith.maximumf %139, %140 : vector<8x256xf32>
    %c0_58 = arith.constant 0 : index
    %c8 = arith.constant 8 : index
    %c0_59 = arith.constant 0 : index
    %142 = vector.load %arg11[%c0_58, %c8, %c0_59] : memref<2x32x256xf32, #tpu.memory_space<vmem>>, vector<1x8x256xf32>
    %143 = vector.shape_cast %142 : vector<1x8x256xf32> to vector<8x256xf32>
    %144 = vector.shape_cast %141 : vector<8x256xf32> to vector<1x8x256xf32>
    tpu.vector_store %arg11[%c0_58, %c8, %c0_59], %144 {strides = array<i32>} : memref<2x32x256xf32, #tpu.memory_space<vmem>>, vector<1x8x256xf32>,
    %cst_60 = arith.constant 0.000000e+00 : f32
    %145 = vector.broadcast %cst_60 : f32 to vector<8x256xf32>
    %c34_i32 = arith.constant 34 : i32
    %146 = tpu.dynamic_rotate %19 by %c34_i32 dim 1 : vector<4x256xf32>, i32 -> vector<4x256xf32>
    %c2_i32 = arith.constant 2 : i32
    %147 = vector.broadcast %c2_i32 : i32 to vector<1x256xi32>
    %148 = arith.cmpi sge, %0, %147 : vector<1x256xi32>
    %c2_i32_61 = arith.constant 2 : i32
    %149 = vector.broadcast %c2_i32_61 : i32 to vector<1x256xi32>
    %150 = arith.cmpi sge, %1, %149 : vector<1x256xi32>
    %151 = arith.andi %148, %150 : vector<1x256xi1>
    %cst_62 = arith.constant 0.000000e+00 : f32
    %152 = vector.shape_cast %151 : vector<1x256xi1> to vector<1x256xi1>
    %153 = vector.broadcast %152 : vector<1x256xi1> to vector<4x256xi1>
    %154 = vector.broadcast %cst_62 : f32 to vector<4x256xf32>
    %155 = arith.select %153, %146, %154 : vector<4x256xi1>, vector<4x256xf32>
    %156 = vector.extract_strided_slice %6 {offsets = [0, 0, 0], sizes = [1, 8, 4], strides = [1, 1, 1]} : vector<25x8x4xbf16> to vector<1x8x4xbf16>
    %157 = vector.shape_cast %156 : vector<1x8x4xbf16> to vector<8x4xbf16>
    %158 = arith.truncf %155 : vector<4x256xf32> to vector<4x256xbf16>
    %cst_63 = arith.constant dense<0.000000e+00> : vector<8x256xf32>
    %159 = tpu.matmul %157, %158, %cst_63 {dimension_numbers = #tpu.dot_dimension_numbers<[1], [0], [0], [1], [0, 0, 1, 1], [], []>} : vector<8x4xbf16>, vector<4x256xbf16>, vector<8x256xf32> -> vector<8x256xf32>
    %160 = arith.addf %145, %159 : vector<8x256xf32>
    %c33_i32 = arith.constant 33 : i32
    %161 = tpu.dynamic_rotate %19 by %c33_i32 dim 1 : vector<4x256xf32>, i32 -> vector<4x256xf32>
    %c2_i32_64 = arith.constant 2 : i32
    %162 = vector.broadcast %c2_i32_64 : i32 to vector<1x256xi32>
    %163 = arith.cmpi sge, %0, %162 : vector<1x256xi32>
    %c1_i32_65 = arith.constant 1 : i32
    %164 = vector.broadcast %c1_i32_65 : i32 to vector<1x256xi32>
    %165 = arith.cmpi sge, %1, %164 : vector<1x256xi32>
    %166 = arith.andi %163, %165 : vector<1x256xi1>
    %cst_66 = arith.constant 0.000000e+00 : f32
    %167 = vector.shape_cast %166 : vector<1x256xi1> to vector<1x256xi1>
    %168 = vector.broadcast %167 : vector<1x256xi1> to vector<4x256xi1>
    %169 = vector.broadcast %cst_66 : f32 to vector<4x256xf32>
    %170 = arith.select %168, %161, %169 : vector<4x256xi1>, vector<4x256xf32>
    %171 = vector.extract_strided_slice %6 {offsets = [1, 0, 0], sizes = [1, 8, 4], strides = [1, 1, 1]} : vector<25x8x4xbf16> to vector<1x8x4xbf16>
    %172 = vector.shape_cast %171 : vector<1x8x4xbf16> to vector<8x4xbf16>
    %173 = arith.truncf %170 : vector<4x256xf32> to vector<4x256xbf16>
    %cst_67 = arith.constant dense<0.000000e+00> : vector<8x256xf32>
    %174 = tpu.matmul %172, %173, %cst_67 {dimension_numbers = #tpu.dot_dimension_numbers<[1], [0], [0], [1], [0, 0, 1, 1], [], []>} : vector<8x4xbf16>, vector<4x256xbf16>, vector<8x256xf32> -> vector<8x256xf32>
    %175 = arith.addf %160, %174 : vector<8x256xf32>
    %c32_i32 = arith.constant 32 : i32
    %176 = tpu.dynamic_rotate %19 by %c32_i32 dim 1 : vector<4x256xf32>, i32 -> vector<4x256xf32>
    %c2_i32_68 = arith.constant 2 : i32
    %177 = vector.broadcast %c2_i32_68 : i32 to vector<1x256xi32>
    %178 = arith.cmpi sge, %0, %177 : vector<1x256xi32>
    %cst_69 = arith.constant 0.000000e+00 : f32
    %179 = vector.shape_cast %178 : vector<1x256xi1> to vector<1x256xi1>
    %180 = vector.broadcast %179 : vector<1x256xi1> to vector<4x256xi1>
    %181 = vector.broadcast %cst_69 : f32 to vector<4x256xf32>
    %182 = arith.select %180, %176, %181 : vector<4x256xi1>, vector<4x256xf32>
    %183 = vector.extract_strided_slice %6 {offsets = [2, 0, 0], sizes = [1, 8, 4], strides = [1, 1, 1]} : vector<25x8x4xbf16> to vector<1x8x4xbf16>
    %184 = vector.shape_cast %183 : vector<1x8x4xbf16> to vector<8x4xbf16>
    %185 = arith.truncf %182 : vector<4x256xf32> to vector<4x256xbf16>
    %cst_70 = arith.constant dense<0.000000e+00> : vector<8x256xf32>
    %186 = tpu.matmul %184, %185, %cst_70 {dimension_numbers = #tpu.dot_dimension_numbers<[1], [0], [0], [1], [0, 0, 1, 1], [], []>} : vector<8x4xbf16>, vector<4x256xbf16>, vector<8x256xf32> -> vector<8x256xf32>
    %187 = arith.addf %175, %186 : vector<8x256xf32>
    %c31_i32 = arith.constant 31 : i32
    %188 = tpu.dynamic_rotate %19 by %c31_i32 dim 1 : vector<4x256xf32>, i32 -> vector<4x256xf32>
    %c2_i32_71 = arith.constant 2 : i32
    %189 = vector.broadcast %c2_i32_71 : i32 to vector<1x256xi32>
    %190 = arith.cmpi sge, %0, %189 : vector<1x256xi32>
    %c15_i32_72 = arith.constant 15 : i32
    %191 = vector.broadcast %c15_i32_72 : i32 to vector<1x256xi32>
    %192 = arith.cmpi slt, %1, %191 : vector<1x256xi32>
    %193 = arith.andi %190, %192 : vector<1x256xi1>
    %cst_73 = arith.constant 0.000000e+00 : f32
    %194 = vector.shape_cast %193 : vector<1x256xi1> to vector<1x256xi1>
    %195 = vector.broadcast %194 : vector<1x256xi1> to vector<4x256xi1>
    %196 = vector.broadcast %cst_73 : f32 to vector<4x256xf32>
    %197 = arith.select %195, %188, %196 : vector<4x256xi1>, vector<4x256xf32>
    %198 = vector.extract_strided_slice %6 {offsets = [3, 0, 0], sizes = [1, 8, 4], strides = [1, 1, 1]} : vector<25x8x4xbf16> to vector<1x8x4xbf16>
    %199 = vector.shape_cast %198 : vector<1x8x4xbf16> to vector<8x4xbf16>
    %200 = arith.truncf %197 : vector<4x256xf32> to vector<4x256xbf16>
    %cst_74 = arith.constant dense<0.000000e+00> : vector<8x256xf32>
    %201 = tpu.matmul %199, %200, %cst_74 {dimension_numbers = #tpu.dot_dimension_numbers<[1], [0], [0], [1], [0, 0, 1, 1], [], []>} : vector<8x4xbf16>, vector<4x256xbf16>, vector<8x256xf32> -> vector<8x256xf32>
    %202 = arith.addf %187, %201 : vector<8x256xf32>
    %c30_i32 = arith.constant 30 : i32
    %203 = tpu.dynamic_rotate %19 by %c30_i32 dim 1 : vector<4x256xf32>, i32 -> vector<4x256xf32>
    %c2_i32_75 = arith.constant 2 : i32
    %204 = vector.broadcast %c2_i32_75 : i32 to vector<1x256xi32>
    %205 = arith.cmpi sge, %0, %204 : vector<1x256xi32>
    %c14_i32 = arith.constant 14 : i32
    %206 = vector.broadcast %c14_i32 : i32 to vector<1x256xi32>
    %207 = arith.cmpi slt, %1, %206 : vector<1x256xi32>
    %208 = arith.andi %205, %207 : vector<1x256xi1>
    %cst_76 = arith.constant 0.000000e+00 : f32
    %209 = vector.shape_cast %208 : vector<1x256xi1> to vector<1x256xi1>
    %210 = vector.broadcast %209 : vector<1x256xi1> to vector<4x256xi1>
    %211 = vector.broadcast %cst_76 : f32 to vector<4x256xf32>
    %212 = arith.select %210, %203, %211 : vector<4x256xi1>, vector<4x256xf32>
    %213 = vector.extract_strided_slice %6 {offsets = [4, 0, 0], sizes = [1, 8, 4], strides = [1, 1, 1]} : vector<25x8x4xbf16> to vector<1x8x4xbf16>
    %214 = vector.shape_cast %213 : vector<1x8x4xbf16> to vector<8x4xbf16>
    %215 = arith.truncf %212 : vector<4x256xf32> to vector<4x256xbf16>
    %cst_77 = arith.constant dense<0.000000e+00> : vector<8x256xf32>
    %216 = tpu.matmul %214, %215, %cst_77 {dimension_numbers = #tpu.dot_dimension_numbers<[1], [0], [0], [1], [0, 0, 1, 1], [], []>} : vector<8x4xbf16>, vector<4x256xbf16>, vector<8x256xf32> -> vector<8x256xf32>
    %217 = arith.addf %202, %216 : vector<8x256xf32>
    %c18_i32 = arith.constant 18 : i32
    %218 = tpu.dynamic_rotate %19 by %c18_i32 dim 1 : vector<4x256xf32>, i32 -> vector<4x256xf32>
    %c1_i32_78 = arith.constant 1 : i32
    %219 = vector.broadcast %c1_i32_78 : i32 to vector<1x256xi32>
    %220 = arith.cmpi sge, %0, %219 : vector<1x256xi32>
    %c2_i32_79 = arith.constant 2 : i32
    %221 = vector.broadcast %c2_i32_79 : i32 to vector<1x256xi32>
    %222 = arith.cmpi sge, %1, %221 : vector<1x256xi32>
    %223 = arith.andi %220, %222 : vector<1x256xi1>
    %cst_80 = arith.constant 0.000000e+00 : f32
    %224 = vector.shape_cast %223 : vector<1x256xi1> to vector<1x256xi1>
    %225 = vector.broadcast %224 : vector<1x256xi1> to vector<4x256xi1>
    %226 = vector.broadcast %cst_80 : f32 to vector<4x256xf32>
    %227 = arith.select %225, %218, %226 : vector<4x256xi1>, vector<4x256xf32>
    %228 = vector.extract_strided_slice %6 {offsets = [5, 0, 0], sizes = [1, 8, 4], strides = [1, 1, 1]} : vector<25x8x4xbf16> to vector<1x8x4xbf16>
    %229 = vector.shape_cast %228 : vector<1x8x4xbf16> to vector<8x4xbf16>
    %230 = arith.truncf %227 : vector<4x256xf32> to vector<4x256xbf16>
    %cst_81 = arith.constant dense<0.000000e+00> : vector<8x256xf32>
    %231 = tpu.matmul %229, %230, %cst_81 {dimension_numbers = #tpu.dot_dimension_numbers<[1], [0], [0], [1], [0, 0, 1, 1], [], []>} : vector<8x4xbf16>, vector<4x256xbf16>, vector<8x256xf32> -> vector<8x256xf32>
    %232 = arith.addf %217, %231 : vector<8x256xf32>
    %c17_i32_82 = arith.constant 17 : i32
    %233 = tpu.dynamic_rotate %19 by %c17_i32_82 dim 1 : vector<4x256xf32>, i32 -> vector<4x256xf32>
    %c1_i32_83 = arith.constant 1 : i32
    %234 = vector.broadcast %c1_i32_83 : i32 to vector<1x256xi32>
    %235 = arith.cmpi sge, %0, %234 : vector<1x256xi32>
    %c1_i32_84 = arith.constant 1 : i32
    %236 = vector.broadcast %c1_i32_84 : i32 to vector<1x256xi32>
    %237 = arith.cmpi sge, %1, %236 : vector<1x256xi32>
    %238 = arith.andi %235, %237 : vector<1x256xi1>
    %cst_85 = arith.constant 0.000000e+00 : f32
    %239 = vector.shape_cast %238 : vector<1x256xi1> to vector<1x256xi1>
    %240 = vector.broadcast %239 : vector<1x256xi1> to vector<4x256xi1>
    %241 = vector.broadcast %cst_85 : f32 to vector<4x256xf32>
    %242 = arith.select %240, %233, %241 : vector<4x256xi1>, vector<4x256xf32>
    %243 = vector.extract_strided_slice %6 {offsets = [6, 0, 0], sizes = [1, 8, 4], strides = [1, 1, 1]} : vector<25x8x4xbf16> to vector<1x8x4xbf16>
    %244 = vector.shape_cast %243 : vector<1x8x4xbf16> to vector<8x4xbf16>
    %245 = arith.truncf %242 : vector<4x256xf32> to vector<4x256xbf16>
    %cst_86 = arith.constant dense<0.000000e+00> : vector<8x256xf32>
    %246 = tpu.matmul %244, %245, %cst_86 {dimension_numbers = #tpu.dot_dimension_numbers<[1], [0], [0], [1], [0, 0, 1, 1], [], []>} : vector<8x4xbf16>, vector<4x256xbf16>, vector<8x256xf32> -> vector<8x256xf32>
    %247 = arith.addf %232, %246 : vector<8x256xf32>
    %c16_i32_87 = arith.constant 16 : i32
    %248 = tpu.dynamic_rotate %19 by %c16_i32_87 dim 1 : vector<4x256xf32>, i32 -> vector<4x256xf32>
    %c1_i32_88 = arith.constant 1 : i32
    %249 = vector.broadcast %c1_i32_88 : i32 to vector<1x256xi32>
    %250 = arith.cmpi sge, %0, %249 : vector<1x256xi32>
    %cst_89 = arith.constant 0.000000e+00 : f32
    %251 = vector.shape_cast %250 : vector<1x256xi1> to vector<1x256xi1>
    %252 = vector.broadcast %251 : vector<1x256xi1> to vector<4x256xi1>
    %253 = vector.broadcast %cst_89 : f32 to vector<4x256xf32>
    %254 = arith.select %252, %248, %253 : vector<4x256xi1>, vector<4x256xf32>
    %255 = vector.extract_strided_slice %6 {offsets = [7, 0, 0], sizes = [1, 8, 4], strides = [1, 1, 1]} : vector<25x8x4xbf16> to vector<1x8x4xbf16>
    %256 = vector.shape_cast %255 : vector<1x8x4xbf16> to vector<8x4xbf16>
    %257 = arith.truncf %254 : vector<4x256xf32> to vector<4x256xbf16>
    %cst_90 = arith.constant dense<0.000000e+00> : vector<8x256xf32>
    %258 = tpu.matmul %256, %257, %cst_90 {dimension_numbers = #tpu.dot_dimension_numbers<[1], [0], [0], [1], [0, 0, 1, 1], [], []>} : vector<8x4xbf16>, vector<4x256xbf16>, vector<8x256xf32> -> vector<8x256xf32>
    %259 = arith.addf %247, %258 : vector<8x256xf32>
    %c15_i32_91 = arith.constant 15 : i32
    %260 = tpu.dynamic_rotate %19 by %c15_i32_91 dim 1 : vector<4x256xf32>, i32 -> vector<4x256xf32>
    %c1_i32_92 = arith.constant 1 : i32
    %261 = vector.broadcast %c1_i32_92 : i32 to vector<1x256xi32>
    %262 = arith.cmpi sge, %0, %261 : vector<1x256xi32>
    %c15_i32_93 = arith.constant 15 : i32
    %263 = vector.broadcast %c15_i32_93 : i32 to vector<1x256xi32>
    %264 = arith.cmpi slt, %1, %263 : vector<1x256xi32>
    %265 = arith.andi %262, %264 : vector<1x256xi1>
    %cst_94 = arith.constant 0.000000e+00 : f32
    %266 = vector.shape_cast %265 : vector<1x256xi1> to vector<1x256xi1>
    %267 = vector.broadcast %266 : vector<1x256xi1> to vector<4x256xi1>
    %268 = vector.broadcast %cst_94 : f32 to vector<4x256xf32>
    %269 = arith.select %267, %260, %268 : vector<4x256xi1>, vector<4x256xf32>
    %270 = vector.extract_strided_slice %6 {offsets = [8, 0, 0], sizes = [1, 8, 4], strides = [1, 1, 1]} : vector<25x8x4xbf16> to vector<1x8x4xbf16>
    %271 = vector.shape_cast %270 : vector<1x8x4xbf16> to vector<8x4xbf16>
    %272 = arith.truncf %269 : vector<4x256xf32> to vector<4x256xbf16>
    %cst_95 = arith.constant dense<0.000000e+00> : vector<8x256xf32>
    %273 = tpu.matmul %271, %272, %cst_95 {dimension_numbers = #tpu.dot_dimension_numbers<[1], [0], [0], [1], [0, 0, 1, 1], [], []>} : vector<8x4xbf16>, vector<4x256xbf16>, vector<8x256xf32> -> vector<8x256xf32>
    %274 = arith.addf %259, %273 : vector<8x256xf32>
    %c14_i32_96 = arith.constant 14 : i32
    %275 = tpu.dynamic_rotate %19 by %c14_i32_96 dim 1 : vector<4x256xf32>, i32 -> vector<4x256xf32>
    %c1_i32_97 = arith.constant 1 : i32
    %276 = vector.broadcast %c1_i32_97 : i32 to vector<1x256xi32>
    %277 = arith.cmpi sge, %0, %276 : vector<1x256xi32>
    %c14_i32_98 = arith.constant 14 : i32
    %278 = vector.broadcast %c14_i32_98 : i32 to vector<1x256xi32>
    %279 = arith.cmpi slt, %1, %278 : vector<1x256xi32>
    %280 = arith.andi %277, %279 : vector<1x256xi1>
    %cst_99 = arith.constant 0.000000e+00 : f32
    %281 = vector.shape_cast %280 : vector<1x256xi1> to vector<1x256xi1>
    %282 = vector.broadcast %281 : vector<1x256xi1> to vector<4x256xi1>
    %283 = vector.broadcast %cst_99 : f32 to vector<4x256xf32>
    %284 = arith.select %282, %275, %283 : vector<4x256xi1>, vector<4x256xf32>
    %285 = vector.extract_strided_slice %6 {offsets = [9, 0, 0], sizes = [1, 8, 4], strides = [1, 1, 1]} : vector<25x8x4xbf16> to vector<1x8x4xbf16>
    %286 = vector.shape_cast %285 : vector<1x8x4xbf16> to vector<8x4xbf16>
    %287 = arith.truncf %284 : vector<4x256xf32> to vector<4x256xbf16>
    %cst_100 = arith.constant dense<0.000000e+00> : vector<8x256xf32>
    %288 = tpu.matmul %286, %287, %cst_100 {dimension_numbers = #tpu.dot_dimension_numbers<[1], [0], [0], [1], [0, 0, 1, 1], [], []>} : vector<8x4xbf16>, vector<4x256xbf16>, vector<8x256xf32> -> vector<8x256xf32>
    %289 = arith.addf %274, %288 : vector<8x256xf32>
    %c2_i32_101 = arith.constant 2 : i32
    %290 = tpu.dynamic_rotate %19 by %c2_i32_101 dim 1 : vector<4x256xf32>, i32 -> vector<4x256xf32>
    %c2_i32_102 = arith.constant 2 : i32
    %291 = vector.broadcast %c2_i32_102 : i32 to vector<1x256xi32>
    %292 = arith.cmpi sge, %1, %291 : vector<1x256xi32>
    %cst_103 = arith.constant 0.000000e+00 : f32
    %293 = vector.shape_cast %292 : vector<1x256xi1> to vector<1x256xi1>
    %294 = vector.broadcast %293 : vector<1x256xi1> to vector<4x256xi1>
    %295 = vector.broadcast %cst_103 : f32 to vector<4x256xf32>
    %296 = arith.select %294, %290, %295 : vector<4x256xi1>, vector<4x256xf32>
    %297 = vector.extract_strided_slice %6 {offsets = [10, 0, 0], sizes = [1, 8, 4], strides = [1, 1, 1]} : vector<25x8x4xbf16> to vector<1x8x4xbf16>
    %298 = vector.shape_cast %297 : vector<1x8x4xbf16> to vector<8x4xbf16>
    %299 = arith.truncf %296 : vector<4x256xf32> to vector<4x256xbf16>
    %cst_104 = arith.constant dense<0.000000e+00> : vector<8x256xf32>
    %300 = tpu.matmul %298, %299, %cst_104 {dimension_numbers = #tpu.dot_dimension_numbers<[1], [0], [0], [1], [0, 0, 1, 1], [], []>} : vector<8x4xbf16>, vector<4x256xbf16>, vector<8x256xf32> -> vector<8x256xf32>
    %301 = arith.addf %289, %300 : vector<8x256xf32>
    %c1_i32_105 = arith.constant 1 : i32
    %302 = tpu.dynamic_rotate %19 by %c1_i32_105 dim 1 : vector<4x256xf32>, i32 -> vector<4x256xf32>
    %c1_i32_106 = arith.constant 1 : i32
    %303 = vector.broadcast %c1_i32_106 : i32 to vector<1x256xi32>
    %304 = arith.cmpi sge, %1, %303 : vector<1x256xi32>
    %cst_107 = arith.constant 0.000000e+00 : f32
    %305 = vector.shape_cast %304 : vector<1x256xi1> to vector<1x256xi1>
    %306 = vector.broadcast %305 : vector<1x256xi1> to vector<4x256xi1>
    %307 = vector.broadcast %cst_107 : f32 to vector<4x256xf32>
    %308 = arith.select %306, %302, %307 : vector<4x256xi1>, vector<4x256xf32>
    %309 = vector.extract_strided_slice %6 {offsets = [11, 0, 0], sizes = [1, 8, 4], strides = [1, 1, 1]} : vector<25x8x4xbf16> to vector<1x8x4xbf16>
    %310 = vector.shape_cast %309 : vector<1x8x4xbf16> to vector<8x4xbf16>
    %311 = arith.truncf %308 : vector<4x256xf32> to vector<4x256xbf16>
    %cst_108 = arith.constant dense<0.000000e+00> : vector<8x256xf32>
    %312 = tpu.matmul %310, %311, %cst_108 {dimension_numbers = #tpu.dot_dimension_numbers<[1], [0], [0], [1], [0, 0, 1, 1], [], []>} : vector<8x4xbf16>, vector<4x256xbf16>, vector<8x256xf32> -> vector<8x256xf32>
    %313 = arith.addf %301, %312 : vector<8x256xf32>
    %314 = vector.extract_strided_slice %6 {offsets = [12, 0, 0], sizes = [1, 8, 4], strides = [1, 1, 1]} : vector<25x8x4xbf16> to vector<1x8x4xbf16>
    %315 = vector.shape_cast %314 : vector<1x8x4xbf16> to vector<8x4xbf16>
    %316 = arith.truncf %19 : vector<4x256xf32> to vector<4x256xbf16>
    %cst_109 = arith.constant dense<0.000000e+00> : vector<8x256xf32>
    %317 = tpu.matmul %315, %316, %cst_109 {dimension_numbers = #tpu.dot_dimension_numbers<[1], [0], [0], [1], [0, 0, 1, 1], [], []>} : vector<8x4xbf16>, vector<4x256xbf16>, vector<8x256xf32> -> vector<8x256xf32>
    %318 = arith.addf %313, %317 : vector<8x256xf32>
    %c255_i32_110 = arith.constant 255 : i32
    %319 = tpu.dynamic_rotate %19 by %c255_i32_110 dim 1 : vector<4x256xf32>, i32 -> vector<4x256xf32>
    %c15_i32_111 = arith.constant 15 : i32
    %320 = vector.broadcast %c15_i32_111 : i32 to vector<1x256xi32>
    %321 = arith.cmpi slt, %1, %320 : vector<1x256xi32>
    %cst_112 = arith.constant 0.000000e+00 : f32
    %322 = vector.shape_cast %321 : vector<1x256xi1> to vector<1x256xi1>
    %323 = vector.broadcast %322 : vector<1x256xi1> to vector<4x256xi1>
    %324 = vector.broadcast %cst_112 : f32 to vector<4x256xf32>
    %325 = arith.select %323, %319, %324 : vector<4x256xi1>, vector<4x256xf32>
    %326 = vector.extract_strided_slice %6 {offsets = [13, 0, 0], sizes = [1, 8, 4], strides = [1, 1, 1]} : vector<25x8x4xbf16> to vector<1x8x4xbf16>
    %327 = vector.shape_cast %326 : vector<1x8x4xbf16> to vector<8x4xbf16>
    %328 = arith.truncf %325 : vector<4x256xf32> to vector<4x256xbf16>
    %cst_113 = arith.constant dense<0.000000e+00> : vector<8x256xf32>
    %329 = tpu.matmul %327, %328, %cst_113 {dimension_numbers = #tpu.dot_dimension_numbers<[1], [0], [0], [1], [0, 0, 1, 1], [], []>} : vector<8x4xbf16>, vector<4x256xbf16>, vector<8x256xf32> -> vector<8x256xf32>
    %330 = arith.addf %318, %329 : vector<8x256xf32>
    %c254_i32 = arith.constant 254 : i32
    %331 = tpu.dynamic_rotate %19 by %c254_i32 dim 1 : vector<4x256xf32>, i32 -> vector<4x256xf32>
    %c14_i32_114 = arith.constant 14 : i32
    %332 = vector.broadcast %c14_i32_114 : i32 to vector<1x256xi32>
    %333 = arith.cmpi slt, %1, %332 : vector<1x256xi32>
    %cst_115 = arith.constant 0.000000e+00 : f32
    %334 = vector.shape_cast %333 : vector<1x256xi1> to vector<1x256xi1>
    %335 = vector.broadcast %334 : vector<1x256xi1> to vector<4x256xi1>
    %336 = vector.broadcast %cst_115 : f32 to vector<4x256xf32>
    %337 = arith.select %335, %331, %336 : vector<4x256xi1>, vector<4x256xf32>
    %338 = vector.extract_strided_slice %6 {offsets = [14, 0, 0], sizes = [1, 8, 4], strides = [1, 1, 1]} : vector<25x8x4xbf16> to vector<1x8x4xbf16>
    %339 = vector.shape_cast %338 : vector<1x8x4xbf16> to vector<8x4xbf16>
    %340 = arith.truncf %337 : vector<4x256xf32> to vector<4x256xbf16>
    %cst_116 = arith.constant dense<0.000000e+00> : vector<8x256xf32>
    %341 = tpu.matmul %339, %340, %cst_116 {dimension_numbers = #tpu.dot_dimension_numbers<[1], [0], [0], [1], [0, 0, 1, 1], [], []>} : vector<8x4xbf16>, vector<4x256xbf16>, vector<8x256xf32> -> vector<8x256xf32>
    %342 = arith.addf %330, %341 : vector<8x256xf32>
    %c242_i32 = arith.constant 242 : i32
    %343 = tpu.dynamic_rotate %19 by %c242_i32 dim 1 : vector<4x256xf32>, i32 -> vector<4x256xf32>
    %c15_i32_117 = arith.constant 15 : i32
    %344 = vector.broadcast %c15_i32_117 : i32 to vector<1x256xi32>
    %345 = arith.cmpi slt, %0, %344 : vector<1x256xi32>
    %c2_i32_118 = arith.constant 2 : i32
    %346 = vector.broadcast %c2_i32_118 : i32 to vector<1x256xi32>
    %347 = arith.cmpi sge, %1, %346 : vector<1x256xi32>
    %348 = arith.andi %345, %347 : vector<1x256xi1>
    %cst_119 = arith.constant 0.000000e+00 : f32
    %349 = vector.shape_cast %348 : vector<1x256xi1> to vector<1x256xi1>
    %350 = vector.broadcast %349 : vector<1x256xi1> to vector<4x256xi1>
    %351 = vector.broadcast %cst_119 : f32 to vector<4x256xf32>
    %352 = arith.select %350, %343, %351 : vector<4x256xi1>, vector<4x256xf32>
    %353 = vector.extract_strided_slice %6 {offsets = [15, 0, 0], sizes = [1, 8, 4], strides = [1, 1, 1]} : vector<25x8x4xbf16> to vector<1x8x4xbf16>
    %354 = vector.shape_cast %353 : vector<1x8x4xbf16> to vector<8x4xbf16>
    %355 = arith.truncf %352 : vector<4x256xf32> to vector<4x256xbf16>
    %cst_120 = arith.constant dense<0.000000e+00> : vector<8x256xf32>
    %356 = tpu.matmul %354, %355, %cst_120 {dimension_numbers = #tpu.dot_dimension_numbers<[1], [0], [0], [1], [0, 0, 1, 1], [], []>} : vector<8x4xbf16>, vector<4x256xbf16>, vector<8x256xf32> -> vector<8x256xf32>
    %357 = arith.addf %342, %356 : vector<8x256xf32>
    %c241_i32_121 = arith.constant 241 : i32
    %358 = tpu.dynamic_rotate %19 by %c241_i32_121 dim 1 : vector<4x256xf32>, i32 -> vector<4x256xf32>
    %c15_i32_122 = arith.constant 15 : i32
    %359 = vector.broadcast %c15_i32_122 : i32 to vector<1x256xi32>
    %360 = arith.cmpi slt, %0, %359 : vector<1x256xi32>
    %c1_i32_123 = arith.constant 1 : i32
    %361 = vector.broadcast %c1_i32_123 : i32 to vector<1x256xi32>
    %362 = arith.cmpi sge, %1, %361 : vector<1x256xi32>
    %363 = arith.andi %360, %362 : vector<1x256xi1>
    %cst_124 = arith.constant 0.000000e+00 : f32
    %364 = vector.shape_cast %363 : vector<1x256xi1> to vector<1x256xi1>
    %365 = vector.broadcast %364 : vector<1x256xi1> to vector<4x256xi1>
    %366 = vector.broadcast %cst_124 : f32 to vector<4x256xf32>
    %367 = arith.select %365, %358, %366 : vector<4x256xi1>, vector<4x256xf32>
    %368 = vector.extract_strided_slice %6 {offsets = [16, 0, 0], sizes = [1, 8, 4], strides = [1, 1, 1]} : vector<25x8x4xbf16> to vector<1x8x4xbf16>
    %369 = vector.shape_cast %368 : vector<1x8x4xbf16> to vector<8x4xbf16>
    %370 = arith.truncf %367 : vector<4x256xf32> to vector<4x256xbf16>
    %cst_125 = arith.constant dense<0.000000e+00> : vector<8x256xf32>
    %371 = tpu.matmul %369, %370, %cst_125 {dimension_numbers = #tpu.dot_dimension_numbers<[1], [0], [0], [1], [0, 0, 1, 1], [], []>} : vector<8x4xbf16>, vector<4x256xbf16>, vector<8x256xf32> -> vector<8x256xf32>
    %372 = arith.addf %357, %371 : vector<8x256xf32>
    %c240_i32_126 = arith.constant 240 : i32
    %373 = tpu.dynamic_rotate %19 by %c240_i32_126 dim 1 : vector<4x256xf32>, i32 -> vector<4x256xf32>
    %c15_i32_127 = arith.constant 15 : i32
    %374 = vector.broadcast %c15_i32_127 : i32 to vector<1x256xi32>
    %375 = arith.cmpi slt, %0, %374 : vector<1x256xi32>
    %cst_128 = arith.constant 0.000000e+00 : f32
    %376 = vector.shape_cast %375 : vector<1x256xi1> to vector<1x256xi1>
    %377 = vector.broadcast %376 : vector<1x256xi1> to vector<4x256xi1>
    %378 = vector.broadcast %cst_128 : f32 to vector<4x256xf32>
    %379 = arith.select %377, %373, %378 : vector<4x256xi1>, vector<4x256xf32>
    %380 = vector.extract_strided_slice %6 {offsets = [17, 0, 0], sizes = [1, 8, 4], strides = [1, 1, 1]} : vector<25x8x4xbf16> to vector<1x8x4xbf16>
    %381 = vector.shape_cast %380 : vector<1x8x4xbf16> to vector<8x4xbf16>
    %382 = arith.truncf %379 : vector<4x256xf32> to vector<4x256xbf16>
    %cst_129 = arith.constant dense<0.000000e+00> : vector<8x256xf32>
    %383 = tpu.matmul %381, %382, %cst_129 {dimension_numbers = #tpu.dot_dimension_numbers<[1], [0], [0], [1], [0, 0, 1, 1], [], []>} : vector<8x4xbf16>, vector<4x256xbf16>, vector<8x256xf32> -> vector<8x256xf32>
    %384 = arith.addf %372, %383 : vector<8x256xf32>
    %c239_i32_130 = arith.constant 239 : i32
    %385 = tpu.dynamic_rotate %19 by %c239_i32_130 dim 1 : vector<4x256xf32>, i32 -> vector<4x256xf32>
    %c15_i32_131 = arith.constant 15 : i32
    %386 = vector.broadcast %c15_i32_131 : i32 to vector<1x256xi32>
    %387 = arith.cmpi slt, %0, %386 : vector<1x256xi32>
    %c15_i32_132 = arith.constant 15 : i32
    %388 = vector.broadcast %c15_i32_132 : i32 to vector<1x256xi32>
    %389 = arith.cmpi slt, %1, %388 : vector<1x256xi32>
    %390 = arith.andi %387, %389 : vector<1x256xi1>
    %cst_133 = arith.constant 0.000000e+00 : f32
    %391 = vector.shape_cast %390 : vector<1x256xi1> to vector<1x256xi1>
    %392 = vector.broadcast %391 : vector<1x256xi1> to vector<4x256xi1>
    %393 = vector.broadcast %cst_133 : f32 to vector<4x256xf32>
    %394 = arith.select %392, %385, %393 : vector<4x256xi1>, vector<4x256xf32>
    %395 = vector.extract_strided_slice %6 {offsets = [18, 0, 0], sizes = [1, 8, 4], strides = [1, 1, 1]} : vector<25x8x4xbf16> to vector<1x8x4xbf16>
    %396 = vector.shape_cast %395 : vector<1x8x4xbf16> to vector<8x4xbf16>
    %397 = arith.truncf %394 : vector<4x256xf32> to vector<4x256xbf16>
    %cst_134 = arith.constant dense<0.000000e+00> : vector<8x256xf32>
    %398 = tpu.matmul %396, %397, %cst_134 {dimension_numbers = #tpu.dot_dimension_numbers<[1], [0], [0], [1], [0, 0, 1, 1], [], []>} : vector<8x4xbf16>, vector<4x256xbf16>, vector<8x256xf32> -> vector<8x256xf32>
    %399 = arith.addf %384, %398 : vector<8x256xf32>
    %c238_i32 = arith.constant 238 : i32
    %400 = tpu.dynamic_rotate %19 by %c238_i32 dim 1 : vector<4x256xf32>, i32 -> vector<4x256xf32>
    %c15_i32_135 = arith.constant 15 : i32
    %401 = vector.broadcast %c15_i32_135 : i32 to vector<1x256xi32>
    %402 = arith.cmpi slt, %0, %401 : vector<1x256xi32>
    %c14_i32_136 = arith.constant 14 : i32
    %403 = vector.broadcast %c14_i32_136 : i32 to vector<1x256xi32>
    %404 = arith.cmpi slt, %1, %403 : vector<1x256xi32>
    %405 = arith.andi %402, %404 : vector<1x256xi1>
    %cst_137 = arith.constant 0.000000e+00 : f32
    %406 = vector.shape_cast %405 : vector<1x256xi1> to vector<1x256xi1>
    %407 = vector.broadcast %406 : vector<1x256xi1> to vector<4x256xi1>
    %408 = vector.broadcast %cst_137 : f32 to vector<4x256xf32>
    %409 = arith.select %407, %400, %408 : vector<4x256xi1>, vector<4x256xf32>
    %410 = vector.extract_strided_slice %6 {offsets = [19, 0, 0], sizes = [1, 8, 4], strides = [1, 1, 1]} : vector<25x8x4xbf16> to vector<1x8x4xbf16>
    %411 = vector.shape_cast %410 : vector<1x8x4xbf16> to vector<8x4xbf16>
    %412 = arith.truncf %409 : vector<4x256xf32> to vector<4x256xbf16>
    %cst_138 = arith.constant dense<0.000000e+00> : vector<8x256xf32>
    %413 = tpu.matmul %411, %412, %cst_138 {dimension_numbers = #tpu.dot_dimension_numbers<[1], [0], [0], [1], [0, 0, 1, 1], [], []>} : vector<8x4xbf16>, vector<4x256xbf16>, vector<8x256xf32> -> vector<8x256xf32>
    %414 = arith.addf %399, %413 : vector<8x256xf32>
    %c226_i32 = arith.constant 226 : i32
    %415 = tpu.dynamic_rotate %19 by %c226_i32 dim 1 : vector<4x256xf32>, i32 -> vector<4x256xf32>
    %c14_i32_139 = arith.constant 14 : i32
    %416 = vector.broadcast %c14_i32_139 : i32 to vector<1x256xi32>
    %417 = arith.cmpi slt, %0, %416 : vector<1x256xi32>
    %c2_i32_140 = arith.constant 2 : i32
    %418 = vector.broadcast %c2_i32_140 : i32 to vector<1x256xi32>
    %419 = arith.cmpi sge, %1, %418 : vector<1x256xi32>
    %420 = arith.andi %417, %419 : vector<1x256xi1>
    %cst_141 = arith.constant 0.000000e+00 : f32
    %421 = vector.shape_cast %420 : vector<1x256xi1> to vector<1x256xi1>
    %422 = vector.broadcast %421 : vector<1x256xi1> to vector<4x256xi1>
    %423 = vector.broadcast %cst_141 : f32 to vector<4x256xf32>
    %424 = arith.select %422, %415, %423 : vector<4x256xi1>, vector<4x256xf32>
    %425 = vector.extract_strided_slice %6 {offsets = [20, 0, 0], sizes = [1, 8, 4], strides = [1, 1, 1]} : vector<25x8x4xbf16> to vector<1x8x4xbf16>
    %426 = vector.shape_cast %425 : vector<1x8x4xbf16> to vector<8x4xbf16>
    %427 = arith.truncf %424 : vector<4x256xf32> to vector<4x256xbf16>
    %cst_142 = arith.constant dense<0.000000e+00> : vector<8x256xf32>
    %428 = tpu.matmul %426, %427, %cst_142 {dimension_numbers = #tpu.dot_dimension_numbers<[1], [0], [0], [1], [0, 0, 1, 1], [], []>} : vector<8x4xbf16>, vector<4x256xbf16>, vector<8x256xf32> -> vector<8x256xf32>
    %429 = arith.addf %414, %428 : vector<8x256xf32>
    %c225_i32 = arith.constant 225 : i32
    %430 = tpu.dynamic_rotate %19 by %c225_i32 dim 1 : vector<4x256xf32>, i32 -> vector<4x256xf32>
    %c14_i32_143 = arith.constant 14 : i32
    %431 = vector.broadcast %c14_i32_143 : i32 to vector<1x256xi32>
    %432 = arith.cmpi slt, %0, %431 : vector<1x256xi32>
    %c1_i32_144 = arith.constant 1 : i32
    %433 = vector.broadcast %c1_i32_144 : i32 to vector<1x256xi32>
    %434 = arith.cmpi sge, %1, %433 : vector<1x256xi32>
    %435 = arith.andi %432, %434 : vector<1x256xi1>
    %cst_145 = arith.constant 0.000000e+00 : f32
    %436 = vector.shape_cast %435 : vector<1x256xi1> to vector<1x256xi1>
    %437 = vector.broadcast %436 : vector<1x256xi1> to vector<4x256xi1>
    %438 = vector.broadcast %cst_145 : f32 to vector<4x256xf32>
    %439 = arith.select %437, %430, %438 : vector<4x256xi1>, vector<4x256xf32>
    %440 = vector.extract_strided_slice %6 {offsets = [21, 0, 0], sizes = [1, 8, 4], strides = [1, 1, 1]} : vector<25x8x4xbf16> to vector<1x8x4xbf16>
    %441 = vector.shape_cast %440 : vector<1x8x4xbf16> to vector<8x4xbf16>
    %442 = arith.truncf %439 : vector<4x256xf32> to vector<4x256xbf16>
    %cst_146 = arith.constant dense<0.000000e+00> : vector<8x256xf32>
    %443 = tpu.matmul %441, %442, %cst_146 {dimension_numbers = #tpu.dot_dimension_numbers<[1], [0], [0], [1], [0, 0, 1, 1], [], []>} : vector<8x4xbf16>, vector<4x256xbf16>, vector<8x256xf32> -> vector<8x256xf32>
    %444 = arith.addf %429, %443 : vector<8x256xf32>
    %c224_i32 = arith.constant 224 : i32
    %445 = tpu.dynamic_rotate %19 by %c224_i32 dim 1 : vector<4x256xf32>, i32 -> vector<4x256xf32>
    %c14_i32_147 = arith.constant 14 : i32
    %446 = vector.broadcast %c14_i32_147 : i32 to vector<1x256xi32>
    %447 = arith.cmpi slt, %0, %446 : vector<1x256xi32>
    %cst_148 = arith.constant 0.000000e+00 : f32
    %448 = vector.shape_cast %447 : vector<1x256xi1> to vector<1x256xi1>
    %449 = vector.broadcast %448 : vector<1x256xi1> to vector<4x256xi1>
    %450 = vector.broadcast %cst_148 : f32 to vector<4x256xf32>
    %451 = arith.select %449, %445, %450 : vector<4x256xi1>, vector<4x256xf32>
    %452 = vector.extract_strided_slice %6 {offsets = [22, 0, 0], sizes = [1, 8, 4], strides = [1, 1, 1]} : vector<25x8x4xbf16> to vector<1x8x4xbf16>
    %453 = vector.shape_cast %452 : vector<1x8x4xbf16> to vector<8x4xbf16>
    %454 = arith.truncf %451 : vector<4x256xf32> to vector<4x256xbf16>
    %cst_149 = arith.constant dense<0.000000e+00> : vector<8x256xf32>
    %455 = tpu.matmul %453, %454, %cst_149 {dimension_numbers = #tpu.dot_dimension_numbers<[1], [0], [0], [1], [0, 0, 1, 1], [], []>} : vector<8x4xbf16>, vector<4x256xbf16>, vector<8x256xf32> -> vector<8x256xf32>
    %456 = arith.addf %444, %455 : vector<8x256xf32>
    %c223_i32 = arith.constant 223 : i32
    %457 = tpu.dynamic_rotate %19 by %c223_i32 dim 1 : vector<4x256xf32>, i32 -> vector<4x256xf32>
    %c14_i32_150 = arith.constant 14 : i32
    %458 = vector.broadcast %c14_i32_150 : i32 to vector<1x256xi32>
    %459 = arith.cmpi slt, %0, %458 : vector<1x256xi32>
    %c15_i32_151 = arith.constant 15 : i32
    %460 = vector.broadcast %c15_i32_151 : i32 to vector<1x256xi32>
    %461 = arith.cmpi slt, %1, %460 : vector<1x256xi32>
    %462 = arith.andi %459, %461 : vector<1x256xi1>
    %cst_152 = arith.constant 0.000000e+00 : f32
    %463 = vector.shape_cast %462 : vector<1x256xi1> to vector<1x256xi1>
    %464 = vector.broadcast %463 : vector<1x256xi1> to vector<4x256xi1>
    %465 = vector.broadcast %cst_152 : f32 to vector<4x256xf32>
    %466 = arith.select %464, %457, %465 : vector<4x256xi1>, vector<4x256xf32>
    %467 = vector.extract_strided_slice %6 {offsets = [23, 0, 0], sizes = [1, 8, 4], strides = [1, 1, 1]} : vector<25x8x4xbf16> to vector<1x8x4xbf16>
    %468 = vector.shape_cast %467 : vector<1x8x4xbf16> to vector<8x4xbf16>
    %469 = arith.truncf %466 : vector<4x256xf32> to vector<4x256xbf16>
    %cst_153 = arith.constant dense<0.000000e+00> : vector<8x256xf32>
    %470 = tpu.matmul %468, %469, %cst_153 {dimension_numbers = #tpu.dot_dimension_numbers<[1], [0], [0], [1], [0, 0, 1, 1], [], []>} : vector<8x4xbf16>, vector<4x256xbf16>, vector<8x256xf32> -> vector<8x256xf32>
    %471 = arith.addf %456, %470 : vector<8x256xf32>
    %c222_i32 = arith.constant 222 : i32
    %472 = tpu.dynamic_rotate %19 by %c222_i32 dim 1 : vector<4x256xf32>, i32 -> vector<4x256xf32>
    %c14_i32_154 = arith.constant 14 : i32
    %473 = vector.broadcast %c14_i32_154 : i32 to vector<1x256xi32>
    %474 = arith.cmpi slt, %0, %473 : vector<1x256xi32>
    %c14_i32_155 = arith.constant 14 : i32
    %475 = vector.broadcast %c14_i32_155 : i32 to vector<1x256xi32>
    %476 = arith.cmpi slt, %1, %475 : vector<1x256xi32>
    %477 = arith.andi %474, %476 : vector<1x256xi1>
    %cst_156 = arith.constant 0.000000e+00 : f32
    %478 = vector.shape_cast %477 : vector<1x256xi1> to vector<1x256xi1>
    %479 = vector.broadcast %478 : vector<1x256xi1> to vector<4x256xi1>
    %480 = vector.broadcast %cst_156 : f32 to vector<4x256xf32>
    %481 = arith.select %479, %472, %480 : vector<4x256xi1>, vector<4x256xf32>
    %482 = vector.extract_strided_slice %6 {offsets = [24, 0, 0], sizes = [1, 8, 4], strides = [1, 1, 1]} : vector<25x8x4xbf16> to vector<1x8x4xbf16>
    %483 = vector.shape_cast %482 : vector<1x8x4xbf16> to vector<8x4xbf16>
    %484 = arith.truncf %481 : vector<4x256xf32> to vector<4x256xbf16>
    %cst_157 = arith.constant dense<0.000000e+00> : vector<8x256xf32>
    %485 = tpu.matmul %483, %484, %cst_157 {dimension_numbers = #tpu.dot_dimension_numbers<[1], [0], [0], [1], [0, 0, 1, 1], [], []>} : vector<8x4xbf16>, vector<4x256xbf16>, vector<8x256xf32> -> vector<8x256xf32>
    %486 = arith.addf %471, %485 : vector<8x256xf32>
    %487 = vector.broadcast %7 : vector<8x1xf32> to vector<8x256xf32>
    %488 = arith.addf %486, %487 : vector<8x256xf32>
    %cst_158 = arith.constant 0.000000e+00 : f32
    %489 = vector.broadcast %cst_158 : f32 to vector<8x256xf32>
    %490 = arith.maximumf %488, %489 : vector<8x256xf32>
    %c0_159 = arith.constant 0 : index
    %c16 = arith.constant 16 : index
    %c0_160 = arith.constant 0 : index
    %491 = vector.load %arg11[%c0_159, %c16, %c0_160] : memref<2x32x256xf32, #tpu.memory_space<vmem>>, vector<1x8x256xf32>
    %492 = vector.shape_cast %491 : vector<1x8x256xf32> to vector<8x256xf32>
    %493 = vector.shape_cast %490 : vector<8x256xf32> to vector<1x8x256xf32>
    tpu.vector_store %arg11[%c0_159, %c16, %c0_160], %493 {strides = array<i32>} : memref<2x32x256xf32, #tpu.memory_space<vmem>>, vector<1x8x256xf32>,
    %c16_i32_161 = arith.constant 16 : i32
    %494 = tpu.dynamic_rotate %11 by %c16_i32_161 dim 1 : vector<4x256xf32>, i32 -> vector<4x256xf32>
    %c1_i32_162 = arith.constant 1 : i32
    %495 = vector.broadcast %c1_i32_162 : i32 to vector<1x256xi32>
    %496 = arith.cmpi sge, %0, %495 : vector<1x256xi32>
    %497 = vector.shape_cast %496 : vector<1x256xi1> to vector<1x256xi1>
    %498 = vector.broadcast %497 : vector<1x256xi1> to vector<4x256xi1>
    %499 = arith.select %498, %494, %11 : vector<4x256xi1>, vector<4x256xf32>
    %c240_i32_163 = arith.constant 240 : i32
    %500 = tpu.dynamic_rotate %11 by %c240_i32_163 dim 1 : vector<4x256xf32>, i32 -> vector<4x256xf32>
    %c15_i32_164 = arith.constant 15 : i32
    %501 = vector.broadcast %c15_i32_164 : i32 to vector<1x256xi32>
    %502 = arith.cmpi slt, %0, %501 : vector<1x256xi32>
    %503 = vector.shape_cast %502 : vector<1x256xi1> to vector<1x256xi1>
    %504 = vector.broadcast %503 : vector<1x256xi1> to vector<4x256xi1>
    %505 = arith.select %504, %500, %11 : vector<4x256xi1>, vector<4x256xf32>
    %506 = arith.maximumf %499, %505 : vector<4x256xf32>
    %507 = arith.maximumf %11, %506 : vector<4x256xf32>
    %c1_i32_165 = arith.constant 1 : i32
    %508 = tpu.dynamic_rotate %507 by %c1_i32_165 dim 1 : vector<4x256xf32>, i32 -> vector<4x256xf32>
    %c1_i32_166 = arith.constant 1 : i32
    %509 = vector.broadcast %c1_i32_166 : i32 to vector<1x256xi32>
    %510 = arith.cmpi sge, %1, %509 : vector<1x256xi32>
    %511 = vector.shape_cast %510 : vector<1x256xi1> to vector<1x256xi1>
    %512 = vector.broadcast %511 : vector<1x256xi1> to vector<4x256xi1>
    %513 = arith.select %512, %508, %507 : vector<4x256xi1>, vector<4x256xf32>
    %c255_i32_167 = arith.constant 255 : i32
    %514 = tpu.dynamic_rotate %507 by %c255_i32_167 dim 1 : vector<4x256xf32>, i32 -> vector<4x256xf32>
    %c15_i32_168 = arith.constant 15 : i32
    %515 = vector.broadcast %c15_i32_168 : i32 to vector<1x256xi32>
    %516 = arith.cmpi slt, %1, %515 : vector<1x256xi32>
    %517 = vector.shape_cast %516 : vector<1x256xi1> to vector<1x256xi1>
    %518 = vector.broadcast %517 : vector<1x256xi1> to vector<4x256xi1>
    %519 = arith.select %518, %514, %507 : vector<4x256xi1>, vector<4x256xf32>
    %520 = arith.maximumf %513, %519 : vector<4x256xf32>
    %521 = arith.maximumf %507, %520 : vector<4x256xf32>
    %522 = arith.truncf %521 : vector<4x256xf32> to vector<4x256xbf16>
    %cst_169 = arith.constant dense<0.000000e+00> : vector<8x256xf32>
    %523 = tpu.matmul %8, %522, %cst_169 {dimension_numbers = #tpu.dot_dimension_numbers<[1], [0], [0], [1], [0, 0, 1, 1], [], []>} : vector<8x4xbf16>, vector<4x256xbf16>, vector<8x256xf32> -> vector<8x256xf32>
    %524 = vector.broadcast %9 : vector<8x1xf32> to vector<8x256xf32>
    %525 = arith.addf %523, %524 : vector<8x256xf32>
    %cst_170 = arith.constant 0.000000e+00 : f32
    %526 = vector.broadcast %cst_170 : f32 to vector<8x256xf32>
    %527 = arith.maximumf %525, %526 : vector<8x256xf32>
    %c0_171 = arith.constant 0 : index
    %c24 = arith.constant 24 : index
    %c0_172 = arith.constant 0 : index
    %528 = vector.load %arg11[%c0_171, %c24, %c0_172] : memref<2x32x256xf32, #tpu.memory_space<vmem>>, vector<1x8x256xf32>
    %529 = vector.shape_cast %528 : vector<1x8x256xf32> to vector<8x256xf32>
    %530 = vector.shape_cast %527 : vector<8x256xf32> to vector<1x8x256xf32>
    tpu.vector_store %arg11[%c0_171, %c24, %c0_172], %530 {strides = array<i32>} : memref<2x32x256xf32, #tpu.memory_space<vmem>>, vector<1x8x256xf32>,
    %c1_173 = arith.constant 1 : index
    %c0_174 = arith.constant 0 : index
    %c0_175 = arith.constant 0 : index
    %531 = vector.load %arg2[%c1_173, %c0_174, %c0_175] : memref<2x4x256xf32, #tpu.memory_space<vmem>>, vector<1x4x256xf32>
    %532 = vector.shape_cast %531 : vector<1x4x256xf32> to vector<4x256xf32>
    %533 = arith.truncf %532 : vector<4x256xf32> to vector<4x256xbf16>
    %cst_176 = arith.constant dense<0.000000e+00> : vector<16x256xf32>
    %534 = tpu.matmul %2, %533, %cst_176 {dimension_numbers = #tpu.dot_dimension_numbers<[1], [0], [0], [1], [0, 0, 1, 1], [], []>} : vector<16x4xbf16>, vector<4x256xbf16>, vector<16x256xf32> -> vector<16x256xf32>
    %535 = vector.broadcast %3 : vector<16x1xf32> to vector<16x256xf32>
    %536 = arith.addf %534, %535 : vector<16x256xf32>
    %cst_177 = arith.constant 0.000000e+00 : f32
    %537 = vector.broadcast %cst_177 : f32 to vector<16x256xf32>
    %538 = arith.maximumf %536, %537 : vector<16x256xf32>
    %539 = vector.extract_strided_slice %538 {offsets = [0, 0], sizes = [4, 256], strides = [1, 1]} : vector<16x256xf32> to vector<4x256xf32>
    %540 = vector.extract_strided_slice %538 {offsets = [4, 0], sizes = [4, 256], strides = [1, 1]} : vector<16x256xf32> to vector<4x256xf32>
    %541 = vector.extract_strided_slice %538 {offsets = [8, 0], sizes = [8, 256], strides = [1, 1]} : vector<16x256xf32> to vector<8x256xf32>
    %c1_178 = arith.constant 1 : index
    %c0_179 = arith.constant 0 : index
    %c0_180 = arith.constant 0 : index
    %542 = vector.load %arg11[%c1_178, %c0_179, %c0_180] : memref<2x32x256xf32, #tpu.memory_space<vmem>>, vector<1x8x256xf32>
    %543 = vector.shape_cast %542 : vector<1x8x256xf32> to vector<8x256xf32>
    %544 = vector.shape_cast %541 : vector<8x256xf32> to vector<1x8x256xf32>
    tpu.vector_store %arg11[%c1_178, %c0_179, %c0_180], %544 {strides = array<i32>} : memref<2x32x256xf32, #tpu.memory_space<vmem>>, vector<1x8x256xf32>,
    %cst_181 = arith.constant 0.000000e+00 : f32
    %545 = vector.broadcast %cst_181 : f32 to vector<8x256xf32>
    %c17_i32_182 = arith.constant 17 : i32
    %546 = tpu.dynamic_rotate %539 by %c17_i32_182 dim 1 : vector<4x256xf32>, i32 -> vector<4x256xf32>
    %c1_i32_183 = arith.constant 1 : i32
    %547 = vector.broadcast %c1_i32_183 : i32 to vector<1x256xi32>
    %548 = arith.cmpi sge, %0, %547 : vector<1x256xi32>
    %c1_i32_184 = arith.constant 1 : i32
    %549 = vector.broadcast %c1_i32_184 : i32 to vector<1x256xi32>
    %550 = arith.cmpi sge, %1, %549 : vector<1x256xi32>
    %551 = arith.andi %548, %550 : vector<1x256xi1>
    %cst_185 = arith.constant 0.000000e+00 : f32
    %552 = vector.shape_cast %551 : vector<1x256xi1> to vector<1x256xi1>
    %553 = vector.broadcast %552 : vector<1x256xi1> to vector<4x256xi1>
    %554 = vector.broadcast %cst_185 : f32 to vector<4x256xf32>
    %555 = arith.select %553, %546, %554 : vector<4x256xi1>, vector<4x256xf32>
    %556 = vector.extract_strided_slice %4 {offsets = [0, 0, 0], sizes = [1, 8, 4], strides = [1, 1, 1]} : vector<9x8x4xbf16> to vector<1x8x4xbf16>
    %557 = vector.shape_cast %556 : vector<1x8x4xbf16> to vector<8x4xbf16>
    %558 = arith.truncf %555 : vector<4x256xf32> to vector<4x256xbf16>
    %cst_186 = arith.constant dense<0.000000e+00> : vector<8x256xf32>
    %559 = tpu.matmul %557, %558, %cst_186 {dimension_numbers = #tpu.dot_dimension_numbers<[1], [0], [0], [1], [0, 0, 1, 1], [], []>} : vector<8x4xbf16>, vector<4x256xbf16>, vector<8x256xf32> -> vector<8x256xf32>
    %560 = arith.addf %545, %559 : vector<8x256xf32>
    %c16_i32_187 = arith.constant 16 : i32
    %561 = tpu.dynamic_rotate %539 by %c16_i32_187 dim 1 : vector<4x256xf32>, i32 -> vector<4x256xf32>
    %c1_i32_188 = arith.constant 1 : i32
    %562 = vector.broadcast %c1_i32_188 : i32 to vector<1x256xi32>
    %563 = arith.cmpi sge, %0, %562 : vector<1x256xi32>
    %cst_189 = arith.constant 0.000000e+00 : f32
    %564 = vector.shape_cast %563 : vector<1x256xi1> to vector<1x256xi1>
    %565 = vector.broadcast %564 : vector<1x256xi1> to vector<4x256xi1>
    %566 = vector.broadcast %cst_189 : f32 to vector<4x256xf32>
    %567 = arith.select %565, %561, %566 : vector<4x256xi1>, vector<4x256xf32>
    %568 = vector.extract_strided_slice %4 {offsets = [1, 0, 0], sizes = [1, 8, 4], strides = [1, 1, 1]} : vector<9x8x4xbf16> to vector<1x8x4xbf16>
    %569 = vector.shape_cast %568 : vector<1x8x4xbf16> to vector<8x4xbf16>
    %570 = arith.truncf %567 : vector<4x256xf32> to vector<4x256xbf16>
    %cst_190 = arith.constant dense<0.000000e+00> : vector<8x256xf32>
    %571 = tpu.matmul %569, %570, %cst_190 {dimension_numbers = #tpu.dot_dimension_numbers<[1], [0], [0], [1], [0, 0, 1, 1], [], []>} : vector<8x4xbf16>, vector<4x256xbf16>, vector<8x256xf32> -> vector<8x256xf32>
    %572 = arith.addf %560, %571 : vector<8x256xf32>
    %c15_i32_191 = arith.constant 15 : i32
    %573 = tpu.dynamic_rotate %539 by %c15_i32_191 dim 1 : vector<4x256xf32>, i32 -> vector<4x256xf32>
    %c1_i32_192 = arith.constant 1 : i32
    %574 = vector.broadcast %c1_i32_192 : i32 to vector<1x256xi32>
    %575 = arith.cmpi sge, %0, %574 : vector<1x256xi32>
    %c15_i32_193 = arith.constant 15 : i32
    %576 = vector.broadcast %c15_i32_193 : i32 to vector<1x256xi32>
    %577 = arith.cmpi slt, %1, %576 : vector<1x256xi32>
    %578 = arith.andi %575, %577 : vector<1x256xi1>
    %cst_194 = arith.constant 0.000000e+00 : f32
    %579 = vector.shape_cast %578 : vector<1x256xi1> to vector<1x256xi1>
    %580 = vector.broadcast %579 : vector<1x256xi1> to vector<4x256xi1>
    %581 = vector.broadcast %cst_194 : f32 to vector<4x256xf32>
    %582 = arith.select %580, %573, %581 : vector<4x256xi1>, vector<4x256xf32>
    %583 = vector.extract_strided_slice %4 {offsets = [2, 0, 0], sizes = [1, 8, 4], strides = [1, 1, 1]} : vector<9x8x4xbf16> to vector<1x8x4xbf16>
    %584 = vector.shape_cast %583 : vector<1x8x4xbf16> to vector<8x4xbf16>
    %585 = arith.truncf %582 : vector<4x256xf32> to vector<4x256xbf16>
    %cst_195 = arith.constant dense<0.000000e+00> : vector<8x256xf32>
    %586 = tpu.matmul %584, %585, %cst_195 {dimension_numbers = #tpu.dot_dimension_numbers<[1], [0], [0], [1], [0, 0, 1, 1], [], []>} : vector<8x4xbf16>, vector<4x256xbf16>, vector<8x256xf32> -> vector<8x256xf32>
    %587 = arith.addf %572, %586 : vector<8x256xf32>
    %c1_i32_196 = arith.constant 1 : i32
    %588 = tpu.dynamic_rotate %539 by %c1_i32_196 dim 1 : vector<4x256xf32>, i32 -> vector<4x256xf32>
    %c1_i32_197 = arith.constant 1 : i32
    %589 = vector.broadcast %c1_i32_197 : i32 to vector<1x256xi32>
    %590 = arith.cmpi sge, %1, %589 : vector<1x256xi32>
    %cst_198 = arith.constant 0.000000e+00 : f32
    %591 = vector.shape_cast %590 : vector<1x256xi1> to vector<1x256xi1>
    %592 = vector.broadcast %591 : vector<1x256xi1> to vector<4x256xi1>
    %593 = vector.broadcast %cst_198 : f32 to vector<4x256xf32>
    %594 = arith.select %592, %588, %593 : vector<4x256xi1>, vector<4x256xf32>
    %595 = vector.extract_strided_slice %4 {offsets = [3, 0, 0], sizes = [1, 8, 4], strides = [1, 1, 1]} : vector<9x8x4xbf16> to vector<1x8x4xbf16>
    %596 = vector.shape_cast %595 : vector<1x8x4xbf16> to vector<8x4xbf16>
    %597 = arith.truncf %594 : vector<4x256xf32> to vector<4x256xbf16>
    %cst_199 = arith.constant dense<0.000000e+00> : vector<8x256xf32>
    %598 = tpu.matmul %596, %597, %cst_199 {dimension_numbers = #tpu.dot_dimension_numbers<[1], [0], [0], [1], [0, 0, 1, 1], [], []>} : vector<8x4xbf16>, vector<4x256xbf16>, vector<8x256xf32> -> vector<8x256xf32>
    %599 = arith.addf %587, %598 : vector<8x256xf32>
    %600 = vector.extract_strided_slice %4 {offsets = [4, 0, 0], sizes = [1, 8, 4], strides = [1, 1, 1]} : vector<9x8x4xbf16> to vector<1x8x4xbf16>
    %601 = vector.shape_cast %600 : vector<1x8x4xbf16> to vector<8x4xbf16>
    %602 = arith.truncf %539 : vector<4x256xf32> to vector<4x256xbf16>
    %cst_200 = arith.constant dense<0.000000e+00> : vector<8x256xf32>
    %603 = tpu.matmul %601, %602, %cst_200 {dimension_numbers = #tpu.dot_dimension_numbers<[1], [0], [0], [1], [0, 0, 1, 1], [], []>} : vector<8x4xbf16>, vector<4x256xbf16>, vector<8x256xf32> -> vector<8x256xf32>
    %604 = arith.addf %599, %603 : vector<8x256xf32>
    %c255_i32_201 = arith.constant 255 : i32
    %605 = tpu.dynamic_rotate %539 by %c255_i32_201 dim 1 : vector<4x256xf32>, i32 -> vector<4x256xf32>
    %c15_i32_202 = arith.constant 15 : i32
    %606 = vector.broadcast %c15_i32_202 : i32 to vector<1x256xi32>
    %607 = arith.cmpi slt, %1, %606 : vector<1x256xi32>
    %cst_203 = arith.constant 0.000000e+00 : f32
    %608 = vector.shape_cast %607 : vector<1x256xi1> to vector<1x256xi1>
    %609 = vector.broadcast %608 : vector<1x256xi1> to vector<4x256xi1>
    %610 = vector.broadcast %cst_203 : f32 to vector<4x256xf32>
    %611 = arith.select %609, %605, %610 : vector<4x256xi1>, vector<4x256xf32>
    %612 = vector.extract_strided_slice %4 {offsets = [5, 0, 0], sizes = [1, 8, 4], strides = [1, 1, 1]} : vector<9x8x4xbf16> to vector<1x8x4xbf16>
    %613 = vector.shape_cast %612 : vector<1x8x4xbf16> to vector<8x4xbf16>
    %614 = arith.truncf %611 : vector<4x256xf32> to vector<4x256xbf16>
    %cst_204 = arith.constant dense<0.000000e+00> : vector<8x256xf32>
    %615 = tpu.matmul %613, %614, %cst_204 {dimension_numbers = #tpu.dot_dimension_numbers<[1], [0], [0], [1], [0, 0, 1, 1], [], []>} : vector<8x4xbf16>, vector<4x256xbf16>, vector<8x256xf32> -> vector<8x256xf32>
    %616 = arith.addf %604, %615 : vector<8x256xf32>
    %c241_i32_205 = arith.constant 241 : i32
    %617 = tpu.dynamic_rotate %539 by %c241_i32_205 dim 1 : vector<4x256xf32>, i32 -> vector<4x256xf32>
    %c15_i32_206 = arith.constant 15 : i32
    %618 = vector.broadcast %c15_i32_206 : i32 to vector<1x256xi32>
    %619 = arith.cmpi slt, %0, %618 : vector<1x256xi32>
    %c1_i32_207 = arith.constant 1 : i32
    %620 = vector.broadcast %c1_i32_207 : i32 to vector<1x256xi32>
    %621 = arith.cmpi sge, %1, %620 : vector<1x256xi32>
    %622 = arith.andi %619, %621 : vector<1x256xi1>
    %cst_208 = arith.constant 0.000000e+00 : f32
    %623 = vector.shape_cast %622 : vector<1x256xi1> to vector<1x256xi1>
    %624 = vector.broadcast %623 : vector<1x256xi1> to vector<4x256xi1>
    %625 = vector.broadcast %cst_208 : f32 to vector<4x256xf32>
    %626 = arith.select %624, %617, %625 : vector<4x256xi1>, vector<4x256xf32>
    %627 = vector.extract_strided_slice %4 {offsets = [6, 0, 0], sizes = [1, 8, 4], strides = [1, 1, 1]} : vector<9x8x4xbf16> to vector<1x8x4xbf16>
    %628 = vector.shape_cast %627 : vector<1x8x4xbf16> to vector<8x4xbf16>
    %629 = arith.truncf %626 : vector<4x256xf32> to vector<4x256xbf16>
    %cst_209 = arith.constant dense<0.000000e+00> : vector<8x256xf32>
    %630 = tpu.matmul %628, %629, %cst_209 {dimension_numbers = #tpu.dot_dimension_numbers<[1], [0], [0], [1], [0, 0, 1, 1], [], []>} : vector<8x4xbf16>, vector<4x256xbf16>, vector<8x256xf32> -> vector<8x256xf32>
    %631 = arith.addf %616, %630 : vector<8x256xf32>
    %c240_i32_210 = arith.constant 240 : i32
    %632 = tpu.dynamic_rotate %539 by %c240_i32_210 dim 1 : vector<4x256xf32>, i32 -> vector<4x256xf32>
    %c15_i32_211 = arith.constant 15 : i32
    %633 = vector.broadcast %c15_i32_211 : i32 to vector<1x256xi32>
    %634 = arith.cmpi slt, %0, %633 : vector<1x256xi32>
    %cst_212 = arith.constant 0.000000e+00 : f32
    %635 = vector.shape_cast %634 : vector<1x256xi1> to vector<1x256xi1>
    %636 = vector.broadcast %635 : vector<1x256xi1> to vector<4x256xi1>
    %637 = vector.broadcast %cst_212 : f32 to vector<4x256xf32>
    %638 = arith.select %636, %632, %637 : vector<4x256xi1>, vector<4x256xf32>
    %639 = vector.extract_strided_slice %4 {offsets = [7, 0, 0], sizes = [1, 8, 4], strides = [1, 1, 1]} : vector<9x8x4xbf16> to vector<1x8x4xbf16>
    %640 = vector.shape_cast %639 : vector<1x8x4xbf16> to vector<8x4xbf16>
    %641 = arith.truncf %638 : vector<4x256xf32> to vector<4x256xbf16>
    %cst_213 = arith.constant dense<0.000000e+00> : vector<8x256xf32>
    %642 = tpu.matmul %640, %641, %cst_213 {dimension_numbers = #tpu.dot_dimension_numbers<[1], [0], [0], [1], [0, 0, 1, 1], [], []>} : vector<8x4xbf16>, vector<4x256xbf16>, vector<8x256xf32> -> vector<8x256xf32>
    %643 = arith.addf %631, %642 : vector<8x256xf32>
    %c239_i32_214 = arith.constant 239 : i32
    %644 = tpu.dynamic_rotate %539 by %c239_i32_214 dim 1 : vector<4x256xf32>, i32 -> vector<4x256xf32>
    %c15_i32_215 = arith.constant 15 : i32
    %645 = vector.broadcast %c15_i32_215 : i32 to vector<1x256xi32>
    %646 = arith.cmpi slt, %0, %645 : vector<1x256xi32>
    %c15_i32_216 = arith.constant 15 : i32
    %647 = vector.broadcast %c15_i32_216 : i32 to vector<1x256xi32>
    %648 = arith.cmpi slt, %1, %647 : vector<1x256xi32>
    %649 = arith.andi %646, %648 : vector<1x256xi1>
    %cst_217 = arith.constant 0.000000e+00 : f32
    %650 = vector.shape_cast %649 : vector<1x256xi1> to vector<1x256xi1>
    %651 = vector.broadcast %650 : vector<1x256xi1> to vector<4x256xi1>
    %652 = vector.broadcast %cst_217 : f32 to vector<4x256xf32>
    %653 = arith.select %651, %644, %652 : vector<4x256xi1>, vector<4x256xf32>
    %654 = vector.extract_strided_slice %4 {offsets = [8, 0, 0], sizes = [1, 8, 4], strides = [1, 1, 1]} : vector<9x8x4xbf16> to vector<1x8x4xbf16>
    %655 = vector.shape_cast %654 : vector<1x8x4xbf16> to vector<8x4xbf16>
    %656 = arith.truncf %653 : vector<4x256xf32> to vector<4x256xbf16>
    %cst_218 = arith.constant dense<0.000000e+00> : vector<8x256xf32>
    %657 = tpu.matmul %655, %656, %cst_218 {dimension_numbers = #tpu.dot_dimension_numbers<[1], [0], [0], [1], [0, 0, 1, 1], [], []>} : vector<8x4xbf16>, vector<4x256xbf16>, vector<8x256xf32> -> vector<8x256xf32>
    %658 = arith.addf %643, %657 : vector<8x256xf32>
    %659 = vector.broadcast %5 : vector<8x1xf32> to vector<8x256xf32>
    %660 = arith.addf %658, %659 : vector<8x256xf32>
    %cst_219 = arith.constant 0.000000e+00 : f32
    %661 = vector.broadcast %cst_219 : f32 to vector<8x256xf32>
    %662 = arith.maximumf %660, %661 : vector<8x256xf32>
    %c1_220 = arith.constant 1 : index
    %c8_221 = arith.constant 8 : index
    %c0_222 = arith.constant 0 : index
    %663 = vector.load %arg11[%c1_220, %c8_221, %c0_222] : memref<2x32x256xf32, #tpu.memory_space<vmem>>, vector<1x8x256xf32>
    %664 = vector.shape_cast %663 : vector<1x8x256xf32> to vector<8x256xf32>
    %665 = vector.shape_cast %662 : vector<8x256xf32> to vector<1x8x256xf32>
    tpu.vector_store %arg11[%c1_220, %c8_221, %c0_222], %665 {strides = array<i32>} : memref<2x32x256xf32, #tpu.memory_space<vmem>>, vector<1x8x256xf32>,
    %cst_223 = arith.constant 0.000000e+00 : f32
    %666 = vector.broadcast %cst_223 : f32 to vector<8x256xf32>
    %c34_i32_224 = arith.constant 34 : i32
    %667 = tpu.dynamic_rotate %540 by %c34_i32_224 dim 1 : vector<4x256xf32>, i32 -> vector<4x256xf32>
    %c2_i32_225 = arith.constant 2 : i32
    %668 = vector.broadcast %c2_i32_225 : i32 to vector<1x256xi32>
    %669 = arith.cmpi sge, %0, %668 : vector<1x256xi32>
    %c2_i32_226 = arith.constant 2 : i32
    %670 = vector.broadcast %c2_i32_226 : i32 to vector<1x256xi32>
    %671 = arith.cmpi sge, %1, %670 : vector<1x256xi32>
    %672 = arith.andi %669, %671 : vector<1x256xi1>
    %cst_227 = arith.constant 0.000000e+00 : f32
    %673 = vector.shape_cast %672 : vector<1x256xi1> to vector<1x256xi1>
    %674 = vector.broadcast %673 : vector<1x256xi1> to vector<4x256xi1>
    %675 = vector.broadcast %cst_227 : f32 to vector<4x256xf32>
    %676 = arith.select %674, %667, %675 : vector<4x256xi1>, vector<4x256xf32>
    %677 = vector.extract_strided_slice %6 {offsets = [0, 0, 0], sizes = [1, 8, 4], strides = [1, 1, 1]} : vector<25x8x4xbf16> to vector<1x8x4xbf16>
    %678 = vector.shape_cast %677 : vector<1x8x4xbf16> to vector<8x4xbf16>
    %679 = arith.truncf %676 : vector<4x256xf32> to vector<4x256xbf16>
    %cst_228 = arith.constant dense<0.000000e+00> : vector<8x256xf32>
    %680 = tpu.matmul %678, %679, %cst_228 {dimension_numbers = #tpu.dot_dimension_numbers<[1], [0], [0], [1], [0, 0, 1, 1], [], []>} : vector<8x4xbf16>, vector<4x256xbf16>, vector<8x256xf32> -> vector<8x256xf32>
    %681 = arith.addf %666, %680 : vector<8x256xf32>
    %c33_i32_229 = arith.constant 33 : i32
    %682 = tpu.dynamic_rotate %540 by %c33_i32_229 dim 1 : vector<4x256xf32>, i32 -> vector<4x256xf32>
    %c2_i32_230 = arith.constant 2 : i32
    %683 = vector.broadcast %c2_i32_230 : i32 to vector<1x256xi32>
    %684 = arith.cmpi sge, %0, %683 : vector<1x256xi32>
    %c1_i32_231 = arith.constant 1 : i32
    %685 = vector.broadcast %c1_i32_231 : i32 to vector<1x256xi32>
    %686 = arith.cmpi sge, %1, %685 : vector<1x256xi32>
    %687 = arith.andi %684, %686 : vector<1x256xi1>
    %cst_232 = arith.constant 0.000000e+00 : f32
    %688 = vector.shape_cast %687 : vector<1x256xi1> to vector<1x256xi1>
    %689 = vector.broadcast %688 : vector<1x256xi1> to vector<4x256xi1>
    %690 = vector.broadcast %cst_232 : f32 to vector<4x256xf32>
    %691 = arith.select %689, %682, %690 : vector<4x256xi1>, vector<4x256xf32>
    %692 = vector.extract_strided_slice %6 {offsets = [1, 0, 0], sizes = [1, 8, 4], strides = [1, 1, 1]} : vector<25x8x4xbf16> to vector<1x8x4xbf16>
    %693 = vector.shape_cast %692 : vector<1x8x4xbf16> to vector<8x4xbf16>
    %694 = arith.truncf %691 : vector<4x256xf32> to vector<4x256xbf16>
    %cst_233 = arith.constant dense<0.000000e+00> : vector<8x256xf32>
    %695 = tpu.matmul %693, %694, %cst_233 {dimension_numbers = #tpu.dot_dimension_numbers<[1], [0], [0], [1], [0, 0, 1, 1], [], []>} : vector<8x4xbf16>, vector<4x256xbf16>, vector<8x256xf32> -> vector<8x256xf32>
    %696 = arith.addf %681, %695 : vector<8x256xf32>
    %c32_i32_234 = arith.constant 32 : i32
    %697 = tpu.dynamic_rotate %540 by %c32_i32_234 dim 1 : vector<4x256xf32>, i32 -> vector<4x256xf32>
    %c2_i32_235 = arith.constant 2 : i32
    %698 = vector.broadcast %c2_i32_235 : i32 to vector<1x256xi32>
    %699 = arith.cmpi sge, %0, %698 : vector<1x256xi32>
    %cst_236 = arith.constant 0.000000e+00 : f32
    %700 = vector.shape_cast %699 : vector<1x256xi1> to vector<1x256xi1>
    %701 = vector.broadcast %700 : vector<1x256xi1> to vector<4x256xi1>
    %702 = vector.broadcast %cst_236 : f32 to vector<4x256xf32>
    %703 = arith.select %701, %697, %702 : vector<4x256xi1>, vector<4x256xf32>
    %704 = vector.extract_strided_slice %6 {offsets = [2, 0, 0], sizes = [1, 8, 4], strides = [1, 1, 1]} : vector<25x8x4xbf16> to vector<1x8x4xbf16>
    %705 = vector.shape_cast %704 : vector<1x8x4xbf16> to vector<8x4xbf16>
    %706 = arith.truncf %703 : vector<4x256xf32> to vector<4x256xbf16>
    %cst_237 = arith.constant dense<0.000000e+00> : vector<8x256xf32>
    %707 = tpu.matmul %705, %706, %cst_237 {dimension_numbers = #tpu.dot_dimension_numbers<[1], [0], [0], [1], [0, 0, 1, 1], [], []>} : vector<8x4xbf16>, vector<4x256xbf16>, vector<8x256xf32> -> vector<8x256xf32>
    %708 = arith.addf %696, %707 : vector<8x256xf32>
    %c31_i32_238 = arith.constant 31 : i32
    %709 = tpu.dynamic_rotate %540 by %c31_i32_238 dim 1 : vector<4x256xf32>, i32 -> vector<4x256xf32>
    %c2_i32_239 = arith.constant 2 : i32
    %710 = vector.broadcast %c2_i32_239 : i32 to vector<1x256xi32>
    %711 = arith.cmpi sge, %0, %710 : vector<1x256xi32>
    %c15_i32_240 = arith.constant 15 : i32
    %712 = vector.broadcast %c15_i32_240 : i32 to vector<1x256xi32>
    %713 = arith.cmpi slt, %1, %712 : vector<1x256xi32>
    %714 = arith.andi %711, %713 : vector<1x256xi1>
    %cst_241 = arith.constant 0.000000e+00 : f32
    %715 = vector.shape_cast %714 : vector<1x256xi1> to vector<1x256xi1>
    %716 = vector.broadcast %715 : vector<1x256xi1> to vector<4x256xi1>
    %717 = vector.broadcast %cst_241 : f32 to vector<4x256xf32>
    %718 = arith.select %716, %709, %717 : vector<4x256xi1>, vector<4x256xf32>
    %719 = vector.extract_strided_slice %6 {offsets = [3, 0, 0], sizes = [1, 8, 4], strides = [1, 1, 1]} : vector<25x8x4xbf16> to vector<1x8x4xbf16>
    %720 = vector.shape_cast %719 : vector<1x8x4xbf16> to vector<8x4xbf16>
    %721 = arith.truncf %718 : vector<4x256xf32> to vector<4x256xbf16>
    %cst_242 = arith.constant dense<0.000000e+00> : vector<8x256xf32>
    %722 = tpu.matmul %720, %721, %cst_242 {dimension_numbers = #tpu.dot_dimension_numbers<[1], [0], [0], [1], [0, 0, 1, 1], [], []>} : vector<8x4xbf16>, vector<4x256xbf16>, vector<8x256xf32> -> vector<8x256xf32>
    %723 = arith.addf %708, %722 : vector<8x256xf32>
    %c30_i32_243 = arith.constant 30 : i32
    %724 = tpu.dynamic_rotate %540 by %c30_i32_243 dim 1 : vector<4x256xf32>, i32 -> vector<4x256xf32>
    %c2_i32_244 = arith.constant 2 : i32
    %725 = vector.broadcast %c2_i32_244 : i32 to vector<1x256xi32>
    %726 = arith.cmpi sge, %0, %725 : vector<1x256xi32>
    %c14_i32_245 = arith.constant 14 : i32
    %727 = vector.broadcast %c14_i32_245 : i32 to vector<1x256xi32>
    %728 = arith.cmpi slt, %1, %727 : vector<1x256xi32>
    %729 = arith.andi %726, %728 : vector<1x256xi1>
    %cst_246 = arith.constant 0.000000e+00 : f32
    %730 = vector.shape_cast %729 : vector<1x256xi1> to vector<1x256xi1>
    %731 = vector.broadcast %730 : vector<1x256xi1> to vector<4x256xi1>
    %732 = vector.broadcast %cst_246 : f32 to vector<4x256xf32>
    %733 = arith.select %731, %724, %732 : vector<4x256xi1>, vector<4x256xf32>
    %734 = vector.extract_strided_slice %6 {offsets = [4, 0, 0], sizes = [1, 8, 4], strides = [1, 1, 1]} : vector<25x8x4xbf16> to vector<1x8x4xbf16>
    %735 = vector.shape_cast %734 : vector<1x8x4xbf16> to vector<8x4xbf16>
    %736 = arith.truncf %733 : vector<4x256xf32> to vector<4x256xbf16>
    %cst_247 = arith.constant dense<0.000000e+00> : vector<8x256xf32>
    %737 = tpu.matmul %735, %736, %cst_247 {dimension_numbers = #tpu.dot_dimension_numbers<[1], [0], [0], [1], [0, 0, 1, 1], [], []>} : vector<8x4xbf16>, vector<4x256xbf16>, vector<8x256xf32> -> vector<8x256xf32>
    %738 = arith.addf %723, %737 : vector<8x256xf32>
    %c18_i32_248 = arith.constant 18 : i32
    %739 = tpu.dynamic_rotate %540 by %c18_i32_248 dim 1 : vector<4x256xf32>, i32 -> vector<4x256xf32>
    %c1_i32_249 = arith.constant 1 : i32
    %740 = vector.broadcast %c1_i32_249 : i32 to vector<1x256xi32>
    %741 = arith.cmpi sge, %0, %740 : vector<1x256xi32>
    %c2_i32_250 = arith.constant 2 : i32
    %742 = vector.broadcast %c2_i32_250 : i32 to vector<1x256xi32>
    %743 = arith.cmpi sge, %1, %742 : vector<1x256xi32>
    %744 = arith.andi %741, %743 : vector<1x256xi1>
    %cst_251 = arith.constant 0.000000e+00 : f32
    %745 = vector.shape_cast %744 : vector<1x256xi1> to vector<1x256xi1>
    %746 = vector.broadcast %745 : vector<1x256xi1> to vector<4x256xi1>
    %747 = vector.broadcast %cst_251 : f32 to vector<4x256xf32>
    %748 = arith.select %746, %739, %747 : vector<4x256xi1>, vector<4x256xf32>
    %749 = vector.extract_strided_slice %6 {offsets = [5, 0, 0], sizes = [1, 8, 4], strides = [1, 1, 1]} : vector<25x8x4xbf16> to vector<1x8x4xbf16>
    %750 = vector.shape_cast %749 : vector<1x8x4xbf16> to vector<8x4xbf16>
    %751 = arith.truncf %748 : vector<4x256xf32> to vector<4x256xbf16>
    %cst_252 = arith.constant dense<0.000000e+00> : vector<8x256xf32>
    %752 = tpu.matmul %750, %751, %cst_252 {dimension_numbers = #tpu.dot_dimension_numbers<[1], [0], [0], [1], [0, 0, 1, 1], [], []>} : vector<8x4xbf16>, vector<4x256xbf16>, vector<8x256xf32> -> vector<8x256xf32>
    %753 = arith.addf %738, %752 : vector<8x256xf32>
    %c17_i32_253 = arith.constant 17 : i32
    %754 = tpu.dynamic_rotate %540 by %c17_i32_253 dim 1 : vector<4x256xf32>, i32 -> vector<4x256xf32>
    %c1_i32_254 = arith.constant 1 : i32
    %755 = vector.broadcast %c1_i32_254 : i32 to vector<1x256xi32>
    %756 = arith.cmpi sge, %0, %755 : vector<1x256xi32>
    %c1_i32_255 = arith.constant 1 : i32
    %757 = vector.broadcast %c1_i32_255 : i32 to vector<1x256xi32>
    %758 = arith.cmpi sge, %1, %757 : vector<1x256xi32>
    %759 = arith.andi %756, %758 : vector<1x256xi1>
    %cst_256 = arith.constant 0.000000e+00 : f32
    %760 = vector.shape_cast %759 : vector<1x256xi1> to vector<1x256xi1>
    %761 = vector.broadcast %760 : vector<1x256xi1> to vector<4x256xi1>
    %762 = vector.broadcast %cst_256 : f32 to vector<4x256xf32>
    %763 = arith.select %761, %754, %762 : vector<4x256xi1>, vector<4x256xf32>
    %764 = vector.extract_strided_slice %6 {offsets = [6, 0, 0], sizes = [1, 8, 4], strides = [1, 1, 1]} : vector<25x8x4xbf16> to vector<1x8x4xbf16>
    %765 = vector.shape_cast %764 : vector<1x8x4xbf16> to vector<8x4xbf16>
    %766 = arith.truncf %763 : vector<4x256xf32> to vector<4x256xbf16>
    %cst_257 = arith.constant dense<0.000000e+00> : vector<8x256xf32>
    %767 = tpu.matmul %765, %766, %cst_257 {dimension_numbers = #tpu.dot_dimension_numbers<[1], [0], [0], [1], [0, 0, 1, 1], [], []>} : vector<8x4xbf16>, vector<4x256xbf16>, vector<8x256xf32> -> vector<8x256xf32>
    %768 = arith.addf %753, %767 : vector<8x256xf32>
    %c16_i32_258 = arith.constant 16 : i32
    %769 = tpu.dynamic_rotate %540 by %c16_i32_258 dim 1 : vector<4x256xf32>, i32 -> vector<4x256xf32>
    %c1_i32_259 = arith.constant 1 : i32
    %770 = vector.broadcast %c1_i32_259 : i32 to vector<1x256xi32>
    %771 = arith.cmpi sge, %0, %770 : vector<1x256xi32>
    %cst_260 = arith.constant 0.000000e+00 : f32
    %772 = vector.shape_cast %771 : vector<1x256xi1> to vector<1x256xi1>
    %773 = vector.broadcast %772 : vector<1x256xi1> to vector<4x256xi1>
    %774 = vector.broadcast %cst_260 : f32 to vector<4x256xf32>
    %775 = arith.select %773, %769, %774 : vector<4x256xi1>, vector<4x256xf32>
    %776 = vector.extract_strided_slice %6 {offsets = [7, 0, 0], sizes = [1, 8, 4], strides = [1, 1, 1]} : vector<25x8x4xbf16> to vector<1x8x4xbf16>
    %777 = vector.shape_cast %776 : vector<1x8x4xbf16> to vector<8x4xbf16>
    %778 = arith.truncf %775 : vector<4x256xf32> to vector<4x256xbf16>
    %cst_261 = arith.constant dense<0.000000e+00> : vector<8x256xf32>
    %779 = tpu.matmul %777, %778, %cst_261 {dimension_numbers = #tpu.dot_dimension_numbers<[1], [0], [0], [1], [0, 0, 1, 1], [], []>} : vector<8x4xbf16>, vector<4x256xbf16>, vector<8x256xf32> -> vector<8x256xf32>
    %780 = arith.addf %768, %779 : vector<8x256xf32>
    %c15_i32_262 = arith.constant 15 : i32
    %781 = tpu.dynamic_rotate %540 by %c15_i32_262 dim 1 : vector<4x256xf32>, i32 -> vector<4x256xf32>
    %c1_i32_263 = arith.constant 1 : i32
    %782 = vector.broadcast %c1_i32_263 : i32 to vector<1x256xi32>
    %783 = arith.cmpi sge, %0, %782 : vector<1x256xi32>
    %c15_i32_264 = arith.constant 15 : i32
    %784 = vector.broadcast %c15_i32_264 : i32 to vector<1x256xi32>
    %785 = arith.cmpi slt, %1, %784 : vector<1x256xi32>
    %786 = arith.andi %783, %785 : vector<1x256xi1>
    %cst_265 = arith.constant 0.000000e+00 : f32
    %787 = vector.shape_cast %786 : vector<1x256xi1> to vector<1x256xi1>
    %788 = vector.broadcast %787 : vector<1x256xi1> to vector<4x256xi1>
    %789 = vector.broadcast %cst_265 : f32 to vector<4x256xf32>
    %790 = arith.select %788, %781, %789 : vector<4x256xi1>, vector<4x256xf32>
    %791 = vector.extract_strided_slice %6 {offsets = [8, 0, 0], sizes = [1, 8, 4], strides = [1, 1, 1]} : vector<25x8x4xbf16> to vector<1x8x4xbf16>
    %792 = vector.shape_cast %791 : vector<1x8x4xbf16> to vector<8x4xbf16>
    %793 = arith.truncf %790 : vector<4x256xf32> to vector<4x256xbf16>
    %cst_266 = arith.constant dense<0.000000e+00> : vector<8x256xf32>
    %794 = tpu.matmul %792, %793, %cst_266 {dimension_numbers = #tpu.dot_dimension_numbers<[1], [0], [0], [1], [0, 0, 1, 1], [], []>} : vector<8x4xbf16>, vector<4x256xbf16>, vector<8x256xf32> -> vector<8x256xf32>
    %795 = arith.addf %780, %794 : vector<8x256xf32>
    %c14_i32_267 = arith.constant 14 : i32
    %796 = tpu.dynamic_rotate %540 by %c14_i32_267 dim 1 : vector<4x256xf32>, i32 -> vector<4x256xf32>
    %c1_i32_268 = arith.constant 1 : i32
    %797 = vector.broadcast %c1_i32_268 : i32 to vector<1x256xi32>
    %798 = arith.cmpi sge, %0, %797 : vector<1x256xi32>
    %c14_i32_269 = arith.constant 14 : i32
    %799 = vector.broadcast %c14_i32_269 : i32 to vector<1x256xi32>
    %800 = arith.cmpi slt, %1, %799 : vector<1x256xi32>
    %801 = arith.andi %798, %800 : vector<1x256xi1>
    %cst_270 = arith.constant 0.000000e+00 : f32
    %802 = vector.shape_cast %801 : vector<1x256xi1> to vector<1x256xi1>
    %803 = vector.broadcast %802 : vector<1x256xi1> to vector<4x256xi1>
    %804 = vector.broadcast %cst_270 : f32 to vector<4x256xf32>
    %805 = arith.select %803, %796, %804 : vector<4x256xi1>, vector<4x256xf32>
    %806 = vector.extract_strided_slice %6 {offsets = [9, 0, 0], sizes = [1, 8, 4], strides = [1, 1, 1]} : vector<25x8x4xbf16> to vector<1x8x4xbf16>
    %807 = vector.shape_cast %806 : vector<1x8x4xbf16> to vector<8x4xbf16>
    %808 = arith.truncf %805 : vector<4x256xf32> to vector<4x256xbf16>
    %cst_271 = arith.constant dense<0.000000e+00> : vector<8x256xf32>
    %809 = tpu.matmul %807, %808, %cst_271 {dimension_numbers = #tpu.dot_dimension_numbers<[1], [0], [0], [1], [0, 0, 1, 1], [], []>} : vector<8x4xbf16>, vector<4x256xbf16>, vector<8x256xf32> -> vector<8x256xf32>
    %810 = arith.addf %795, %809 : vector<8x256xf32>
    %c2_i32_272 = arith.constant 2 : i32
    %811 = tpu.dynamic_rotate %540 by %c2_i32_272 dim 1 : vector<4x256xf32>, i32 -> vector<4x256xf32>
    %c2_i32_273 = arith.constant 2 : i32
    %812 = vector.broadcast %c2_i32_273 : i32 to vector<1x256xi32>
    %813 = arith.cmpi sge, %1, %812 : vector<1x256xi32>
    %cst_274 = arith.constant 0.000000e+00 : f32
    %814 = vector.shape_cast %813 : vector<1x256xi1> to vector<1x256xi1>
    %815 = vector.broadcast %814 : vector<1x256xi1> to vector<4x256xi1>
    %816 = vector.broadcast %cst_274 : f32 to vector<4x256xf32>
    %817 = arith.select %815, %811, %816 : vector<4x256xi1>, vector<4x256xf32>
    %818 = vector.extract_strided_slice %6 {offsets = [10, 0, 0], sizes = [1, 8, 4], strides = [1, 1, 1]} : vector<25x8x4xbf16> to vector<1x8x4xbf16>
    %819 = vector.shape_cast %818 : vector<1x8x4xbf16> to vector<8x4xbf16>
    %820 = arith.truncf %817 : vector<4x256xf32> to vector<4x256xbf16>
    %cst_275 = arith.constant dense<0.000000e+00> : vector<8x256xf32>
    %821 = tpu.matmul %819, %820, %cst_275 {dimension_numbers = #tpu.dot_dimension_numbers<[1], [0], [0], [1], [0, 0, 1, 1], [], []>} : vector<8x4xbf16>, vector<4x256xbf16>, vector<8x256xf32> -> vector<8x256xf32>
    %822 = arith.addf %810, %821 : vector<8x256xf32>
    %c1_i32_276 = arith.constant 1 : i32
    %823 = tpu.dynamic_rotate %540 by %c1_i32_276 dim 1 : vector<4x256xf32>, i32 -> vector<4x256xf32>
    %c1_i32_277 = arith.constant 1 : i32
    %824 = vector.broadcast %c1_i32_277 : i32 to vector<1x256xi32>
    %825 = arith.cmpi sge, %1, %824 : vector<1x256xi32>
    %cst_278 = arith.constant 0.000000e+00 : f32
    %826 = vector.shape_cast %825 : vector<1x256xi1> to vector<1x256xi1>
    %827 = vector.broadcast %826 : vector<1x256xi1> to vector<4x256xi1>
    %828 = vector.broadcast %cst_278 : f32 to vector<4x256xf32>
    %829 = arith.select %827, %823, %828 : vector<4x256xi1>, vector<4x256xf32>
    %830 = vector.extract_strided_slice %6 {offsets = [11, 0, 0], sizes = [1, 8, 4], strides = [1, 1, 1]} : vector<25x8x4xbf16> to vector<1x8x4xbf16>
    %831 = vector.shape_cast %830 : vector<1x8x4xbf16> to vector<8x4xbf16>
    %832 = arith.truncf %829 : vector<4x256xf32> to vector<4x256xbf16>
    %cst_279 = arith.constant dense<0.000000e+00> : vector<8x256xf32>
    %833 = tpu.matmul %831, %832, %cst_279 {dimension_numbers = #tpu.dot_dimension_numbers<[1], [0], [0], [1], [0, 0, 1, 1], [], []>} : vector<8x4xbf16>, vector<4x256xbf16>, vector<8x256xf32> -> vector<8x256xf32>
    %834 = arith.addf %822, %833 : vector<8x256xf32>
    %835 = vector.extract_strided_slice %6 {offsets = [12, 0, 0], sizes = [1, 8, 4], strides = [1, 1, 1]} : vector<25x8x4xbf16> to vector<1x8x4xbf16>
    %836 = vector.shape_cast %835 : vector<1x8x4xbf16> to vector<8x4xbf16>
    %837 = arith.truncf %540 : vector<4x256xf32> to vector<4x256xbf16>
    %cst_280 = arith.constant dense<0.000000e+00> : vector<8x256xf32>
    %838 = tpu.matmul %836, %837, %cst_280 {dimension_numbers = #tpu.dot_dimension_numbers<[1], [0], [0], [1], [0, 0, 1, 1], [], []>} : vector<8x4xbf16>, vector<4x256xbf16>, vector<8x256xf32> -> vector<8x256xf32>
    %839 = arith.addf %834, %838 : vector<8x256xf32>
    %c255_i32_281 = arith.constant 255 : i32
    %840 = tpu.dynamic_rotate %540 by %c255_i32_281 dim 1 : vector<4x256xf32>, i32 -> vector<4x256xf32>
    %c15_i32_282 = arith.constant 15 : i32
    %841 = vector.broadcast %c15_i32_282 : i32 to vector<1x256xi32>
    %842 = arith.cmpi slt, %1, %841 : vector<1x256xi32>
    %cst_283 = arith.constant 0.000000e+00 : f32
    %843 = vector.shape_cast %842 : vector<1x256xi1> to vector<1x256xi1>
    %844 = vector.broadcast %843 : vector<1x256xi1> to vector<4x256xi1>
    %845 = vector.broadcast %cst_283 : f32 to vector<4x256xf32>
    %846 = arith.select %844, %840, %845 : vector<4x256xi1>, vector<4x256xf32>
    %847 = vector.extract_strided_slice %6 {offsets = [13, 0, 0], sizes = [1, 8, 4], strides = [1, 1, 1]} : vector<25x8x4xbf16> to vector<1x8x4xbf16>
    %848 = vector.shape_cast %847 : vector<1x8x4xbf16> to vector<8x4xbf16>
    %849 = arith.truncf %846 : vector<4x256xf32> to vector<4x256xbf16>
    %cst_284 = arith.constant dense<0.000000e+00> : vector<8x256xf32>
    %850 = tpu.matmul %848, %849, %cst_284 {dimension_numbers = #tpu.dot_dimension_numbers<[1], [0], [0], [1], [0, 0, 1, 1], [], []>} : vector<8x4xbf16>, vector<4x256xbf16>, vector<8x256xf32> -> vector<8x256xf32>
    %851 = arith.addf %839, %850 : vector<8x256xf32>
    %c254_i32_285 = arith.constant 254 : i32
    %852 = tpu.dynamic_rotate %540 by %c254_i32_285 dim 1 : vector<4x256xf32>, i32 -> vector<4x256xf32>
    %c14_i32_286 = arith.constant 14 : i32
    %853 = vector.broadcast %c14_i32_286 : i32 to vector<1x256xi32>
    %854 = arith.cmpi slt, %1, %853 : vector<1x256xi32>
    %cst_287 = arith.constant 0.000000e+00 : f32
    %855 = vector.shape_cast %854 : vector<1x256xi1> to vector<1x256xi1>
    %856 = vector.broadcast %855 : vector<1x256xi1> to vector<4x256xi1>
    %857 = vector.broadcast %cst_287 : f32 to vector<4x256xf32>
    %858 = arith.select %856, %852, %857 : vector<4x256xi1>, vector<4x256xf32>
    %859 = vector.extract_strided_slice %6 {offsets = [14, 0, 0], sizes = [1, 8, 4], strides = [1, 1, 1]} : vector<25x8x4xbf16> to vector<1x8x4xbf16>
    %860 = vector.shape_cast %859 : vector<1x8x4xbf16> to vector<8x4xbf16>
    %861 = arith.truncf %858 : vector<4x256xf32> to vector<4x256xbf16>
    %cst_288 = arith.constant dense<0.000000e+00> : vector<8x256xf32>
    %862 = tpu.matmul %860, %861, %cst_288 {dimension_numbers = #tpu.dot_dimension_numbers<[1], [0], [0], [1], [0, 0, 1, 1], [], []>} : vector<8x4xbf16>, vector<4x256xbf16>, vector<8x256xf32> -> vector<8x256xf32>
    %863 = arith.addf %851, %862 : vector<8x256xf32>
    %c242_i32_289 = arith.constant 242 : i32
    %864 = tpu.dynamic_rotate %540 by %c242_i32_289 dim 1 : vector<4x256xf32>, i32 -> vector<4x256xf32>
    %c15_i32_290 = arith.constant 15 : i32
    %865 = vector.broadcast %c15_i32_290 : i32 to vector<1x256xi32>
    %866 = arith.cmpi slt, %0, %865 : vector<1x256xi32>
    %c2_i32_291 = arith.constant 2 : i32
    %867 = vector.broadcast %c2_i32_291 : i32 to vector<1x256xi32>
    %868 = arith.cmpi sge, %1, %867 : vector<1x256xi32>
    %869 = arith.andi %866, %868 : vector<1x256xi1>
    %cst_292 = arith.constant 0.000000e+00 : f32
    %870 = vector.shape_cast %869 : vector<1x256xi1> to vector<1x256xi1>
    %871 = vector.broadcast %870 : vector<1x256xi1> to vector<4x256xi1>
    %872 = vector.broadcast %cst_292 : f32 to vector<4x256xf32>
    %873 = arith.select %871, %864, %872 : vector<4x256xi1>, vector<4x256xf32>
    %874 = vector.extract_strided_slice %6 {offsets = [15, 0, 0], sizes = [1, 8, 4], strides = [1, 1, 1]} : vector<25x8x4xbf16> to vector<1x8x4xbf16>
    %875 = vector.shape_cast %874 : vector<1x8x4xbf16> to vector<8x4xbf16>
    %876 = arith.truncf %873 : vector<4x256xf32> to vector<4x256xbf16>
    %cst_293 = arith.constant dense<0.000000e+00> : vector<8x256xf32>
    %877 = tpu.matmul %875, %876, %cst_293 {dimension_numbers = #tpu.dot_dimension_numbers<[1], [0], [0], [1], [0, 0, 1, 1], [], []>} : vector<8x4xbf16>, vector<4x256xbf16>, vector<8x256xf32> -> vector<8x256xf32>
    %878 = arith.addf %863, %877 : vector<8x256xf32>
    %c241_i32_294 = arith.constant 241 : i32
    %879 = tpu.dynamic_rotate %540 by %c241_i32_294 dim 1 : vector<4x256xf32>, i32 -> vector<4x256xf32>
    %c15_i32_295 = arith.constant 15 : i32
    %880 = vector.broadcast %c15_i32_295 : i32 to vector<1x256xi32>
    %881 = arith.cmpi slt, %0, %880 : vector<1x256xi32>
    %c1_i32_296 = arith.constant 1 : i32
    %882 = vector.broadcast %c1_i32_296 : i32 to vector<1x256xi32>
    %883 = arith.cmpi sge, %1, %882 : vector<1x256xi32>
    %884 = arith.andi %881, %883 : vector<1x256xi1>
    %cst_297 = arith.constant 0.000000e+00 : f32
    %885 = vector.shape_cast %884 : vector<1x256xi1> to vector<1x256xi1>
    %886 = vector.broadcast %885 : vector<1x256xi1> to vector<4x256xi1>
    %887 = vector.broadcast %cst_297 : f32 to vector<4x256xf32>
    %888 = arith.select %886, %879, %887 : vector<4x256xi1>, vector<4x256xf32>
    %889 = vector.extract_strided_slice %6 {offsets = [16, 0, 0], sizes = [1, 8, 4], strides = [1, 1, 1]} : vector<25x8x4xbf16> to vector<1x8x4xbf16>
    %890 = vector.shape_cast %889 : vector<1x8x4xbf16> to vector<8x4xbf16>
    %891 = arith.truncf %888 : vector<4x256xf32> to vector<4x256xbf16>
    %cst_298 = arith.constant dense<0.000000e+00> : vector<8x256xf32>
    %892 = tpu.matmul %890, %891, %cst_298 {dimension_numbers = #tpu.dot_dimension_numbers<[1], [0], [0], [1], [0, 0, 1, 1], [], []>} : vector<8x4xbf16>, vector<4x256xbf16>, vector<8x256xf32> -> vector<8x256xf32>
    %893 = arith.addf %878, %892 : vector<8x256xf32>
    %c240_i32_299 = arith.constant 240 : i32
    %894 = tpu.dynamic_rotate %540 by %c240_i32_299 dim 1 : vector<4x256xf32>, i32 -> vector<4x256xf32>
    %c15_i32_300 = arith.constant 15 : i32
    %895 = vector.broadcast %c15_i32_300 : i32 to vector<1x256xi32>
    %896 = arith.cmpi slt, %0, %895 : vector<1x256xi32>
    %cst_301 = arith.constant 0.000000e+00 : f32
    %897 = vector.shape_cast %896 : vector<1x256xi1> to vector<1x256xi1>
    %898 = vector.broadcast %897 : vector<1x256xi1> to vector<4x256xi1>
    %899 = vector.broadcast %cst_301 : f32 to vector<4x256xf32>
    %900 = arith.select %898, %894, %899 : vector<4x256xi1>, vector<4x256xf32>
    %901 = vector.extract_strided_slice %6 {offsets = [17, 0, 0], sizes = [1, 8, 4], strides = [1, 1, 1]} : vector<25x8x4xbf16> to vector<1x8x4xbf16>
    %902 = vector.shape_cast %901 : vector<1x8x4xbf16> to vector<8x4xbf16>
    %903 = arith.truncf %900 : vector<4x256xf32> to vector<4x256xbf16>
    %cst_302 = arith.constant dense<0.000000e+00> : vector<8x256xf32>
    %904 = tpu.matmul %902, %903, %cst_302 {dimension_numbers = #tpu.dot_dimension_numbers<[1], [0], [0], [1], [0, 0, 1, 1], [], []>} : vector<8x4xbf16>, vector<4x256xbf16>, vector<8x256xf32> -> vector<8x256xf32>
    %905 = arith.addf %893, %904 : vector<8x256xf32>
    %c239_i32_303 = arith.constant 239 : i32
    %906 = tpu.dynamic_rotate %540 by %c239_i32_303 dim 1 : vector<4x256xf32>, i32 -> vector<4x256xf32>
    %c15_i32_304 = arith.constant 15 : i32
    %907 = vector.broadcast %c15_i32_304 : i32 to vector<1x256xi32>
    %908 = arith.cmpi slt, %0, %907 : vector<1x256xi32>
    %c15_i32_305 = arith.constant 15 : i32
    %909 = vector.broadcast %c15_i32_305 : i32 to vector<1x256xi32>
    %910 = arith.cmpi slt, %1, %909 : vector<1x256xi32>
    %911 = arith.andi %908, %910 : vector<1x256xi1>
    %cst_306 = arith.constant 0.000000e+00 : f32
    %912 = vector.shape_cast %911 : vector<1x256xi1> to vector<1x256xi1>
    %913 = vector.broadcast %912 : vector<1x256xi1> to vector<4x256xi1>
    %914 = vector.broadcast %cst_306 : f32 to vector<4x256xf32>
    %915 = arith.select %913, %906, %914 : vector<4x256xi1>, vector<4x256xf32>
    %916 = vector.extract_strided_slice %6 {offsets = [18, 0, 0], sizes = [1, 8, 4], strides = [1, 1, 1]} : vector<25x8x4xbf16> to vector<1x8x4xbf16>
    %917 = vector.shape_cast %916 : vector<1x8x4xbf16> to vector<8x4xbf16>
    %918 = arith.truncf %915 : vector<4x256xf32> to vector<4x256xbf16>
    %cst_307 = arith.constant dense<0.000000e+00> : vector<8x256xf32>
    %919 = tpu.matmul %917, %918, %cst_307 {dimension_numbers = #tpu.dot_dimension_numbers<[1], [0], [0], [1], [0, 0, 1, 1], [], []>} : vector<8x4xbf16>, vector<4x256xbf16>, vector<8x256xf32> -> vector<8x256xf32>
    %920 = arith.addf %905, %919 : vector<8x256xf32>
    %c238_i32_308 = arith.constant 238 : i32
    %921 = tpu.dynamic_rotate %540 by %c238_i32_308 dim 1 : vector<4x256xf32>, i32 -> vector<4x256xf32>
    %c15_i32_309 = arith.constant 15 : i32
    %922 = vector.broadcast %c15_i32_309 : i32 to vector<1x256xi32>
    %923 = arith.cmpi slt, %0, %922 : vector<1x256xi32>
    %c14_i32_310 = arith.constant 14 : i32
    %924 = vector.broadcast %c14_i32_310 : i32 to vector<1x256xi32>
    %925 = arith.cmpi slt, %1, %924 : vector<1x256xi32>
    %926 = arith.andi %923, %925 : vector<1x256xi1>
    %cst_311 = arith.constant 0.000000e+00 : f32
    %927 = vector.shape_cast %926 : vector<1x256xi1> to vector<1x256xi1>
    %928 = vector.broadcast %927 : vector<1x256xi1> to vector<4x256xi1>
    %929 = vector.broadcast %cst_311 : f32 to vector<4x256xf32>
    %930 = arith.select %928, %921, %929 : vector<4x256xi1>, vector<4x256xf32>
    %931 = vector.extract_strided_slice %6 {offsets = [19, 0, 0], sizes = [1, 8, 4], strides = [1, 1, 1]} : vector<25x8x4xbf16> to vector<1x8x4xbf16>
    %932 = vector.shape_cast %931 : vector<1x8x4xbf16> to vector<8x4xbf16>
    %933 = arith.truncf %930 : vector<4x256xf32> to vector<4x256xbf16>
    %cst_312 = arith.constant dense<0.000000e+00> : vector<8x256xf32>
    %934 = tpu.matmul %932, %933, %cst_312 {dimension_numbers = #tpu.dot_dimension_numbers<[1], [0], [0], [1], [0, 0, 1, 1], [], []>} : vector<8x4xbf16>, vector<4x256xbf16>, vector<8x256xf32> -> vector<8x256xf32>
    %935 = arith.addf %920, %934 : vector<8x256xf32>
    %c226_i32_313 = arith.constant 226 : i32
    %936 = tpu.dynamic_rotate %540 by %c226_i32_313 dim 1 : vector<4x256xf32>, i32 -> vector<4x256xf32>
    %c14_i32_314 = arith.constant 14 : i32
    %937 = vector.broadcast %c14_i32_314 : i32 to vector<1x256xi32>
    %938 = arith.cmpi slt, %0, %937 : vector<1x256xi32>
    %c2_i32_315 = arith.constant 2 : i32
    %939 = vector.broadcast %c2_i32_315 : i32 to vector<1x256xi32>
    %940 = arith.cmpi sge, %1, %939 : vector<1x256xi32>
    %941 = arith.andi %938, %940 : vector<1x256xi1>
    %cst_316 = arith.constant 0.000000e+00 : f32
    %942 = vector.shape_cast %941 : vector<1x256xi1> to vector<1x256xi1>
    %943 = vector.broadcast %942 : vector<1x256xi1> to vector<4x256xi1>
    %944 = vector.broadcast %cst_316 : f32 to vector<4x256xf32>
    %945 = arith.select %943, %936, %944 : vector<4x256xi1>, vector<4x256xf32>
    %946 = vector.extract_strided_slice %6 {offsets = [20, 0, 0], sizes = [1, 8, 4], strides = [1, 1, 1]} : vector<25x8x4xbf16> to vector<1x8x4xbf16>
    %947 = vector.shape_cast %946 : vector<1x8x4xbf16> to vector<8x4xbf16>
    %948 = arith.truncf %945 : vector<4x256xf32> to vector<4x256xbf16>
    %cst_317 = arith.constant dense<0.000000e+00> : vector<8x256xf32>
    %949 = tpu.matmul %947, %948, %cst_317 {dimension_numbers = #tpu.dot_dimension_numbers<[1], [0], [0], [1], [0, 0, 1, 1], [], []>} : vector<8x4xbf16>, vector<4x256xbf16>, vector<8x256xf32> -> vector<8x256xf32>
    %950 = arith.addf %935, %949 : vector<8x256xf32>
    %c225_i32_318 = arith.constant 225 : i32
    %951 = tpu.dynamic_rotate %540 by %c225_i32_318 dim 1 : vector<4x256xf32>, i32 -> vector<4x256xf32>
    %c14_i32_319 = arith.constant 14 : i32
    %952 = vector.broadcast %c14_i32_319 : i32 to vector<1x256xi32>
    %953 = arith.cmpi slt, %0, %952 : vector<1x256xi32>
    %c1_i32_320 = arith.constant 1 : i32
    %954 = vector.broadcast %c1_i32_320 : i32 to vector<1x256xi32>
    %955 = arith.cmpi sge, %1, %954 : vector<1x256xi32>
    %956 = arith.andi %953, %955 : vector<1x256xi1>
    %cst_321 = arith.constant 0.000000e+00 : f32
    %957 = vector.shape_cast %956 : vector<1x256xi1> to vector<1x256xi1>
    %958 = vector.broadcast %957 : vector<1x256xi1> to vector<4x256xi1>
    %959 = vector.broadcast %cst_321 : f32 to vector<4x256xf32>
    %960 = arith.select %958, %951, %959 : vector<4x256xi1>, vector<4x256xf32>
    %961 = vector.extract_strided_slice %6 {offsets = [21, 0, 0], sizes = [1, 8, 4], strides = [1, 1, 1]} : vector<25x8x4xbf16> to vector<1x8x4xbf16>
    %962 = vector.shape_cast %961 : vector<1x8x4xbf16> to vector<8x4xbf16>
    %963 = arith.truncf %960 : vector<4x256xf32> to vector<4x256xbf16>
    %cst_322 = arith.constant dense<0.000000e+00> : vector<8x256xf32>
    %964 = tpu.matmul %962, %963, %cst_322 {dimension_numbers = #tpu.dot_dimension_numbers<[1], [0], [0], [1], [0, 0, 1, 1], [], []>} : vector<8x4xbf16>, vector<4x256xbf16>, vector<8x256xf32> -> vector<8x256xf32>
    %965 = arith.addf %950, %964 : vector<8x256xf32>
    %c224_i32_323 = arith.constant 224 : i32
    %966 = tpu.dynamic_rotate %540 by %c224_i32_323 dim 1 : vector<4x256xf32>, i32 -> vector<4x256xf32>
    %c14_i32_324 = arith.constant 14 : i32
    %967 = vector.broadcast %c14_i32_324 : i32 to vector<1x256xi32>
    %968 = arith.cmpi slt, %0, %967 : vector<1x256xi32>
    %cst_325 = arith.constant 0.000000e+00 : f32
    %969 = vector.shape_cast %968 : vector<1x256xi1> to vector<1x256xi1>
    %970 = vector.broadcast %969 : vector<1x256xi1> to vector<4x256xi1>
    %971 = vector.broadcast %cst_325 : f32 to vector<4x256xf32>
    %972 = arith.select %970, %966, %971 : vector<4x256xi1>, vector<4x256xf32>
    %973 = vector.extract_strided_slice %6 {offsets = [22, 0, 0], sizes = [1, 8, 4], strides = [1, 1, 1]} : vector<25x8x4xbf16> to vector<1x8x4xbf16>
    %974 = vector.shape_cast %973 : vector<1x8x4xbf16> to vector<8x4xbf16>
    %975 = arith.truncf %972 : vector<4x256xf32> to vector<4x256xbf16>
    %cst_326 = arith.constant dense<0.000000e+00> : vector<8x256xf32>
    %976 = tpu.matmul %974, %975, %cst_326 {dimension_numbers = #tpu.dot_dimension_numbers<[1], [0], [0], [1], [0, 0, 1, 1], [], []>} : vector<8x4xbf16>, vector<4x256xbf16>, vector<8x256xf32> -> vector<8x256xf32>
    %977 = arith.addf %965, %976 : vector<8x256xf32>
    %c223_i32_327 = arith.constant 223 : i32
    %978 = tpu.dynamic_rotate %540 by %c223_i32_327 dim 1 : vector<4x256xf32>, i32 -> vector<4x256xf32>
    %c14_i32_328 = arith.constant 14 : i32
    %979 = vector.broadcast %c14_i32_328 : i32 to vector<1x256xi32>
    %980 = arith.cmpi slt, %0, %979 : vector<1x256xi32>
    %c15_i32_329 = arith.constant 15 : i32
    %981 = vector.broadcast %c15_i32_329 : i32 to vector<1x256xi32>
    %982 = arith.cmpi slt, %1, %981 : vector<1x256xi32>
    %983 = arith.andi %980, %982 : vector<1x256xi1>
    %cst_330 = arith.constant 0.000000e+00 : f32
    %984 = vector.shape_cast %983 : vector<1x256xi1> to vector<1x256xi1>
    %985 = vector.broadcast %984 : vector<1x256xi1> to vector<4x256xi1>
    %986 = vector.broadcast %cst_330 : f32 to vector<4x256xf32>
    %987 = arith.select %985, %978, %986 : vector<4x256xi1>, vector<4x256xf32>
    %988 = vector.extract_strided_slice %6 {offsets = [23, 0, 0], sizes = [1, 8, 4], strides = [1, 1, 1]} : vector<25x8x4xbf16> to vector<1x8x4xbf16>
    %989 = vector.shape_cast %988 : vector<1x8x4xbf16> to vector<8x4xbf16>
    %990 = arith.truncf %987 : vector<4x256xf32> to vector<4x256xbf16>
    %cst_331 = arith.constant dense<0.000000e+00> : vector<8x256xf32>
    %991 = tpu.matmul %989, %990, %cst_331 {dimension_numbers = #tpu.dot_dimension_numbers<[1], [0], [0], [1], [0, 0, 1, 1], [], []>} : vector<8x4xbf16>, vector<4x256xbf16>, vector<8x256xf32> -> vector<8x256xf32>
    %992 = arith.addf %977, %991 : vector<8x256xf32>
    %c222_i32_332 = arith.constant 222 : i32
    %993 = tpu.dynamic_rotate %540 by %c222_i32_332 dim 1 : vector<4x256xf32>, i32 -> vector<4x256xf32>
    %c14_i32_333 = arith.constant 14 : i32
    %994 = vector.broadcast %c14_i32_333 : i32 to vector<1x256xi32>
    %995 = arith.cmpi slt, %0, %994 : vector<1x256xi32>
    %c14_i32_334 = arith.constant 14 : i32
    %996 = vector.broadcast %c14_i32_334 : i32 to vector<1x256xi32>
    %997 = arith.cmpi slt, %1, %996 : vector<1x256xi32>
    %998 = arith.andi %995, %997 : vector<1x256xi1>
    %cst_335 = arith.constant 0.000000e+00 : f32
    %999 = vector.shape_cast %998 : vector<1x256xi1> to vector<1x256xi1>
    %1000 = vector.broadcast %999 : vector<1x256xi1> to vector<4x256xi1>
    %1001 = vector.broadcast %cst_335 : f32 to vector<4x256xf32>
    %1002 = arith.select %1000, %993, %1001 : vector<4x256xi1>, vector<4x256xf32>
    %1003 = vector.extract_strided_slice %6 {offsets = [24, 0, 0], sizes = [1, 8, 4], strides = [1, 1, 1]} : vector<25x8x4xbf16> to vector<1x8x4xbf16>
    %1004 = vector.shape_cast %1003 : vector<1x8x4xbf16> to vector<8x4xbf16>
    %1005 = arith.truncf %1002 : vector<4x256xf32> to vector<4x256xbf16>
    %cst_336 = arith.constant dense<0.000000e+00> : vector<8x256xf32>
    %1006 = tpu.matmul %1004, %1005, %cst_336 {dimension_numbers = #tpu.dot_dimension_numbers<[1], [0], [0], [1], [0, 0, 1, 1], [], []>} : vector<8x4xbf16>, vector<4x256xbf16>, vector<8x256xf32> -> vector<8x256xf32>
    %1007 = arith.addf %992, %1006 : vector<8x256xf32>
    %1008 = vector.broadcast %7 : vector<8x1xf32> to vector<8x256xf32>
    %1009 = arith.addf %1007, %1008 : vector<8x256xf32>
    %cst_337 = arith.constant 0.000000e+00 : f32
    %1010 = vector.broadcast %cst_337 : f32 to vector<8x256xf32>
    %1011 = arith.maximumf %1009, %1010 : vector<8x256xf32>
    %c1_338 = arith.constant 1 : index
    %c16_339 = arith.constant 16 : index
    %c0_340 = arith.constant 0 : index
    %1012 = vector.load %arg11[%c1_338, %c16_339, %c0_340] : memref<2x32x256xf32, #tpu.memory_space<vmem>>, vector<1x8x256xf32>
    %1013 = vector.shape_cast %1012 : vector<1x8x256xf32> to vector<8x256xf32>
    %1014 = vector.shape_cast %1011 : vector<8x256xf32> to vector<1x8x256xf32>
    tpu.vector_store %arg11[%c1_338, %c16_339, %c0_340], %1014 {strides = array<i32>} : memref<2x32x256xf32, #tpu.memory_space<vmem>>, vector<1x8x256xf32>,
    %c16_i32_341 = arith.constant 16 : i32
    %1015 = tpu.dynamic_rotate %532 by %c16_i32_341 dim 1 : vector<4x256xf32>, i32 -> vector<4x256xf32>
    %c1_i32_342 = arith.constant 1 : i32
    %1016 = vector.broadcast %c1_i32_342 : i32 to vector<1x256xi32>
    %1017 = arith.cmpi sge, %0, %1016 : vector<1x256xi32>
    %1018 = vector.shape_cast %1017 : vector<1x256xi1> to vector<1x256xi1>
    %1019 = vector.broadcast %1018 : vector<1x256xi1> to vector<4x256xi1>
    %1020 = arith.select %1019, %1015, %532 : vector<4x256xi1>, vector<4x256xf32>
    %c240_i32_343 = arith.constant 240 : i32
    %1021 = tpu.dynamic_rotate %532 by %c240_i32_343 dim 1 : vector<4x256xf32>, i32 -> vector<4x256xf32>
    %c15_i32_344 = arith.constant 15 : i32
    %1022 = vector.broadcast %c15_i32_344 : i32 to vector<1x256xi32>
    %1023 = arith.cmpi slt, %0, %1022 : vector<1x256xi32>
    %1024 = vector.shape_cast %1023 : vector<1x256xi1> to vector<1x256xi1>
    %1025 = vector.broadcast %1024 : vector<1x256xi1> to vector<4x256xi1>
    %1026 = arith.select %1025, %1021, %532 : vector<4x256xi1>, vector<4x256xf32>
    %1027 = arith.maximumf %1020, %1026 : vector<4x256xf32>
    %1028 = arith.maximumf %532, %1027 : vector<4x256xf32>
    %c1_i32_345 = arith.constant 1 : i32
    %1029 = tpu.dynamic_rotate %1028 by %c1_i32_345 dim 1 : vector<4x256xf32>, i32 -> vector<4x256xf32>
    %c1_i32_346 = arith.constant 1 : i32
    %1030 = vector.broadcast %c1_i32_346 : i32 to vector<1x256xi32>
    %1031 = arith.cmpi sge, %1, %1030 : vector<1x256xi32>
    %1032 = vector.shape_cast %1031 : vector<1x256xi1> to vector<1x256xi1>
    %1033 = vector.broadcast %1032 : vector<1x256xi1> to vector<4x256xi1>
    %1034 = arith.select %1033, %1029, %1028 : vector<4x256xi1>, vector<4x256xf32>
    %c255_i32_347 = arith.constant 255 : i32
    %1035 = tpu.dynamic_rotate %1028 by %c255_i32_347 dim 1 : vector<4x256xf32>, i32 -> vector<4x256xf32>
    %c15_i32_348 = arith.constant 15 : i32
    %1036 = vector.broadcast %c15_i32_348 : i32 to vector<1x256xi32>
    %1037 = arith.cmpi slt, %1, %1036 : vector<1x256xi32>
    %1038 = vector.shape_cast %1037 : vector<1x256xi1> to vector<1x256xi1>
    %1039 = vector.broadcast %1038 : vector<1x256xi1> to vector<4x256xi1>
    %1040 = arith.select %1039, %1035, %1028 : vector<4x256xi1>, vector<4x256xf32>
    %1041 = arith.maximumf %1034, %1040 : vector<4x256xf32>
    %1042 = arith.maximumf %1028, %1041 : vector<4x256xf32>
    %1043 = arith.truncf %1042 : vector<4x256xf32> to vector<4x256xbf16>
    %cst_349 = arith.constant dense<0.000000e+00> : vector<8x256xf32>
    %1044 = tpu.matmul %8, %1043, %cst_349 {dimension_numbers = #tpu.dot_dimension_numbers<[1], [0], [0], [1], [0, 0, 1, 1], [], []>} : vector<8x4xbf16>, vector<4x256xbf16>, vector<8x256xf32> -> vector<8x256xf32>
    %1045 = vector.broadcast %9 : vector<8x1xf32> to vector<8x256xf32>
    %1046 = arith.addf %1044, %1045 : vector<8x256xf32>
    %cst_350 = arith.constant 0.000000e+00 : f32
    %1047 = vector.broadcast %cst_350 : f32 to vector<8x256xf32>
    %1048 = arith.maximumf %1046, %1047 : vector<8x256xf32>
    %c1_351 = arith.constant 1 : index
    %c24_352 = arith.constant 24 : index
    %c0_353 = arith.constant 0 : index
    %1049 = vector.load %arg11[%c1_351, %c24_352, %c0_353] : memref<2x32x256xf32, #tpu.memory_space<vmem>>, vector<1x8x256xf32>
    %1050 = vector.shape_cast %1049 : vector<1x8x256xf32> to vector<8x256xf32>
    %1051 = vector.shape_cast %1048 : vector<8x256xf32> to vector<1x8x256xf32>
    tpu.vector_store %arg11[%c1_351, %c24_352, %c0_353], %1051 {strides = array<i32>} : memref<2x32x256xf32, #tpu.memory_space<vmem>>, vector<1x8x256xf32>,
    return
  }
  func.func @transform_0(%arg0: i32) -> (i32, i32) {
    %c0_i32 = arith.constant 0 : i32
    %c0_i32_0 = arith.constant 0 : i32
    %c0_i32_1 = arith.constant 0 : i32
    return %c0_i32, %c0_i32_0 : i32, i32
  }
  func.func @transform_1(%arg0: i32) -> (i32, i32, i32) {
    %c0_i32 = arith.constant 0 : i32
    %c0_i32_0 = arith.constant 0 : i32
    %c0_i32_1 = arith.constant 0 : i32
    return %arg0, %c0_i32, %c0_i32_0 : i32, i32, i32
  }
  func.func @transform_2(%arg0: i32) -> (i32, i32) {
    %c0_i32 = arith.constant 0 : i32
    %c0_i32_0 = arith.constant 0 : i32
    %c0_i32_1 = arith.constant 0 : i32
    return %c0_i32, %c0_i32_0 : i32, i32
  }
  func.func @transform_3(%arg0: i32) -> (i32, i32) {
    %c0_i32 = arith.constant 0 : i32
    %c0_i32_0 = arith.constant 0 : i32
    %c0_i32_1 = arith.constant 0 : i32
    return %c0_i32, %c0_i32_0 : i32, i32
  }
  func.func @transform_4(%arg0: i32) -> (i32, i32, i32) {
    %c0_i32 = arith.constant 0 : i32
    %c0_i32_0 = arith.constant 0 : i32
    %c0_i32_1 = arith.constant 0 : i32
    %c0_i32_2 = arith.constant 0 : i32
    return %c0_i32, %c0_i32_0, %c0_i32_1 : i32, i32, i32
  }
  func.func @transform_5(%arg0: i32) -> (i32, i32) {
    %c0_i32 = arith.constant 0 : i32
    %c0_i32_0 = arith.constant 0 : i32
    %c0_i32_1 = arith.constant 0 : i32
    return %c0_i32, %c0_i32_0 : i32, i32
  }
  func.func @transform_6(%arg0: i32) -> (i32, i32, i32) {
    %c0_i32 = arith.constant 0 : i32
    %c0_i32_0 = arith.constant 0 : i32
    %c0_i32_1 = arith.constant 0 : i32
    %c0_i32_2 = arith.constant 0 : i32
    return %c0_i32, %c0_i32_0, %c0_i32_1 : i32, i32, i32
  }
  func.func @transform_7(%arg0: i32) -> (i32, i32) {
    %c0_i32 = arith.constant 0 : i32
    %c0_i32_0 = arith.constant 0 : i32
    %c0_i32_1 = arith.constant 0 : i32
    return %c0_i32, %c0_i32_0 : i32, i32
  }
  func.func @transform_8(%arg0: i32) -> (i32, i32) {
    %c0_i32 = arith.constant 0 : i32
    %c0_i32_0 = arith.constant 0 : i32
    %c0_i32_1 = arith.constant 0 : i32
    return %c0_i32, %c0_i32_0 : i32, i32
  }
  func.func @transform_9(%arg0: i32) -> (i32, i32) {
    %c0_i32 = arith.constant 0 : i32
    %c0_i32_0 = arith.constant 0 : i32
    %c0_i32_1 = arith.constant 0 : i32
    return %c0_i32, %c0_i32_0 : i32, i32
  }
  func.func @transform_10(%arg0: i32) -> (i32, i32, i32) {
    %c0_i32 = arith.constant 0 : i32
    %c0_i32_0 = arith.constant 0 : i32
    %c0_i32_1 = arith.constant 0 : i32
    return %arg0, %c0_i32, %c0_i32_0 : i32, i32, i32
  }
}

</mosaic_0001>

<llo_original>
// kernel: tile.9
$region0: #{tile.9}
  %s0 = inlined_call_operand.vmem [shape: s32[16,16], index: 0, kind: input, shape index: {}]
  %s1 = inlined_call_operand.vmem [shape: s32[1,256], index: 1, kind: output, shape index: {}]
  $region1: #{tile.9} parent=0
    #allocation0 [shape = 'u8[8192]{0}', space=vmem, size = 0x2000, scoped, tag = 'scoped mem for output reshape']
    %s2 = smov 3
    %v3 = vld [vmem:[%s0] ss:$8 sm:%s2]
    %vm4 = vcmask 130048
    %5 = vst.msk [vmem:[#allocation0] ss:$8 sm:$0x3] %vm4, %v3
    %s6 = scalar_lea.vmem %s0, 7
    %s7 = smov 3
    %v8 = vld [vmem:[%s6] ss:$8 sm:%s7]
    %9 = vrot.lane.b32.xlu0 %v8, 112
    %v10 = vpop.permute.xlu0 %9
    %vm11 = vcmask 1048448
    %12 = vst.msk [vmem:[#allocation0] ss:$8 sm:$0x3] %vm11, %v10
    %s13 = scalar_lea.vmem %s0, 6
    %s14 = smov 3
    %v15 = vld [vmem:[%s13] ss:$8 sm:%s14]
    %16 = vrot.lane.b32.xlu0 %v15, 96
    %v17 = vpop.permute.xlu0 %16
    %vm18 = vcmask 917248
    %19 = vst.msk [vmem:[#allocation0] ss:$8 sm:$0x3] %vm18, %v17
    %s20 = scalar_lea.vmem %s0, 5
    %s21 = smov 3
    %v22 = vld [vmem:[%s20] ss:$8 sm:%s21]
    %23 = vrot.lane.b32.xlu0 %v22, 80
    %v24 = vpop.permute.xlu0 %23
    %vm25 = vcmask 786048
    %26 = vst.msk [vmem:[#allocation0] ss:$8 sm:$0x3] %vm25, %v24
    %s27 = scalar_lea.vmem %s0, 4
    %s28 = smov 3
    %v29 = vld [vmem:[%s27] ss:$8 sm:%s28]
    %30 = vrot.lane.b32.xlu0 %v29, 64
    %v31 = vpop.permute.xlu0 %30
    %vm32 = vcmask 654848
    %33 = vst.msk [vmem:[#allocation0] ss:$8 sm:$0x3] %vm32, %v31
    %s34 = scalar_lea.vmem %s0, 3
    %s35 = smov 3
    %v36 = vld [vmem:[%s34] ss:$8 sm:%s35]
    %37 = vrot.lane.b32.xlu0 %v36, 48
    %v38 = vpop.permute.xlu0 %37
    %vm39 = vcmask 523648
    %40 = vst.msk [vmem:[#allocation0] ss:$8 sm:$0x3] %vm39, %v38
    %s41 = scalar_lea.vmem %s0, 2
    %s42 = smov 3
    %v43 = vld [vmem:[%s41] ss:$8 sm:%s42]
    %44 = vrot.lane.b32.xlu0 %v43, 32
    %v45 = vpop.permute.xlu0 %44
    %vm46 = vcmask 392448
    %47 = vst.msk [vmem:[#allocation0] ss:$8 sm:$0x3] %vm46, %v45
    %s48 = scalar_lea.vmem %s0, 1
    %s49 = smov 3
    %v50 = vld [vmem:[%s48] ss:$8 sm:%s49]
    %51 = vrot.lane.b32.xlu0 %v50, 16
    %v52 = vpop.permute.xlu0 %51
    %vm53 = vcmask 261248
    %54 = vst.msk [vmem:[#allocation0] ss:$8 sm:$0x3] %vm53, %v52
    %s56 = sshllo.u32 0, 1
    %v58 = vld [vmem:[#allocation0] sm:%s56]
    %s59 = sshllo.u32 0, 1
    %60 = vst [vmem:[%s1] sm:%s59] %v58
    %s61 = scalar_lea.vmem [#allocation0], 8
    %v62 = vld [vmem:[%s61] sm:%s56]
    %s63 = sshllo.u32 0, 1
    %s64 = scalar_lea.vmem %s1, 1
    %65 = vst [vmem:[%s64] sm:%s63] %v62

// kernel: inception_forward.1
$region0: #{inception_forward.1}
  #allocation0 [shape = 'u32[]', space=smem, size = 0x4, offset = 0x4, fixed_abs, tag = 'smem constant byte address 0x4 - core index']
  #allocation1 [shape = 'u32[144,128]{1,0:T(1,128)}', space=vmem, size = 0x12000, scoped, tag = 'internal scratch']
  %s0 = inlined_call_operand.vmem [shape: s32[2,256], index: 0, kind: input, shape index: {}]
  %s1 = inlined_call_operand.vmem [shape: f32[2,4,256], index: 1, kind: input, shape index: {}]
  %s2 = inlined_call_operand.vmem [shape: bf16[16,4], index: 2, kind: input, shape index: {}]
  %s3 = inlined_call_operand.vmem [shape: f32[16,1], index: 3, kind: input, shape index: {}]
  %s4 = inlined_call_operand.vmem [shape: bf16[9,8,4], index: 4, kind: input, shape index: {}]
  %s5 = inlined_call_operand.vmem [shape: f32[8,1], index: 5, kind: input, shape index: {}]
  %s6 = inlined_call_operand.vmem [shape: bf16[25,8,4], index: 6, kind: input, shape index: {}]
  %s7 = inlined_call_operand.vmem [shape: f32[8,1], index: 7, kind: input, shape index: {}]
  %s8 = inlined_call_operand.vmem [shape: bf16[8,4], index: 8, kind: input, shape index: {}]
  %s9 = inlined_call_operand.vmem [shape: f32[8,1], index: 9, kind: input, shape index: {}]
  %s10 = inlined_call_operand.vmem [shape: f32[2,32,256], index: 10, kind: output, shape index: {}]
  %s11 = sld [smem:[#allocation0]]
  $region50: #{inception_forward.1} parent=0
    _
  %s13 = ssub.s32 1, %s11
  %s14 = scalar_select 0, %s13, %s11
  // Predicated region
  $region2: #{inception_forward.1} parent=0 // pred_check
    _
  $region3: #{inception_forward.1} parent=0 // pred_check_branch
    %16 = sbr.rel (0) target = $region5
  $region4: #{inception_forward.1} parent=0 // pred_region
    _
  $region5: #{inception_forward.1} parent=0 // pred_fallthru
    _
  // Predicated region
  $region6: #{inception_forward.1} parent=0 // pred_check
    _
  $region7: #{inception_forward.1} parent=0 // pred_check_branch
    %18 = sbr.rel (0) target = $region9
  $region8: #{inception_forward.1} parent=0 // pred_region
    _
  $region9: #{inception_forward.1} parent=0 // pred_fallthru
    _
  // Predicated region
  $region10: #{inception_forward.1} parent=0 // pred_check
    _
  $region11: #{inception_forward.1} parent=0 // pred_check_branch
    %20 = sbr.rel (0) target = $region13
  $region12: #{inception_forward.1} parent=0 // pred_region
    _
  $region13: #{inception_forward.1} parent=0 // pred_fallthru
    _
  // Predicated region
  $region14: #{inception_forward.1} parent=0 // pred_check
    _
  $region15: #{inception_forward.1} parent=0 // pred_check_branch
    %22 = sbr.rel (0) target = $region17
  $region16: #{inception_forward.1} parent=0 // pred_region
    _
  $region17: #{inception_forward.1} parent=0 // pred_fallthru
    _
  // Predicated region
  $region18: #{inception_forward.1} parent=0 // pred_check
    _
  $region19: #{inception_forward.1} parent=0 // pred_check_branch
    %24 = sbr.rel (0) target = $region21
  $region20: #{inception_forward.1} parent=0 // pred_region
    _
  $region21: #{inception_forward.1} parent=0 // pred_fallthru
    _
  // Predicated region
  $region22: #{inception_forward.1} parent=0 // pred_check
    _
  $region23: #{inception_forward.1} parent=0 // pred_check_branch
    %26 = sbr.rel (0) target = $region25
  $region24: #{inception_forward.1} parent=0 // pred_region
    _
  $region25: #{inception_forward.1} parent=0 // pred_fallthru
    _
  // Predicated region
  $region26: #{inception_forward.1} parent=0 // pred_check
    _
  $region27: #{inception_forward.1} parent=0 // pred_check_branch
    %28 = sbr.rel (0) target = $region29
  $region28: #{inception_forward.1} parent=0 // pred_region
    _
  $region29: #{inception_forward.1} parent=0 // pred_fallthru
    _
  // Predicated region
  $region30: #{inception_forward.1} parent=0 // pred_check
    _
  $region31: #{inception_forward.1} parent=0 // pred_check_branch
    %30 = sbr.rel (0) target = $region33
  $region32: #{inception_forward.1} parent=0 // pred_region
    _
  $region33: #{inception_forward.1} parent=0 // pred_fallthru
    _
  // Predicated region
  $region34: #{inception_forward.1} parent=0 // pred_check
    _
  $region35: #{inception_forward.1} parent=0 // pred_check_branch
    %32 = sbr.rel (0) target = $region37
  $region36: #{inception_forward.1} parent=0 // pred_region
    _
  $region37: #{inception_forward.1} parent=0 // pred_fallthru
    _
  // Predicated region
  $region38: #{inception_forward.1} parent=0 // pred_check
    _
  $region39: #{inception_forward.1} parent=0 // pred_check_branch
    %34 = sbr.rel (0) target = $region41
  $region40: #{inception_forward.1} parent=0 // pred_region
    _
  $region41: #{inception_forward.1} parent=0 // pred_fallthru
    _
  %v36 = vld [vmem:[%s0] ss:$2 sm:$0x3]
  %s37 = scalar_lea.vmem %s0, 1
  %v38 = vld [vmem:[%s37] ss:$2 sm:$0x3]
  %v39 = vld [vmem:[%s2] sm:$0xf]
  %v40 = vld [vmem:[%s2 + $0x4] sm:$0xf]
  %v41 = vld [vmem:[%s3] sm:$0xff]
  %v42 = vld [vmem:[%s3 + $0x8] sm:$0xff]
  %v43 = vld [vmem:[%s4] sm:$0xf]
  %v44 = vld [vmem:[%s4 + $0x4] sm:$0xf]
  %v45 = vld [vmem:[%s4 + $0x8] sm:$0xf]
  %v46 = vld [vmem:[%s4 + $0xc] sm:$0xf]
  %v47 = vld [vmem:[%s4 + $0x10] sm:$0xf]
  %v48 = vld [vmem:[%s4 + $0x14] sm:$0xf]
  %v49 = vld [vmem:[%s4 + $0x18] sm:$0xf]
  %v50 = vld [vmem:[%s4 + $0x1c] sm:$0xf]
  %v51 = vld [vmem:[%s4 + $0x20] sm:$0xf]
  %v52 = vld [vmem:[%s5] sm:$0xff]
  %v53 = vld [vmem:[%s6] sm:$0xf]
  %v54 = vld [vmem:[%s6 + $0x4] sm:$0xf]
  %v55 = vld [vmem:[%s6 + $0x8] sm:$0xf]
  %v56 = vld [vmem:[%s6 + $0xc] sm:$0xf]
  %v57 = vld [vmem:[%s6 + $0x10] sm:$0xf]
  %v58 = vld [vmem:[%s6 + $0x14] sm:$0xf]
  %v59 = vld [vmem:[%s6 + $0x18] sm:$0xf]
  %v60 = vld [vmem:[%s6 + $0x1c] sm:$0xf]
  %v61 = vld [vmem:[%s6 + $0x20] sm:$0xf]
  %v62 = vld [vmem:[%s6 + $0x24] sm:$0xf]
  %v63 = vld [vmem:[%s6 + $0x28] sm:$0xf]
  %v64 = vld [vmem:[%s6 + $0x2c] sm:$0xf]
  %v65 = vld [vmem:[%s6 + $0x30] sm:$0xf]
  %v66 = vld [vmem:[%s6 + $0x34] sm:$0xf]
  %v67 = vld [vmem:[%s6 + $0x38] sm:$0xf]
  %v68 = vld [vmem:[%s6 + $0x3c] sm:$0xf]
  %v69 = vld [vmem:[%s6 + $0x40] sm:$0xf]
  %v70 = vld [vmem:[%s6 + $0x44] sm:$0xf]
  %v71 = vld [vmem:[%s6 + $0x48] sm:$0xf]
  %v72 = vld [vmem:[%s6 + $0x4c] sm:$0xf]
  %v73 = vld [vmem:[%s6 + $0x50] sm:$0xf]
  %v74 = vld [vmem:[%s6 + $0x54] sm:$0xf]
  %v75 = vld [vmem:[%s6 + $0x58] sm:$0xf]
  %v76 = vld [vmem:[%s6 + $0x5c] sm:$0xf]
  %v77 = vld [vmem:[%s6 + $0x60] sm:$0xf]
  %v78 = vld [vmem:[%s7] sm:$0xff]
  %v79 = vld [vmem:[%s8] sm:$0xf]
  %v80 = vld [vmem:[%s9] sm:$0xff]
  %v81 = vld [vmem:[%s1] sm:$0xff]
  %v83 = vcombine.high %v81, %v81
  %v85 = vpack.c.bf16 %v81, %v81
  %v86 = vpack.c.bf16 %v83, %v83
  %88 = vset.pattern.permute.xlu0 0
  %89 = vperm.xlu0 %88, %v41
  %v90 = vpop.permute.xlu0 %89
  %93 = vset.pattern.permute.xlu0 0
  %94 = vperm.xlu0 %93, %v42
  %v95 = vpop.permute.xlu0 %94
  %v99 = vunpack.c.l.b16 %v39
  %v100 = vunpack.c.l.b16 %v40
  %v101 = vpack.c.b16 %v100, %v99
  %vm102 = vcmask 31744
  %v104 = vsel %vm102, %v101, 0
  %vm106 = vcmask 1041408
  %v108 = vsel %vm106, %v85, 0
  %v111 = vsel %vm106, %v86, 0
  %113 = vmatprep.subr.bf16.mxu0 %v111
  %114 = vmatpush1.bf16.msra.mxu0 %v108
  %115 = vmatprep.subr.bf16.mxu0 0
  %116 = vmatpush1.bf16.msra.mxu0 0
  %117 = vmatprep.subr.bf16.mxu0 0
  %118 = vmatpush1.bf16.msra.mxu0 0
  %119 = vmatprep.subr.bf16.mxu0 0
  %120 = vmatpush1.bf16.msra.mxu0 0
  %121 = vmatprep.subr.bf16.mxu0 0
  %122 = vmatpush1.bf16.msra.mxu0 0
  %123 = vmatprep.subr.bf16.mxu0 0
  %124 = vmatpush1.bf16.msra.mxu0 0
  %125 = vmatprep.subr.bf16.mxu0 0
  %126 = vmatpush1.bf16.msra.mxu0 0
  %127 = vmatprep.subr.bf16.mxu0 0
  %128 = vmatpush1.bf16.msra.mxu0 0
  %129 = vmatprep.subr.bf16.mxu0 0
  %130 = vmatpush1.bf16.msra.mxu0 0
  %131 = vmatprep.subr.bf16.mxu0 0
  %132 = vmatpush1.bf16.msra.mxu0 0
  %133 = vmatprep.subr.bf16.mxu0 0
  %134 = vmatpush1.bf16.msra.mxu0 0
  %135 = vmatprep.subr.bf16.mxu0 0
  %136 = vmatpush1.bf16.msra.mxu0 0
  %137 = vmatprep.subr.bf16.mxu0 0
  %138 = vmatpush1.bf16.msra.mxu0 0
  %139 = vmatprep.subr.bf16.mxu0 0
  %140 = vmatpush1.bf16.msra.mxu0 0
  %141 = vmatprep.subr.bf16.mxu0 0
  %142 = vmatpush1.bf16.msra.mxu0 0
  %143 = vmatprep.subr.bf16.mxu0 0
  %144 = vmatpush1.bf16.msra.mxu0 0
  %145 = vmatprep.mubr.bf16.mxu0 0
  %146 = vmatmul.mubr.bf16.gmra.mrb[0].mxu0 %v104
  %v147 = vpop.f32.mrb[0].mxu0
  %v148 = vadd.f32 %v90, %v147
  %v149 = vpop.f32.mrb[0].mxu0
  %v150 = vadd.f32 %v90, %v149
  %v151 = vpop.f32.mrb[0].mxu0
  %v152 = vadd.f32 %v95, %v151
  %v153 = vpop.f32.mrb[0].mxu0
  %v154 = vadd.f32 %v95, %v153
  %155 = vdwg.mxu0
  %v156 = vmax.f32 %v148, 0.0
  %v157 = vmax.f32 %v150, 0.0
  %v158 = vmax.f32 %v152, 0.0
  %v159 = vmax.f32 %v154, 0.0
  %160 = vst [vmem:[%s10] sm:$0xff] %v158
  %161 = vst [vmem:[%s10 + $0x8] sm:$0xff] %v159
  %162 = vrot.lane.b32.xlu0 %v156, 17
  %v163 = vpop.permute.xlu0 %162
  %164 = vrot.lane.b32.xlu0 %v157, 17
  %v165 = vpop.permute.xlu0 %164
  %v166 = vlaneseq
  %v167 = vand.u32 %v166, 127
  %vm168 = vcmp.lt.s32.totalorder %v167, 17
  %v169 = vsel %vm168, %v163, %v165
  %v170 = vsel %vm168, %v165, %v163
  %vm171 = vcmp.ge.s32.totalorder %v36, 1
  %vm172 = vcmp.ge.s32.totalorder %v38, 1
  %vm173 = vmand %vm171, %vm172
  %v174 = vsel %vm173, 1, 0
  %v175 = vlaneseq
  %v176 = vshrl.u32 %v175, 7
  %v177 = vsub.s32 0, %v176
  %v178 = vrot.slane %v174, %v177
  %v179 = vlaneseq
  %v180 = vshrl.u32 %v179, 7
  %v181 = vsub.s32 1, %v180
  %v182 = vrot.slane %v174, %v181
  %vm183 = vcmp.eq.s32.totalorder %v178, 1
  %vm184 = vcmp.eq.s32.totalorder %v182, 1
  %v185 = vsel %vm183, %v170, 0.0
  %v186 = vsel %vm184, %v169, 0.0
  %v187 = vpack.c.bf16 %v185, %v185
  %v188 = vpack.c.bf16 %v186, %v186
  %189 = vrot.lane.b32.xlu0 %v156, 16
  %v190 = vpop.permute.xlu0 %189
  %191 = vrot.lane.b32.xlu0 %v157, 16
  %v192 = vpop.permute.xlu0 %191
  %vm193 = vcmp.lt.s32.totalorder %v167, 16
  %v194 = vsel %vm193, %v190, %v192
  %v195 = vsel %vm193, %v192, %v190
  %v196 = vsel %vm171, 1, 0
  %v197 = vlaneseq
  %v198 = vshrl.u32 %v197, 7
  %v199 = vsub.s32 0, %v198
  %v200 = vrot.slane %v196, %v199
  %v201 = vlaneseq
  %v202 = vshrl.u32 %v201, 7
  %v203 = vsub.s32 1, %v202
  %v204 = vrot.slane %v196, %v203
  %vm205 = vcmp.eq.s32.totalorder %v200, 1
  %vm206 = vcmp.eq.s32.totalorder %v204, 1
  %v207 = vsel %vm205, %v195, 0.0
  %v208 = vsel %vm206, %v194, 0.0
  %v209 = vpack.c.bf16 %v207, %v207
  %v210 = vpack.c.bf16 %v208, %v208
  %v212 = vsel %vm102, %v44, 0
  %v215 = vsel %vm106, %v209, 0
  %v218 = vsel %vm106, %v210, 0
  %220 = vmatprep.subr.bf16.mxu0 %v218
  %221 = vmatpush1.bf16.msra.mxu0 %v215
  %222 = vmatprep.subr.bf16.mxu0 0
  %223 = vmatpush1.bf16.msra.mxu0 0
  %224 = vmatprep.subr.bf16.mxu0 0
  %225 = vmatpush1.bf16.msra.mxu0 0
  %226 = vmatprep.subr.bf16.mxu0 0
  %227 = vmatpush1.bf16.msra.mxu0 0
  %228 = vmatprep.subr.bf16.mxu0 0
  %229 = vmatpush1.bf16.msra.mxu0 0
  %230 = vmatprep.subr.bf16.mxu0 0
  %231 = vmatpush1.bf16.msra.mxu0 0
  %232 = vmatprep.subr.bf16.mxu0 0
  %233 = vmatpush1.bf16.msra.mxu0 0
  %234 = vmatprep.subr.bf16.mxu0 0
  %235 = vmatpush1.bf16.msra.mxu0 0
  %236 = vmatprep.subr.bf16.mxu0 0
  %237 = vmatpush1.bf16.msra.mxu0 0
  %238 = vmatprep.subr.bf16.mxu0 0
  %239 = vmatpush1.bf16.msra.mxu0 0
  %240 = vmatprep.subr.bf16.mxu0 0
  %241 = vmatpush1.bf16.msra.mxu0 0
  %242 = vmatprep.subr.bf16.mxu0 0
  %243 = vmatpush1.bf16.msra.mxu0 0
  %244 = vmatprep.subr.bf16.mxu0 0
  %245 = vmatpush1.bf16.msra.mxu0 0
  %246 = vmatprep.subr.bf16.mxu0 0
  %247 = vmatpush1.bf16.msra.mxu0 0
  %248 = vmatprep.subr.bf16.mxu0 0
  %249 = vmatpush1.bf16.msra.mxu0 0
  %250 = vmatprep.subr.bf16.mxu0 0
  %251 = vmatpush1.bf16.msra.mxu0 0
  %252 = vmatprep.mubr.bf16.mxu0 0
  %253 = vmatmul.mubr.bf16.gmra.mrb[0].mxu0 %v212
  %v254 = vpop.f32.mrb[0].mxu0
  %v255 = vadd.f32 0.0, %v254
  %v256 = vpop.f32.mrb[0].mxu0
  %v257 = vadd.f32 0.0, %v256
  %v258 = vpop.f32.mrb[0].mxu0
  %v259 = vpop.f32.mrb[0].mxu0
  %260 = vdwg.mxu0
  %v262 = vsel %vm102, %v43, 0
  %v265 = vsel %vm106, %v187, 0
  %v268 = vsel %vm106, %v188, 0
  %270 = vmatprep.subr.bf16.mxu0 %v268
  %271 = vmatpush1.bf16.msra.mxu0 %v265
  %272 = vmatprep.subr.bf16.mxu0 0
  %273 = vmatpush1.bf16.msra.mxu0 0
  %274 = vmatprep.subr.bf16.mxu0 0
  %275 = vmatpush1.bf16.msra.mxu0 0
  %276 = vmatprep.subr.bf16.mxu0 0
  %277 = vmatpush1.bf16.msra.mxu0 0
  %278 = vmatprep.subr.bf16.mxu0 0
  %279 = vmatpush1.bf16.msra.mxu0 0
  %280 = vmatprep.subr.bf16.mxu0 0
  %281 = vmatpush1.bf16.msra.mxu0 0
  %282 = vmatprep.subr.bf16.mxu0 0
  %283 = vmatpush1.bf16.msra.mxu0 0
  %284 = vmatprep.subr.bf16.mxu0 0
  %285 = vmatpush1.bf16.msra.mxu0 0
  %286 = vmatprep.subr.bf16.mxu0 0
  %287 = vmatpush1.bf16.msra.mxu0 0
  %288 = vmatprep.subr.bf16.mxu0 0
  %289 = vmatpush1.bf16.msra.mxu0 0
  %290 = vmatprep.subr.bf16.mxu0 0
  %291 = vmatpush1.bf16.msra.mxu0 0
  %292 = vmatprep.subr.bf16.mxu0 0
  %293 = vmatpush1.bf16.msra.mxu0 0
  %294 = vmatprep.subr.bf16.mxu0 0
  %295 = vmatpush1.bf16.msra.mxu0 0
  %296 = vmatprep.subr.bf16.mxu0 0
  %297 = vmatpush1.bf16.msra.mxu0 0
  %298 = vmatprep.subr.bf16.mxu0 0
  %299 = vmatpush1.bf16.msra.mxu0 0
  %300 = vmatprep.subr.bf16.mxu0 0
  %301 = vmatpush1.bf16.msra.mxu0 0
  %302 = vmatprep.mubr.bf16.mxu0 0
  %303 = vmatmul.mubr.bf16.gmra.mrb[0].mxu0 %v262
  %v304 = vpop.f32.mrb[0].mxu0
  %v305 = vadd.f32 %v255, %v304
  %v306 = vpop.f32.mrb[0].mxu0
  %v307 = vadd.f32 %v257, %v306
  %v308 = vpop.f32.mrb[0].mxu0
  %v309 = vpop.f32.mrb[0].mxu0
  %310 = vdwg.mxu0
  %311 = vrot.lane.b32.xlu0 %v156, 15
  %v312 = vpop.permute.xlu0 %311
  %313 = vrot.lane.b32.xlu0 %v157, 15
  %v314 = vpop.permute.xlu0 %313
  %vm315 = vcmp.lt.s32.totalorder %v167, 15
  %v316 = vsel %vm315, %v312, %v314
  %v317 = vsel %vm315, %v314, %v312
  %vm318 = vcmp.lt.s32.totalorder %v38, 15
  %vm319 = vmand %vm171, %vm318
  %v320 = vsel %vm319, 1, 0
  %v321 = vlaneseq
  %v322 = vshrl.u32 %v321, 7
  %v323 = vsub.s32 0, %v322
  %v324 = vrot.slane %v320, %v323
  %v325 = vlaneseq
  %v326 = vshrl.u32 %v325, 7
  %v327 = vsub.s32 1, %v326
  %v328 = vrot.slane %v320, %v327
  %vm329 = vcmp.eq.s32.totalorder %v324, 1
  %vm330 = vcmp.eq.s32.totalorder %v328, 1
  %v331 = vsel %vm329, %v317, 0.0
  %v332 = vsel %vm330, %v316, 0.0
  %v333 = vpack.c.bf16 %v331, %v331
  %v334 = vpack.c.bf16 %v332, %v332
  %v336 = vsel %vm102, %v45, 0
  %v339 = vsel %vm106, %v333, 0
  %v342 = vsel %vm106, %v334, 0
  %344 = vmatprep.subr.bf16.mxu0 %v342
  %345 = vmatpush1.bf16.msra.mxu0 %v339
  %346 = vmatprep.subr.bf16.mxu0 0
  %347 = vmatpush1.bf16.msra.mxu0 0
  %348 = vmatprep.subr.bf16.mxu0 0
  %349 = vmatpush1.bf16.msra.mxu0 0
  %350 = vmatprep.subr.bf16.mxu0 0
  %351 = vmatpush1.bf16.msra.mxu0 0
  %352 = vmatprep.subr.bf16.mxu0 0
  %353 = vmatpush1.bf16.msra.mxu0 0
  %354 = vmatprep.subr.bf16.mxu0 0
  %355 = vmatpush1.bf16.msra.mxu0 0
  %356 = vmatprep.subr.bf16.mxu0 0
  %357 = vmatpush1.bf16.msra.mxu0 0
  %358 = vmatprep.subr.bf16.mxu0 0
  %359 = vmatpush1.bf16.msra.mxu0 0
  %360 = vmatprep.subr.bf16.mxu0 0
  %361 = vmatpush1.bf16.msra.mxu0 0
  %362 = vmatprep.subr.bf16.mxu0 0
  %363 = vmatpush1.bf16.msra.mxu0 0
  %364 = vmatprep.subr.bf16.mxu0 0
  %365 = vmatpush1.bf16.msra.mxu0 0
  %366 = vmatprep.subr.bf16.mxu0 0
  %367 = vmatpush1.bf16.msra.mxu0 0
  %368 = vmatprep.subr.bf16.mxu0 0
  %369 = vmatpush1.bf16.msra.mxu0 0
  %370 = vmatprep.subr.bf16.mxu0 0
  %371 = vmatpush1.bf16.msra.mxu0 0
  %372 = vmatprep.subr.bf16.mxu0 0
  %373 = vmatpush1.bf16.msra.mxu0 0
  %374 = vmatprep.subr.bf16.mxu0 0
  %375 = vmatpush1.bf16.msra.mxu0 0
  %376 = vmatprep.mubr.bf16.mxu0 0
  %377 = vmatmul.mubr.bf16.gmra.mrb[0].mxu0 %v336
  %v378 = vpop.f32.mrb[0].mxu0
  %v379 = vadd.f32 0.0, %v378
  %v380 = vpop.f32.mrb[0].mxu0
  %v381 = vadd.f32 0.0, %v380
  %v382 = vpop.f32.mrb[0].mxu0
  %v383 = vpop.f32.mrb[0].mxu0
  %384 = vdwg.mxu0
  %v385 = vadd.f32 %v305, %v379
  %v386 = vadd.f32 %v307, %v381
  %387 = vrot.lane.b32.xlu0 %v156, 1
  %v388 = vpop.permute.xlu0 %387
  %389 = vrot.lane.b32.xlu0 %v157, 1
  %v390 = vpop.permute.xlu0 %389
  %vm391 = vcmp.lt.s32.totalorder %v167, 1
  %v392 = vsel %vm391, %v388, %v390
  %v393 = vsel %vm391, %v390, %v388
  %v394 = vsel %vm172, 1, 0
  %v395 = vlaneseq
  %v396 = vshrl.u32 %v395, 7
  %v397 = vsub.s32 0, %v396
  %v398 = vrot.slane %v394, %v397
  %v399 = vlaneseq
  %v400 = vshrl.u32 %v399, 7
  %v401 = vsub.s32 1, %v400
  %v402 = vrot.slane %v394, %v401
  %vm403 = vcmp.eq.s32.totalorder %v398, 1
  %vm404 = vcmp.eq.s32.totalorder %v402, 1
  %v405 = vsel %vm403, %v393, 0.0
  %v406 = vsel %vm404, %v392, 0.0
  %v407 = vpack.c.bf16 %v405, %v405
  %v408 = vpack.c.bf16 %v406, %v406
  %v410 = vsel %vm102, %v46, 0
  %v413 = vsel %vm106, %v407, 0
  %v416 = vsel %vm106, %v408, 0
  %418 = vmatprep.subr.bf16.mxu0 %v416
  %419 = vmatpush1.bf16.msra.mxu0 %v413
  %420 = vmatprep.subr.bf16.mxu0 0
  %421 = vmatpush1.bf16.msra.mxu0 0
  %422 = vmatprep.subr.bf16.mxu0 0
  %423 = vmatpush1.bf16.msra.mxu0 0
  %424 = vmatprep.subr.bf16.mxu0 0
  %425 = vmatpush1.bf16.msra.mxu0 0
  %426 = vmatprep.subr.bf16.mxu0 0
  %427 = vmatpush1.bf16.msra.mxu0 0
  %428 = vmatprep.subr.bf16.mxu0 0
  %429 = vmatpush1.bf16.msra.mxu0 0
  %430 = vmatprep.subr.bf16.mxu0 0
  %431 = vmatpush1.bf16.msra.mxu0 0
  %432 = vmatprep.subr.bf16.mxu0 0
  %433 = vmatpush1.bf16.msra.mxu0 0
  %434 = vmatprep.subr.bf16.mxu0 0
  %435 = vmatpush1.bf16.msra.mxu0 0
  %436 = vmatprep.subr.bf16.mxu0 0
  %437 = vmatpush1.bf16.msra.mxu0 0
  %438 = vmatprep.subr.bf16.mxu0 0
  %439 = vmatpush1.bf16.msra.mxu0 0
  %440 = vmatprep.subr.bf16.mxu0 0
  %441 = vmatpush1.bf16.msra.mxu0 0
  %442 = vmatprep.subr.bf16.mxu0 0
  %443 = vmatpush1.bf16.msra.mxu0 0
  %444 = vmatprep.subr.bf16.mxu0 0
  %445 = vmatpush1.bf16.msra.mxu0 0
  %446 = vmatprep.subr.bf16.mxu0 0
  %447 = vmatpush1.bf16.msra.mxu0 0
  %448 = vmatprep.subr.bf16.mxu0 0
  %449 = vmatpush1.bf16.msra.mxu0 0
  %450 = vmatprep.mubr.bf16.mxu0 0
  %451 = vmatmul.mubr.bf16.gmra.mrb[0].mxu0 %v410
  %v452 = vpop.f32.mrb[0].mxu0
  %v453 = vadd.f32 0.0, %v452
  %v454 = vpop.f32.mrb[0].mxu0
  %v455 = vadd.f32 0.0, %v454
  %v456 = vpop.f32.mrb[0].mxu0
  %v457 = vpop.f32.mrb[0].mxu0
  %458 = vdwg.mxu0
  %v459 = vadd.f32 %v385, %v453
  %v460 = vadd.f32 %v386, %v455
  %v461 = vpack.c.bf16 %v156, %v156
  %v462 = vpack.c.bf16 %v157, %v157
  %v464 = vsel %vm102, %v47, 0
  %v467 = vsel %vm106, %v461, 0
  %v470 = vsel %vm106, %v462, 0
  %472 = vmatprep.subr.bf16.mxu0 %v470
  %473 = vmatpush1.bf16.msra.mxu0 %v467
  %474 = vmatprep.subr.bf16.mxu0 0
  %475 = vmatpush1.bf16.msra.mxu0 0
  %476 = vmatprep.subr.bf16.mxu0 0
  %477 = vmatpush1.bf16.msra.mxu0 0
  %478 = vmatprep.subr.bf16.mxu0 0
  %479 = vmatpush1.bf16.msra.mxu0 0
  %480 = vmatprep.subr.bf16.mxu0 0
  %481 = vmatpush1.bf16.msra.mxu0 0
  %482 = vmatprep.subr.bf16.mxu0 0
  %483 = vmatpush1.bf16.msra.mxu0 0
  %484 = vmatprep.subr.bf16.mxu0 0
  %485 = vmatpush1.bf16.msra.mxu0 0
  %486 = vmatprep.subr.bf16.mxu0 0
  %487 = vmatpush1.bf16.msra.mxu0 0
  %488 = vmatprep.subr.bf16.mxu0 0
  %489 = vmatpush1.bf16.msra.mxu0 0
  %490 = vmatprep.subr.bf16.mxu0 0
  %491 = vmatpush1.bf16.msra.mxu0 0
  %492 = vmatprep.subr.bf16.mxu0 0
  %493 = vmatpush1.bf16.msra.mxu0 0
  %494 = vmatprep.subr.bf16.mxu0 0
  %495 = vmatpush1.bf16.msra.mxu0 0
  %496 = vmatprep.subr.bf16.mxu0 0
  %497 = vmatpush1.bf16.msra.mxu0 0
  %498 = vmatprep.subr.bf16.mxu0 0
  %499 = vmatpush1.bf16.msra.mxu0 0
  %500 = vmatprep.subr.bf16.mxu0 0
  %501 = vmatpush1.bf16.msra.mxu0 0
  %502 = vmatprep.subr.bf16.mxu0 0
  %503 = vmatpush1.bf16.msra.mxu0 0
  %504 = vmatprep.mubr.bf16.mxu0 0
  %505 = vmatmul.mubr.bf16.gmra.mrb[0].mxu0 %v464
  %v506 = vpop.f32.mrb[0].mxu0
  %v507 = vadd.f32 0.0, %v506
  %v508 = vpop.f32.mrb[0].mxu0
  %v509 = vadd.f32 0.0, %v508
  %v510 = vpop.f32.mrb[0].mxu0
  %v511 = vpop.f32.mrb[0].mxu0
  %512 = vdwg.mxu0
  %v513 = vadd.f32 %v459, %v507
  %v514 = vadd.f32 %v460, %v509
  %515 = vrot.lane.b32.xlu0 %v156, 127
  %v516 = vpop.permute.xlu0 %515
  %517 = vrot.lane.b32.xlu0 %v157, 127
  %v518 = vpop.permute.xlu0 %517
  %vm519 = vcmp.lt.s32.totalorder %v167, 127
  %v520 = vsel %vm519, %v516, %v518
  %v521 = vsel %vm519, %v518, %v516
  %v522 = vsel %vm318, 1, 0
  %v523 = vlaneseq
  %v524 = vshrl.u32 %v523, 7
  %v525 = vsub.s32 0, %v524
  %v526 = vrot.slane %v522, %v525
  %v527 = vlaneseq
  %v528 = vshrl.u32 %v527, 7
  %v529 = vsub.s32 1, %v528
  %v530 = vrot.slane %v522, %v529
  %vm531 = vcmp.eq.s32.totalorder %v526, 1
  %vm532 = vcmp.eq.s32.totalorder %v530, 1
  %v533 = vsel %vm531, %v520, 0.0
  %v534 = vsel %vm532, %v521, 0.0
  %v535 = vpack.c.bf16 %v533, %v533
  %v536 = vpack.c.bf16 %v534, %v534
  %v538 = vsel %vm102, %v48, 0
  %v541 = vsel %vm106, %v535, 0
  %v544 = vsel %vm106, %v536, 0
  %546 = vmatprep.subr.bf16.mxu0 %v544
  %547 = vmatpush1.bf16.msra.mxu0 %v541
  %548 = vmatprep.subr.bf16.mxu0 0
  %549 = vmatpush1.bf16.msra.mxu0 0
  %550 = vmatprep.subr.bf16.mxu0 0
  %551 = vmatpush1.bf16.msra.mxu0 0
  %552 = vmatprep.subr.bf16.mxu0 0
  %553 = vmatpush1.bf16.msra.mxu0 0
  %554 = vmatprep.subr.bf16.mxu0 0
  %555 = vmatpush1.bf16.msra.mxu0 0
  %556 = vmatprep.subr.bf16.mxu0 0
  %557 = vmatpush1.bf16.msra.mxu0 0
  %558 = vmatprep.subr.bf16.mxu0 0
  %559 = vmatpush1.bf16.msra.mxu0 0
  %560 = vmatprep.subr.bf16.mxu0 0
  %561 = vmatpush1.bf16.msra.mxu0 0
  %562 = vmatprep.subr.bf16.mxu0 0
  %563 = vmatpush1.bf16.msra.mxu0 0
  %564 = vmatprep.subr.bf16.mxu0 0
  %565 = vmatpush1.bf16.msra.mxu0 0
  %566 = vmatprep.subr.bf16.mxu0 0
  %567 = vmatpush1.bf16.msra.mxu0 0
  %568 = vmatprep.subr.bf16.mxu0 0
  %569 = vmatpush1.bf16.msra.mxu0 0
  %570 = vmatprep.subr.bf16.mxu0 0
  %571 = vmatpush1.bf16.msra.mxu0 0
  %572 = vmatprep.subr.bf16.mxu0 0
  %573 = vmatpush1.bf16.msra.mxu0 0
  %574 = vmatprep.subr.bf16.mxu0 0
  %575 = vmatpush1.bf16.msra.mxu0 0
  %576 = vmatprep.subr.bf16.mxu0 0
  %577 = vmatpush1.bf16.msra.mxu0 0
  %578 = vmatprep.mubr.bf16.mxu0 0
  %579 = vmatmul.mubr.bf16.gmra.mrb[0].mxu0 %v538
  %v580 = vpop.f32.mrb[0].mxu0
  %v581 = vadd.f32 0.0, %v580
  %v582 = vpop.f32.mrb[0].mxu0
  %v583 = vadd.f32 0.0, %v582
  %v584 = vpop.f32.mrb[0].mxu0
  %v585 = vpop.f32.mrb[0].mxu0
  %586 = vdwg.mxu0
  %v587 = vadd.f32 %v513, %v581
  %v588 = vadd.f32 %v514, %v583
  %589 = vrot.lane.b32.xlu0 %v156, 113
  %v590 = vpop.permute.xlu0 %589
  %591 = vrot.lane.b32.xlu0 %v157, 113
  %v592 = vpop.permute.xlu0 %591
  %vm593 = vcmp.lt.s32.totalorder %v167, 113
  %v594 = vsel %vm593, %v590, %v592
  %v595 = vsel %vm593, %v592, %v590
  %vm596 = vcmp.lt.s32.totalorder %v36, 15
  %vm597 = vmand %vm596, %vm172
  %v598 = vsel %vm597, 1, 0
  %v599 = vlaneseq
  %v600 = vshrl.u32 %v599, 7
  %v601 = vsub.s32 0, %v600
  %v602 = vrot.slane %v598, %v601
  %v603 = vlaneseq
  %v604 = vshrl.u32 %v603, 7
  %v605 = vsub.s32 1, %v604
  %v606 = vrot.slane %v598, %v605
  %vm607 = vcmp.eq.s32.totalorder %v602, 1
  %vm608 = vcmp.eq.s32.totalorder %v606, 1
  %v609 = vsel %vm607, %v594, 0.0
  %v610 = vsel %vm608, %v595, 0.0
  %v611 = vpack.c.bf16 %v609, %v609
  %v612 = vpack.c.bf16 %v610, %v610
  %v614 = vsel %vm102, %v49, 0
  %v617 = vsel %vm106, %v611, 0
  %v620 = vsel %vm106, %v612, 0
  %622 = vmatprep.subr.bf16.mxu0 %v620
  %623 = vmatpush1.bf16.msra.mxu0 %v617
  %624 = vmatprep.subr.bf16.mxu0 0
  %625 = vmatpush1.bf16.msra.mxu0 0
  %626 = vmatprep.subr.bf16.mxu0 0
  %627 = vmatpush1.bf16.msra.mxu0 0
  %628 = vmatprep.subr.bf16.mxu0 0
  %629 = vmatpush1.bf16.msra.mxu0 0
  %630 = vmatprep.subr.bf16.mxu0 0
  %631 = vmatpush1.bf16.msra.mxu0 0
  %632 = vmatprep.subr.bf16.mxu0 0
  %633 = vmatpush1.bf16.msra.mxu0 0
  %634 = vmatprep.subr.bf16.mxu0 0
  %635 = vmatpush1.bf16.msra.mxu0 0
  %636 = vmatprep.subr.bf16.mxu0 0
  %637 = vmatpush1.bf16.msra.mxu0 0
  %638 = vmatprep.subr.bf16.mxu0 0
  %639 = vmatpush1.bf16.msra.mxu0 0
  %640 = vmatprep.subr.bf16.mxu0 0
  %641 = vmatpush1.bf16.msra.mxu0 0
  %642 = vmatprep.subr.bf16.mxu0 0
  %643 = vmatpush1.bf16.msra.mxu0 0
  %644 = vmatprep.subr.bf16.mxu0 0
  %645 = vmatpush1.bf16.msra.mxu0 0
  %646 = vmatprep.subr.bf16.mxu0 0
  %647 = vmatpush1.bf16.msra.mxu0 0
  %648 = vmatprep.subr.bf16.mxu0 0
  %649 = vmatpush1.bf16.msra.mxu0 0
  %650 = vmatprep.subr.bf16.mxu0 0
  %651 = vmatpush1.bf16.msra.mxu0 0
  %652 = vmatprep.subr.bf16.mxu0 0
  %653 = vmatpush1.bf16.msra.mxu0 0
  %654 = vmatprep.mubr.bf16.mxu0 0
  %655 = vmatmul.mubr.bf16.gmra.mrb[0].mxu0 %v614
  %v656 = vpop.f32.mrb[0].mxu0
  %v657 = vadd.f32 0.0, %v656
  %v658 = vpop.f32.mrb[0].mxu0
  %v659 = vadd.f32 0.0, %v658
  %v660 = vpop.f32.mrb[0].mxu0
  %v661 = vpop.f32.mrb[0].mxu0
  %662 = vdwg.mxu0
  %v663 = vadd.f32 %v587, %v657
  %v664 = vadd.f32 %v588, %v659
  %665 = vrot.lane.b32.xlu0 %v156, 112
  %v666 = vpop.permute.xlu0 %665
  %667 = vrot.lane.b32.xlu0 %v157, 112
  %v668 = vpop.permute.xlu0 %667
  %vm669 = vcmp.lt.s32.totalorder %v167, 112
  %v670 = vsel %vm669, %v666, %v668
  %v671 = vsel %vm669, %v668, %v666
  %v672 = vsel %vm596, 1, 0
  %v673 = vlaneseq
  %v674 = vshrl.u32 %v673, 7
  %v675 = vsub.s32 0, %v674
  %v676 = vrot.slane %v672, %v675
  %v677 = vlaneseq
  %v678 = vshrl.u32 %v677, 7
  %v679 = vsub.s32 1, %v678
  %v680 = vrot.slane %v672, %v679
  %vm681 = vcmp.eq.s32.totalorder %v676, 1
  %vm682 = vcmp.eq.s32.totalorder %v680, 1
  %v683 = vsel %vm681, %v670, 0.0
  %v684 = vsel %vm682, %v671, 0.0
  %v685 = vpack.c.bf16 %v683, %v683
  %v686 = vpack.c.bf16 %v684, %v684
  %v688 = vsel %vm102, %v50, 0
  %v691 = vsel %vm106, %v685, 0
  %v694 = vsel %vm106, %v686, 0
  %696 = vmatprep.subr.bf16.mxu0 %v694
  %697 = vmatpush1.bf16.msra.mxu0 %v691
  %698 = vmatprep.subr.bf16.mxu0 0
  %699 = vmatpush1.bf16.msra.mxu0 0
  %700 = vmatprep.subr.bf16.mxu0 0
  %701 = vmatpush1.bf16.msra.mxu0 0
  %702 = vmatprep.subr.bf16.mxu0 0
  %703 = vmatpush1.bf16.msra.mxu0 0
  %704 = vmatprep.subr.bf16.mxu0 0
  %705 = vmatpush1.bf16.msra.mxu0 0
  %706 = vmatprep.subr.bf16.mxu0 0
  %707 = vmatpush1.bf16.msra.mxu0 0
  %708 = vmatprep.subr.bf16.mxu0 0
  %709 = vmatpush1.bf16.msra.mxu0 0
  %710 = vmatprep.subr.bf16.mxu0 0
  %711 = vmatpush1.bf16.msra.mxu0 0
  %712 = vmatprep.subr.bf16.mxu0 0
  %713 = vmatpush1.bf16.msra.mxu0 0
  %714 = vmatprep.subr.bf16.mxu0 0
  %715 = vmatpush1.bf16.msra.mxu0 0
  %716 = vmatprep.subr.bf16.mxu0 0
  %717 = vmatpush1.bf16.msra.mxu0 0
  %718 = vmatprep.subr.bf16.mxu0 0
  %719 = vmatpush1.bf16.msra.mxu0 0
  %720 = vmatprep.subr.bf16.mxu0 0
  %721 = vmatpush1.bf16.msra.mxu0 0
  %722 = vmatprep.subr.bf16.mxu0 0
  %723 = vmatpush1.bf16.msra.mxu0 0
  %724 = vmatprep.subr.bf16.mxu0 0
  %725 = vmatpush1.bf16.msra.mxu0 0
  %726 = vmatprep.subr.bf16.mxu0 0
  %727 = vmatpush1.bf16.msra.mxu0 0
  %728 = vmatprep.mubr.bf16.mxu0 0
  %729 = vmatmul.mubr.bf16.gmra.mrb[0].mxu0 %v688
  %v730 = vpop.f32.mrb[0].mxu0
  %v731 = vadd.f32 0.0, %v730
  %v732 = vpop.f32.mrb[0].mxu0
  %v733 = vadd.f32 0.0, %v732
  %v734 = vpop.f32.mrb[0].mxu0
  %v735 = vpop.f32.mrb[0].mxu0
  %736 = vdwg.mxu0
  %v737 = vadd.f32 %v663, %v731
  %v738 = vadd.f32 %v664, %v733
  %739 = vrot.lane.b32.xlu0 %v156, 111
  %v740 = vpop.permute.xlu0 %739
  %741 = vrot.lane.b32.xlu0 %v157, 111
  %v742 = vpop.permute.xlu0 %741
  %vm743 = vcmp.lt.s32.totalorder %v167, 111
  %v744 = vsel %vm743, %v740, %v742
  %v745 = vsel %vm743, %v742, %v740
  %vm746 = vmand %vm596, %vm318
  %v747 = vsel %vm746, 1, 0
  %v748 = vlaneseq
  %v749 = vshrl.u32 %v748, 7
  %v750 = vsub.s32 0, %v749
  %v751 = vrot.slane %v747, %v750
  %v752 = vlaneseq
  %v753 = vshrl.u32 %v752, 7
  %v754 = vsub.s32 1, %v753
  %v755 = vrot.slane %v747, %v754
  %vm756 = vcmp.eq.s32.totalorder %v751, 1
  %vm757 = vcmp.eq.s32.totalorder %v755, 1
  %v758 = vsel %vm756, %v744, 0.0
  %v759 = vsel %vm757, %v745, 0.0
  %v760 = vpack.c.bf16 %v758, %v758
  %v761 = vpack.c.bf16 %v759, %v759
  %v763 = vsel %vm102, %v51, 0
  %v766 = vsel %vm106, %v760, 0
  %v769 = vsel %vm106, %v761, 0
  %771 = vmatprep.subr.bf16.mxu0 %v769
  %772 = vmatpush1.bf16.msra.mxu0 %v766
  %773 = vmatprep.subr.bf16.mxu0 0
  %774 = vmatpush1.bf16.msra.mxu0 0
  %775 = vmatprep.subr.bf16.mxu0 0
  %776 = vmatpush1.bf16.msra.mxu0 0
  %777 = vmatprep.subr.bf16.mxu0 0
  %778 = vmatpush1.bf16.msra.mxu0 0
  %779 = vmatprep.subr.bf16.mxu0 0
  %780 = vmatpush1.bf16.msra.mxu0 0
  %781 = vmatprep.subr.bf16.mxu0 0
  %782 = vmatpush1.bf16.msra.mxu0 0
  %783 = vmatprep.subr.bf16.mxu0 0
  %784 = vmatpush1.bf16.msra.mxu0 0
  %785 = vmatprep.subr.bf16.mxu0 0
  %786 = vmatpush1.bf16.msra.mxu0 0
  %787 = vmatprep.subr.bf16.mxu0 0
  %788 = vmatpush1.bf16.msra.mxu0 0
  %789 = vmatprep.subr.bf16.mxu0 0
  %790 = vmatpush1.bf16.msra.mxu0 0
  %791 = vmatprep.subr.bf16.mxu0 0
  %792 = vmatpush1.bf16.msra.mxu0 0
  %793 = vmatprep.subr.bf16.mxu0 0
  %794 = vmatpush1.bf16.msra.mxu0 0
  %795 = vmatprep.subr.bf16.mxu0 0
  %796 = vmatpush1.bf16.msra.mxu0 0
  %797 = vmatprep.subr.bf16.mxu0 0
  %798 = vmatpush1.bf16.msra.mxu0 0
  %799 = vmatprep.subr.bf16.mxu0 0
  %800 = vmatpush1.bf16.msra.mxu0 0
  %801 = vmatprep.subr.bf16.mxu0 0
  %802 = vmatpush1.bf16.msra.mxu0 0
  %803 = vmatprep.mubr.bf16.mxu0 0
  %804 = vmatmul.mubr.bf16.gmra.mrb[0].mxu0 %v763
  %v805 = vpop.f32.mrb[0].mxu0
  %v806 = vadd.f32 0.0, %v805
  %v807 = vpop.f32.mrb[0].mxu0
  %v808 = vadd.f32 0.0, %v807
  %v809 = vpop.f32.mrb[0].mxu0
  %v810 = vpop.f32.mrb[0].mxu0
  %811 = vdwg.mxu0
  %v812 = vadd.f32 %v737, %v806
  %v813 = vadd.f32 %v738, %v808
  %815 = vset.pattern.permute.xlu0 0
  %816 = vperm.xlu0 %815, %v52
  %v817 = vpop.permute.xlu0 %816
  %v819 = vadd.f32 %v812, %v817
  %v820 = vadd.f32 %v813, %v817
  %v821 = vmax.f32 %v819, 0.0
  %v822 = vmax.f32 %v820, 0.0
  %823 = vst [vmem:[%s10 + $0x10] sm:$0xff] %v821
  %824 = vst [vmem:[%s10 + $0x18] sm:$0xff] %v822
  %v827 = vrot.slane %v156, 4
  %v828 = vrot.slane %v157, 4
  %831 = vrot.lane.b32.xlu0 %v827, 34
  %v832 = vpop.permute.xlu0 %831
  %833 = vrot.lane.b32.xlu0 %v828, 34
  %v834 = vpop.permute.xlu0 %833
  %vm835 = vcmp.lt.s32.totalorder %v167, 34
  %v836 = vsel %vm835, %v832, %v834
  %v837 = vsel %vm835, %v834, %v832
  %vm838 = vcmp.ge.s32.totalorder %v36, 2
  %vm839 = vcmp.ge.s32.totalorder %v38, 2
  %vm840 = vmand %vm838, %vm839
  %v841 = vsel %vm840, 1, 0
  %v842 = vlaneseq
  %v843 = vshrl.u32 %v842, 7
  %v844 = vsub.s32 0, %v843
  %v845 = vrot.slane %v841, %v844
  %v846 = vlaneseq
  %v847 = vshrl.u32 %v846, 7
  %v848 = vsub.s32 1, %v847
  %v849 = vrot.slane %v841, %v848
  %vm850 = vcmp.eq.s32.totalorder %v845, 1
  %vm851 = vcmp.eq.s32.totalorder %v849, 1
  %v852 = vsel %vm850, %v837, 0.0
  %v853 = vsel %vm851, %v836, 0.0
  %v854 = vpack.c.bf16 %v852, %v852
  %v855 = vpack.c.bf16 %v853, %v853
  %856 = vrot.lane.b32.xlu0 %v827, 33
  %v857 = vpop.permute.xlu0 %856
  %858 = vrot.lane.b32.xlu0 %v828, 33
  %v859 = vpop.permute.xlu0 %858
  %vm860 = vcmp.lt.s32.totalorder %v167, 33
  %v861 = vsel %vm860, %v857, %v859
  %v862 = vsel %vm860, %v859, %v857
  %vm863 = vmand %vm838, %vm172
  %v864 = vsel %vm863, 1, 0
  %v865 = vlaneseq
  %v866 = vshrl.u32 %v865, 7
  %v867 = vsub.s32 0, %v866
  %v868 = vrot.slane %v864, %v867
  %v869 = vlaneseq
  %v870 = vshrl.u32 %v869, 7
  %v871 = vsub.s32 1, %v870
  %v872 = vrot.slane %v864, %v871
  %vm873 = vcmp.eq.s32.totalorder %v868, 1
  %vm874 = vcmp.eq.s32.totalorder %v872, 1
  %v875 = vsel %vm873, %v862, 0.0
  %v876 = vsel %vm874, %v861, 0.0
  %v877 = vpack.c.bf16 %v875, %v875
  %v878 = vpack.c.bf16 %v876, %v876
  %v880 = vsel %vm102, %v54, 0
  %v883 = vsel %vm106, %v877, 0
  %v886 = vsel %vm106, %v878, 0
  %888 = vmatprep.subr.bf16.mxu0 %v886
  %889 = vmatpush1.bf16.msra.mxu0 %v883
  %890 = vmatprep.subr.bf16.mxu0 0
  %891 = vmatpush1.bf16.msra.mxu0 0
  %892 = vmatprep.subr.bf16.mxu0 0
  %893 = vmatpush1.bf16.msra.mxu0 0
  %894 = vmatprep.subr.bf16.mxu0 0
  %895 = vmatpush1.bf16.msra.mxu0 0
  %896 = vmatprep.subr.bf16.mxu0 0
  %897 = vmatpush1.bf16.msra.mxu0 0
  %898 = vmatprep.subr.bf16.mxu0 0
  %899 = vmatpush1.bf16.msra.mxu0 0
  %900 = vmatprep.subr.bf16.mxu0 0
  %901 = vmatpush1.bf16.msra.mxu0 0
  %902 = vmatprep.subr.bf16.mxu0 0
  %903 = vmatpush1.bf16.msra.mxu0 0
  %904 = vmatprep.subr.bf16.mxu0 0
  %905 = vmatpush1.bf16.msra.mxu0 0
  %906 = vmatprep.subr.bf16.mxu0 0
  %907 = vmatpush1.bf16.msra.mxu0 0
  %908 = vmatprep.subr.bf16.mxu0 0
  %909 = vmatpush1.bf16.msra.mxu0 0
  %910 = vmatprep.subr.bf16.mxu0 0
  %911 = vmatpush1.bf16.msra.mxu0 0
  %912 = vmatprep.subr.bf16.mxu0 0
  %913 = vmatpush1.bf16.msra.mxu0 0
  %914 = vmatprep.subr.bf16.mxu0 0
  %915 = vmatpush1.bf16.msra.mxu0 0
  %916 = vmatprep.subr.bf16.mxu0 0
  %917 = vmatpush1.bf16.msra.mxu0 0
  %918 = vmatprep.subr.bf16.mxu0 0
  %919 = vmatpush1.bf16.msra.mxu0 0
  %920 = vmatprep.mubr.bf16.mxu0 0
  %921 = vmatmul.mubr.bf16.gmra.mrb[0].mxu0 %v880
  %v922 = vpop.f32.mrb[0].mxu0
  %v923 = vadd.f32 0.0, %v922
  %v924 = vpop.f32.mrb[0].mxu0
  %v925 = vadd.f32 0.0, %v924
  %v926 = vpop.f32.mrb[0].mxu0
  %v927 = vpop.f32.mrb[0].mxu0
  %928 = vdwg.mxu0
  %v930 = vsel %vm102, %v53, 0
  %v933 = vsel %vm106, %v854, 0
  %v936 = vsel %vm106, %v855, 0
  %938 = vmatprep.subr.bf16.mxu0 %v936
  %939 = vmatpush1.bf16.msra.mxu0 %v933
  %940 = vmatprep.subr.bf16.mxu0 0
  %941 = vmatpush1.bf16.msra.mxu0 0
  %942 = vmatprep.subr.bf16.mxu0 0
  %943 = vmatpush1.bf16.msra.mxu0 0
  %944 = vmatprep.subr.bf16.mxu0 0
  %945 = vmatpush1.bf16.msra.mxu0 0
  %946 = vmatprep.subr.bf16.mxu0 0
  %947 = vmatpush1.bf16.msra.mxu0 0
  %948 = vmatprep.subr.bf16.mxu0 0
  %949 = vmatpush1.bf16.msra.mxu0 0
  %950 = vmatprep.subr.bf16.mxu0 0
  %951 = vmatpush1.bf16.msra.mxu0 0
  %952 = vmatprep.subr.bf16.mxu0 0
  %953 = vmatpush1.bf16.msra.mxu0 0
  %954 = vmatprep.subr.bf16.mxu0 0
  %955 = vmatpush1.bf16.msra.mxu0 0
  %956 = vmatprep.subr.bf16.mxu0 0
  %957 = vmatpush1.bf16.msra.mxu0 0
  %958 = vmatprep.subr.bf16.mxu0 0
  %959 = vmatpush1.bf16.msra.mxu0 0
  %960 = vmatprep.subr.bf16.mxu0 0
  %961 = vmatpush1.bf16.msra.mxu0 0
  %962 = vmatprep.subr.bf16.mxu0 0
  %963 = vmatpush1.bf16.msra.mxu0 0
  %964 = vmatprep.subr.bf16.mxu0 0
  %965 = vmatpush1.bf16.msra.mxu0 0
  %966 = vmatprep.subr.bf16.mxu0 0
  %967 = vmatpush1.bf16.msra.mxu0 0
  %968 = vmatprep.subr.bf16.mxu0 0
  %969 = vmatpush1.bf16.msra.mxu0 0
  %970 = vmatprep.mubr.bf16.mxu0 0
  %971 = vmatmul.mubr.bf16.gmra.mrb[0].mxu0 %v930
  %v972 = vpop.f32.mrb[0].mxu0
  %v973 = vadd.f32 %v923, %v972
  %v974 = vpop.f32.mrb[0].mxu0
  %v975 = vadd.f32 %v925, %v974
  %v976 = vpop.f32.mrb[0].mxu0
  %v977 = vpop.f32.mrb[0].mxu0
  %978 = vdwg.mxu0
  %979 = vrot.lane.b32.xlu0 %v827, 32
  %v980 = vpop.permute.xlu0 %979
  %981 = vrot.lane.b32.xlu0 %v828, 32
  %v982 = vpop.permute.xlu0 %981
  %vm983 = vcmp.lt.s32.totalorder %v167, 32
  %v984 = vsel %vm983, %v980, %v982
  %v985 = vsel %vm983, %v982, %v980
  %v986 = vsel %vm838, 1, 0
  %v987 = vlaneseq
  %v988 = vshrl.u32 %v987, 7
  %v989 = vsub.s32 0, %v988
  %v990 = vrot.slane %v986, %v989
  %v991 = vlaneseq
  %v992 = vshrl.u32 %v991, 7
  %v993 = vsub.s32 1, %v992
  %v994 = vrot.slane %v986, %v993
  %vm995 = vcmp.eq.s32.totalorder %v990, 1
  %vm996 = vcmp.eq.s32.totalorder %v994, 1
  %v997 = vsel %vm995, %v985, 0.0
  %v998 = vsel %vm996, %v984, 0.0
  %v999 = vpack.c.bf16 %v997, %v997
  %v1000 = vpack.c.bf16 %v998, %v998
  %v1002 = vsel %vm102, %v55, 0
  %v1005 = vsel %vm106, %v999, 0
  %v1008 = vsel %vm106, %v1000, 0
  %1010 = vmatprep.subr.bf16.mxu0 %v1008
  %1011 = vmatpush1.bf16.msra.mxu0 %v1005
  %1012 = vmatprep.subr.bf16.mxu0 0
  %1013 = vmatpush1.bf16.msra.mxu0 0
  %1014 = vmatprep.subr.bf16.mxu0 0
  %1015 = vmatpush1.bf16.msra.mxu0 0
  %1016 = vmatprep.subr.bf16.mxu0 0
  %1017 = vmatpush1.bf16.msra.mxu0 0
  %1018 = vmatprep.subr.bf16.mxu0 0
  %1019 = vmatpush1.bf16.msra.mxu0 0
  %1020 = vmatprep.subr.bf16.mxu0 0
  %1021 = vmatpush1.bf16.msra.mxu0 0
  %1022 = vmatprep.subr.bf16.mxu0 0
  %1023 = vmatpush1.bf16.msra.mxu0 0
  %1024 = vmatprep.subr.bf16.mxu0 0
  %1025 = vmatpush1.bf16.msra.mxu0 0
  %1026 = vmatprep.subr.bf16.mxu0 0
  %1027 = vmatpush1.bf16.msra.mxu0 0
  %1028 = vmatprep.subr.bf16.mxu0 0
  %1029 = vmatpush1.bf16.msra.mxu0 0
  %1030 = vmatprep.subr.bf16.mxu0 0
  %1031 = vmatpush1.bf16.msra.mxu0 0
  %1032 = vmatprep.subr.bf16.mxu0 0
  %1033 = vmatpush1.bf16.msra.mxu0 0
  %1034 = vmatprep.subr.bf16.mxu0 0
  %1035 = vmatpush1.bf16.msra.mxu0 0
  %1036 = vmatprep.subr.bf16.mxu0 0
  %1037 = vmatpush1.bf16.msra.mxu0 0
  %1038 = vmatprep.subr.bf16.mxu0 0
  %1039 = vmatpush1.bf16.msra.mxu0 0
  %1040 = vmatprep.subr.bf16.mxu0 0
  %1041 = vmatpush1.bf16.msra.mxu0 0
  %1042 = vmatprep.mubr.bf16.mxu0 0
  %1043 = vmatmul.mubr.bf16.gmra.mrb[0].mxu0 %v1002
  %v1044 = vpop.f32.mrb[0].mxu0
  %v1045 = vadd.f32 0.0, %v1044
  %v1046 = vpop.f32.mrb[0].mxu0
  %v1047 = vadd.f32 0.0, %v1046
  %v1048 = vpop.f32.mrb[0].mxu0
  %v1049 = vpop.f32.mrb[0].mxu0
  %1050 = vdwg.mxu0
  %v1051 = vadd.f32 %v973, %v1045
  %v1052 = vadd.f32 %v975, %v1047
  %1053 = vrot.lane.b32.xlu0 %v827, 31
  %v1054 = vpop.permute.xlu0 %1053
  %1055 = vrot.lane.b32.xlu0 %v828, 31
  %v1056 = vpop.permute.xlu0 %1055
  %vm1057 = vcmp.lt.s32.totalorder %v167, 31
  %v1058 = vsel %vm1057, %v1054, %v1056
  %v1059 = vsel %vm1057, %v1056, %v1054
  %vm1060 = vmand %vm838, %vm318
  %v1061 = vsel %vm1060, 1, 0
  %v1062 = vlaneseq
  %v1063 = vshrl.u32 %v1062, 7
  %v1064 = vsub.s32 0, %v1063
  %v1065 = vrot.slane %v1061, %v1064
  %v1066 = vlaneseq
  %v1067 = vshrl.u32 %v1066, 7
  %v1068 = vsub.s32 1, %v1067
  %v1069 = vrot.slane %v1061, %v1068
  %vm1070 = vcmp.eq.s32.totalorder %v1065, 1
  %vm1071 = vcmp.eq.s32.totalorder %v1069, 1
  %v1072 = vsel %vm1070, %v1059, 0.0
  %v1073 = vsel %vm1071, %v1058, 0.0
  %v1074 = vpack.c.bf16 %v1072, %v1072
  %v1075 = vpack.c.bf16 %v1073, %v1073
  %v1077 = vsel %vm102, %v56, 0
  %v1080 = vsel %vm106, %v1074, 0
  %v1083 = vsel %vm106, %v1075, 0
  %1085 = vmatprep.subr.bf16.mxu0 %v1083
  %1086 = vmatpush1.bf16.msra.mxu0 %v1080
  %1087 = vmatprep.subr.bf16.mxu0 0
  %1088 = vmatpush1.bf16.msra.mxu0 0
  %1089 = vmatprep.subr.bf16.mxu0 0
  %1090 = vmatpush1.bf16.msra.mxu0 0
  %1091 = vmatprep.subr.bf16.mxu0 0
  %1092 = vmatpush1.bf16.msra.mxu0 0
  %1093 = vmatprep.subr.bf16.mxu0 0
  %1094 = vmatpush1.bf16.msra.mxu0 0
  %1095 = vmatprep.subr.bf16.mxu0 0
  %1096 = vmatpush1.bf16.msra.mxu0 0
  %1097 = vmatprep.subr.bf16.mxu0 0
  %1098 = vmatpush1.bf16.msra.mxu0 0
  %1099 = vmatprep.subr.bf16.mxu0 0
  %1100 = vmatpush1.bf16.msra.mxu0 0
  %1101 = vmatprep.subr.bf16.mxu0 0
  %1102 = vmatpush1.bf16.msra.mxu0 0
  %1103 = vmatprep.subr.bf16.mxu0 0
  %1104 = vmatpush1.bf16.msra.mxu0 0
  %1105 = vmatprep.subr.bf16.mxu0 0
  %1106 = vmatpush1.bf16.msra.mxu0 0
  %1107 = vmatprep.subr.bf16.mxu0 0
  %1108 = vmatpush1.bf16.msra.mxu0 0
  %1109 = vmatprep.subr.bf16.mxu0 0
  %1110 = vmatpush1.bf16.msra.mxu0 0
  %1111 = vmatprep.subr.bf16.mxu0 0
  %1112 = vmatpush1.bf16.msra.mxu0 0
  %1113 = vmatprep.subr.bf16.mxu0 0
  %1114 = vmatpush1.bf16.msra.mxu0 0
  %1115 = vmatprep.subr.bf16.mxu0 0
  %1116 = vmatpush1.bf16.msra.mxu0 0
  %1117 = vmatprep.mubr.bf16.mxu0 0
  %1118 = vmatmul.mubr.bf16.gmra.mrb[0].mxu0 %v1077
  %v1119 = vpop.f32.mrb[0].mxu0
  %v1120 = vadd.f32 0.0, %v1119
  %v1121 = vpop.f32.mrb[0].mxu0
  %v1122 = vadd.f32 0.0, %v1121
  %v1123 = vpop.f32.mrb[0].mxu0
  %v1124 = vpop.f32.mrb[0].mxu0
  %1125 = vdwg.mxu0
  %v1126 = vadd.f32 %v1051, %v1120
  %v1127 = vadd.f32 %v1052, %v1122
  %1128 = vrot.lane.b32.xlu0 %v827, 30
  %v1129 = vpop.permute.xlu0 %1128
  %1130 = vrot.lane.b32.xlu0 %v828, 30
  %v1131 = vpop.permute.xlu0 %1130
  %vm1132 = vcmp.lt.s32.totalorder %v167, 30
  %v1133 = vsel %vm1132, %v1129, %v1131
  %v1134 = vsel %vm1132, %v1131, %v1129
  %vm1135 = vcmp.lt.s32.totalorder %v38, 14
  %vm1136 = vmand %vm838, %vm1135
  %v1137 = vsel %vm1136, 1, 0
  %v1138 = vlaneseq
  %v1139 = vshrl.u32 %v1138, 7
  %v1140 = vsub.s32 0, %v1139
  %v1141 = vrot.slane %v1137, %v1140
  %v1142 = vlaneseq
  %v1143 = vshrl.u32 %v1142, 7
  %v1144 = vsub.s32 1, %v1143
  %v1145 = vrot.slane %v1137, %v1144
  %vm1146 = vcmp.eq.s32.totalorder %v1141, 1
  %vm1147 = vcmp.eq.s32.totalorder %v1145, 1
  %v1148 = vsel %vm1146, %v1134, 0.0
  %v1149 = vsel %vm1147, %v1133, 0.0
  %v1150 = vpack.c.bf16 %v1148, %v1148
  %v1151 = vpack.c.bf16 %v1149, %v1149
  %v1153 = vsel %vm102, %v57, 0
  %v1156 = vsel %vm106, %v1150, 0
  %v1159 = vsel %vm106, %v1151, 0
  %1161 = vmatprep.subr.bf16.mxu0 %v1159
  %1162 = vmatpush1.bf16.msra.mxu0 %v1156
  %1163 = vmatprep.subr.bf16.mxu0 0
  %1164 = vmatpush1.bf16.msra.mxu0 0
  %1165 = vmatprep.subr.bf16.mxu0 0
  %1166 = vmatpush1.bf16.msra.mxu0 0
  %1167 = vmatprep.subr.bf16.mxu0 0
  %1168 = vmatpush1.bf16.msra.mxu0 0
  %1169 = vmatprep.subr.bf16.mxu0 0
  %1170 = vmatpush1.bf16.msra.mxu0 0
  %1171 = vmatprep.subr.bf16.mxu0 0
  %1172 = vmatpush1.bf16.msra.mxu0 0
  %1173 = vmatprep.subr.bf16.mxu0 0
  %1174 = vmatpush1.bf16.msra.mxu0 0
  %1175 = vmatprep.subr.bf16.mxu0 0
  %1176 = vmatpush1.bf16.msra.mxu0 0
  %1177 = vmatprep.subr.bf16.mxu0 0
  %1178 = vmatpush1.bf16.msra.mxu0 0
  %1179 = vmatprep.subr.bf16.mxu0 0
  %1180 = vmatpush1.bf16.msra.mxu0 0
  %1181 = vmatprep.subr.bf16.mxu0 0
  %1182 = vmatpush1.bf16.msra.mxu0 0
  %1183 = vmatprep.subr.bf16.mxu0 0
  %1184 = vmatpush1.bf16.msra.mxu0 0
  %1185 = vmatprep.subr.bf16.mxu0 0
  %1186 = vmatpush1.bf16.msra.mxu0 0
  %1187 = vmatprep.subr.bf16.mxu0 0
  %1188 = vmatpush1.bf16.msra.mxu0 0
  %1189 = vmatprep.subr.bf16.mxu0 0
  %1190 = vmatpush1.bf16.msra.mxu0 0
  %1191 = vmatprep.subr.bf16.mxu0 0
  %1192 = vmatpush1.bf16.msra.mxu0 0
  %1193 = vmatprep.mubr.bf16.mxu0 0
  %1194 = vmatmul.mubr.bf16.gmra.mrb[0].mxu0 %v1153
  %v1195 = vpop.f32.mrb[0].mxu0
  %v1196 = vadd.f32 0.0, %v1195
  %v1197 = vpop.f32.mrb[0].mxu0
  %v1198 = vadd.f32 0.0, %v1197
  %v1199 = vpop.f32.mrb[0].mxu0
  %v1200 = vpop.f32.mrb[0].mxu0
  %1201 = vdwg.mxu0
  %v1202 = vadd.f32 %v1126, %v1196
  %v1203 = vadd.f32 %v1127, %v1198
  %1204 = vrot.lane.b32.xlu0 %v827, 18
  %v1205 = vpop.permute.xlu0 %1204
  %1206 = vrot.lane.b32.xlu0 %v828, 18
  %v1207 = vpop.permute.xlu0 %1206
  %vm1208 = vcmp.lt.s32.totalorder %v167, 18
  %v1209 = vsel %vm1208, %v1205, %v1207
  %v1210 = vsel %vm1208, %v1207, %v1205
  %vm1211 = vmand %vm171, %vm839
  %v1212 = vsel %vm1211, 1, 0
  %v1213 = vlaneseq
  %v1214 = vshrl.u32 %v1213, 7
  %v1215 = vsub.s32 0, %v1214
  %v1216 = vrot.slane %v1212, %v1215
  %v1217 = vlaneseq
  %v1218 = vshrl.u32 %v1217, 7
  %v1219 = vsub.s32 1, %v1218
  %v1220 = vrot.slane %v1212, %v1219
  %vm1221 = vcmp.eq.s32.totalorder %v1216, 1
  %vm1222 = vcmp.eq.s32.totalorder %v1220, 1
  %v1223 = vsel %vm1221, %v1210, 0.0
  %v1224 = vsel %vm1222, %v1209, 0.0
  %v1225 = vpack.c.bf16 %v1223, %v1223
  %v1226 = vpack.c.bf16 %v1224, %v1224
  %v1228 = vsel %vm102, %v58, 0
  %v1231 = vsel %vm106, %v1225, 0
  %v1234 = vsel %vm106, %v1226, 0
  %1236 = vmatprep.subr.bf16.mxu0 %v1234
  %1237 = vmatpush1.bf16.msra.mxu0 %v1231
  %1238 = vmatprep.subr.bf16.mxu0 0
  %1239 = vmatpush1.bf16.msra.mxu0 0
  %1240 = vmatprep.subr.bf16.mxu0 0
  %1241 = vmatpush1.bf16.msra.mxu0 0
  %1242 = vmatprep.subr.bf16.mxu0 0
  %1243 = vmatpush1.bf16.msra.mxu0 0
  %1244 = vmatprep.subr.bf16.mxu0 0
  %1245 = vmatpush1.bf16.msra.mxu0 0
  %1246 = vmatprep.subr.bf16.mxu0 0
  %1247 = vmatpush1.bf16.msra.mxu0 0
  %1248 = vmatprep.subr.bf16.mxu0 0
  %1249 = vmatpush1.bf16.msra.mxu0 0
  %1250 = vmatprep.subr.bf16.mxu0 0
  %1251 = vmatpush1.bf16.msra.mxu0 0
  %1252 = vmatprep.subr.bf16.mxu0 0
  %1253 = vmatpush1.bf16.msra.mxu0 0
  %1254 = vmatprep.subr.bf16.mxu0 0
  %1255 = vmatpush1.bf16.msra.mxu0 0
  %1256 = vmatprep.subr.bf16.mxu0 0
  %1257 = vmatpush1.bf16.msra.mxu0 0
  %1258 = vmatprep.subr.bf16.mxu0 0
  %1259 = vmatpush1.bf16.msra.mxu0 0
  %1260 = vmatprep.subr.bf16.mxu0 0
  %1261 = vmatpush1.bf16.msra.mxu0 0
  %1262 = vmatprep.subr.bf16.mxu0 0
  %1263 = vmatpush1.bf16.msra.mxu0 0
  %1264 = vmatprep.subr.bf16.mxu0 0
  %1265 = vmatpush1.bf16.msra.mxu0 0
  %1266 = vmatprep.subr.bf16.mxu0 0
  %1267 = vmatpush1.bf16.msra.mxu0 0
  %1268 = vmatprep.mubr.bf16.mxu0 0
  %1269 = vmatmul.mubr.bf16.gmra.mrb[0].mxu0 %v1228
  %v1270 = vpop.f32.mrb[0].mxu0
  %v1271 = vadd.f32 0.0, %v1270
  %v1272 = vpop.f32.mrb[0].mxu0
  %v1273 = vadd.f32 0.0, %v1272
  %v1274 = vpop.f32.mrb[0].mxu0
  %v1275 = vpop.f32.mrb[0].mxu0
  %1276 = vdwg.mxu0
  %v1277 = vadd.f32 %v1202, %v1271
  %v1278 = vadd.f32 %v1203, %v1273
  %1279 = vrot.lane.b32.xlu0 %v827, 17
  %v1280 = vpop.permute.xlu0 %1279
  %1281 = vrot.lane.b32.xlu0 %v828, 17
  %v1282 = vpop.permute.xlu0 %1281
  %v1283 = vsel %vm168, %v1280, %v1282
  %v1284 = vsel %vm168, %v1282, %v1280
  %v1285 = vsel %vm183, %v1284, 0.0
  %v1286 = vsel %vm184, %v1283, 0.0
  %v1287 = vpack.c.bf16 %v1285, %v1285
  %v1288 = vpack.c.bf16 %v1286, %v1286
  %v1290 = vsel %vm102, %v59, 0
  %v1293 = vsel %vm106, %v1287, 0
  %v1296 = vsel %vm106, %v1288, 0
  %1298 = vmatprep.subr.bf16.mxu0 %v1296
  %1299 = vmatpush1.bf16.msra.mxu0 %v1293
  %1300 = vmatprep.subr.bf16.mxu0 0
  %1301 = vmatpush1.bf16.msra.mxu0 0
  %1302 = vmatprep.subr.bf16.mxu0 0
  %1303 = vmatpush1.bf16.msra.mxu0 0
  %1304 = vmatprep.subr.bf16.mxu0 0
  %1305 = vmatpush1.bf16.msra.mxu0 0
  %1306 = vmatprep.subr.bf16.mxu0 0
  %1307 = vmatpush1.bf16.msra.mxu0 0
  %1308 = vmatprep.subr.bf16.mxu0 0
  %1309 = vmatpush1.bf16.msra.mxu0 0
  %1310 = vmatprep.subr.bf16.mxu0 0
  %1311 = vmatpush1.bf16.msra.mxu0 0
  %1312 = vmatprep.subr.bf16.mxu0 0
  %1313 = vmatpush1.bf16.msra.mxu0 0
  %1314 = vmatprep.subr.bf16.mxu0 0
  %1315 = vmatpush1.bf16.msra.mxu0 0
  %1316 = vmatprep.subr.bf16.mxu0 0
  %1317 = vmatpush1.bf16.msra.mxu0 0
  %1318 = vmatprep.subr.bf16.mxu0 0
  %1319 = vmatpush1.bf16.msra.mxu0 0
  %1320 = vmatprep.subr.bf16.mxu0 0
  %1321 = vmatpush1.bf16.msra.mxu0 0
  %1322 = vmatprep.subr.bf16.mxu0 0
  %1323 = vmatpush1.bf16.msra.mxu0 0
  %1324 = vmatprep.subr.bf16.mxu0 0
  %1325 = vmatpush1.bf16.msra.mxu0 0
  %1326 = vmatprep.subr.bf16.mxu0 0
  %1327 = vmatpush1.bf16.msra.mxu0 0
  %1328 = vmatprep.subr.bf16.mxu0 0
  %1329 = vmatpush1.bf16.msra.mxu0 0
  %1330 = vmatprep.mubr.bf16.mxu0 0
  %1331 = vmatmul.mubr.bf16.gmra.mrb[0].mxu0 %v1290
  %v1332 = vpop.f32.mrb[0].mxu0
  %v1333 = vadd.f32 0.0, %v1332
  %v1334 = vpop.f32.mrb[0].mxu0
  %v1335 = vadd.f32 0.0, %v1334
  %v1336 = vpop.f32.mrb[0].mxu0
  %v1337 = vpop.f32.mrb[0].mxu0
  %1338 = vdwg.mxu0
  %v1339 = vadd.f32 %v1277, %v1333
  %v1340 = vadd.f32 %v1278, %v1335
  %1341 = vrot.lane.b32.xlu0 %v827, 16
  %v1342 = vpop.permute.xlu0 %1341
  %1343 = vrot.lane.b32.xlu0 %v828, 16
  %v1344 = vpop.permute.xlu0 %1343
  %v1345 = vsel %vm193, %v1342, %v1344
  %v1346 = vsel %vm193, %v1344, %v1342
  %v1347 = vsel %vm205, %v1346, 0.0
  %v1348 = vsel %vm206, %v1345, 0.0
  %v1349 = vpack.c.bf16 %v1347, %v1347
  %v1350 = vpack.c.bf16 %v1348, %v1348
  %v1352 = vsel %vm102, %v60, 0
  %v1355 = vsel %vm106, %v1349, 0
  %v1358 = vsel %vm106, %v1350, 0
  %1360 = vmatprep.subr.bf16.mxu0 %v1358
  %1361 = vmatpush1.bf16.msra.mxu0 %v1355
  %1362 = vmatprep.subr.bf16.mxu0 0
  %1363 = vmatpush1.bf16.msra.mxu0 0
  %1364 = vmatprep.subr.bf16.mxu0 0
  %1365 = vmatpush1.bf16.msra.mxu0 0
  %1366 = vmatprep.subr.bf16.mxu0 0
  %1367 = vmatpush1.bf16.msra.mxu0 0
  %1368 = vmatprep.subr.bf16.mxu0 0
  %1369 = vmatpush1.bf16.msra.mxu0 0
  %1370 = vmatprep.subr.bf16.mxu0 0
  %1371 = vmatpush1.bf16.msra.mxu0 0
  %1372 = vmatprep.subr.bf16.mxu0 0
  %1373 = vmatpush1.bf16.msra.mxu0 0
  %1374 = vmatprep.subr.bf16.mxu0 0
  %1375 = vmatpush1.bf16.msra.mxu0 0
  %1376 = vmatprep.subr.bf16.mxu0 0
  %1377 = vmatpush1.bf16.msra.mxu0 0
  %1378 = vmatprep.subr.bf16.mxu0 0
  %1379 = vmatpush1.bf16.msra.mxu0 0
  %1380 = vmatprep.subr.bf16.mxu0 0
  %1381 = vmatpush1.bf16.msra.mxu0 0
  %1382 = vmatprep.subr.bf16.mxu0 0
  %1383 = vmatpush1.bf16.msra.mxu0 0
  %1384 = vmatprep.subr.bf16.mxu0 0
  %1385 = vmatpush1.bf16.msra.mxu0 0
  %1386 = vmatprep.subr.bf16.mxu0 0
  %1387 = vmatpush1.bf16.msra.mxu0 0
  %1388 = vmatprep.subr.bf16.mxu0 0
  %1389 = vmatpush1.bf16.msra.mxu0 0
  %1390 = vmatprep.subr.bf16.mxu0 0
  %1391 = vmatpush1.bf16.msra.mxu0 0
  %1392 = vmatprep.mubr.bf16.mxu0 0
  %1393 = vmatmul.mubr.bf16.gmra.mrb[0].mxu0 %v1352
  %v1394 = vpop.f32.mrb[0].mxu0
  %v1395 = vadd.f32 0.0, %v1394
  %v1396 = vpop.f32.mrb[0].mxu0
  %v1397 = vadd.f32 0.0, %v1396
  %v1398 = vpop.f32.mrb[0].mxu0
  %v1399 = vpop.f32.mrb[0].mxu0
  %1400 = vdwg.mxu0
  %v1401 = vadd.f32 %v1339, %v1395
  %v1402 = vadd.f32 %v1340, %v1397
  %1403 = vrot.lane.b32.xlu0 %v827, 15
  %v1404 = vpop.permute.xlu0 %1403
  %1405 = vrot.lane.b32.xlu0 %v828, 15
  %v1406 = vpop.permute.xlu0 %1405
  %v1407 = vsel %vm315, %v1404, %v1406
  %v1408 = vsel %vm315, %v1406, %v1404
  %v1409 = vsel %vm329, %v1408, 0.0
  %v1410 = vsel %vm330, %v1407, 0.0
  %v1411 = vpack.c.bf16 %v1409, %v1409
  %v1412 = vpack.c.bf16 %v1410, %v1410
  %v1414 = vsel %vm102, %v61, 0
  %v1417 = vsel %vm106, %v1411, 0
  %v1420 = vsel %vm106, %v1412, 0
  %1422 = vmatprep.subr.bf16.mxu0 %v1420
  %1423 = vmatpush1.bf16.msra.mxu0 %v1417
  %1424 = vmatprep.subr.bf16.mxu0 0
  %1425 = vmatpush1.bf16.msra.mxu0 0
  %1426 = vmatprep.subr.bf16.mxu0 0
  %1427 = vmatpush1.bf16.msra.mxu0 0
  %1428 = vmatprep.subr.bf16.mxu0 0
  %1429 = vmatpush1.bf16.msra.mxu0 0
  %1430 = vmatprep.subr.bf16.mxu0 0
  %1431 = vmatpush1.bf16.msra.mxu0 0
  %1432 = vmatprep.subr.bf16.mxu0 0
  %1433 = vmatpush1.bf16.msra.mxu0 0
  %1434 = vmatprep.subr.bf16.mxu0 0
  %1435 = vmatpush1.bf16.msra.mxu0 0
  %1436 = vmatprep.subr.bf16.mxu0 0
  %1437 = vmatpush1.bf16.msra.mxu0 0
  %1438 = vmatprep.subr.bf16.mxu0 0
  %1439 = vmatpush1.bf16.msra.mxu0 0
  %1440 = vmatprep.subr.bf16.mxu0 0
  %1441 = vmatpush1.bf16.msra.mxu0 0
  %1442 = vmatprep.subr.bf16.mxu0 0
  %1443 = vmatpush1.bf16.msra.mxu0 0
  %1444 = vmatprep.subr.bf16.mxu0 0
  %1445 = vmatpush1.bf16.msra.mxu0 0
  %1446 = vmatprep.subr.bf16.mxu0 0
  %1447 = vmatpush1.bf16.msra.mxu0 0
  %1448 = vmatprep.subr.bf16.mxu0 0
  %1449 = vmatpush1.bf16.msra.mxu0 0
  %1450 = vmatprep.subr.bf16.mxu0 0
  %1451 = vmatpush1.bf16.msra.mxu0 0
  %1452 = vmatprep.subr.bf16.mxu0 0
  %1453 = vmatpush1.bf16.msra.mxu0 0
  %1454 = vmatprep.mubr.bf16.mxu0 0
  %1455 = vmatmul.mubr.bf16.gmra.mrb[0].mxu0 %v1414
  %v1456 = vpop.f32.mrb[0].mxu0
  %v1457 = vadd.f32 0.0, %v1456
  %v1458 = vpop.f32.mrb[0].mxu0
  %v1459 = vadd.f32 0.0, %v1458
  %v1460 = vpop.f32.mrb[0].mxu0
  %v1461 = vpop.f32.mrb[0].mxu0
  %1462 = vdwg.mxu0
  %v1463 = vadd.f32 %v1401, %v1457
  %v1464 = vadd.f32 %v1402, %v1459
  %1465 = vrot.lane.b32.xlu0 %v827, 14
  %v1466 = vpop.permute.xlu0 %1465
  %1467 = vrot.lane.b32.xlu0 %v828, 14
  %v1468 = vpop.permute.xlu0 %1467
  %vm1469 = vcmp.lt.s32.totalorder %v167, 14
  %v1470 = vsel %vm1469, %v1466, %v1468
  %v1471 = vsel %vm1469, %v1468, %v1466
  %vm1472 = vmand %vm171, %vm1135
  %v1473 = vsel %vm1472, 1, 0
  %v1474 = vlaneseq
  %v1475 = vshrl.u32 %v1474, 7
  %v1476 = vsub.s32 0, %v1475
  %v1477 = vrot.slane %v1473, %v1476
  %v1478 = vlaneseq
  %v1479 = vshrl.u32 %v1478, 7
  %v1480 = vsub.s32 1, %v1479
  %v1481 = vrot.slane %v1473, %v1480
  %vm1482 = vcmp.eq.s32.totalorder %v1477, 1
  %vm1483 = vcmp.eq.s32.totalorder %v1481, 1
  %v1484 = vsel %vm1482, %v1471, 0.0
  %v1485 = vsel %vm1483, %v1470, 0.0
  %v1486 = vpack.c.bf16 %v1484, %v1484
  %v1487 = vpack.c.bf16 %v1485, %v1485
  %v1489 = vsel %vm102, %v62, 0
  %v1492 = vsel %vm106, %v1486, 0
  %v1495 = vsel %vm106, %v1487, 0
  %1497 = vmatprep.subr.bf16.mxu0 %v1495
  %1498 = vmatpush1.bf16.msra.mxu0 %v1492
  %1499 = vmatprep.subr.bf16.mxu0 0
  %1500 = vmatpush1.bf16.msra.mxu0 0
  %1501 = vmatprep.subr.bf16.mxu0 0
  %1502 = vmatpush1.bf16.msra.mxu0 0
  %1503 = vmatprep.subr.bf16.mxu0 0
  %1504 = vmatpush1.bf16.msra.mxu0 0
  %1505 = vmatprep.subr.bf16.mxu0 0
  %1506 = vmatpush1.bf16.msra.mxu0 0
  %1507 = vmatprep.subr.bf16.mxu0 0
  %1508 = vmatpush1.bf16.msra.mxu0 0
  %1509 = vmatprep.subr.bf16.mxu0 0
  %1510 = vmatpush1.bf16.msra.mxu0 0
  %1511 = vmatprep.subr.bf16.mxu0 0
  %1512 = vmatpush1.bf16.msra.mxu0 0
  %1513 = vmatprep.subr.bf16.mxu0 0
  %1514 = vmatpush1.bf16.msra.mxu0 0
  %1515 = vmatprep.subr.bf16.mxu0 0
  %1516 = vmatpush1.bf16.msra.mxu0 0
  %1517 = vmatprep.subr.bf16.mxu0 0
  %1518 = vmatpush1.bf16.msra.mxu0 0
  %1519 = vmatprep.subr.bf16.mxu0 0
  %1520 = vmatpush1.bf16.msra.mxu0 0
  %1521 = vmatprep.subr.bf16.mxu0 0
  %1522 = vmatpush1.bf16.msra.mxu0 0
  %1523 = vmatprep.subr.bf16.mxu0 0
  %1524 = vmatpush1.bf16.msra.mxu0 0
  %1525 = vmatprep.subr.bf16.mxu0 0
  %1526 = vmatpush1.bf16.msra.mxu0 0
  %1527 = vmatprep.subr.bf16.mxu0 0
  %1528 = vmatpush1.bf16.msra.mxu0 0
  %1529 = vmatprep.mubr.bf16.mxu0 0
  %1530 = vmatmul.mubr.bf16.gmra.mrb[0].mxu0 %v1489
  %v1531 = vpop.f32.mrb[0].mxu0
  %v1532 = vadd.f32 0.0, %v1531
  %v1533 = vpop.f32.mrb[0].mxu0
  %v1534 = vadd.f32 0.0, %v1533
  %v1535 = vpop.f32.mrb[0].mxu0
  %v1536 = vpop.f32.mrb[0].mxu0
  %1537 = vdwg.mxu0
  %v1538 = vadd.f32 %v1463, %v1532
  %v1539 = vadd.f32 %v1464, %v1534
  %1540 = vrot.lane.b32.xlu0 %v827, 2
  %v1541 = vpop.permute.xlu0 %1540
  %1542 = vrot.lane.b32.xlu0 %v828, 2
  %v1543 = vpop.permute.xlu0 %1542
  %vm1544 = vcmp.lt.s32.totalorder %v167, 2
  %v1545 = vsel %vm1544, %v1541, %v1543
  %v1546 = vsel %vm1544, %v1543, %v1541
  %v1547 = vsel %vm839, 1, 0
  %v1548 = vlaneseq
  %v1549 = vshrl.u32 %v1548, 7
  %v1550 = vsub.s32 0, %v1549
  %v1551 = vrot.slane %v1547, %v1550
  %v1552 = vlaneseq
  %v1553 = vshrl.u32 %v1552, 7
  %v1554 = vsub.s32 1, %v1553
  %v1555 = vrot.slane %v1547, %v1554
  %vm1556 = vcmp.eq.s32.totalorder %v1551, 1
  %vm1557 = vcmp.eq.s32.totalorder %v1555, 1
  %v1558 = vsel %vm1556, %v1546, 0.0
  %v1559 = vsel %vm1557, %v1545, 0.0
  %v1560 = vpack.c.bf16 %v1558, %v1558
  %v1561 = vpack.c.bf16 %v1559, %v1559
  %v1563 = vsel %vm102, %v63, 0
  %v1566 = vsel %vm106, %v1560, 0
  %v1569 = vsel %vm106, %v1561, 0
  %1571 = vmatprep.subr.bf16.mxu0 %v1569
  %1572 = vmatpush1.bf16.msra.mxu0 %v1566
  %1573 = vmatprep.subr.bf16.mxu0 0
  %1574 = vmatpush1.bf16.msra.mxu0 0
  %1575 = vmatprep.subr.bf16.mxu0 0
  %1576 = vmatpush1.bf16.msra.mxu0 0
  %1577 = vmatprep.subr.bf16.mxu0 0
  %1578 = vmatpush1.bf16.msra.mxu0 0
  %1579 = vmatprep.subr.bf16.mxu0 0
  %1580 = vmatpush1.bf16.msra.mxu0 0
  %1581 = vmatprep.subr.bf16.mxu0 0
  %1582 = vmatpush1.bf16.msra.mxu0 0
  %1583 = vmatprep.subr.bf16.mxu0 0
  %1584 = vmatpush1.bf16.msra.mxu0 0
  %1585 = vmatprep.subr.bf16.mxu0 0
  %1586 = vmatpush1.bf16.msra.mxu0 0
  %1587 = vmatprep.subr.bf16.mxu0 0
  %1588 = vmatpush1.bf16.msra.mxu0 0
  %1589 = vmatprep.subr.bf16.mxu0 0
  %1590 = vmatpush1.bf16.msra.mxu0 0
  %1591 = vmatprep.subr.bf16.mxu0 0
  %1592 = vmatpush1.bf16.msra.mxu0 0
  %1593 = vmatprep.subr.bf16.mxu0 0
  %1594 = vmatpush1.bf16.msra.mxu0 0
  %1595 = vmatprep.subr.bf16.mxu0 0
  %1596 = vmatpush1.bf16.msra.mxu0 0
  %1597 = vmatprep.subr.bf16.mxu0 0
  %1598 = vmatpush1.bf16.msra.mxu0 0
  %1599 = vmatprep.subr.bf16.mxu0 0
  %1600 = vmatpush1.bf16.msra.mxu0 0
  %1601 = vmatprep.subr.bf16.mxu0 0
  %1602 = vmatpush1.bf16.msra.mxu0 0
  %1603 = vmatprep.mubr.bf16.mxu0 0
  %1604 = vmatmul.mubr.bf16.gmra.mrb[0].mxu0 %v1563
  %v1605 = vpop.f32.mrb[0].mxu0
  %v1606 = vadd.f32 0.0, %v1605
  %v1607 = vpop.f32.mrb[0].mxu0
  %v1608 = vadd.f32 0.0, %v1607
  %v1609 = vpop.f32.mrb[0].mxu0
  %v1610 = vpop.f32.mrb[0].mxu0
  %1611 = vdwg.mxu0
  %v1612 = vadd.f32 %v1538, %v1606
  %v1613 = vadd.f32 %v1539, %v1608
  %1614 = vrot.lane.b32.xlu0 %v827, 1
  %v1615 = vpop.permute.xlu0 %1614
  %1616 = vrot.lane.b32.xlu0 %v828, 1
  %v1617 = vpop.permute.xlu0 %1616
  %v1618 = vsel %vm391, %v1615, %v1617
  %v1619 = vsel %vm391, %v1617, %v1615
  %v1620 = vsel %vm403, %v1619, 0.0
  %v1621 = vsel %vm404, %v1618, 0.0
  %v1622 = vpack.c.bf16 %v1620, %v1620
  %v1623 = vpack.c.bf16 %v1621, %v1621
  %v1625 = vsel %vm102, %v64, 0
  %v1628 = vsel %vm106, %v1622, 0
  %v1631 = vsel %vm106, %v1623, 0
  %1633 = vmatprep.subr.bf16.mxu0 %v1631
  %1634 = vmatpush1.bf16.msra.mxu0 %v1628
  %1635 = vmatprep.subr.bf16.mxu0 0
  %1636 = vmatpush1.bf16.msra.mxu0 0
  %1637 = vmatprep.subr.bf16.mxu0 0
  %1638 = vmatpush1.bf16.msra.mxu0 0
  %1639 = vmatprep.subr.bf16.mxu0 0
  %1640 = vmatpush1.bf16.msra.mxu0 0
  %1641 = vmatprep.subr.bf16.mxu0 0
  %1642 = vmatpush1.bf16.msra.mxu0 0
  %1643 = vmatprep.subr.bf16.mxu0 0
  %1644 = vmatpush1.bf16.msra.mxu0 0
  %1645 = vmatprep.subr.bf16.mxu0 0
  %1646 = vmatpush1.bf16.msra.mxu0 0
  %1647 = vmatprep.subr.bf16.mxu0 0
  %1648 = vmatpush1.bf16.msra.mxu0 0
  %1649 = vmatprep.subr.bf16.mxu0 0
  %1650 = vmatpush1.bf16.msra.mxu0 0
  %1651 = vmatprep.subr.bf16.mxu0 0
  %1652 = vmatpush1.bf16.msra.mxu0 0
  %1653 = vmatprep.subr.bf16.mxu0 0
  %1654 = vmatpush1.bf16.msra.mxu0 0
  %1655 = vmatprep.subr.bf16.mxu0 0
  %1656 = vmatpush1.bf16.msra.mxu0 0
  %1657 = vmatprep.subr.bf16.mxu0 0
  %1658 = vmatpush1.bf16.msra.mxu0 0
  %1659 = vmatprep.subr.bf16.mxu0 0
  %1660 = vmatpush1.bf16.msra.mxu0 0
  %1661 = vmatprep.subr.bf16.mxu0 0
  %1662 = vmatpush1.bf16.msra.mxu0 0
  %1663 = vmatprep.subr.bf16.mxu0 0
  %1664 = vmatpush1.bf16.msra.mxu0 0
  %1665 = vmatprep.mubr.bf16.mxu0 0
  %1666 = vmatmul.mubr.bf16.gmra.mrb[0].mxu0 %v1625
  %v1667 = vpop.f32.mrb[0].mxu0
  %v1668 = vadd.f32 0.0, %v1667
  %v1669 = vpop.f32.mrb[0].mxu0
  %v1670 = vadd.f32 0.0, %v1669
  %v1671 = vpop.f32.mrb[0].mxu0
  %v1672 = vpop.f32.mrb[0].mxu0
  %1673 = vdwg.mxu0
  %v1674 = vadd.f32 %v1612, %v1668
  %v1675 = vadd.f32 %v1613, %v1670
  %v1678 = vrot.slane %v461, 2
  %v1679 = vrot.slane %v462, 2
  %v1681 = vsel %vm102, %v65, 0
  %v1684 = vsel %vm106, %v1678, 0
  %v1687 = vsel %vm106, %v1679, 0
  %1689 = vmatprep.subr.bf16.mxu0 %v1687
  %1690 = vmatpush1.bf16.msra.mxu0 %v1684
  %1691 = vmatprep.subr.bf16.mxu0 0
  %1692 = vmatpush1.bf16.msra.mxu0 0
  %1693 = vmatprep.subr.bf16.mxu0 0
  %1694 = vmatpush1.bf16.msra.mxu0 0
  %1695 = vmatprep.subr.bf16.mxu0 0
  %1696 = vmatpush1.bf16.msra.mxu0 0
  %1697 = vmatprep.subr.bf16.mxu0 0
  %1698 = vmatpush1.bf16.msra.mxu0 0
  %1699 = vmatprep.subr.bf16.mxu0 0
  %1700 = vmatpush1.bf16.msra.mxu0 0
  %1701 = vmatprep.subr.bf16.mxu0 0
  %1702 = vmatpush1.bf16.msra.mxu0 0
  %1703 = vmatprep.subr.bf16.mxu0 0
  %1704 = vmatpush1.bf16.msra.mxu0 0
  %1705 = vmatprep.subr.bf16.mxu0 0
  %1706 = vmatpush1.bf16.msra.mxu0 0
  %1707 = vmatprep.subr.bf16.mxu0 0
  %1708 = vmatpush1.bf16.msra.mxu0 0
  %1709 = vmatprep.subr.bf16.mxu0 0
  %1710 = vmatpush1.bf16.msra.mxu0 0
  %1711 = vmatprep.subr.bf16.mxu0 0
  %1712 = vmatpush1.bf16.msra.mxu0 0
  %1713 = vmatprep.subr.bf16.mxu0 0
  %1714 = vmatpush1.bf16.msra.mxu0 0
  %1715 = vmatprep.subr.bf16.mxu0 0
  %1716 = vmatpush1.bf16.msra.mxu0 0
  %1717 = vmatprep.subr.bf16.mxu0 0
  %1718 = vmatpush1.bf16.msra.mxu0 0
  %1719 = vmatprep.subr.bf16.mxu0 0
  %1720 = vmatpush1.bf16.msra.mxu0 0
  %1721 = vmatprep.mubr.bf16.mxu0 0
  %1722 = vmatmul.mubr.bf16.gmra.mrb[0].mxu0 %v1681
  %v1723 = vpop.f32.mrb[0].mxu0
  %v1724 = vadd.f32 0.0, %v1723
  %v1725 = vpop.f32.mrb[0].mxu0
  %v1726 = vadd.f32 0.0, %v1725
  %v1727 = vpop.f32.mrb[0].mxu0
  %v1728 = vpop.f32.mrb[0].mxu0
  %1729 = vdwg.mxu0
  %v1730 = vadd.f32 %v1674, %v1724
  %v1731 = vadd.f32 %v1675, %v1726
  %1732 = vrot.lane.b32.xlu0 %v827, 127
  %v1733 = vpop.permute.xlu0 %1732
  %1734 = vrot.lane.b32.xlu0 %v828, 127
  %v1735 = vpop.permute.xlu0 %1734
  %v1736 = vsel %vm519, %v1733, %v1735
  %v1737 = vsel %vm519, %v1735, %v1733
  %v1738 = vsel %vm531, %v1736, 0.0
  %v1739 = vsel %vm532, %v1737, 0.0
  %v1740 = vpack.c.bf16 %v1738, %v1738
  %v1741 = vpack.c.bf16 %v1739, %v1739
  %v1743 = vsel %vm102, %v66, 0
  %v1746 = vsel %vm106, %v1740, 0
  %v1749 = vsel %vm106, %v1741, 0
  %1751 = vmatprep.subr.bf16.mxu0 %v1749
  %1752 = vmatpush1.bf16.msra.mxu0 %v1746
  %1753 = vmatprep.subr.bf16.mxu0 0
  %1754 = vmatpush1.bf16.msra.mxu0 0
  %1755 = vmatprep.subr.bf16.mxu0 0
  %1756 = vmatpush1.bf16.msra.mxu0 0
  %1757 = vmatprep.subr.bf16.mxu0 0
  %1758 = vmatpush1.bf16.msra.mxu0 0
  %1759 = vmatprep.subr.bf16.mxu0 0
  %1760 = vmatpush1.bf16.msra.mxu0 0
  %1761 = vmatprep.subr.bf16.mxu0 0
  %1762 = vmatpush1.bf16.msra.mxu0 0
  %1763 = vmatprep.subr.bf16.mxu0 0
  %1764 = vmatpush1.bf16.msra.mxu0 0
  %1765 = vmatprep.subr.bf16.mxu0 0
  %1766 = vmatpush1.bf16.msra.mxu0 0
  %1767 = vmatprep.subr.bf16.mxu0 0
  %1768 = vmatpush1.bf16.msra.mxu0 0
  %1769 = vmatprep.subr.bf16.mxu0 0
  %1770 = vmatpush1.bf16.msra.mxu0 0
  %1771 = vmatprep.subr.bf16.mxu0 0
  %1772 = vmatpush1.bf16.msra.mxu0 0
  %1773 = vmatprep.subr.bf16.mxu0 0
  %1774 = vmatpush1.bf16.msra.mxu0 0
  %1775 = vmatprep.subr.bf16.mxu0 0
  %1776 = vmatpush1.bf16.msra.mxu0 0
  %1777 = vmatprep.subr.bf16.mxu0 0
  %1778 = vmatpush1.bf16.msra.mxu0 0
  %1779 = vmatprep.subr.bf16.mxu0 0
  %1780 = vmatpush1.bf16.msra.mxu0 0
  %1781 = vmatprep.subr.bf16.mxu0 0
  %1782 = vmatpush1.bf16.msra.mxu0 0
  %1783 = vmatprep.mubr.bf16.mxu0 0
  %1784 = vmatmul.mubr.bf16.gmra.mrb[0].mxu0 %v1743
  %v1785 = vpop.f32.mrb[0].mxu0
  %v1786 = vadd.f32 0.0, %v1785
  %v1787 = vpop.f32.mrb[0].mxu0
  %v1788 = vadd.f32 0.0, %v1787
  %v1789 = vpop.f32.mrb[0].mxu0
  %v1790 = vpop.f32.mrb[0].mxu0
  %1791 = vdwg.mxu0
  %v1792 = vadd.f32 %v1730, %v1786
  %v1793 = vadd.f32 %v1731, %v1788
  %1794 = vrot.lane.b32.xlu0 %v827, 126
  %v1795 = vpop.permute.xlu0 %1794
  %1796 = vrot.lane.b32.xlu0 %v828, 126
  %v1797 = vpop.permute.xlu0 %1796
  %vm1798 = vcmp.lt.s32.totalorder %v167, 126
  %v1799 = vsel %vm1798, %v1795, %v1797
  %v1800 = vsel %vm1798, %v1797, %v1795
  %v1801 = vsel %vm1135, 1, 0
  %v1802 = vlaneseq
  %v1803 = vshrl.u32 %v1802, 7
  %v1804 = vsub.s32 0, %v1803
  %v1805 = vrot.slane %v1801, %v1804
  %v1806 = vlaneseq
  %v1807 = vshrl.u32 %v1806, 7
  %v1808 = vsub.s32 1, %v1807
  %v1809 = vrot.slane %v1801, %v1808
  %vm1810 = vcmp.eq.s32.totalorder %v1805, 1
  %vm1811 = vcmp.eq.s32.totalorder %v1809, 1
  %v1812 = vsel %vm1810, %v1799, 0.0
  %v1813 = vsel %vm1811, %v1800, 0.0
  %v1814 = vpack.c.bf16 %v1812, %v1812
  %v1815 = vpack.c.bf16 %v1813, %v1813
  %v1817 = vsel %vm102, %v67, 0
  %v1820 = vsel %vm106, %v1814, 0
  %v1823 = vsel %vm106, %v1815, 0
  %1825 = vmatprep.subr.bf16.mxu0 %v1823
  %1826 = vmatpush1.bf16.msra.mxu0 %v1820
  %1827 = vmatprep.subr.bf16.mxu0 0
  %1828 = vmatpush1.bf16.msra.mxu0 0
  %1829 = vmatprep.subr.bf16.mxu0 0
  %1830 = vmatpush1.bf16.msra.mxu0 0
  %1831 = vmatprep.subr.bf16.mxu0 0
  %1832 = vmatpush1.bf16.msra.mxu0 0
  %1833 = vmatprep.subr.bf16.mxu0 0
  %1834 = vmatpush1.bf16.msra.mxu0 0
  %1835 = vmatprep.subr.bf16.mxu0 0
  %1836 = vmatpush1.bf16.msra.mxu0 0
  %1837 = vmatprep.subr.bf16.mxu0 0
  %1838 = vmatpush1.bf16.msra.mxu0 0
  %1839 = vmatprep.subr.bf16.mxu0 0
  %1840 = vmatpush1.bf16.msra.mxu0 0
  %1841 = vmatprep.subr.bf16.mxu0 0
  %1842 = vmatpush1.bf16.msra.mxu0 0
  %1843 = vmatprep.subr.bf16.mxu0 0
  %1844 = vmatpush1.bf16.msra.mxu0 0
  %1845 = vmatprep.subr.bf16.mxu0 0
  %1846 = vmatpush1.bf16.msra.mxu0 0
  %1847 = vmatprep.subr.bf16.mxu0 0
  %1848 = vmatpush1.bf16.msra.mxu0 0
  %1849 = vmatprep.subr.bf16.mxu0 0
  %1850 = vmatpush1.bf16.msra.mxu0 0
  %1851 = vmatprep.subr.bf16.mxu0 0
  %1852 = vmatpush1.bf16.msra.mxu0 0
  %1853 = vmatprep.subr.bf16.mxu0 0
  %1854 = vmatpush1.bf16.msra.mxu0 0
  %1855 = vmatprep.subr.bf16.mxu0 0
  %1856 = vmatpush1.bf16.msra.mxu0 0
  %1857 = vmatprep.mubr.bf16.mxu0 0
  %1858 = vmatmul.mubr.bf16.gmra.mrb[0].mxu0 %v1817
  %v1859 = vpop.f32.mrb[0].mxu0
  %v1860 = vadd.f32 0.0, %v1859
  %v1861 = vpop.f32.mrb[0].mxu0
  %v1862 = vadd.f32 0.0, %v1861
  %v1863 = vpop.f32.mrb[0].mxu0
  %v1864 = vpop.f32.mrb[0].mxu0
  %1865 = vdwg.mxu0
  %v1866 = vadd.f32 %v1792, %v1860
  %v1867 = vadd.f32 %v1793, %v1862
  %1868 = vrot.lane.b32.xlu0 %v827, 114
  %v1869 = vpop.permute.xlu0 %1868
  %1870 = vrot.lane.b32.xlu0 %v828, 114
  %v1871 = vpop.permute.xlu0 %1870
  %vm1872 = vcmp.lt.s32.totalorder %v167, 114
  %v1873 = vsel %vm1872, %v1869, %v1871
  %v1874 = vsel %vm1872, %v1871, %v1869
  %vm1875 = vmand %vm596, %vm839
  %v1876 = vsel %vm1875, 1, 0
  %v1877 = vlaneseq
  %v1878 = vshrl.u32 %v1877, 7
  %v1879 = vsub.s32 0, %v1878
  %v1880 = vrot.slane %v1876, %v1879
  %v1881 = vlaneseq
  %v1882 = vshrl.u32 %v1881, 7
  %v1883 = vsub.s32 1, %v1882
  %v1884 = vrot.slane %v1876, %v1883
  %vm1885 = vcmp.eq.s32.totalorder %v1880, 1
  %vm1886 = vcmp.eq.s32.totalorder %v1884, 1
  %v1887 = vsel %vm1885, %v1873, 0.0
  %v1888 = vsel %vm1886, %v1874, 0.0
  %v1889 = vpack.c.bf16 %v1887, %v1887
  %v1890 = vpack.c.bf16 %v1888, %v1888
  %v1892 = vsel %vm102, %v68, 0
  %v1895 = vsel %vm106, %v1889, 0
  %v1898 = vsel %vm106, %v1890, 0
  %1900 = vmatprep.subr.bf16.mxu0 %v1898
  %1901 = vmatpush1.bf16.msra.mxu0 %v1895
  %1902 = vmatprep.subr.bf16.mxu0 0
  %1903 = vmatpush1.bf16.msra.mxu0 0
  %1904 = vmatprep.subr.bf16.mxu0 0
  %1905 = vmatpush1.bf16.msra.mxu0 0
  %1906 = vmatprep.subr.bf16.mxu0 0
  %1907 = vmatpush1.bf16.msra.mxu0 0
  %1908 = vmatprep.subr.bf16.mxu0 0
  %1909 = vmatpush1.bf16.msra.mxu0 0
  %1910 = vmatprep.subr.bf16.mxu0 0
  %1911 = vmatpush1.bf16.msra.mxu0 0
  %1912 = vmatprep.subr.bf16.mxu0 0
  %1913 = vmatpush1.bf16.msra.mxu0 0
  %1914 = vmatprep.subr.bf16.mxu0 0
  %1915 = vmatpush1.bf16.msra.mxu0 0
  %1916 = vmatprep.subr.bf16.mxu0 0
  %1917 = vmatpush1.bf16.msra.mxu0 0
  %1918 = vmatprep.subr.bf16.mxu0 0
  %1919 = vmatpush1.bf16.msra.mxu0 0
  %1920 = vmatprep.subr.bf16.mxu0 0
  %1921 = vmatpush1.bf16.msra.mxu0 0
  %1922 = vmatprep.subr.bf16.mxu0 0
  %1923 = vmatpush1.bf16.msra.mxu0 0
  %1924 = vmatprep.subr.bf16.mxu0 0
  %1925 = vmatpush1.bf16.msra.mxu0 0
  %1926 = vmatprep.subr.bf16.mxu0 0
  %1927 = vmatpush1.bf16.msra.mxu0 0
  %1928 = vmatprep.subr.bf16.mxu0 0
  %1929 = vmatpush1.bf16.msra.mxu0 0
  %1930 = vmatprep.subr.bf16.mxu0 0
  %1931 = vmatpush1.bf16.msra.mxu0 0
  %1932 = vmatprep.mubr.bf16.mxu0 0
  %1933 = vmatmul.mubr.bf16.gmra.mrb[0].mxu0 %v1892
  %v1934 = vpop.f32.mrb[0].mxu0
  %v1935 = vadd.f32 0.0, %v1934
  %v1936 = vpop.f32.mrb[0].mxu0
  %v1937 = vadd.f32 0.0, %v1936
  %v1938 = vpop.f32.mrb[0].mxu0
  %v1939 = vpop.f32.mrb[0].mxu0
  %1940 = vdwg.mxu0
  %v1941 = vadd.f32 %v1866, %v1935
  %v1942 = vadd.f32 %v1867, %v1937
  %1943 = vrot.lane.b32.xlu0 %v827, 113
  %v1944 = vpop.permute.xlu0 %1943
  %1945 = vrot.lane.b32.xlu0 %v828, 113
  %v1946 = vpop.permute.xlu0 %1945
  %v1947 = vsel %vm593, %v1944, %v1946
  %v1948 = vsel %vm593, %v1946, %v1944
  %v1949 = vsel %vm607, %v1947, 0.0
  %v1950 = vsel %vm608, %v1948, 0.0
  %v1951 = vpack.c.bf16 %v1949, %v1949
  %v1952 = vpack.c.bf16 %v1950, %v1950
  %v1954 = vsel %vm102, %v69, 0
  %v1957 = vsel %vm106, %v1951, 0
  %v1960 = vsel %vm106, %v1952, 0
  %1962 = vmatprep.subr.bf16.mxu0 %v1960
  %1963 = vmatpush1.bf16.msra.mxu0 %v1957
  %1964 = vmatprep.subr.bf16.mxu0 0
  %1965 = vmatpush1.bf16.msra.mxu0 0
  %1966 = vmatprep.subr.bf16.mxu0 0
  %1967 = vmatpush1.bf16.msra.mxu0 0
  %1968 = vmatprep.subr.bf16.mxu0 0
  %1969 = vmatpush1.bf16.msra.mxu0 0
  %1970 = vmatprep.subr.bf16.mxu0 0
  %1971 = vmatpush1.bf16.msra.mxu0 0
  %1972 = vmatprep.subr.bf16.mxu0 0
  %1973 = vmatpush1.bf16.msra.mxu0 0
  %1974 = vmatprep.subr.bf16.mxu0 0
  %1975 = vmatpush1.bf16.msra.mxu0 0
  %1976 = vmatprep.subr.bf16.mxu0 0
  %1977 = vmatpush1.bf16.msra.mxu0 0
  %1978 = vmatprep.subr.bf16.mxu0 0
  %1979 = vmatpush1.bf16.msra.mxu0 0
  %1980 = vmatprep.subr.bf16.mxu0 0
  %1981 = vmatpush1.bf16.msra.mxu0 0
  %1982 = vmatprep.subr.bf16.mxu0 0
  %1983 = vmatpush1.bf16.msra.mxu0 0
  %1984 = vmatprep.subr.bf16.mxu0 0
  %1985 = vmatpush1.bf16.msra.mxu0 0
  %1986 = vmatprep.subr.bf16.mxu0 0
  %1987 = vmatpush1.bf16.msra.mxu0 0
  %1988 = vmatprep.subr.bf16.mxu0 0
  %1989 = vmatpush1.bf16.msra.mxu0 0
  %1990 = vmatprep.subr.bf16.mxu0 0
  %1991 = vmatpush1.bf16.msra.mxu0 0
  %1992 = vmatprep.subr.bf16.mxu0 0
  %1993 = vmatpush1.bf16.msra.mxu0 0
  %1994 = vmatprep.mubr.bf16.mxu0 0
  %1995 = vmatmul.mubr.bf16.gmra.mrb[0].mxu0 %v1954
  %v1996 = vpop.f32.mrb[0].mxu0
  %v1997 = vadd.f32 0.0, %v1996
  %v1998 = vpop.f32.mrb[0].mxu0
  %v1999 = vadd.f32 0.0, %v1998
  %v2000 = vpop.f32.mrb[0].mxu0
  %v2001 = vpop.f32.mrb[0].mxu0
  %2002 = vdwg.mxu0
  %v2003 = vadd.f32 %v1941, %v1997
  %v2004 = vadd.f32 %v1942, %v1999
  %2005 = vrot.lane.b32.xlu0 %v827, 112
  %v2006 = vpop.permute.xlu0 %2005
  %2007 = vrot.lane.b32.xlu0 %v828, 112
  %v2008 = vpop.permute.xlu0 %2007
  %v2009 = vsel %vm669, %v2006, %v2008
  %v2010 = vsel %vm669, %v2008, %v2006
  %v2011 = vsel %vm681, %v2009, 0.0
  %v2012 = vsel %vm682, %v2010, 0.0
  %v2013 = vpack.c.bf16 %v2011, %v2011
  %v2014 = vpack.c.bf16 %v2012, %v2012
  %v2016 = vsel %vm102, %v70, 0
  %v2019 = vsel %vm106, %v2013, 0
  %v2022 = vsel %vm106, %v2014, 0
  %2024 = vmatprep.subr.bf16.mxu0 %v2022
  %2025 = vmatpush1.bf16.msra.mxu0 %v2019
  %2026 = vmatprep.subr.bf16.mxu0 0
  %2027 = vmatpush1.bf16.msra.mxu0 0
  %2028 = vmatprep.subr.bf16.mxu0 0
  %2029 = vmatpush1.bf16.msra.mxu0 0
  %2030 = vmatprep.subr.bf16.mxu0 0
  %2031 = vmatpush1.bf16.msra.mxu0 0
  %2032 = vmatprep.subr.bf16.mxu0 0
  %2033 = vmatpush1.bf16.msra.mxu0 0
  %2034 = vmatprep.subr.bf16.mxu0 0
  %2035 = vmatpush1.bf16.msra.mxu0 0
  %2036 = vmatprep.subr.bf16.mxu0 0
  %2037 = vmatpush1.bf16.msra.mxu0 0
  %2038 = vmatprep.subr.bf16.mxu0 0
  %2039 = vmatpush1.bf16.msra.mxu0 0
  %2040 = vmatprep.subr.bf16.mxu0 0
  %2041 = vmatpush1.bf16.msra.mxu0 0
  %2042 = vmatprep.subr.bf16.mxu0 0
  %2043 = vmatpush1.bf16.msra.mxu0 0
  %2044 = vmatprep.subr.bf16.mxu0 0
  %2045 = vmatpush1.bf16.msra.mxu0 0
  %2046 = vmatprep.subr.bf16.mxu0 0
  %2047 = vmatpush1.bf16.msra.mxu0 0
  %2048 = vmatprep.subr.bf16.mxu0 0
  %2049 = vmatpush1.bf16.msra.mxu0 0
  %2050 = vmatprep.subr.bf16.mxu0 0
  %2051 = vmatpush1.bf16.msra.mxu0 0
  %2052 = vmatprep.subr.bf16.mxu0 0
  %2053 = vmatpush1.bf16.msra.mxu0 0
  %2054 = vmatprep.subr.bf16.mxu0 0
  %2055 = vmatpush1.bf16.msra.mxu0 0
  %2056 = vmatprep.mubr.bf16.mxu0 0
  %2057 = vmatmul.mubr.bf16.gmra.mrb[0].mxu0 %v2016
  %v2058 = vpop.f32.mrb[0].mxu0
  %v2059 = vadd.f32 0.0, %v2058
  %v2060 = vpop.f32.mrb[0].mxu0
  %v2061 = vadd.f32 0.0, %v2060
  %v2062 = vpop.f32.mrb[0].mxu0
  %v2063 = vpop.f32.mrb[0].mxu0
  %2064 = vdwg.mxu0
  %v2065 = vadd.f32 %v2003, %v2059
  %v2066 = vadd.f32 %v2004, %v2061
  %2067 = vrot.lane.b32.xlu0 %v827, 111
  %v2068 = vpop.permute.xlu0 %2067
  %2069 = vrot.lane.b32.xlu0 %v828, 111
  %v2070 = vpop.permute.xlu0 %2069
  %v2071 = vsel %vm743, %v2068, %v2070
  %v2072 = vsel %vm743, %v2070, %v2068
  %v2073 = vsel %vm756, %v2071, 0.0
  %v2074 = vsel %vm757, %v2072, 0.0
  %v2075 = vpack.c.bf16 %v2073, %v2073
  %v2076 = vpack.c.bf16 %v2074, %v2074
  %v2078 = vsel %vm102, %v71, 0
  %v2081 = vsel %vm106, %v2075, 0
  %v2084 = vsel %vm106, %v2076, 0
  %2086 = vmatprep.subr.bf16.mxu0 %v2084
  %2087 = vmatpush1.bf16.msra.mxu0 %v2081
  %2088 = vmatprep.subr.bf16.mxu0 0
  %2089 = vmatpush1.bf16.msra.mxu0 0
  %2090 = vmatprep.subr.bf16.mxu0 0
  %2091 = vmatpush1.bf16.msra.mxu0 0
  %2092 = vmatprep.subr.bf16.mxu0 0
  %2093 = vmatpush1.bf16.msra.mxu0 0
  %2094 = vmatprep.subr.bf16.mxu0 0
  %2095 = vmatpush1.bf16.msra.mxu0 0
  %2096 = vmatprep.subr.bf16.mxu0 0
  %2097 = vmatpush1.bf16.msra.mxu0 0
  %2098 = vmatprep.subr.bf16.mxu0 0
  %2099 = vmatpush1.bf16.msra.mxu0 0
  %2100 = vmatprep.subr.bf16.mxu0 0
  %2101 = vmatpush1.bf16.msra.mxu0 0
  %2102 = vmatprep.subr.bf16.mxu0 0
  %2103 = vmatpush1.bf16.msra.mxu0 0
  %2104 = vmatprep.subr.bf16.mxu0 0
  %2105 = vmatpush1.bf16.msra.mxu0 0
  %2106 = vmatprep.subr.bf16.mxu0 0
  %2107 = vmatpush1.bf16.msra.mxu0 0
  %2108 = vmatprep.subr.bf16.mxu0 0
  %2109 = vmatpush1.bf16.msra.mxu0 0
  %2110 = vmatprep.subr.bf16.mxu0 0
  %2111 = vmatpush1.bf16.msra.mxu0 0
  %2112 = vmatprep.subr.bf16.mxu0 0
  %2113 = vmatpush1.bf16.msra.mxu0 0
  %2114 = vmatprep.subr.bf16.mxu0 0
  %2115 = vmatpush1.bf16.msra.mxu0 0
  %2116 = vmatprep.subr.bf16.mxu0 0
  %2117 = vmatpush1.bf16.msra.mxu0 0
  %2118 = vmatprep.mubr.bf16.mxu0 0
  %2119 = vmatmul.mubr.bf16.gmra.mrb[0].mxu0 %v2078
  %v2120 = vpop.f32.mrb[0].mxu0
  %v2121 = vadd.f32 0.0, %v2120
  %v2122 = vpop.f32.mrb[0].mxu0
  %v2123 = vadd.f32 0.0, %v2122
  %v2124 = vpop.f32.mrb[0].mxu0
  %v2125 = vpop.f32.mrb[0].mxu0
  %2126 = vdwg.mxu0
  %v2127 = vadd.f32 %v2065, %v2121
  %v2128 = vadd.f32 %v2066, %v2123
  %2129 = vrot.lane.b32.xlu0 %v827, 110
  %v2130 = vpop.permute.xlu0 %2129
  %2131 = vrot.lane.b32.xlu0 %v828, 110
  %v2132 = vpop.permute.xlu0 %2131
  %vm2133 = vcmp.lt.s32.totalorder %v167, 110
  %v2134 = vsel %vm2133, %v2130, %v2132
  %v2135 = vsel %vm2133, %v2132, %v2130
  %vm2136 = vmand %vm596, %vm1135
  %v2137 = vsel %vm2136, 1, 0
  %v2138 = vlaneseq
  %v2139 = vshrl.u32 %v2138, 7
  %v2140 = vsub.s32 0, %v2139
  %v2141 = vrot.slane %v2137, %v2140
  %v2142 = vlaneseq
  %v2143 = vshrl.u32 %v2142, 7
  %v2144 = vsub.s32 1, %v2143
  %v2145 = vrot.slane %v2137, %v2144
  %vm2146 = vcmp.eq.s32.totalorder %v2141, 1
  %vm2147 = vcmp.eq.s32.totalorder %v2145, 1
  %v2148 = vsel %vm2146, %v2134, 0.0
  %v2149 = vsel %vm2147, %v2135, 0.0
  %v2150 = vpack.c.bf16 %v2148, %v2148
  %v2151 = vpack.c.bf16 %v2149, %v2149
  %v2153 = vsel %vm102, %v72, 0
  %v2156 = vsel %vm106, %v2150, 0
  %v2159 = vsel %vm106, %v2151, 0
  %2161 = vmatprep.subr.bf16.mxu0 %v2159
  %2162 = vmatpush1.bf16.msra.mxu0 %v2156
  %2163 = vmatprep.subr.bf16.mxu0 0
  %2164 = vmatpush1.bf16.msra.mxu0 0
  %2165 = vmatprep.subr.bf16.mxu0 0
  %2166 = vmatpush1.bf16.msra.mxu0 0
  %2167 = vmatprep.subr.bf16.mxu0 0
  %2168 = vmatpush1.bf16.msra.mxu0 0
  %2169 = vmatprep.subr.bf16.mxu0 0
  %2170 = vmatpush1.bf16.msra.mxu0 0
  %2171 = vmatprep.subr.bf16.mxu0 0
  %2172 = vmatpush1.bf16.msra.mxu0 0
  %2173 = vmatprep.subr.bf16.mxu0 0
  %2174 = vmatpush1.bf16.msra.mxu0 0
  %2175 = vmatprep.subr.bf16.mxu0 0
  %2176 = vmatpush1.bf16.msra.mxu0 0
  %2177 = vmatprep.subr.bf16.mxu0 0
  %2178 = vmatpush1.bf16.msra.mxu0 0
  %2179 = vmatprep.subr.bf16.mxu0 0
  %2180 = vmatpush1.bf16.msra.mxu0 0
  %2181 = vmatprep.subr.bf16.mxu0 0
  %2182 = vmatpush1.bf16.msra.mxu0 0
  %2183 = vmatprep.subr.bf16.mxu0 0
  %2184 = vmatpush1.bf16.msra.mxu0 0
  %2185 = vmatprep.subr.bf16.mxu0 0
  %2186 = vmatpush1.bf16.msra.mxu0 0
  %2187 = vmatprep.subr.bf16.mxu0 0
  %2188 = vmatpush1.bf16.msra.mxu0 0
  %2189 = vmatprep.subr.bf16.mxu0 0
  %2190 = vmatpush1.bf16.msra.mxu0 0
  %2191 = vmatprep.subr.bf16.mxu0 0
  %2192 = vmatpush1.bf16.msra.mxu0 0
  %2193 = vmatprep.mubr.bf16.mxu0 0
  %2194 = vmatmul.mubr.bf16.gmra.mrb[0].mxu0 %v2153
  %v2195 = vpop.f32.mrb[0].mxu0
  %v2196 = vadd.f32 0.0, %v2195
  %v2197 = vpop.f32.mrb[0].mxu0
  %v2198 = vadd.f32 0.0, %v2197
  %v2199 = vpop.f32.mrb[0].mxu0
  %v2200 = vpop.f32.mrb[0].mxu0
  %2201 = vdwg.mxu0
  %v2202 = vadd.f32 %v2127, %v2196
  %v2203 = vadd.f32 %v2128, %v2198
  %2204 = vrot.lane.b32.xlu0 %v827, 98
  %v2205 = vpop.permute.xlu0 %2204
  %2206 = vrot.lane.b32.xlu0 %v828, 98
  %v2207 = vpop.permute.xlu0 %2206
  %vm2208 = vcmp.lt.s32.totalorder %v167, 98
  %v2209 = vsel %vm2208, %v2205, %v2207
  %v2210 = vsel %vm2208, %v2207, %v2205
  %vm2211 = vcmp.lt.s32.totalorder %v36, 14
  %vm2212 = vmand %vm2211, %vm839
  %v2213 = vsel %vm2212, 1, 0
  %v2214 = vlaneseq
  %v2215 = vshrl.u32 %v2214, 7
  %v2216 = vsub.s32 0, %v2215
  %v2217 = vrot.slane %v2213, %v2216
  %v2218 = vlaneseq
  %v2219 = vshrl.u32 %v2218, 7
  %v2220 = vsub.s32 1, %v2219
  %v2221 = vrot.slane %v2213, %v2220
  %vm2222 = vcmp.eq.s32.totalorder %v2217, 1
  %vm2223 = vcmp.eq.s32.totalorder %v2221, 1
  %v2224 = vsel %vm2222, %v2209, 0.0
  %v2225 = vsel %vm2223, %v2210, 0.0
  %v2226 = vpack.c.bf16 %v2224, %v2224
  %v2227 = vpack.c.bf16 %v2225, %v2225
  %v2229 = vsel %vm102, %v73, 0
  %v2232 = vsel %vm106, %v2226, 0
  %v2235 = vsel %vm106, %v2227, 0
  %2237 = vmatprep.subr.bf16.mxu0 %v2235
  %2238 = vmatpush1.bf16.msra.mxu0 %v2232
  %2239 = vmatprep.subr.bf16.mxu0 0
  %2240 = vmatpush1.bf16.msra.mxu0 0
  %2241 = vmatprep.subr.bf16.mxu0 0
  %2242 = vmatpush1.bf16.msra.mxu0 0
  %2243 = vmatprep.subr.bf16.mxu0 0
  %2244 = vmatpush1.bf16.msra.mxu0 0
  %2245 = vmatprep.subr.bf16.mxu0 0
  %2246 = vmatpush1.bf16.msra.mxu0 0
  %2247 = vmatprep.subr.bf16.mxu0 0
  %2248 = vmatpush1.bf16.msra.mxu0 0
  %2249 = vmatprep.subr.bf16.mxu0 0
  %2250 = vmatpush1.bf16.msra.mxu0 0
  %2251 = vmatprep.subr.bf16.mxu0 0
  %2252 = vmatpush1.bf16.msra.mxu0 0
  %2253 = vmatprep.subr.bf16.mxu0 0
  %2254 = vmatpush1.bf16.msra.mxu0 0
  %2255 = vmatprep.subr.bf16.mxu0 0
  %2256 = vmatpush1.bf16.msra.mxu0 0
  %2257 = vmatprep.subr.bf16.mxu0 0
  %2258 = vmatpush1.bf16.msra.mxu0 0
  %2259 = vmatprep.subr.bf16.mxu0 0
  %2260 = vmatpush1.bf16.msra.mxu0 0
  %2261 = vmatprep.subr.bf16.mxu0 0
  %2262 = vmatpush1.bf16.msra.mxu0 0
  %2263 = vmatprep.subr.bf16.mxu0 0
  %2264 = vmatpush1.bf16.msra.mxu0 0
  %2265 = vmatprep.subr.bf16.mxu0 0
  %2266 = vmatpush1.bf16.msra.mxu0 0
  %2267 = vmatprep.subr.bf16.mxu0 0
  %2268 = vmatpush1.bf16.msra.mxu0 0
  %2269 = vmatprep.mubr.bf16.mxu0 0
  %2270 = vmatmul.mubr.bf16.gmra.mrb[0].mxu0 %v2229
  %v2271 = vpop.f32.mrb[0].mxu0
  %v2272 = vadd.f32 0.0, %v2271
  %v2273 = vpop.f32.mrb[0].mxu0
  %v2274 = vadd.f32 0.0, %v2273
  %v2275 = vpop.f32.mrb[0].mxu0
  %v2276 = vpop.f32.mrb[0].mxu0
  %2277 = vdwg.mxu0
  %v2278 = vadd.f32 %v2202, %v2272
  %v2279 = vadd.f32 %v2203, %v2274
  %2280 = vrot.lane.b32.xlu0 %v827, 97
  %v2281 = vpop.permute.xlu0 %2280
  %2282 = vrot.lane.b32.xlu0 %v828, 97
  %v2283 = vpop.permute.xlu0 %2282
  %vm2284 = vcmp.lt.s32.totalorder %v167, 97
  %v2285 = vsel %vm2284, %v2281, %v2283
  %v2286 = vsel %vm2284, %v2283, %v2281
  %vm2287 = vmand %vm2211, %vm172
  %v2288 = vsel %vm2287, 1, 0
  %v2289 = vlaneseq
  %v2290 = vshrl.u32 %v2289, 7
  %v2291 = vsub.s32 0, %v2290
  %v2292 = vrot.slane %v2288, %v2291
  %v2293 = vlaneseq
  %v2294 = vshrl.u32 %v2293, 7
  %v2295 = vsub.s32 1, %v2294
  %v2296 = vrot.slane %v2288, %v2295
  %vm2297 = vcmp.eq.s32.totalorder %v2292, 1
  %vm2298 = vcmp.eq.s32.totalorder %v2296, 1
  %v2299 = vsel %vm2297, %v2285, 0.0
  %v2300 = vsel %vm2298, %v2286, 0.0
  %v2301 = vpack.c.bf16 %v2299, %v2299
  %v2302 = vpack.c.bf16 %v2300, %v2300
  %v2304 = vsel %vm102, %v74, 0
  %v2307 = vsel %vm106, %v2301, 0
  %v2310 = vsel %vm106, %v2302, 0
  %2312 = vmatprep.subr.bf16.mxu0 %v2310
  %2313 = vmatpush1.bf16.msra.mxu0 %v2307
  %2314 = vmatprep.subr.bf16.mxu0 0
  %2315 = vmatpush1.bf16.msra.mxu0 0
  %2316 = vmatprep.subr.bf16.mxu0 0
  %2317 = vmatpush1.bf16.msra.mxu0 0
  %2318 = vmatprep.subr.bf16.mxu0 0
  %2319 = vmatpush1.bf16.msra.mxu0 0
  %2320 = vmatprep.subr.bf16.mxu0 0
  %2321 = vmatpush1.bf16.msra.mxu0 0
  %2322 = vmatprep.subr.bf16.mxu0 0
  %2323 = vmatpush1.bf16.msra.mxu0 0
  %2324 = vmatprep.subr.bf16.mxu0 0
  %2325 = vmatpush1.bf16.msra.mxu0 0
  %2326 = vmatprep.subr.bf16.mxu0 0
  %2327 = vmatpush1.bf16.msra.mxu0 0
  %2328 = vmatprep.subr.bf16.mxu0 0
  %2329 = vmatpush1.bf16.msra.mxu0 0
  %2330 = vmatprep.subr.bf16.mxu0 0
  %2331 = vmatpush1.bf16.msra.mxu0 0
  %2332 = vmatprep.subr.bf16.mxu0 0
  %2333 = vmatpush1.bf16.msra.mxu0 0
  %2334 = vmatprep.subr.bf16.mxu0 0
  %2335 = vmatpush1.bf16.msra.mxu0 0
  %2336 = vmatprep.subr.bf16.mxu0 0
  %2337 = vmatpush1.bf16.msra.mxu0 0
  %2338 = vmatprep.subr.bf16.mxu0 0
  %2339 = vmatpush1.bf16.msra.mxu0 0
  %2340 = vmatprep.subr.bf16.mxu0 0
  %2341 = vmatpush1.bf16.msra.mxu0 0
  %2342 = vmatprep.subr.bf16.mxu0 0
  %2343 = vmatpush1.bf16.msra.mxu0 0
  %2344 = vmatprep.mubr.bf16.mxu0 0
  %2345 = vmatmul.mubr.bf16.gmra.mrb[0].mxu0 %v2304
  %v2346 = vpop.f32.mrb[0].mxu0
  %v2347 = vadd.f32 0.0, %v2346
  %v2348 = vpop.f32.mrb[0].mxu0
  %v2349 = vadd.f32 0.0, %v2348
  %v2350 = vpop.f32.mrb[0].mxu0
  %v2351 = vpop.f32.mrb[0].mxu0
  %2352 = vdwg.mxu0
  %v2353 = vadd.f32 %v2278, %v2347
  %v2354 = vadd.f32 %v2279, %v2349
  %2355 = vrot.lane.b32.xlu0 %v827, 96
  %v2356 = vpop.permute.xlu0 %2355
  %2357 = vrot.lane.b32.xlu0 %v828, 96
  %v2358 = vpop.permute.xlu0 %2357
  %vm2359 = vcmp.lt.s32.totalorder %v167, 96
  %v2360 = vsel %vm2359, %v2356, %v2358
  %v2361 = vsel %vm2359, %v2358, %v2356
  %v2362 = vsel %vm2211, 1, 0
  %v2363 = vlaneseq
  %v2364 = vshrl.u32 %v2363, 7
  %v2365 = vsub.s32 0, %v2364
  %v2366 = vrot.slane %v2362, %v2365
  %v2367 = vlaneseq
  %v2368 = vshrl.u32 %v2367, 7
  %v2369 = vsub.s32 1, %v2368
  %v2370 = vrot.slane %v2362, %v2369
  %vm2371 = vcmp.eq.s32.totalorder %v2366, 1
  %vm2372 = vcmp.eq.s32.totalorder %v2370, 1
  %v2373 = vsel %vm2371, %v2360, 0.0
  %v2374 = vsel %vm2372, %v2361, 0.0
  %v2375 = vpack.c.bf16 %v2373, %v2373
  %v2376 = vpack.c.bf16 %v2374, %v2374
  %v2378 = vsel %vm102, %v75, 0
  %v2381 = vsel %vm106, %v2375, 0
  %v2384 = vsel %vm106, %v2376, 0
  %2386 = vmatprep.subr.bf16.mxu0 %v2384
  %2387 = vmatpush1.bf16.msra.mxu0 %v2381
  %2388 = vmatprep.subr.bf16.mxu0 0
  %2389 = vmatpush1.bf16.msra.mxu0 0
  %2390 = vmatprep.subr.bf16.mxu0 0
  %2391 = vmatpush1.bf16.msra.mxu0 0
  %2392 = vmatprep.subr.bf16.mxu0 0
  %2393 = vmatpush1.bf16.msra.mxu0 0
  %2394 = vmatprep.subr.bf16.mxu0 0
  %2395 = vmatpush1.bf16.msra.mxu0 0
  %2396 = vmatprep.subr.bf16.mxu0 0
  %2397 = vmatpush1.bf16.msra.mxu0 0
  %2398 = vmatprep.subr.bf16.mxu0 0
  %2399 = vmatpush1.bf16.msra.mxu0 0
  %2400 = vmatprep.subr.bf16.mxu0 0
  %2401 = vmatpush1.bf16.msra.mxu0 0
  %2402 = vmatprep.subr.bf16.mxu0 0
  %2403 = vmatpush1.bf16.msra.mxu0 0
  %2404 = vmatprep.subr.bf16.mxu0 0
  %2405 = vmatpush1.bf16.msra.mxu0 0
  %2406 = vmatprep.subr.bf16.mxu0 0
  %2407 = vmatpush1.bf16.msra.mxu0 0
  %2408 = vmatprep.subr.bf16.mxu0 0
  %2409 = vmatpush1.bf16.msra.mxu0 0
  %2410 = vmatprep.subr.bf16.mxu0 0
  %2411 = vmatpush1.bf16.msra.mxu0 0
  %2412 = vmatprep.subr.bf16.mxu0 0
  %2413 = vmatpush1.bf16.msra.mxu0 0
  %2414 = vmatprep.subr.bf16.mxu0 0
  %2415 = vmatpush1.bf16.msra.mxu0 0
  %2416 = vmatprep.subr.bf16.mxu0 0
  %2417 = vmatpush1.bf16.msra.mxu0 0
  %2418 = vmatprep.mubr.bf16.mxu0 0
  %2419 = vmatmul.mubr.bf16.gmra.mrb[0].mxu0 %v2378
  %v2420 = vpop.f32.mrb[0].mxu0
  %v2421 = vadd.f32 0.0, %v2420
  %v2422 = vpop.f32.mrb[0].mxu0
  %v2423 = vadd.f32 0.0, %v2422
  %v2424 = vpop.f32.mrb[0].mxu0
  %v2425 = vpop.f32.mrb[0].mxu0
  %2426 = vdwg.mxu0
  %v2427 = vadd.f32 %v2353, %v2421
  %v2428 = vadd.f32 %v2354, %v2423
  %2429 = vrot.lane.b32.xlu0 %v827, 95
  %v2430 = vpop.permute.xlu0 %2429
  %2431 = vrot.lane.b32.xlu0 %v828, 95
  %v2432 = vpop.permute.xlu0 %2431
  %vm2433 = vcmp.lt.s32.totalorder %v167, 95
  %v2434 = vsel %vm2433, %v2430, %v2432
  %v2435 = vsel %vm2433, %v2432, %v2430
  %vm2436 = vmand %vm2211, %vm318
  %v2437 = vsel %vm2436, 1, 0
  %v2438 = vlaneseq
  %v2439 = vshrl.u32 %v2438, 7
  %v2440 = vsub.s32 0, %v2439
  %v2441 = vrot.slane %v2437, %v2440
  %v2442 = vlaneseq
  %v2443 = vshrl.u32 %v2442, 7
  %v2444 = vsub.s32 1, %v2443
  %v2445 = vrot.slane %v2437, %v2444
  %vm2446 = vcmp.eq.s32.totalorder %v2441, 1
  %vm2447 = vcmp.eq.s32.totalorder %v2445, 1
  %v2448 = vsel %vm2446, %v2434, 0.0
  %v2449 = vsel %vm2447, %v2435, 0.0
  %v2450 = vpack.c.bf16 %v2448, %v2448
  %v2451 = vpack.c.bf16 %v2449, %v2449
  %v2453 = vsel %vm102, %v76, 0
  %v2456 = vsel %vm106, %v2450, 0
  %v2459 = vsel %vm106, %v2451, 0
  %2461 = vmatprep.subr.bf16.mxu0 %v2459
  %2462 = vmatpush1.bf16.msra.mxu0 %v2456
  %2463 = vmatprep.subr.bf16.mxu0 0
  %2464 = vmatpush1.bf16.msra.mxu0 0
  %2465 = vmatprep.subr.bf16.mxu0 0
  %2466 = vmatpush1.bf16.msra.mxu0 0
  %2467 = vmatprep.subr.bf16.mxu0 0
  %2468 = vmatpush1.bf16.msra.mxu0 0
  %2469 = vmatprep.subr.bf16.mxu0 0
  %2470 = vmatpush1.bf16.msra.mxu0 0
  %2471 = vmatprep.subr.bf16.mxu0 0
  %2472 = vmatpush1.bf16.msra.mxu0 0
  %2473 = vmatprep.subr.bf16.mxu0 0
  %2474 = vmatpush1.bf16.msra.mxu0 0
  %2475 = vmatprep.subr.bf16.mxu0 0
  %2476 = vmatpush1.bf16.msra.mxu0 0
  %2477 = vmatprep.subr.bf16.mxu0 0
  %2478 = vmatpush1.bf16.msra.mxu0 0
  %2479 = vmatprep.subr.bf16.mxu0 0
  %2480 = vmatpush1.bf16.msra.mxu0 0
  %2481 = vmatprep.subr.bf16.mxu0 0
  %2482 = vmatpush1.bf16.msra.mxu0 0
  %2483 = vmatprep.subr.bf16.mxu0 0
  %2484 = vmatpush1.bf16.msra.mxu0 0
  %2485 = vmatprep.subr.bf16.mxu0 0
  %2486 = vmatpush1.bf16.msra.mxu0 0
  %2487 = vmatprep.subr.bf16.mxu0 0
  %2488 = vmatpush1.bf16.msra.mxu0 0
  %2489 = vmatprep.subr.bf16.mxu0 0
  %2490 = vmatpush1.bf16.msra.mxu0 0
  %2491 = vmatprep.subr.bf16.mxu0 0
  %2492 = vmatpush1.bf16.msra.mxu0 0
  %2493 = vmatprep.mubr.bf16.mxu0 0
  %2494 = vmatmul.mubr.bf16.gmra.mrb[0].mxu0 %v2453
  %v2495 = vpop.f32.mrb[0].mxu0
  %v2496 = vadd.f32 0.0, %v2495
  %v2497 = vpop.f32.mrb[0].mxu0
  %v2498 = vadd.f32 0.0, %v2497
  %v2499 = vpop.f32.mrb[0].mxu0
  %v2500 = vpop.f32.mrb[0].mxu0
  %2501 = vdwg.mxu0
  %v2502 = vadd.f32 %v2427, %v2496
  %v2503 = vadd.f32 %v2428, %v2498
  %2504 = vrot.lane.b32.xlu0 %v827, 94
  %v2505 = vpop.permute.xlu0 %2504
  %2506 = vrot.lane.b32.xlu0 %v828, 94
  %v2507 = vpop.permute.xlu0 %2506
  %vm2508 = vcmp.lt.s32.totalorder %v167, 94
  %v2509 = vsel %vm2508, %v2505, %v2507
  %v2510 = vsel %vm2508, %v2507, %v2505
  %vm2511 = vmand %vm2211, %vm1135
  %v2512 = vsel %vm2511, 1, 0
  %v2513 = vlaneseq
  %v2514 = vshrl.u32 %v2513, 7
  %v2515 = vsub.s32 0, %v2514
  %v2516 = vrot.slane %v2512, %v2515
  %v2517 = vlaneseq
  %v2518 = vshrl.u32 %v2517, 7
  %v2519 = vsub.s32 1, %v2518
  %v2520 = vrot.slane %v2512, %v2519
  %vm2521 = vcmp.eq.s32.totalorder %v2516, 1
  %vm2522 = vcmp.eq.s32.totalorder %v2520, 1
  %v2523 = vsel %vm2521, %v2509, 0.0
  %v2524 = vsel %vm2522, %v2510, 0.0
  %v2525 = vpack.c.bf16 %v2523, %v2523
  %v2526 = vpack.c.bf16 %v2524, %v2524
  %v2528 = vsel %vm102, %v77, 0
  %v2531 = vsel %vm106, %v2525, 0
  %v2534 = vsel %vm106, %v2526, 0
  %2536 = vmatprep.subr.bf16.mxu0 %v2534
  %2537 = vmatpush1.bf16.msra.mxu0 %v2531
  %2538 = vmatprep.subr.bf16.mxu0 0
  %2539 = vmatpush1.bf16.msra.mxu0 0
  %2540 = vmatprep.subr.bf16.mxu0 0
  %2541 = vmatpush1.bf16.msra.mxu0 0
  %2542 = vmatprep.subr.bf16.mxu0 0
  %2543 = vmatpush1.bf16.msra.mxu0 0
  %2544 = vmatprep.subr.bf16.mxu0 0
  %2545 = vmatpush1.bf16.msra.mxu0 0
  %2546 = vmatprep.subr.bf16.mxu0 0
  %2547 = vmatpush1.bf16.msra.mxu0 0
  %2548 = vmatprep.subr.bf16.mxu0 0
  %2549 = vmatpush1.bf16.msra.mxu0 0
  %2550 = vmatprep.subr.bf16.mxu0 0
  %2551 = vmatpush1.bf16.msra.mxu0 0
  %2552 = vmatprep.subr.bf16.mxu0 0
  %2553 = vmatpush1.bf16.msra.mxu0 0
  %2554 = vmatprep.subr.bf16.mxu0 0
  %2555 = vmatpush1.bf16.msra.mxu0 0
  %2556 = vmatprep.subr.bf16.mxu0 0
  %2557 = vmatpush1.bf16.msra.mxu0 0
  %2558 = vmatprep.subr.bf16.mxu0 0
  %2559 = vmatpush1.bf16.msra.mxu0 0
  %2560 = vmatprep.subr.bf16.mxu0 0
  %2561 = vmatpush1.bf16.msra.mxu0 0
  %2562 = vmatprep.subr.bf16.mxu0 0
  %2563 = vmatpush1.bf16.msra.mxu0 0
  %2564 = vmatprep.subr.bf16.mxu0 0
  %2565 = vmatpush1.bf16.msra.mxu0 0
  %2566 = vmatprep.subr.bf16.mxu0 0
  %2567 = vmatpush1.bf16.msra.mxu0 0
  %2568 = vmatprep.mubr.bf16.mxu0 0
  %2569 = vmatmul.mubr.bf16.gmra.mrb[0].mxu0 %v2528
  %v2570 = vpop.f32.mrb[0].mxu0
  %v2571 = vadd.f32 0.0, %v2570
  %v2572 = vpop.f32.mrb[0].mxu0
  %v2573 = vadd.f32 0.0, %v2572
  %v2574 = vpop.f32.mrb[0].mxu0
  %v2575 = vpop.f32.mrb[0].mxu0
  %2576 = vdwg.mxu0
  %v2577 = vadd.f32 %v2502, %v2571
  %v2578 = vadd.f32 %v2503, %v2573
  %2580 = vset.pattern.permute.xlu0 0
  %2581 = vperm.xlu0 %2580, %v78
  %v2582 = vpop.permute.xlu0 %2581
  %v2584 = vadd.f32 %v2577, %v2582
  %v2585 = vadd.f32 %v2578, %v2582
  %v2586 = vmax.f32 %v2584, 0.0
  %v2587 = vmax.f32 %v2585, 0.0
  %2588 = vst [vmem:[%s10 + $0x20] sm:$0xff] %v2586
  %2589 = vst [vmem:[%s10 + $0x28] sm:$0xff] %v2587
  %2590 = vrot.lane.b32.xlu0 %v81, 16
  %v2591 = vpop.permute.xlu0 %2590
  %2592 = vrot.lane.b32.xlu0 %v83, 16
  %v2593 = vpop.permute.xlu0 %2592
  %v2594 = vsel %vm193, %v2591, %v2593
  %v2595 = vsel %vm193, %v2593, %v2591
  %v2596 = vsel %vm205, %v2595, %v81
  %v2597 = vsel %vm206, %v2594, %v83
  %2598 = vrot.lane.b32.xlu0 %v81, 112
  %v2599 = vpop.permute.xlu0 %2598
  %2600 = vrot.lane.b32.xlu0 %v83, 112
  %v2601 = vpop.permute.xlu0 %2600
  %v2602 = vsel %vm669, %v2599, %v2601
  %v2603 = vsel %vm669, %v2601, %v2599
  %v2604 = vsel %vm681, %v2602, %v81
  %v2605 = vsel %vm682, %v2603, %v83
  %v2606 = vmax.f32 %v2596, %v2604
  %v2607 = vmax.f32 %v2597, %v2605
  %v2610 = vcombine.low %v2606, %v2607
  %v2612 = vmax.f32 %v81, %v2610
  %v2614 = vcombine.high %v2612, %v2612
  %2616 = vrot.lane.b32.xlu0 %v2612, 1
  %v2617 = vpop.permute.xlu0 %2616
  %2618 = vrot.lane.b32.xlu0 %v2614, 1
  %v2619 = vpop.permute.xlu0 %2618
  %v2620 = vsel %vm391, %v2617, %v2619
  %v2621 = vsel %vm391, %v2619, %v2617
  %v2622 = vsel %vm403, %v2621, %v2612
  %v2623 = vsel %vm404, %v2620, %v2614
  %2624 = vrot.lane.b32.xlu0 %v2612, 127
  %v2625 = vpop.permute.xlu0 %2624
  %2626 = vrot.lane.b32.xlu0 %v2614, 127
  %v2627 = vpop.permute.xlu0 %2626
  %v2628 = vsel %vm519, %v2625, %v2627
  %v2629 = vsel %vm519, %v2627, %v2625
  %v2630 = vsel %vm531, %v2628, %v2612
  %v2631 = vsel %vm532, %v2629, %v2614
  %v2632 = vmax.f32 %v2622, %v2630
  %v2633 = vmax.f32 %v2623, %v2631
  %v2636 = vcombine.low %v2632, %v2633
  %v2638 = vmax.f32 %v2612, %v2636
  %v2640 = vcombine.high %v2638, %v2638
  %v2642 = vpack.c.bf16 %v2638, %v2638
  %v2643 = vpack.c.bf16 %v2640, %v2640
  %2645 = vset.pattern.permute.xlu0 0
  %2646 = vperm.xlu0 %2645, %v80
  %v2647 = vpop.permute.xlu0 %2646
  %v2650 = vsel %vm102, %v79, 0
  %v2653 = vsel %vm106, %v2642, 0
  %v2656 = vsel %vm106, %v2643, 0
  %2658 = vmatprep.subr.bf16.mxu0 %v2656
  %2659 = vmatpush1.bf16.msra.mxu0 %v2653
  %2660 = vmatprep.subr.bf16.mxu0 0
  %2661 = vmatpush1.bf16.msra.mxu0 0
  %2662 = vmatprep.subr.bf16.mxu0 0
  %2663 = vmatpush1.bf16.msra.mxu0 0
  %2664 = vmatprep.subr.bf16.mxu0 0
  %2665 = vmatpush1.bf16.msra.mxu0 0
  %2666 = vmatprep.subr.bf16.mxu0 0
  %2667 = vmatpush1.bf16.msra.mxu0 0
  %2668 = vmatprep.subr.bf16.mxu0 0
  %2669 = vmatpush1.bf16.msra.mxu0 0
  %2670 = vmatprep.subr.bf16.mxu0 0
  %2671 = vmatpush1.bf16.msra.mxu0 0
  %2672 = vmatprep.subr.bf16.mxu0 0
  %2673 = vmatpush1.bf16.msra.mxu0 0
  %2674 = vmatprep.subr.bf16.mxu0 0
  %2675 = vmatpush1.bf16.msra.mxu0 0
  %2676 = vmatprep.subr.bf16.mxu0 0
  %2677 = vmatpush1.bf16.msra.mxu0 0
  %2678 = vmatprep.subr.bf16.mxu0 0
  %2679 = vmatpush1.bf16.msra.mxu0 0
  %2680 = vmatprep.subr.bf16.mxu0 0
  %2681 = vmatpush1.bf16.msra.mxu0 0
  %2682 = vmatprep.subr.bf16.mxu0 0
  %2683 = vmatpush1.bf16.msra.mxu0 0
  %2684 = vmatprep.subr.bf16.mxu0 0
  %2685 = vmatpush1.bf16.msra.mxu0 0
  %2686 = vmatprep.subr.bf16.mxu0 0
  %2687 = vmatpush1.bf16.msra.mxu0 0
  %2688 = vmatprep.subr.bf16.mxu0 0
  %2689 = vmatpush1.bf16.msra.mxu0 0
  %2690 = vmatprep.mubr.bf16.mxu0 0
  %2691 = vmatmul.mubr.bf16.gmra.mrb[0].mxu0 %v2650
  %v2692 = vpop.f32.mrb[0].mxu0
  %v2693 = vadd.f32 %v2647, %v2692
  %v2694 = vpop.f32.mrb[0].mxu0
  %v2695 = vadd.f32 %v2647, %v2694
  %v2696 = vpop.f32.mrb[0].mxu0
  %v2697 = vpop.f32.mrb[0].mxu0
  %2698 = vdwg.mxu0
  %v2699 = vmax.f32 %v2693, 0.0
  %v2700 = vmax.f32 %v2695, 0.0
  %2701 = vst [vmem:[%s10 + $0x30] sm:$0xff] %v2699
  %2702 = vst [vmem:[%s10 + $0x38] sm:$0xff] %v2700
  %s2703 = scalar_lea.vmem %s1, 8
  %v2704 = vld [vmem:[%s2703] sm:$0xff]
  %v2706 = vcombine.high %v2704, %v2704
  %v2708 = vpack.c.bf16 %v2704, %v2704
  %v2709 = vpack.c.bf16 %v2706, %v2706
  %v2711 = vsel %vm106, %v2708, 0
  %v2714 = vsel %vm106, %v2709, 0
  %2716 = vmatprep.subr.bf16.mxu0 %v2714
  %2717 = vmatpush1.bf16.msra.mxu0 %v2711
  %2718 = vmatprep.subr.bf16.mxu0 0
  %2719 = vmatpush1.bf16.msra.mxu0 0
  %2720 = vmatprep.subr.bf16.mxu0 0
  %2721 = vmatpush1.bf16.msra.mxu0 0
  %2722 = vmatprep.subr.bf16.mxu0 0
  %2723 = vmatpush1.bf16.msra.mxu0 0
  %2724 = vmatprep.subr.bf16.mxu0 0
  %2725 = vmatpush1.bf16.msra.mxu0 0
  %2726 = vmatprep.subr.bf16.mxu0 0
  %2727 = vmatpush1.bf16.msra.mxu0 0
  %2728 = vmatprep.subr.bf16.mxu0 0
  %2729 = vmatpush1.bf16.msra.mxu0 0
  %2730 = vmatprep.subr.bf16.mxu0 0
  %2731 = vmatpush1.bf16.msra.mxu0 0
  %2732 = vmatprep.subr.bf16.mxu0 0
  %2733 = vmatpush1.bf16.msra.mxu0 0
  %2734 = vmatprep.subr.bf16.mxu0 0
  %2735 = vmatpush1.bf16.msra.mxu0 0
  %2736 = vmatprep.subr.bf16.mxu0 0
  %2737 = vmatpush1.bf16.msra.mxu0 0
  %2738 = vmatprep.subr.bf16.mxu0 0
  %2739 = vmatpush1.bf16.msra.mxu0 0
  %2740 = vmatprep.subr.bf16.mxu0 0
  %2741 = vmatpush1.bf16.msra.mxu0 0
  %2742 = vmatprep.subr.bf16.mxu0 0
  %2743 = vmatpush1.bf16.msra.mxu0 0
  %2744 = vmatprep.subr.bf16.mxu0 0
  %2745 = vmatpush1.bf16.msra.mxu0 0
  %2746 = vmatprep.subr.bf16.mxu0 0
  %2747 = vmatpush1.bf16.msra.mxu0 0
  %2748 = vmatprep.mubr.bf16.mxu0 0
  %2749 = vmatmul.mubr.bf16.gmra.mrb[0].mxu0 %v104
  %v2750 = vpop.f32.mrb[0].mxu0
  %v2751 = vadd.f32 %v90, %v2750
  %v2752 = vpop.f32.mrb[0].mxu0
  %v2753 = vadd.f32 %v90, %v2752
  %v2754 = vpop.f32.mrb[0].mxu0
  %v2755 = vadd.f32 %v95, %v2754
  %v2756 = vpop.f32.mrb[0].mxu0
  %v2757 = vadd.f32 %v95, %v2756
  %2758 = vdwg.mxu0
  %v2759 = vmax.f32 %v2751, 0.0
  %v2760 = vmax.f32 %v2753, 0.0
  %v2761 = vmax.f32 %v2755, 0.0
  %v2762 = vmax.f32 %v2757, 0.0
  %s2763 = scalar_lea.vmem %s10, 64
  %2764 = vst [vmem:[%s2763] sm:$0xff] %v2761
  %2765 = vst [vmem:[%s2763 + $0x8] sm:$0xff] %v2762
  %2766 = vrot.lane.b32.xlu0 %v2759, 17
  %v2767 = vpop.permute.xlu0 %2766
  %2768 = vrot.lane.b32.xlu0 %v2760, 17
  %v2769 = vpop.permute.xlu0 %2768
  %v2770 = vsel %vm168, %v2767, %v2769
  %v2771 = vsel %vm168, %v2769, %v2767
  %v2772 = vsel %vm183, %v2771, 0.0
  %v2773 = vsel %vm184, %v2770, 0.0
  %v2774 = vpack.c.bf16 %v2772, %v2772
  %v2775 = vpack.c.bf16 %v2773, %v2773
  %2776 = vrot.lane.b32.xlu0 %v2759, 16
  %v2777 = vpop.permute.xlu0 %2776
  %2778 = vrot.lane.b32.xlu0 %v2760, 16
  %v2779 = vpop.permute.xlu0 %2778
  %v2780 = vsel %vm193, %v2777, %v2779
  %v2781 = vsel %vm193, %v2779, %v2777
  %v2782 = vsel %vm205, %v2781, 0.0
  %v2783 = vsel %vm206, %v2780, 0.0
  %v2784 = vpack.c.bf16 %v2782, %v2782
  %v2785 = vpack.c.bf16 %v2783, %v2783
  %v2787 = vsel %vm106, %v2784, 0
  %v2790 = vsel %vm106, %v2785, 0
  %2792 = vmatprep.subr.bf16.mxu0 %v2790
  %2793 = vmatpush1.bf16.msra.mxu0 %v2787
  %2794 = vmatprep.subr.bf16.mxu0 0
  %2795 = vmatpush1.bf16.msra.mxu0 0
  %2796 = vmatprep.subr.bf16.mxu0 0
  %2797 = vmatpush1.bf16.msra.mxu0 0
  %2798 = vmatprep.subr.bf16.mxu0 0
  %2799 = vmatpush1.bf16.msra.mxu0 0
  %2800 = vmatprep.subr.bf16.mxu0 0
  %2801 = vmatpush1.bf16.msra.mxu0 0
  %2802 = vmatprep.subr.bf16.mxu0 0
  %2803 = vmatpush1.bf16.msra.mxu0 0
  %2804 = vmatprep.subr.bf16.mxu0 0
  %2805 = vmatpush1.bf16.msra.mxu0 0
  %2806 = vmatprep.subr.bf16.mxu0 0
  %2807 = vmatpush1.bf16.msra.mxu0 0
  %2808 = vmatprep.subr.bf16.mxu0 0
  %2809 = vmatpush1.bf16.msra.mxu0 0
  %2810 = vmatprep.subr.bf16.mxu0 0
  %2811 = vmatpush1.bf16.msra.mxu0 0
  %2812 = vmatprep.subr.bf16.mxu0 0
  %2813 = vmatpush1.bf16.msra.mxu0 0
  %2814 = vmatprep.subr.bf16.mxu0 0
  %2815 = vmatpush1.bf16.msra.mxu0 0
  %2816 = vmatprep.subr.bf16.mxu0 0
  %2817 = vmatpush1.bf16.msra.mxu0 0
  %2818 = vmatprep.subr.bf16.mxu0 0
  %2819 = vmatpush1.bf16.msra.mxu0 0
  %2820 = vmatprep.subr.bf16.mxu0 0
  %2821 = vmatpush1.bf16.msra.mxu0 0
  %2822 = vmatprep.subr.bf16.mxu0 0
  %2823 = vmatpush1.bf16.msra.mxu0 0
  %2824 = vmatprep.mubr.bf16.mxu0 0
  %2825 = vmatmul.mubr.bf16.gmra.mrb[0].mxu0 %v212
  %v2826 = vpop.f32.mrb[0].mxu0
  %v2827 = vadd.f32 0.0, %v2826
  %v2828 = vpop.f32.mrb[0].mxu0
  %v2829 = vadd.f32 0.0, %v2828
  %v2830 = vpop.f32.mrb[0].mxu0
  %v2831 = vpop.f32.mrb[0].mxu0
  %2832 = vdwg.mxu0
  %v2834 = vsel %vm106, %v2774, 0
  %v2837 = vsel %vm106, %v2775, 0
  %2839 = vmatprep.subr.bf16.mxu0 %v2837
  %2840 = vmatpush1.bf16.msra.mxu0 %v2834
  %2841 = vmatprep.subr.bf16.mxu0 0
  %2842 = vmatpush1.bf16.msra.mxu0 0
  %2843 = vmatprep.subr.bf16.mxu0 0
  %2844 = vmatpush1.bf16.msra.mxu0 0
  %2845 = vmatprep.subr.bf16.mxu0 0
  %2846 = vmatpush1.bf16.msra.mxu0 0
  %2847 = vmatprep.subr.bf16.mxu0 0
  %2848 = vmatpush1.bf16.msra.mxu0 0
  %2849 = vmatprep.subr.bf16.mxu0 0
  %2850 = vmatpush1.bf16.msra.mxu0 0
  %2851 = vmatprep.subr.bf16.mxu0 0
  %2852 = vmatpush1.bf16.msra.mxu0 0
  %2853 = vmatprep.subr.bf16.mxu0 0
  %2854 = vmatpush1.bf16.msra.mxu0 0
  %2855 = vmatprep.subr.bf16.mxu0 0
  %2856 = vmatpush1.bf16.msra.mxu0 0
  %2857 = vmatprep.subr.bf16.mxu0 0
  %2858 = vmatpush1.bf16.msra.mxu0 0
  %2859 = vmatprep.subr.bf16.mxu0 0
  %2860 = vmatpush1.bf16.msra.mxu0 0
  %2861 = vmatprep.subr.bf16.mxu0 0
  %2862 = vmatpush1.bf16.msra.mxu0 0
  %2863 = vmatprep.subr.bf16.mxu0 0
  %2864 = vmatpush1.bf16.msra.mxu0 0
  %2865 = vmatprep.subr.bf16.mxu0 0
  %2866 = vmatpush1.bf16.msra.mxu0 0
  %2867 = vmatprep.subr.bf16.mxu0 0
  %2868 = vmatpush1.bf16.msra.mxu0 0
  %2869 = vmatprep.subr.bf16.mxu0 0
  %2870 = vmatpush1.bf16.msra.mxu0 0
  %2871 = vmatprep.mubr.bf16.mxu0 0
  %2872 = vmatmul.mubr.bf16.gmra.mrb[0].mxu0 %v262
  %v2873 = vpop.f32.mrb[0].mxu0
  %v2874 = vadd.f32 %v2827, %v2873
  %v2875 = vpop.f32.mrb[0].mxu0
  %v2876 = vadd.f32 %v2829, %v2875
  %v2877 = vpop.f32.mrb[0].mxu0
  %v2878 = vpop.f32.mrb[0].mxu0
  %2879 = vdwg.mxu0
  %2880 = vrot.lane.b32.xlu0 %v2759, 15
  %v2881 = vpop.permute.xlu0 %2880
  %2882 = vrot.lane.b32.xlu0 %v2760, 15
  %v2883 = vpop.permute.xlu0 %2882
  %v2884 = vsel %vm315, %v2881, %v2883
  %v2885 = vsel %vm315, %v2883, %v2881
  %v2886 = vsel %vm329, %v2885, 0.0
  %v2887 = vsel %vm330, %v2884, 0.0
  %v2888 = vpack.c.bf16 %v2886, %v2886
  %v2889 = vpack.c.bf16 %v2887, %v2887
  %v2891 = vsel %vm106, %v2888, 0
  %v2894 = vsel %vm106, %v2889, 0
  %2896 = vmatprep.subr.bf16.mxu0 %v2894
  %2897 = vmatpush1.bf16.msra.mxu0 %v2891
  %2898 = vmatprep.subr.bf16.mxu0 0
  %2899 = vmatpush1.bf16.msra.mxu0 0
  %2900 = vmatprep.subr.bf16.mxu0 0
  %2901 = vmatpush1.bf16.msra.mxu0 0
  %2902 = vmatprep.subr.bf16.mxu0 0
  %2903 = vmatpush1.bf16.msra.mxu0 0
  %2904 = vmatprep.subr.bf16.mxu0 0
  %2905 = vmatpush1.bf16.msra.mxu0 0
  %2906 = vmatprep.subr.bf16.mxu0 0
  %2907 = vmatpush1.bf16.msra.mxu0 0
  %2908 = vmatprep.subr.bf16.mxu0 0
  %2909 = vmatpush1.bf16.msra.mxu0 0
  %2910 = vmatprep.subr.bf16.mxu0 0
  %2911 = vmatpush1.bf16.msra.mxu0 0
  %2912 = vmatprep.subr.bf16.mxu0 0
  %2913 = vmatpush1.bf16.msra.mxu0 0
  %2914 = vmatprep.subr.bf16.mxu0 0
  %2915 = vmatpush1.bf16.msra.mxu0 0
  %2916 = vmatprep.subr.bf16.mxu0 0
  %2917 = vmatpush1.bf16.msra.mxu0 0
  %2918 = vmatprep.subr.bf16.mxu0 0
  %2919 = vmatpush1.bf16.msra.mxu0 0
  %2920 = vmatprep.subr.bf16.mxu0 0
  %2921 = vmatpush1.bf16.msra.mxu0 0
  %2922 = vmatprep.subr.bf16.mxu0 0
  %2923 = vmatpush1.bf16.msra.mxu0 0
  %2924 = vmatprep.subr.bf16.mxu0 0
  %2925 = vmatpush1.bf16.msra.mxu0 0
  %2926 = vmatprep.subr.bf16.mxu0 0
  %2927 = vmatpush1.bf16.msra.mxu0 0
  %2928 = vmatprep.mubr.bf16.mxu0 0
  %2929 = vmatmul.mubr.bf16.gmra.mrb[0].mxu0 %v336
  %v2930 = vpop.f32.mrb[0].mxu0
  %v2931 = vadd.f32 0.0, %v2930
  %v2932 = vpop.f32.mrb[0].mxu0
  %v2933 = vadd.f32 0.0, %v2932
  %v2934 = vpop.f32.mrb[0].mxu0
  %v2935 = vpop.f32.mrb[0].mxu0
  %2936 = vdwg.mxu0
  %v2937 = vadd.f32 %v2874, %v2931
  %v2938 = vadd.f32 %v2876, %v2933
  %2939 = vrot.lane.b32.xlu0 %v2759, 1
  %v2940 = vpop.permute.xlu0 %2939
  %2941 = vrot.lane.b32.xlu0 %v2760, 1
  %v2942 = vpop.permute.xlu0 %2941
  %v2943 = vsel %vm391, %v2940, %v2942
  %v2944 = vsel %vm391, %v2942, %v2940
  %v2945 = vsel %vm403, %v2944, 0.0
  %v2946 = vsel %vm404, %v2943, 0.0
  %v2947 = vpack.c.bf16 %v2945, %v2945
  %v2948 = vpack.c.bf16 %v2946, %v2946
  %v2950 = vsel %vm106, %v2947, 0
  %v2953 = vsel %vm106, %v2948, 0
  %2955 = vmatprep.subr.bf16.mxu0 %v2953
  %2956 = vmatpush1.bf16.msra.mxu0 %v2950
  %2957 = vmatprep.subr.bf16.mxu0 0
  %2958 = vmatpush1.bf16.msra.mxu0 0
  %2959 = vmatprep.subr.bf16.mxu0 0
  %2960 = vmatpush1.bf16.msra.mxu0 0
  %2961 = vmatprep.subr.bf16.mxu0 0
  %2962 = vmatpush1.bf16.msra.mxu0 0
  %2963 = vmatprep.subr.bf16.mxu0 0
  %2964 = vmatpush1.bf16.msra.mxu0 0
  %2965 = vmatprep.subr.bf16.mxu0 0
  %2966 = vmatpush1.bf16.msra.mxu0 0
  %2967 = vmatprep.subr.bf16.mxu0 0
  %2968 = vmatpush1.bf16.msra.mxu0 0
  %2969 = vmatprep.subr.bf16.mxu0 0
  %2970 = vmatpush1.bf16.msra.mxu0 0
  %2971 = vmatprep.subr.bf16.mxu0 0
  %2972 = vmatpush1.bf16.msra.mxu0 0
  %2973 = vmatprep.subr.bf16.mxu0 0
  %2974 = vmatpush1.bf16.msra.mxu0 0
  %2975 = vmatprep.subr.bf16.mxu0 0
  %2976 = vmatpush1.bf16.msra.mxu0 0
  %2977 = vmatprep.subr.bf16.mxu0 0
  %2978 = vmatpush1.bf16.msra.mxu0 0
  %2979 = vmatprep.subr.bf16.mxu0 0
  %2980 = vmatpush1.bf16.msra.mxu0 0
  %2981 = vmatprep.subr.bf16.mxu0 0
  %2982 = vmatpush1.bf16.msra.mxu0 0
  %2983 = vmatprep.subr.bf16.mxu0 0
  %2984 = vmatpush1.bf16.msra.mxu0 0
  %2985 = vmatprep.subr.bf16.mxu0 0
  %2986 = vmatpush1.bf16.msra.mxu0 0
  %2987 = vmatprep.mubr.bf16.mxu0 0
  %2988 = vmatmul.mubr.bf16.gmra.mrb[0].mxu0 %v410
  %v2989 = vpop.f32.mrb[0].mxu0
  %v2990 = vadd.f32 0.0, %v2989
  %v2991 = vpop.f32.mrb[0].mxu0
  %v2992 = vadd.f32 0.0, %v2991
  %v2993 = vpop.f32.mrb[0].mxu0
  %v2994 = vpop.f32.mrb[0].mxu0
  %2995 = vdwg.mxu0
  %v2996 = vadd.f32 %v2937, %v2990
  %v2997 = vadd.f32 %v2938, %v2992
  %v2998 = vpack.c.bf16 %v2759, %v2759
  %v2999 = vpack.c.bf16 %v2760, %v2760
  %v3001 = vsel %vm106, %v2998, 0
  %v3004 = vsel %vm106, %v2999, 0
  %3006 = vmatprep.subr.bf16.mxu0 %v3004
  %3007 = vmatpush1.bf16.msra.mxu0 %v3001
  %3008 = vmatprep.subr.bf16.mxu0 0
  %3009 = vmatpush1.bf16.msra.mxu0 0
  %3010 = vmatprep.subr.bf16.mxu0 0
  %3011 = vmatpush1.bf16.msra.mxu0 0
  %3012 = vmatprep.subr.bf16.mxu0 0
  %3013 = vmatpush1.bf16.msra.mxu0 0
  %3014 = vmatprep.subr.bf16.mxu0 0
  %3015 = vmatpush1.bf16.msra.mxu0 0
  %3016 = vmatprep.subr.bf16.mxu0 0
  %3017 = vmatpush1.bf16.msra.mxu0 0
  %3018 = vmatprep.subr.bf16.mxu0 0
  %3019 = vmatpush1.bf16.msra.mxu0 0
  %3020 = vmatprep.subr.bf16.mxu0 0
  %3021 = vmatpush1.bf16.msra.mxu0 0
  %3022 = vmatprep.subr.bf16.mxu0 0
  %3023 = vmatpush1.bf16.msra.mxu0 0
  %3024 = vmatprep.subr.bf16.mxu0 0
  %3025 = vmatpush1.bf16.msra.mxu0 0
  %3026 = vmatprep.subr.bf16.mxu0 0
  %3027 = vmatpush1.bf16.msra.mxu0 0
  %3028 = vmatprep.subr.bf16.mxu0 0
  %3029 = vmatpush1.bf16.msra.mxu0 0
  %3030 = vmatprep.subr.bf16.mxu0 0
  %3031 = vmatpush1.bf16.msra.mxu0 0
  %3032 = vmatprep.subr.bf16.mxu0 0
  %3033 = vmatpush1.bf16.msra.mxu0 0
  %3034 = vmatprep.subr.bf16.mxu0 0
  %3035 = vmatpush1.bf16.msra.mxu0 0
  %3036 = vmatprep.subr.bf16.mxu0 0
  %3037 = vmatpush1.bf16.msra.mxu0 0
  %3038 = vmatprep.mubr.bf16.mxu0 0
  %3039 = vmatmul.mubr.bf16.gmra.mrb[0].mxu0 %v464
  %v3040 = vpop.f32.mrb[0].mxu0
  %v3041 = vadd.f32 0.0, %v3040
  %v3042 = vpop.f32.mrb[0].mxu0
  %v3043 = vadd.f32 0.0, %v3042
  %v3044 = vpop.f32.mrb[0].mxu0
  %v3045 = vpop.f32.mrb[0].mxu0
  %3046 = vdwg.mxu0
  %v3047 = vadd.f32 %v2996, %v3041
  %v3048 = vadd.f32 %v2997, %v3043
  %3049 = vrot.lane.b32.xlu0 %v2759, 127
  %v3050 = vpop.permute.xlu0 %3049
  %3051 = vrot.lane.b32.xlu0 %v2760, 127
  %v3052 = vpop.permute.xlu0 %3051
  %v3053 = vsel %vm519, %v3050, %v3052
  %v3054 = vsel %vm519, %v3052, %v3050
  %v3055 = vsel %vm531, %v3053, 0.0
  %v3056 = vsel %vm532, %v3054, 0.0
  %v3057 = vpack.c.bf16 %v3055, %v3055
  %v3058 = vpack.c.bf16 %v3056, %v3056
  %v3060 = vsel %vm106, %v3057, 0
  %v3063 = vsel %vm106, %v3058, 0
  %3065 = vmatprep.subr.bf16.mxu0 %v3063
  %3066 = vmatpush1.bf16.msra.mxu0 %v3060
  %3067 = vmatprep.subr.bf16.mxu0 0
  %3068 = vmatpush1.bf16.msra.mxu0 0
  %3069 = vmatprep.subr.bf16.mxu0 0
  %3070 = vmatpush1.bf16.msra.mxu0 0
  %3071 = vmatprep.subr.bf16.mxu0 0
  %3072 = vmatpush1.bf16.msra.mxu0 0
  %3073 = vmatprep.subr.bf16.mxu0 0
  %3074 = vmatpush1.bf16.msra.mxu0 0
  %3075 = vmatprep.subr.bf16.mxu0 0
  %3076 = vmatpush1.bf16.msra.mxu0 0
  %3077 = vmatprep.subr.bf16.mxu0 0
  %3078 = vmatpush1.bf16.msra.mxu0 0
  %3079 = vmatprep.subr.bf16.mxu0 0
  %3080 = vmatpush1.bf16.msra.mxu0 0
  %3081 = vmatprep.subr.bf16.mxu0 0
  %3082 = vmatpush1.bf16.msra.mxu0 0
  %3083 = vmatprep.subr.bf16.mxu0 0
  %3084 = vmatpush1.bf16.msra.mxu0 0
  %3085 = vmatprep.subr.bf16.mxu0 0
  %3086 = vmatpush1.bf16.msra.mxu0 0
  %3087 = vmatprep.subr.bf16.mxu0 0
  %3088 = vmatpush1.bf16.msra.mxu0 0
  %3089 = vmatprep.subr.bf16.mxu0 0
  %3090 = vmatpush1.bf16.msra.mxu0 0
  %3091 = vmatprep.subr.bf16.mxu0 0
  %3092 = vmatpush1.bf16.msra.mxu0 0
  %3093 = vmatprep.subr.bf16.mxu0 0
  %3094 = vmatpush1.bf16.msra.mxu0 0
  %3095 = vmatprep.subr.bf16.mxu0 0
  %3096 = vmatpush1.bf16.msra.mxu0 0
  %3097 = vmatprep.mubr.bf16.mxu0 0
  %3098 = vmatmul.mubr.bf16.gmra.mrb[0].mxu0 %v538
  %v3099 = vpop.f32.mrb[0].mxu0
  %v3100 = vadd.f32 0.0, %v3099
  %v3101 = vpop.f32.mrb[0].mxu0
  %v3102 = vadd.f32 0.0, %v3101
  %v3103 = vpop.f32.mrb[0].mxu0
  %v3104 = vpop.f32.mrb[0].mxu0
  %3105 = vdwg.mxu0
  %v3106 = vadd.f32 %v3047, %v3100
  %v3107 = vadd.f32 %v3048, %v3102
  %3108 = vrot.lane.b32.xlu0 %v2759, 113
  %v3109 = vpop.permute.xlu0 %3108
  %3110 = vrot.lane.b32.xlu0 %v2760, 113
  %v3111 = vpop.permute.xlu0 %3110
  %v3112 = vsel %vm593, %v3109, %v3111
  %v3113 = vsel %vm593, %v3111, %v3109
  %v3114 = vsel %vm607, %v3112, 0.0
  %v3115 = vsel %vm608, %v3113, 0.0
  %v3116 = vpack.c.bf16 %v3114, %v3114
  %v3117 = vpack.c.bf16 %v3115, %v3115
  %v3119 = vsel %vm106, %v3116, 0
  %v3122 = vsel %vm106, %v3117, 0
  %3124 = vmatprep.subr.bf16.mxu0 %v3122
  %3125 = vmatpush1.bf16.msra.mxu0 %v3119
  %3126 = vmatprep.subr.bf16.mxu0 0
  %3127 = vmatpush1.bf16.msra.mxu0 0
  %3128 = vmatprep.subr.bf16.mxu0 0
  %3129 = vmatpush1.bf16.msra.mxu0 0
  %3130 = vmatprep.subr.bf16.mxu0 0
  %3131 = vmatpush1.bf16.msra.mxu0 0
  %3132 = vmatprep.subr.bf16.mxu0 0
  %3133 = vmatpush1.bf16.msra.mxu0 0
  %3134 = vmatprep.subr.bf16.mxu0 0
  %3135 = vmatpush1.bf16.msra.mxu0 0
  %3136 = vmatprep.subr.bf16.mxu0 0
  %3137 = vmatpush1.bf16.msra.mxu0 0
  %3138 = vmatprep.subr.bf16.mxu0 0
  %3139 = vmatpush1.bf16.msra.mxu0 0
  %3140 = vmatprep.subr.bf16.mxu0 0
  %3141 = vmatpush1.bf16.msra.mxu0 0
  %3142 = vmatprep.subr.bf16.mxu0 0
  %3143 = vmatpush1.bf16.msra.mxu0 0
  %3144 = vmatprep.subr.bf16.mxu0 0
  %3145 = vmatpush1.bf16.msra.mxu0 0
  %3146 = vmatprep.subr.bf16.mxu0 0
  %3147 = vmatpush1.bf16.msra.mxu0 0
  %3148 = vmatprep.subr.bf16.mxu0 0
  %3149 = vmatpush1.bf16.msra.mxu0 0
  %3150 = vmatprep.subr.bf16.mxu0 0
  %3151 = vmatpush1.bf16.msra.mxu0 0
  %3152 = vmatprep.subr.bf16.mxu0 0
  %3153 = vmatpush1.bf16.msra.mxu0 0
  %3154 = vmatprep.subr.bf16.mxu0 0
  %3155 = vmatpush1.bf16.msra.mxu0 0
  %3156 = vmatprep.mubr.bf16.mxu0 0
  %3157 = vmatmul.mubr.bf16.gmra.mrb[0].mxu0 %v614
  %v3158 = vpop.f32.mrb[0].mxu0
  %v3159 = vadd.f32 0.0, %v3158
  %v3160 = vpop.f32.mrb[0].mxu0
  %v3161 = vadd.f32 0.0, %v3160
  %v3162 = vpop.f32.mrb[0].mxu0
  %v3163 = vpop.f32.mrb[0].mxu0
  %3164 = vdwg.mxu0
  %v3165 = vadd.f32 %v3106, %v3159
  %v3166 = vadd.f32 %v3107, %v3161
  %3167 = vrot.lane.b32.xlu0 %v2759, 112
  %v3168 = vpop.permute.xlu0 %3167
  %3169 = vrot.lane.b32.xlu0 %v2760, 112
  %v3170 = vpop.permute.xlu0 %3169
  %v3171 = vsel %vm669, %v3168, %v3170
  %v3172 = vsel %vm669, %v3170, %v3168
  %v3173 = vsel %vm681, %v3171, 0.0
  %v3174 = vsel %vm682, %v3172, 0.0
  %v3175 = vpack.c.bf16 %v3173, %v3173
  %v3176 = vpack.c.bf16 %v3174, %v3174
  %v3178 = vsel %vm106, %v3175, 0
  %v3181 = vsel %vm106, %v3176, 0
  %3183 = vmatprep.subr.bf16.mxu0 %v3181
  %3184 = vmatpush1.bf16.msra.mxu0 %v3178
  %3185 = vmatprep.subr.bf16.mxu0 0
  %3186 = vmatpush1.bf16.msra.mxu0 0
  %3187 = vmatprep.subr.bf16.mxu0 0
  %3188 = vmatpush1.bf16.msra.mxu0 0
  %3189 = vmatprep.subr.bf16.mxu0 0
  %3190 = vmatpush1.bf16.msra.mxu0 0
  %3191 = vmatprep.subr.bf16.mxu0 0
  %3192 = vmatpush1.bf16.msra.mxu0 0
  %3193 = vmatprep.subr.bf16.mxu0 0
  %3194 = vmatpush1.bf16.msra.mxu0 0
  %3195 = vmatprep.subr.bf16.mxu0 0
  %3196 = vmatpush1.bf16.msra.mxu0 0
  %3197 = vmatprep.subr.bf16.mxu0 0
  %3198 = vmatpush1.bf16.msra.mxu0 0
  %3199 = vmatprep.subr.bf16.mxu0 0
  %3200 = vmatpush1.bf16.msra.mxu0 0
  %3201 = vmatprep.subr.bf16.mxu0 0
  %3202 = vmatpush1.bf16.msra.mxu0 0
  %3203 = vmatprep.subr.bf16.mxu0 0
  %3204 = vmatpush1.bf16.msra.mxu0 0
  %3205 = vmatprep.subr.bf16.mxu0 0
  %3206 = vmatpush1.bf16.msra.mxu0 0
  %3207 = vmatprep.subr.bf16.mxu0 0
  %3208 = vmatpush1.bf16.msra.mxu0 0
  %3209 = vmatprep.subr.bf16.mxu0 0
  %3210 = vmatpush1.bf16.msra.mxu0 0
  %3211 = vmatprep.subr.bf16.mxu0 0
  %3212 = vmatpush1.bf16.msra.mxu0 0
  %3213 = vmatprep.subr.bf16.mxu0 0
  %3214 = vmatpush1.bf16.msra.mxu0 0
  %3215 = vmatprep.mubr.bf16.mxu0 0
  %3216 = vmatmul.mubr.bf16.gmra.mrb[0].mxu0 %v688
  %v3217 = vpop.f32.mrb[0].mxu0
  %v3218 = vadd.f32 0.0, %v3217
  %v3219 = vpop.f32.mrb[0].mxu0
  %v3220 = vadd.f32 0.0, %v3219
  %v3221 = vpop.f32.mrb[0].mxu0
  %v3222 = vpop.f32.mrb[0].mxu0
  %3223 = vdwg.mxu0
  %v3224 = vadd.f32 %v3165, %v3218
  %v3225 = vadd.f32 %v3166, %v3220
  %3226 = vrot.lane.b32.xlu0 %v2759, 111
  %v3227 = vpop.permute.xlu0 %3226
  %3228 = vrot.lane.b32.xlu0 %v2760, 111
  %v3229 = vpop.permute.xlu0 %3228
  %v3230 = vsel %vm743, %v3227, %v3229
  %v3231 = vsel %vm743, %v3229, %v3227
  %v3232 = vsel %vm756, %v3230, 0.0
  %v3233 = vsel %vm757, %v3231, 0.0
  %v3234 = vpack.c.bf16 %v3232, %v3232
  %v3235 = vpack.c.bf16 %v3233, %v3233
  %v3237 = vsel %vm106, %v3234, 0
  %v3240 = vsel %vm106, %v3235, 0
  %3242 = vmatprep.subr.bf16.mxu0 %v3240
  %3243 = vmatpush1.bf16.msra.mxu0 %v3237
  %3244 = vmatprep.subr.bf16.mxu0 0
  %3245 = vmatpush1.bf16.msra.mxu0 0
  %3246 = vmatprep.subr.bf16.mxu0 0
  %3247 = vmatpush1.bf16.msra.mxu0 0
  %3248 = vmatprep.subr.bf16.mxu0 0
  %3249 = vmatpush1.bf16.msra.mxu0 0
  %3250 = vmatprep.subr.bf16.mxu0 0
  %3251 = vmatpush1.bf16.msra.mxu0 0
  %3252 = vmatprep.subr.bf16.mxu0 0
  %3253 = vmatpush1.bf16.msra.mxu0 0
  %3254 = vmatprep.subr.bf16.mxu0 0
  %3255 = vmatpush1.bf16.msra.mxu0 0
  %3256 = vmatprep.subr.bf16.mxu0 0
  %3257 = vmatpush1.bf16.msra.mxu0 0
  %3258 = vmatprep.subr.bf16.mxu0 0
  %3259 = vmatpush1.bf16.msra.mxu0 0
  %3260 = vmatprep.subr.bf16.mxu0 0
  %3261 = vmatpush1.bf16.msra.mxu0 0
  %3262 = vmatprep.subr.bf16.mxu0 0
  %3263 = vmatpush1.bf16.msra.mxu0 0
  %3264 = vmatprep.subr.bf16.mxu0 0
  %3265 = vmatpush1.bf16.msra.mxu0 0
  %3266 = vmatprep.subr.bf16.mxu0 0
  %3267 = vmatpush1.bf16.msra.mxu0 0
  %3268 = vmatprep.subr.bf16.mxu0 0
  %3269 = vmatpush1.bf16.msra.mxu0 0
  %3270 = vmatprep.subr.bf16.mxu0 0
  %3271 = vmatpush1.bf16.msra.mxu0 0
  %3272 = vmatprep.subr.bf16.mxu0 0
  %3273 = vmatpush1.bf16.msra.mxu0 0
  %3274 = vmatprep.mubr.bf16.mxu0 0
  %3275 = vmatmul.mubr.bf16.gmra.mrb[0].mxu0 %v763
  %v3276 = vpop.f32.mrb[0].mxu0
  %v3277 = vadd.f32 0.0, %v3276
  %v3278 = vpop.f32.mrb[0].mxu0
  %v3279 = vadd.f32 0.0, %v3278
  %v3280 = vpop.f32.mrb[0].mxu0
  %v3281 = vpop.f32.mrb[0].mxu0
  %3282 = vdwg.mxu0
  %v3283 = vadd.f32 %v3224, %v3277
  %v3284 = vadd.f32 %v3225, %v3279
  %v3285 = vadd.f32 %v3283, %v817
  %v3286 = vadd.f32 %v3284, %v817
  %v3287 = vmax.f32 %v3285, 0.0
  %v3288 = vmax.f32 %v3286, 0.0
  %3289 = vst [vmem:[%s2763 + $0x10] sm:$0xff] %v3287
  %3290 = vst [vmem:[%s2763 + $0x18] sm:$0xff] %v3288
  %v3293 = vrot.slane %v2759, 4
  %v3294 = vrot.slane %v2760, 4
  %3297 = vrot.lane.b32.xlu0 %v3293, 34
  %v3298 = vpop.permute.xlu0 %3297
  %3299 = vrot.lane.b32.xlu0 %v3294, 34
  %v3300 = vpop.permute.xlu0 %3299
  %v3301 = vsel %vm835, %v3298, %v3300
  %v3302 = vsel %vm835, %v3300, %v3298
  %v3303 = vsel %vm850, %v3302, 0.0
  %v3304 = vsel %vm851, %v3301, 0.0
  %v3305 = vpack.c.bf16 %v3303, %v3303
  %v3306 = vpack.c.bf16 %v3304, %v3304
  %3307 = vrot.lane.b32.xlu0 %v3293, 33
  %v3308 = vpop.permute.xlu0 %3307
  %3309 = vrot.lane.b32.xlu0 %v3294, 33
  %v3310 = vpop.permute.xlu0 %3309
  %v3311 = vsel %vm860, %v3308, %v3310
  %v3312 = vsel %vm860, %v3310, %v3308
  %v3313 = vsel %vm873, %v3312, 0.0
  %v3314 = vsel %vm874, %v3311, 0.0
  %v3315 = vpack.c.bf16 %v3313, %v3313
  %v3316 = vpack.c.bf16 %v3314, %v3314
  %v3318 = vsel %vm106, %v3315, 0
  %v3321 = vsel %vm106, %v3316, 0
  %3323 = vmatprep.subr.bf16.mxu0 %v3321
  %3324 = vmatpush1.bf16.msra.mxu0 %v3318
  %3325 = vmatprep.subr.bf16.mxu0 0
  %3326 = vmatpush1.bf16.msra.mxu0 0
  %3327 = vmatprep.subr.bf16.mxu0 0
  %3328 = vmatpush1.bf16.msra.mxu0 0
  %3329 = vmatprep.subr.bf16.mxu0 0
  %3330 = vmatpush1.bf16.msra.mxu0 0
  %3331 = vmatprep.subr.bf16.mxu0 0
  %3332 = vmatpush1.bf16.msra.mxu0 0
  %3333 = vmatprep.subr.bf16.mxu0 0
  %3334 = vmatpush1.bf16.msra.mxu0 0
  %3335 = vmatprep.subr.bf16.mxu0 0
  %3336 = vmatpush1.bf16.msra.mxu0 0
  %3337 = vmatprep.subr.bf16.mxu0 0
  %3338 = vmatpush1.bf16.msra.mxu0 0
  %3339 = vmatprep.subr.bf16.mxu0 0
  %3340 = vmatpush1.bf16.msra.mxu0 0
  %3341 = vmatprep.subr.bf16.mxu0 0
  %3342 = vmatpush1.bf16.msra.mxu0 0
  %3343 = vmatprep.subr.bf16.mxu0 0
  %3344 = vmatpush1.bf16.msra.mxu0 0
  %3345 = vmatprep.subr.bf16.mxu0 0
  %3346 = vmatpush1.bf16.msra.mxu0 0
  %3347 = vmatprep.subr.bf16.mxu0 0
  %3348 = vmatpush1.bf16.msra.mxu0 0
  %3349 = vmatprep.subr.bf16.mxu0 0
  %3350 = vmatpush1.bf16.msra.mxu0 0
  %3351 = vmatprep.subr.bf16.mxu0 0
  %3352 = vmatpush1.bf16.msra.mxu0 0
  %3353 = vmatprep.subr.bf16.mxu0 0
  %3354 = vmatpush1.bf16.msra.mxu0 0
  %3355 = vmatprep.mubr.bf16.mxu0 0
  %3356 = vmatmul.mubr.bf16.gmra.mrb[0].mxu0 %v880
  %v3357 = vpop.f32.mrb[0].mxu0
  %v3358 = vadd.f32 0.0, %v3357
  %v3359 = vpop.f32.mrb[0].mxu0
  %v3360 = vadd.f32 0.0, %v3359
  %v3361 = vpop.f32.mrb[0].mxu0
  %v3362 = vpop.f32.mrb[0].mxu0
  %3363 = vdwg.mxu0
  %v3365 = vsel %vm106, %v3305, 0
  %v3368 = vsel %vm106, %v3306, 0
  %3370 = vmatprep.subr.bf16.mxu0 %v3368
  %3371 = vmatpush1.bf16.msra.mxu0 %v3365
  %3372 = vmatprep.subr.bf16.mxu0 0
  %3373 = vmatpush1.bf16.msra.mxu0 0
  %3374 = vmatprep.subr.bf16.mxu0 0
  %3375 = vmatpush1.bf16.msra.mxu0 0
  %3376 = vmatprep.subr.bf16.mxu0 0
  %3377 = vmatpush1.bf16.msra.mxu0 0
  %3378 = vmatprep.subr.bf16.mxu0 0
  %3379 = vmatpush1.bf16.msra.mxu0 0
  %3380 = vmatprep.subr.bf16.mxu0 0
  %3381 = vmatpush1.bf16.msra.mxu0 0
  %3382 = vmatprep.subr.bf16.mxu0 0
  %3383 = vmatpush1.bf16.msra.mxu0 0
  %3384 = vmatprep.subr.bf16.mxu0 0
  %3385 = vmatpush1.bf16.msra.mxu0 0
  %3386 = vmatprep.subr.bf16.mxu0 0
  %3387 = vmatpush1.bf16.msra.mxu0 0
  %3388 = vmatprep.subr.bf16.mxu0 0
  %3389 = vmatpush1.bf16.msra.mxu0 0
  %3390 = vmatprep.subr.bf16.mxu0 0
  %3391 = vmatpush1.bf16.msra.mxu0 0
  %3392 = vmatprep.subr.bf16.mxu0 0
  %3393 = vmatpush1.bf16.msra.mxu0 0
  %3394 = vmatprep.subr.bf16.mxu0 0
  %3395 = vmatpush1.bf16.msra.mxu0 0
  %3396 = vmatprep.subr.bf16.mxu0 0
  %3397 = vmatpush1.bf16.msra.mxu0 0
  %3398 = vmatprep.subr.bf16.mxu0 0
  %3399 = vmatpush1.bf16.msra.mxu0 0
  %3400 = vmatprep.subr.bf16.mxu0 0
  %3401 = vmatpush1.bf16.msra.mxu0 0
  %3402 = vmatprep.mubr.bf16.mxu0 0
  %3403 = vmatmul.mubr.bf16.gmra.mrb[0].mxu0 %v930
  %v3404 = vpop.f32.mrb[0].mxu0
  %v3405 = vadd.f32 %v3358, %v3404
  %v3406 = vpop.f32.mrb[0].mxu0
  %v3407 = vadd.f32 %v3360, %v3406
  %v3408 = vpop.f32.mrb[0].mxu0
  %v3409 = vpop.f32.mrb[0].mxu0
  %3410 = vdwg.mxu0
  %3411 = vrot.lane.b32.xlu0 %v3293, 32
  %v3412 = vpop.permute.xlu0 %3411
  %3413 = vrot.lane.b32.xlu0 %v3294, 32
  %v3414 = vpop.permute.xlu0 %3413
  %v3415 = vsel %vm983, %v3412, %v3414
  %v3416 = vsel %vm983, %v3414, %v3412
  %v3417 = vsel %vm995, %v3416, 0.0
  %v3418 = vsel %vm996, %v3415, 0.0
  %v3419 = vpack.c.bf16 %v3417, %v3417
  %v3420 = vpack.c.bf16 %v3418, %v3418
  %v3422 = vsel %vm106, %v3419, 0
  %v3425 = vsel %vm106, %v3420, 0
  %3427 = vmatprep.subr.bf16.mxu0 %v3425
  %3428 = vmatpush1.bf16.msra.mxu0 %v3422
  %3429 = vmatprep.subr.bf16.mxu0 0
  %3430 = vmatpush1.bf16.msra.mxu0 0
  %3431 = vmatprep.subr.bf16.mxu0 0
  %3432 = vmatpush1.bf16.msra.mxu0 0
  %3433 = vmatprep.subr.bf16.mxu0 0
  %3434 = vmatpush1.bf16.msra.mxu0 0
  %3435 = vmatprep.subr.bf16.mxu0 0
  %3436 = vmatpush1.bf16.msra.mxu0 0
  %3437 = vmatprep.subr.bf16.mxu0 0
  %3438 = vmatpush1.bf16.msra.mxu0 0
  %3439 = vmatprep.subr.bf16.mxu0 0
  %3440 = vmatpush1.bf16.msra.mxu0 0
  %3441 = vmatprep.subr.bf16.mxu0 0
  %3442 = vmatpush1.bf16.msra.mxu0 0
  %3443 = vmatprep.subr.bf16.mxu0 0
  %3444 = vmatpush1.bf16.msra.mxu0 0
  %3445 = vmatprep.subr.bf16.mxu0 0
  %3446 = vmatpush1.bf16.msra.mxu0 0
  %3447 = vmatprep.subr.bf16.mxu0 0
  %3448 = vmatpush1.bf16.msra.mxu0 0
  %3449 = vmatprep.subr.bf16.mxu0 0
  %3450 = vmatpush1.bf16.msra.mxu0 0
  %3451 = vmatprep.subr.bf16.mxu0 0
  %3452 = vmatpush1.bf16.msra.mxu0 0
  %3453 = vmatprep.subr.bf16.mxu0 0
  %3454 = vmatpush1.bf16.msra.mxu0 0
  %3455 = vmatprep.subr.bf16.mxu0 0
  %3456 = vmatpush1.bf16.msra.mxu0 0
  %3457 = vmatprep.subr.bf16.mxu0 0
  %3458 = vmatpush1.bf16.msra.mxu0 0
  %3459 = vmatprep.mubr.bf16.mxu0 0
  %3460 = vmatmul.mubr.bf16.gmra.mrb[0].mxu0 %v1002
  %v3461 = vpop.f32.mrb[0].mxu0
  %v3462 = vadd.f32 0.0, %v3461
  %v3463 = vpop.f32.mrb[0].mxu0
  %v3464 = vadd.f32 0.0, %v3463
  %v3465 = vpop.f32.mrb[0].mxu0
  %v3466 = vpop.f32.mrb[0].mxu0
  %3467 = vdwg.mxu0
  %v3468 = vadd.f32 %v3405, %v3462
  %v3469 = vadd.f32 %v3407, %v3464
  %3470 = vrot.lane.b32.xlu0 %v3293, 31
  %v3471 = vpop.permute.xlu0 %3470
  %3472 = vrot.lane.b32.xlu0 %v3294, 31
  %v3473 = vpop.permute.xlu0 %3472
  %v3474 = vsel %vm1057, %v3471, %v3473
  %v3475 = vsel %vm1057, %v3473, %v3471
  %v3476 = vsel %vm1070, %v3475, 0.0
  %v3477 = vsel %vm1071, %v3474, 0.0
  %v3478 = vpack.c.bf16 %v3476, %v3476
  %v3479 = vpack.c.bf16 %v3477, %v3477
  %v3481 = vsel %vm106, %v3478, 0
  %v3484 = vsel %vm106, %v3479, 0
  %3486 = vmatprep.subr.bf16.mxu0 %v3484
  %3487 = vmatpush1.bf16.msra.mxu0 %v3481
  %3488 = vmatprep.subr.bf16.mxu0 0
  %3489 = vmatpush1.bf16.msra.mxu0 0
  %3490 = vmatprep.subr.bf16.mxu0 0
  %3491 = vmatpush1.bf16.msra.mxu0 0
  %3492 = vmatprep.subr.bf16.mxu0 0
  %3493 = vmatpush1.bf16.msra.mxu0 0
  %3494 = vmatprep.subr.bf16.mxu0 0
  %3495 = vmatpush1.bf16.msra.mxu0 0
  %3496 = vmatprep.subr.bf16.mxu0 0
  %3497 = vmatpush1.bf16.msra.mxu0 0
  %3498 = vmatprep.subr.bf16.mxu0 0
  %3499 = vmatpush1.bf16.msra.mxu0 0
  %3500 = vmatprep.subr.bf16.mxu0 0
  %3501 = vmatpush1.bf16.msra.mxu0 0
  %3502 = vmatprep.subr.bf16.mxu0 0
  %3503 = vmatpush1.bf16.msra.mxu0 0
  %3504 = vmatprep.subr.bf16.mxu0 0
  %3505 = vmatpush1.bf16.msra.mxu0 0
  %3506 = vmatprep.subr.bf16.mxu0 0
  %3507 = vmatpush1.bf16.msra.mxu0 0
  %3508 = vmatprep.subr.bf16.mxu0 0
  %3509 = vmatpush1.bf16.msra.mxu0 0
  %3510 = vmatprep.subr.bf16.mxu0 0
  %3511 = vmatpush1.bf16.msra.mxu0 0
  %3512 = vmatprep.subr.bf16.mxu0 0
  %3513 = vmatpush1.bf16.msra.mxu0 0
  %3514 = vmatprep.subr.bf16.mxu0 0
  %3515 = vmatpush1.bf16.msra.mxu0 0
  %3516 = vmatprep.subr.bf16.mxu0 0
  %3517 = vmatpush1.bf16.msra.mxu0 0
  %3518 = vmatprep.mubr.bf16.mxu0 0
  %3519 = vmatmul.mubr.bf16.gmra.mrb[0].mxu0 %v1077
  %v3520 = vpop.f32.mrb[0].mxu0
  %v3521 = vadd.f32 0.0, %v3520
  %v3522 = vpop.f32.mrb[0].mxu0
  %v3523 = vadd.f32 0.0, %v3522
  %v3524 = vpop.f32.mrb[0].mxu0
  %v3525 = vpop.f32.mrb[0].mxu0
  %3526 = vdwg.mxu0
  %v3527 = vadd.f32 %v3468, %v3521
  %v3528 = vadd.f32 %v3469, %v3523
  %3529 = vrot.lane.b32.xlu0 %v3293, 30
  %v3530 = vpop.permute.xlu0 %3529
  %3531 = vrot.lane.b32.xlu0 %v3294, 30
  %v3532 = vpop.permute.xlu0 %3531
  %v3533 = vsel %vm1132, %v3530, %v3532
  %v3534 = vsel %vm1132, %v3532, %v3530
  %v3535 = vsel %vm1146, %v3534, 0.0
  %v3536 = vsel %vm1147, %v3533, 0.0
  %v3537 = vpack.c.bf16 %v3535, %v3535
  %v3538 = vpack.c.bf16 %v3536, %v3536
  %v3540 = vsel %vm106, %v3537, 0
  %v3543 = vsel %vm106, %v3538, 0
  %3545 = vmatprep.subr.bf16.mxu0 %v3543
  %3546 = vmatpush1.bf16.msra.mxu0 %v3540
  %3547 = vmatprep.subr.bf16.mxu0 0
  %3548 = vmatpush1.bf16.msra.mxu0 0
  %3549 = vmatprep.subr.bf16.mxu0 0
  %3550 = vmatpush1.bf16.msra.mxu0 0
  %3551 = vmatprep.subr.bf16.mxu0 0
  %3552 = vmatpush1.bf16.msra.mxu0 0
  %3553 = vmatprep.subr.bf16.mxu0 0
  %3554 = vmatpush1.bf16.msra.mxu0 0
  %3555 = vmatprep.subr.bf16.mxu0 0
  %3556 = vmatpush1.bf16.msra.mxu0 0
  %3557 = vmatprep.subr.bf16.mxu0 0
  %3558 = vmatpush1.bf16.msra.mxu0 0
  %3559 = vmatprep.subr.bf16.mxu0 0
  %3560 = vmatpush1.bf16.msra.mxu0 0
  %3561 = vmatprep.subr.bf16.mxu0 0
  %3562 = vmatpush1.bf16.msra.mxu0 0
  %3563 = vmatprep.subr.bf16.mxu0 0
  %3564 = vmatpush1.bf16.msra.mxu0 0
  %3565 = vmatprep.subr.bf16.mxu0 0
  %3566 = vmatpush1.bf16.msra.mxu0 0
  %3567 = vmatprep.subr.bf16.mxu0 0
  %3568 = vmatpush1.bf16.msra.mxu0 0
  %3569 = vmatprep.subr.bf16.mxu0 0
  %3570 = vmatpush1.bf16.msra.mxu0 0
  %3571 = vmatprep.subr.bf16.mxu0 0
  %3572 = vmatpush1.bf16.msra.mxu0 0
  %3573 = vmatprep.subr.bf16.mxu0 0
  %3574 = vmatpush1.bf16.msra.mxu0 0
  %3575 = vmatprep.subr.bf16.mxu0 0
  %3576 = vmatpush1.bf16.msra.mxu0 0
  %3577 = vmatprep.mubr.bf16.mxu0 0
  %3578 = vmatmul.mubr.bf16.gmra.mrb[0].mxu0 %v1153
  %v3579 = vpop.f32.mrb[0].mxu0
  %v3580 = vadd.f32 0.0, %v3579
  %v3581 = vpop.f32.mrb[0].mxu0
  %v3582 = vadd.f32 0.0, %v3581
  %v3583 = vpop.f32.mrb[0].mxu0
  %v3584 = vpop.f32.mrb[0].mxu0
  %3585 = vdwg.mxu0
  %v3586 = vadd.f32 %v3527, %v3580
  %v3587 = vadd.f32 %v3528, %v3582
  %3588 = vrot.lane.b32.xlu0 %v3293, 18
  %v3589 = vpop.permute.xlu0 %3588
  %3590 = vrot.lane.b32.xlu0 %v3294, 18
  %v3591 = vpop.permute.xlu0 %3590
  %v3592 = vsel %vm1208, %v3589, %v3591
  %v3593 = vsel %vm1208, %v3591, %v3589
  %v3594 = vsel %vm1221, %v3593, 0.0
  %v3595 = vsel %vm1222, %v3592, 0.0
  %v3596 = vpack.c.bf16 %v3594, %v3594
  %v3597 = vpack.c.bf16 %v3595, %v3595
  %v3599 = vsel %vm106, %v3596, 0
  %v3602 = vsel %vm106, %v3597, 0
  %3604 = vmatprep.subr.bf16.mxu0 %v3602
  %3605 = vmatpush1.bf16.msra.mxu0 %v3599
  %3606 = vmatprep.subr.bf16.mxu0 0
  %3607 = vmatpush1.bf16.msra.mxu0 0
  %3608 = vmatprep.subr.bf16.mxu0 0
  %3609 = vmatpush1.bf16.msra.mxu0 0
  %3610 = vmatprep.subr.bf16.mxu0 0
  %3611 = vmatpush1.bf16.msra.mxu0 0
  %3612 = vmatprep.subr.bf16.mxu0 0
  %3613 = vmatpush1.bf16.msra.mxu0 0
  %3614 = vmatprep.subr.bf16.mxu0 0
  %3615 = vmatpush1.bf16.msra.mxu0 0
  %3616 = vmatprep.subr.bf16.mxu0 0
  %3617 = vmatpush1.bf16.msra.mxu0 0
  %3618 = vmatprep.subr.bf16.mxu0 0
  %3619 = vmatpush1.bf16.msra.mxu0 0
  %3620 = vmatprep.subr.bf16.mxu0 0
  %3621 = vmatpush1.bf16.msra.mxu0 0
  %3622 = vmatprep.subr.bf16.mxu0 0
  %3623 = vmatpush1.bf16.msra.mxu0 0
  %3624 = vmatprep.subr.bf16.mxu0 0
  %3625 = vmatpush1.bf16.msra.mxu0 0
  %3626 = vmatprep.subr.bf16.mxu0 0
  %3627 = vmatpush1.bf16.msra.mxu0 0
  %3628 = vmatprep.subr.bf16.mxu0 0
  %3629 = vmatpush1.bf16.msra.mxu0 0
  %3630 = vmatprep.subr.bf16.mxu0 0
  %3631 = vmatpush1.bf16.msra.mxu0 0
  %3632 = vmatprep.subr.bf16.mxu0 0
  %3633 = vmatpush1.bf16.msra.mxu0 0
  %3634 = vmatprep.subr.bf16.mxu0 0
  %3635 = vmatpush1.bf16.msra.mxu0 0
  %3636 = vmatprep.mubr.bf16.mxu0 0
  %3637 = vmatmul.mubr.bf16.gmra.mrb[0].mxu0 %v1228
  %v3638 = vpop.f32.mrb[0].mxu0
  %v3639 = vadd.f32 0.0, %v3638
  %v3640 = vpop.f32.mrb[0].mxu0
  %v3641 = vadd.f32 0.0, %v3640
  %v3642 = vpop.f32.mrb[0].mxu0
  %v3643 = vpop.f32.mrb[0].mxu0
  %3644 = vdwg.mxu0
  %v3645 = vadd.f32 %v3586, %v3639
  %v3646 = vadd.f32 %v3587, %v3641
  %3647 = vrot.lane.b32.xlu0 %v3293, 17
  %v3648 = vpop.permute.xlu0 %3647
  %3649 = vrot.lane.b32.xlu0 %v3294, 17
  %v3650 = vpop.permute.xlu0 %3649
  %v3651 = vsel %vm168, %v3648, %v3650
  %v3652 = vsel %vm168, %v3650, %v3648
  %v3653 = vsel %vm183, %v3652, 0.0
  %v3654 = vsel %vm184, %v3651, 0.0
  %v3655 = vpack.c.bf16 %v3653, %v3653
  %v3656 = vpack.c.bf16 %v3654, %v3654
  %v3658 = vsel %vm106, %v3655, 0
  %v3661 = vsel %vm106, %v3656, 0
  %3663 = vmatprep.subr.bf16.mxu0 %v3661
  %3664 = vmatpush1.bf16.msra.mxu0 %v3658
  %3665 = vmatprep.subr.bf16.mxu0 0
  %3666 = vmatpush1.bf16.msra.mxu0 0
  %3667 = vmatprep.subr.bf16.mxu0 0
  %3668 = vmatpush1.bf16.msra.mxu0 0
  %3669 = vmatprep.subr.bf16.mxu0 0
  %3670 = vmatpush1.bf16.msra.mxu0 0
  %3671 = vmatprep.subr.bf16.mxu0 0
  %3672 = vmatpush1.bf16.msra.mxu0 0
  %3673 = vmatprep.subr.bf16.mxu0 0
  %3674 = vmatpush1.bf16.msra.mxu0 0
  %3675 = vmatprep.subr.bf16.mxu0 0
  %3676 = vmatpush1.bf16.msra.mxu0 0
  %3677 = vmatprep.subr.bf16.mxu0 0
  %3678 = vmatpush1.bf16.msra.mxu0 0
  %3679 = vmatprep.subr.bf16.mxu0 0
  %3680 = vmatpush1.bf16.msra.mxu0 0
  %3681 = vmatprep.subr.bf16.mxu0 0
  %3682 = vmatpush1.bf16.msra.mxu0 0
  %3683 = vmatprep.subr.bf16.mxu0 0
  %3684 = vmatpush1.bf16.msra.mxu0 0
  %3685 = vmatprep.subr.bf16.mxu0 0
  %3686 = vmatpush1.bf16.msra.mxu0 0
  %3687 = vmatprep.subr.bf16.mxu0 0
  %3688 = vmatpush1.bf16.msra.mxu0 0
  %3689 = vmatprep.subr.bf16.mxu0 0
  %3690 = vmatpush1.bf16.msra.mxu0 0
  %3691 = vmatprep.subr.bf16.mxu0 0
  %3692 = vmatpush1.bf16.msra.mxu0 0
  %3693 = vmatprep.subr.bf16.mxu0 0
  %3694 = vmatpush1.bf16.msra.mxu0 0
  %3695 = vmatprep.mubr.bf16.mxu0 0
  %3696 = vmatmul.mubr.bf16.gmra.mrb[0].mxu0 %v1290
  %v3697 = vpop.f32.mrb[0].mxu0
  %v3698 = vadd.f32 0.0, %v3697
  %v3699 = vpop.f32.mrb[0].mxu0
  %v3700 = vadd.f32 0.0, %v3699
  %v3701 = vpop.f32.mrb[0].mxu0
  %v3702 = vpop.f32.mrb[0].mxu0
  %3703 = vdwg.mxu0
  %v3704 = vadd.f32 %v3645, %v3698
  %v3705 = vadd.f32 %v3646, %v3700
  %3706 = vrot.lane.b32.xlu0 %v3293, 16
  %v3707 = vpop.permute.xlu0 %3706
  %3708 = vrot.lane.b32.xlu0 %v3294, 16
  %v3709 = vpop.permute.xlu0 %3708
  %v3710 = vsel %vm193, %v3707, %v3709
  %v3711 = vsel %vm193, %v3709, %v3707
  %v3712 = vsel %vm205, %v3711, 0.0
  %v3713 = vsel %vm206, %v3710, 0.0
  %v3714 = vpack.c.bf16 %v3712, %v3712
  %v3715 = vpack.c.bf16 %v3713, %v3713
  %v3717 = vsel %vm106, %v3714, 0
  %v3720 = vsel %vm106, %v3715, 0
  %3722 = vmatprep.subr.bf16.mxu0 %v3720
  %3723 = vmatpush1.bf16.msra.mxu0 %v3717
  %3724 = vmatprep.subr.bf16.mxu0 0
  %3725 = vmatpush1.bf16.msra.mxu0 0
  %3726 = vmatprep.subr.bf16.mxu0 0
  %3727 = vmatpush1.bf16.msra.mxu0 0
  %3728 = vmatprep.subr.bf16.mxu0 0
  %3729 = vmatpush1.bf16.msra.mxu0 0
  %3730 = vmatprep.subr.bf16.mxu0 0
  %3731 = vmatpush1.bf16.msra.mxu0 0
  %3732 = vmatprep.subr.bf16.mxu0 0
  %3733 = vmatpush1.bf16.msra.mxu0 0
  %3734 = vmatprep.subr.bf16.mxu0 0
  %3735 = vmatpush1.bf16.msra.mxu0 0
  %3736 = vmatprep.subr.bf16.mxu0 0
  %3737 = vmatpush1.bf16.msra.mxu0 0
  %3738 = vmatprep.subr.bf16.mxu0 0
  %3739 = vmatpush1.bf16.msra.mxu0 0
  %3740 = vmatprep.subr.bf16.mxu0 0
  %3741 = vmatpush1.bf16.msra.mxu0 0
  %3742 = vmatprep.subr.bf16.mxu0 0
  %3743 = vmatpush1.bf16.msra.mxu0 0
  %3744 = vmatprep.subr.bf16.mxu0 0
  %3745 = vmatpush1.bf16.msra.mxu0 0
  %3746 = vmatprep.subr.bf16.mxu0 0
  %3747 = vmatpush1.bf16.msra.mxu0 0
  %3748 = vmatprep.subr.bf16.mxu0 0
  %3749 = vmatpush1.bf16.msra.mxu0 0
  %3750 = vmatprep.subr.bf16.mxu0 0
  %3751 = vmatpush1.bf16.msra.mxu0 0
  %3752 = vmatprep.subr.bf16.mxu0 0
  %3753 = vmatpush1.bf16.msra.mxu0 0
  %3754 = vmatprep.mubr.bf16.mxu0 0
  %3755 = vmatmul.mubr.bf16.gmra.mrb[0].mxu0 %v1352
  %v3756 = vpop.f32.mrb[0].mxu0
  %v3757 = vadd.f32 0.0, %v3756
  %v3758 = vpop.f32.mrb[0].mxu0
  %v3759 = vadd.f32 0.0, %v3758
  %v3760 = vpop.f32.mrb[0].mxu0
  %v3761 = vpop.f32.mrb[0].mxu0
  %3762 = vdwg.mxu0
  %v3763 = vadd.f32 %v3704, %v3757
  %v3764 = vadd.f32 %v3705, %v3759
  %3765 = vrot.lane.b32.xlu0 %v3293, 15
  %v3766 = vpop.permute.xlu0 %3765
  %3767 = vrot.lane.b32.xlu0 %v3294, 15
  %v3768 = vpop.permute.xlu0 %3767
  %v3769 = vsel %vm315, %v3766, %v3768
  %v3770 = vsel %vm315, %v3768, %v3766
  %v3771 = vsel %vm329, %v3770, 0.0
  %v3772 = vsel %vm330, %v3769, 0.0
  %v3773 = vpack.c.bf16 %v3771, %v3771
  %v3774 = vpack.c.bf16 %v3772, %v3772
  %v3776 = vsel %vm106, %v3773, 0
  %v3779 = vsel %vm106, %v3774, 0
  %3781 = vmatprep.subr.bf16.mxu0 %v3779
  %3782 = vmatpush1.bf16.msra.mxu0 %v3776
  %3783 = vmatprep.subr.bf16.mxu0 0
  %3784 = vmatpush1.bf16.msra.mxu0 0
  %3785 = vmatprep.subr.bf16.mxu0 0
  %3786 = vmatpush1.bf16.msra.mxu0 0
  %3787 = vmatprep.subr.bf16.mxu0 0
  %3788 = vmatpush1.bf16.msra.mxu0 0
  %3789 = vmatprep.subr.bf16.mxu0 0
  %3790 = vmatpush1.bf16.msra.mxu0 0
  %3791 = vmatprep.subr.bf16.mxu0 0
  %3792 = vmatpush1.bf16.msra.mxu0 0
  %3793 = vmatprep.subr.bf16.mxu0 0
  %3794 = vmatpush1.bf16.msra.mxu0 0
  %3795 = vmatprep.subr.bf16.mxu0 0
  %3796 = vmatpush1.bf16.msra.mxu0 0
  %3797 = vmatprep.subr.bf16.mxu0 0
  %3798 = vmatpush1.bf16.msra.mxu0 0
  %3799 = vmatprep.subr.bf16.mxu0 0
  %3800 = vmatpush1.bf16.msra.mxu0 0
  %3801 = vmatprep.subr.bf16.mxu0 0
  %3802 = vmatpush1.bf16.msra.mxu0 0
  %3803 = vmatprep.subr.bf16.mxu0 0
  %3804 = vmatpush1.bf16.msra.mxu0 0
  %3805 = vmatprep.subr.bf16.mxu0 0
  %3806 = vmatpush1.bf16.msra.mxu0 0
  %3807 = vmatprep.subr.bf16.mxu0 0
  %3808 = vmatpush1.bf16.msra.mxu0 0
  %3809 = vmatprep.subr.bf16.mxu0 0
  %3810 = vmatpush1.bf16.msra.mxu0 0
  %3811 = vmatprep.subr.bf16.mxu0 0
  %3812 = vmatpush1.bf16.msra.mxu0 0
  %3813 = vmatprep.mubr.bf16.mxu0 0
  %3814 = vmatmul.mubr.bf16.gmra.mrb[0].mxu0 %v1414
  %v3815 = vpop.f32.mrb[0].mxu0
  %v3816 = vadd.f32 0.0, %v3815
  %v3817 = vpop.f32.mrb[0].mxu0
  %v3818 = vadd.f32 0.0, %v3817
  %v3819 = vpop.f32.mrb[0].mxu0
  %v3820 = vpop.f32.mrb[0].mxu0
  %3821 = vdwg.mxu0
  %v3822 = vadd.f32 %v3763, %v3816
  %v3823 = vadd.f32 %v3764, %v3818
  %3824 = vrot.lane.b32.xlu0 %v3293, 14
  %v3825 = vpop.permute.xlu0 %3824
  %3826 = vrot.lane.b32.xlu0 %v3294, 14
  %v3827 = vpop.permute.xlu0 %3826
  %v3828 = vsel %vm1469, %v3825, %v3827
  %v3829 = vsel %vm1469, %v3827, %v3825
  %v3830 = vsel %vm1482, %v3829, 0.0
  %v3831 = vsel %vm1483, %v3828, 0.0
  %v3832 = vpack.c.bf16 %v3830, %v3830
  %v3833 = vpack.c.bf16 %v3831, %v3831
  %v3835 = vsel %vm106, %v3832, 0
  %v3838 = vsel %vm106, %v3833, 0
  %3840 = vmatprep.subr.bf16.mxu0 %v3838
  %3841 = vmatpush1.bf16.msra.mxu0 %v3835
  %3842 = vmatprep.subr.bf16.mxu0 0
  %3843 = vmatpush1.bf16.msra.mxu0 0
  %3844 = vmatprep.subr.bf16.mxu0 0
  %3845 = vmatpush1.bf16.msra.mxu0 0
  %3846 = vmatprep.subr.bf16.mxu0 0
  %3847 = vmatpush1.bf16.msra.mxu0 0
  %3848 = vmatprep.subr.bf16.mxu0 0
  %3849 = vmatpush1.bf16.msra.mxu0 0
  %3850 = vmatprep.subr.bf16.mxu0 0
  %3851 = vmatpush1.bf16.msra.mxu0 0
  %3852 = vmatprep.subr.bf16.mxu0 0
  %3853 = vmatpush1.bf16.msra.mxu0 0
  %3854 = vmatprep.subr.bf16.mxu0 0
  %3855 = vmatpush1.bf16.msra.mxu0 0
  %3856 = vmatprep.subr.bf16.mxu0 0
  %3857 = vmatpush1.bf16.msra.mxu0 0
  %3858 = vmatprep.subr.bf16.mxu0 0
  %3859 = vmatpush1.bf16.msra.mxu0 0
  %3860 = vmatprep.subr.bf16.mxu0 0
  %3861 = vmatpush1.bf16.msra.mxu0 0
  %3862 = vmatprep.subr.bf16.mxu0 0
  %3863 = vmatpush1.bf16.msra.mxu0 0
  %3864 = vmatprep.subr.bf16.mxu0 0
  %3865 = vmatpush1.bf16.msra.mxu0 0
  %3866 = vmatprep.subr.bf16.mxu0 0
  %3867 = vmatpush1.bf16.msra.mxu0 0
  %3868 = vmatprep.subr.bf16.mxu0 0
  %3869 = vmatpush1.bf16.msra.mxu0 0
  %3870 = vmatprep.subr.bf16.mxu0 0
  %3871 = vmatpush1.bf16.msra.mxu0 0
  %3872 = vmatprep.mubr.bf16.mxu0 0
  %3873 = vmatmul.mubr.bf16.gmra.mrb[0].mxu0 %v1489
  %v3874 = vpop.f32.mrb[0].mxu0
  %v3875 = vadd.f32 0.0, %v3874
  %v3876 = vpop.f32.mrb[0].mxu0
  %v3877 = vadd.f32 0.0, %v3876
  %v3878 = vpop.f32.mrb[0].mxu0
  %v3879 = vpop.f32.mrb[0].mxu0
  %3880 = vdwg.mxu0
  %v3881 = vadd.f32 %v3822, %v3875
  %v3882 = vadd.f32 %v3823, %v3877
  %3883 = vrot.lane.b32.xlu0 %v3293, 2
  %v3884 = vpop.permute.xlu0 %3883
  %3885 = vrot.lane.b32.xlu0 %v3294, 2
  %v3886 = vpop.permute.xlu0 %3885
  %v3887 = vsel %vm1544, %v3884, %v3886
  %v3888 = vsel %vm1544, %v3886, %v3884
  %v3889 = vsel %vm1556, %v3888, 0.0
  %v3890 = vsel %vm1557, %v3887, 0.0
  %v3891 = vpack.c.bf16 %v3889, %v3889
  %v3892 = vpack.c.bf16 %v3890, %v3890
  %v3894 = vsel %vm106, %v3891, 0
  %v3897 = vsel %vm106, %v3892, 0
  %3899 = vmatprep.subr.bf16.mxu0 %v3897
  %3900 = vmatpush1.bf16.msra.mxu0 %v3894
  %3901 = vmatprep.subr.bf16.mxu0 0
  %3902 = vmatpush1.bf16.msra.mxu0 0
  %3903 = vmatprep.subr.bf16.mxu0 0
  %3904 = vmatpush1.bf16.msra.mxu0 0
  %3905 = vmatprep.subr.bf16.mxu0 0
  %3906 = vmatpush1.bf16.msra.mxu0 0
  %3907 = vmatprep.subr.bf16.mxu0 0
  %3908 = vmatpush1.bf16.msra.mxu0 0
  %3909 = vmatprep.subr.bf16.mxu0 0
  %3910 = vmatpush1.bf16.msra.mxu0 0
  %3911 = vmatprep.subr.bf16.mxu0 0
  %3912 = vmatpush1.bf16.msra.mxu0 0
  %3913 = vmatprep.subr.bf16.mxu0 0
  %3914 = vmatpush1.bf16.msra.mxu0 0
  %3915 = vmatprep.subr.bf16.mxu0 0
  %3916 = vmatpush1.bf16.msra.mxu0 0
  %3917 = vmatprep.subr.bf16.mxu0 0
  %3918 = vmatpush1.bf16.msra.mxu0 0
  %3919 = vmatprep.subr.bf16.mxu0 0
  %3920 = vmatpush1.bf16.msra.mxu0 0
  %3921 = vmatprep.subr.bf16.mxu0 0
  %3922 = vmatpush1.bf16.msra.mxu0 0
  %3923 = vmatprep.subr.bf16.mxu0 0
  %3924 = vmatpush1.bf16.msra.mxu0 0
  %3925 = vmatprep.subr.bf16.mxu0 0
  %3926 = vmatpush1.bf16.msra.mxu0 0
  %3927 = vmatprep.subr.bf16.mxu0 0
  %3928 = vmatpush1.bf16.msra.mxu0 0
  %3929 = vmatprep.subr.bf16.mxu0 0
  %3930 = vmatpush1.bf16.msra.mxu0 0
  %3931 = vmatprep.mubr.bf16.mxu0 0
  %3932 = vmatmul.mubr.bf16.gmra.mrb[0].mxu0 %v1563
  %v3933 = vpop.f32.mrb[0].mxu0
  %v3934 = vadd.f32 0.0, %v3933
  %v3935 = vpop.f32.mrb[0].mxu0
  %v3936 = vadd.f32 0.0, %v3935
  %v3937 = vpop.f32.mrb[0].mxu0
  %v3938 = vpop.f32.mrb[0].mxu0
  %3939 = vdwg.mxu0
  %v3940 = vadd.f32 %v3881, %v3934
  %v3941 = vadd.f32 %v3882, %v3936
  %3942 = vrot.lane.b32.xlu0 %v3293, 1
  %v3943 = vpop.permute.xlu0 %3942
  %3944 = vrot.lane.b32.xlu0 %v3294, 1
  %v3945 = vpop.permute.xlu0 %3944
  %v3946 = vsel %vm391, %v3943, %v3945
  %v3947 = vsel %vm391, %v3945, %v3943
  %v3948 = vsel %vm403, %v3947, 0.0
  %v3949 = vsel %vm404, %v3946, 0.0
  %v3950 = vpack.c.bf16 %v3948, %v3948
  %v3951 = vpack.c.bf16 %v3949, %v3949
  %v3953 = vsel %vm106, %v3950, 0
  %v3956 = vsel %vm106, %v3951, 0
  %3958 = vmatprep.subr.bf16.mxu0 %v3956
  %3959 = vmatpush1.bf16.msra.mxu0 %v3953
  %3960 = vmatprep.subr.bf16.mxu0 0
  %3961 = vmatpush1.bf16.msra.mxu0 0
  %3962 = vmatprep.subr.bf16.mxu0 0
  %3963 = vmatpush1.bf16.msra.mxu0 0
  %3964 = vmatprep.subr.bf16.mxu0 0
  %3965 = vmatpush1.bf16.msra.mxu0 0
  %3966 = vmatprep.subr.bf16.mxu0 0
  %3967 = vmatpush1.bf16.msra.mxu0 0
  %3968 = vmatprep.subr.bf16.mxu0 0
  %3969 = vmatpush1.bf16.msra.mxu0 0
  %3970 = vmatprep.subr.bf16.mxu0 0
  %3971 = vmatpush1.bf16.msra.mxu0 0
  %3972 = vmatprep.subr.bf16.mxu0 0
  %3973 = vmatpush1.bf16.msra.mxu0 0
  %3974 = vmatprep.subr.bf16.mxu0 0
  %3975 = vmatpush1.bf16.msra.mxu0 0
  %3976 = vmatprep.subr.bf16.mxu0 0
  %3977 = vmatpush1.bf16.msra.mxu0 0
  %3978 = vmatprep.subr.bf16.mxu0 0
  %3979 = vmatpush1.bf16.msra.mxu0 0
  %3980 = vmatprep.subr.bf16.mxu0 0
  %3981 = vmatpush1.bf16.msra.mxu0 0
  %3982 = vmatprep.subr.bf16.mxu0 0
  %3983 = vmatpush1.bf16.msra.mxu0 0
  %3984 = vmatprep.subr.bf16.mxu0 0
  %3985 = vmatpush1.bf16.msra.mxu0 0
  %3986 = vmatprep.subr.bf16.mxu0 0
  %3987 = vmatpush1.bf16.msra.mxu0 0
  %3988 = vmatprep.subr.bf16.mxu0 0
  %3989 = vmatpush1.bf16.msra.mxu0 0
  %3990 = vmatprep.mubr.bf16.mxu0 0
  %3991 = vmatmul.mubr.bf16.gmra.mrb[0].mxu0 %v1625
  %v3992 = vpop.f32.mrb[0].mxu0
  %v3993 = vadd.f32 0.0, %v3992
  %v3994 = vpop.f32.mrb[0].mxu0
  %v3995 = vadd.f32 0.0, %v3994
  %v3996 = vpop.f32.mrb[0].mxu0
  %v3997 = vpop.f32.mrb[0].mxu0
  %3998 = vdwg.mxu0
  %v3999 = vadd.f32 %v3940, %v3993
  %v4000 = vadd.f32 %v3941, %v3995
  %v4003 = vrot.slane %v2998, 2
  %v4004 = vrot.slane %v2999, 2
  %v4006 = vsel %vm106, %v4003, 0
  %v4009 = vsel %vm106, %v4004, 0
  %4011 = vmatprep.subr.bf16.mxu0 %v4009
  %4012 = vmatpush1.bf16.msra.mxu0 %v4006
  %4013 = vmatprep.subr.bf16.mxu0 0
  %4014 = vmatpush1.bf16.msra.mxu0 0
  %4015 = vmatprep.subr.bf16.mxu0 0
  %4016 = vmatpush1.bf16.msra.mxu0 0
  %4017 = vmatprep.subr.bf16.mxu0 0
  %4018 = vmatpush1.bf16.msra.mxu0 0
  %4019 = vmatprep.subr.bf16.mxu0 0
  %4020 = vmatpush1.bf16.msra.mxu0 0
  %4021 = vmatprep.subr.bf16.mxu0 0
  %4022 = vmatpush1.bf16.msra.mxu0 0
  %4023 = vmatprep.subr.bf16.mxu0 0
  %4024 = vmatpush1.bf16.msra.mxu0 0
  %4025 = vmatprep.subr.bf16.mxu0 0
  %4026 = vmatpush1.bf16.msra.mxu0 0
  %4027 = vmatprep.subr.bf16.mxu0 0
  %4028 = vmatpush1.bf16.msra.mxu0 0
  %4029 = vmatprep.subr.bf16.mxu0 0
  %4030 = vmatpush1.bf16.msra.mxu0 0
  %4031 = vmatprep.subr.bf16.mxu0 0
  %4032 = vmatpush1.bf16.msra.mxu0 0
  %4033 = vmatprep.subr.bf16.mxu0 0
  %4034 = vmatpush1.bf16.msra.mxu0 0
  %4035 = vmatprep.subr.bf16.mxu0 0
  %4036 = vmatpush1.bf16.msra.mxu0 0
  %4037 = vmatprep.subr.bf16.mxu0 0
  %4038 = vmatpush1.bf16.msra.mxu0 0
  %4039 = vmatprep.subr.bf16.mxu0 0
  %4040 = vmatpush1.bf16.msra.mxu0 0
  %4041 = vmatprep.subr.bf16.mxu0 0
  %4042 = vmatpush1.bf16.msra.mxu0 0
  %4043 = vmatprep.mubr.bf16.mxu0 0
  %4044 = vmatmul.mubr.bf16.gmra.mrb[0].mxu0 %v1681
  %v4045 = vpop.f32.mrb[0].mxu0
  %v4046 = vadd.f32 0.0, %v4045
  %v4047 = vpop.f32.mrb[0].mxu0
  %v4048 = vadd.f32 0.0, %v4047
  %v4049 = vpop.f32.mrb[0].mxu0
  %v4050 = vpop.f32.mrb[0].mxu0
  %4051 = vdwg.mxu0
  %v4052 = vadd.f32 %v3999, %v4046
  %v4053 = vadd.f32 %v4000, %v4048
  %4054 = vrot.lane.b32.xlu0 %v3293, 127
  %v4055 = vpop.permute.xlu0 %4054
  %4056 = vrot.lane.b32.xlu0 %v3294, 127
  %v4057 = vpop.permute.xlu0 %4056
  %v4058 = vsel %vm519, %v4055, %v4057
  %v4059 = vsel %vm519, %v4057, %v4055
  %v4060 = vsel %vm531, %v4058, 0.0
  %v4061 = vsel %vm532, %v4059, 0.0
  %v4062 = vpack.c.bf16 %v4060, %v4060
  %v4063 = vpack.c.bf16 %v4061, %v4061
  %v4065 = vsel %vm106, %v4062, 0
  %v4068 = vsel %vm106, %v4063, 0
  %4070 = vmatprep.subr.bf16.mxu0 %v4068
  %4071 = vmatpush1.bf16.msra.mxu0 %v4065
  %4072 = vmatprep.subr.bf16.mxu0 0
  %4073 = vmatpush1.bf16.msra.mxu0 0
  %4074 = vmatprep.subr.bf16.mxu0 0
  %4075 = vmatpush1.bf16.msra.mxu0 0
  %4076 = vmatprep.subr.bf16.mxu0 0
  %4077 = vmatpush1.bf16.msra.mxu0 0
  %4078 = vmatprep.subr.bf16.mxu0 0
  %4079 = vmatpush1.bf16.msra.mxu0 0
  %4080 = vmatprep.subr.bf16.mxu0 0
  %4081 = vmatpush1.bf16.msra.mxu0 0
  %4082 = vmatprep.subr.bf16.mxu0 0
  %4083 = vmatpush1.bf16.msra.mxu0 0
  %4084 = vmatprep.subr.bf16.mxu0 0
  %4085 = vmatpush1.bf16.msra.mxu0 0
  %4086 = vmatprep.subr.bf16.mxu0 0
  %4087 = vmatpush1.bf16.msra.mxu0 0
  %4088 = vmatprep.subr.bf16.mxu0 0
  %4089 = vmatpush1.bf16.msra.mxu0 0
  %4090 = vmatprep.subr.bf16.mxu0 0
  %4091 = vmatpush1.bf16.msra.mxu0 0
  %4092 = vmatprep.subr.bf16.mxu0 0
  %4093 = vmatpush1.bf16.msra.mxu0 0
  %4094 = vmatprep.subr.bf16.mxu0 0
  %4095 = vmatpush1.bf16.msra.mxu0 0
  %4096 = vmatprep.subr.bf16.mxu0 0
  %4097 = vmatpush1.bf16.msra.mxu0 0
  %4098 = vmatprep.subr.bf16.mxu0 0
  %4099 = vmatpush1.bf16.msra.mxu0 0
  %4100 = vmatprep.subr.bf16.mxu0 0
  %4101 = vmatpush1.bf16.msra.mxu0 0
  %4102 = vmatprep.mubr.bf16.mxu0 0
  %4103 = vmatmul.mubr.bf16.gmra.mrb[0].mxu0 %v1743
  %v4104 = vpop.f32.mrb[0].mxu0
  %v4105 = vadd.f32 0.0, %v4104
  %v4106 = vpop.f32.mrb[0].mxu0
  %v4107 = vadd.f32 0.0, %v4106
  %v4108 = vpop.f32.mrb[0].mxu0
  %v4109 = vpop.f32.mrb[0].mxu0
  %4110 = vdwg.mxu0
  %v4111 = vadd.f32 %v4052, %v4105
  %v4112 = vadd.f32 %v4053, %v4107
  %4113 = vrot.lane.b32.xlu0 %v3293, 126
  %v4114 = vpop.permute.xlu0 %4113
  %4115 = vrot.lane.b32.xlu0 %v3294, 126
  %v4116 = vpop.permute.xlu0 %4115
  %v4117 = vsel %vm1798, %v4114, %v4116
  %v4118 = vsel %vm1798, %v4116, %v4114
  %v4119 = vsel %vm1810, %v4117, 0.0
  %v4120 = vsel %vm1811, %v4118, 0.0
  %v4121 = vpack.c.bf16 %v4119, %v4119
  %v4122 = vpack.c.bf16 %v4120, %v4120
  %v4124 = vsel %vm106, %v4121, 0
  %v4127 = vsel %vm106, %v4122, 0
  %4129 = vmatprep.subr.bf16.mxu0 %v4127
  %4130 = vmatpush1.bf16.msra.mxu0 %v4124
  %4131 = vmatprep.subr.bf16.mxu0 0
  %4132 = vmatpush1.bf16.msra.mxu0 0
  %4133 = vmatprep.subr.bf16.mxu0 0
  %4134 = vmatpush1.bf16.msra.mxu0 0
  %4135 = vmatprep.subr.bf16.mxu0 0
  %4136 = vmatpush1.bf16.msra.mxu0 0
  %4137 = vmatprep.subr.bf16.mxu0 0
  %4138 = vmatpush1.bf16.msra.mxu0 0
  %4139 = vmatprep.subr.bf16.mxu0 0
  %4140 = vmatpush1.bf16.msra.mxu0 0
  %4141 = vmatprep.subr.bf16.mxu0 0
  %4142 = vmatpush1.bf16.msra.mxu0 0
  %4143 = vmatprep.subr.bf16.mxu0 0
  %4144 = vmatpush1.bf16.msra.mxu0 0
  %4145 = vmatprep.subr.bf16.mxu0 0
  %4146 = vmatpush1.bf16.msra.mxu0 0
  %4147 = vmatprep.subr.bf16.mxu0 0
  %4148 = vmatpush1.bf16.msra.mxu0 0
  %4149 = vmatprep.subr.bf16.mxu0 0
  %4150 = vmatpush1.bf16.msra.mxu0 0
  %4151 = vmatprep.subr.bf16.mxu0 0
  %4152 = vmatpush1.bf16.msra.mxu0 0
  %4153 = vmatprep.subr.bf16.mxu0 0
  %4154 = vmatpush1.bf16.msra.mxu0 0
  %4155 = vmatprep.subr.bf16.mxu0 0
  %4156 = vmatpush1.bf16.msra.mxu0 0
  %4157 = vmatprep.subr.bf16.mxu0 0
  %4158 = vmatpush1.bf16.msra.mxu0 0
  %4159 = vmatprep.subr.bf16.mxu0 0
  %4160 = vmatpush1.bf16.msra.mxu0 0
  %4161 = vmatprep.mubr.bf16.mxu0 0
  %4162 = vmatmul.mubr.bf16.gmra.mrb[0].mxu0 %v1817
  %v4163 = vpop.f32.mrb[0].mxu0
  %v4164 = vadd.f32 0.0, %v4163
  %v4165 = vpop.f32.mrb[0].mxu0
  %v4166 = vadd.f32 0.0, %v4165
  %v4167 = vpop.f32.mrb[0].mxu0
  %v4168 = vpop.f32.mrb[0].mxu0
  %4169 = vdwg.mxu0
  %v4170 = vadd.f32 %v4111, %v4164
  %v4171 = vadd.f32 %v4112, %v4166
  %4172 = vrot.lane.b32.xlu0 %v3293, 114
  %v4173 = vpop.permute.xlu0 %4172
  %4174 = vrot.lane.b32.xlu0 %v3294, 114
  %v4175 = vpop.permute.xlu0 %4174
  %v4176 = vsel %vm1872, %v4173, %v4175
  %v4177 = vsel %vm1872, %v4175, %v4173
  %v4178 = vsel %vm1885, %v4176, 0.0
  %v4179 = vsel %vm1886, %v4177, 0.0
  %v4180 = vpack.c.bf16 %v4178, %v4178
  %v4181 = vpack.c.bf16 %v4179, %v4179
  %v4183 = vsel %vm106, %v4180, 0
  %v4186 = vsel %vm106, %v4181, 0
  %4188 = vmatprep.subr.bf16.mxu0 %v4186
  %4189 = vmatpush1.bf16.msra.mxu0 %v4183
  %4190 = vmatprep.subr.bf16.mxu0 0
  %4191 = vmatpush1.bf16.msra.mxu0 0
  %4192 = vmatprep.subr.bf16.mxu0 0
  %4193 = vmatpush1.bf16.msra.mxu0 0
  %4194 = vmatprep.subr.bf16.mxu0 0
  %4195 = vmatpush1.bf16.msra.mxu0 0
  %4196 = vmatprep.subr.bf16.mxu0 0
  %4197 = vmatpush1.bf16.msra.mxu0 0
  %4198 = vmatprep.subr.bf16.mxu0 0
  %4199 = vmatpush1.bf16.msra.mxu0 0
  %4200 = vmatprep.subr.bf16.mxu0 0
  %4201 = vmatpush1.bf16.msra.mxu0 0
  %4202 = vmatprep.subr.bf16.mxu0 0
  %4203 = vmatpush1.bf16.msra.mxu0 0
  %4204 = vmatprep.subr.bf16.mxu0 0
  %4205 = vmatpush1.bf16.msra.mxu0 0
  %4206 = vmatprep.subr.bf16.mxu0 0
  %4207 = vmatpush1.bf16.msra.mxu0 0
  %4208 = vmatprep.subr.bf16.mxu0 0
  %4209 = vmatpush1.bf16.msra.mxu0 0
  %4210 = vmatprep.subr.bf16.mxu0 0
  %4211 = vmatpush1.bf16.msra.mxu0 0
  %4212 = vmatprep.subr.bf16.mxu0 0
  %4213 = vmatpush1.bf16.msra.mxu0 0
  %4214 = vmatprep.subr.bf16.mxu0 0
  %4215 = vmatpush1.bf16.msra.mxu0 0
  %4216 = vmatprep.subr.bf16.mxu0 0
  %4217 = vmatpush1.bf16.msra.mxu0 0
  %4218 = vmatprep.subr.bf16.mxu0 0
  %4219 = vmatpush1.bf16.msra.mxu0 0
  %4220 = vmatprep.mubr.bf16.mxu0 0
  %4221 = vmatmul.mubr.bf16.gmra.mrb[0].mxu0 %v1892
  %v4222 = vpop.f32.mrb[0].mxu0
  %v4223 = vadd.f32 0.0, %v4222
  %v4224 = vpop.f32.mrb[0].mxu0
  %v4225 = vadd.f32 0.0, %v4224
  %v4226 = vpop.f32.mrb[0].mxu0
  %v4227 = vpop.f32.mrb[0].mxu0
  %4228 = vdwg.mxu0
  %v4229 = vadd.f32 %v4170, %v4223
  %v4230 = vadd.f32 %v4171, %v4225
  %4231 = vrot.lane.b32.xlu0 %v3293, 113
  %v4232 = vpop.permute.xlu0 %4231
  %4233 = vrot.lane.b32.xlu0 %v3294, 113
  %v4234 = vpop.permute.xlu0 %4233
  %v4235 = vsel %vm593, %v4232, %v4234
  %v4236 = vsel %vm593, %v4234, %v4232
  %v4237 = vsel %vm607, %v4235, 0.0
  %v4238 = vsel %vm608, %v4236, 0.0
  %v4239 = vpack.c.bf16 %v4237, %v4237
  %v4240 = vpack.c.bf16 %v4238, %v4238
  %v4242 = vsel %vm106, %v4239, 0
  %v4245 = vsel %vm106, %v4240, 0
  %4247 = vmatprep.subr.bf16.mxu0 %v4245
  %4248 = vmatpush1.bf16.msra.mxu0 %v4242
  %4249 = vmatprep.subr.bf16.mxu0 0
  %4250 = vmatpush1.bf16.msra.mxu0 0
  %4251 = vmatprep.subr.bf16.mxu0 0
  %4252 = vmatpush1.bf16.msra.mxu0 0
  %4253 = vmatprep.subr.bf16.mxu0 0
  %4254 = vmatpush1.bf16.msra.mxu0 0
  %4255 = vmatprep.subr.bf16.mxu0 0
  %4256 = vmatpush1.bf16.msra.mxu0 0
  %4257 = vmatprep.subr.bf16.mxu0 0
  %4258 = vmatpush1.bf16.msra.mxu0 0
  %4259 = vmatprep.subr.bf16.mxu0 0
  %4260 = vmatpush1.bf16.msra.mxu0 0
  %4261 = vmatprep.subr.bf16.mxu0 0
  %4262 = vmatpush1.bf16.msra.mxu0 0
  %4263 = vmatprep.subr.bf16.mxu0 0
  %4264 = vmatpush1.bf16.msra.mxu0 0
  %4265 = vmatprep.subr.bf16.mxu0 0
  %4266 = vmatpush1.bf16.msra.mxu0 0
  %4267 = vmatprep.subr.bf16.mxu0 0
  %4268 = vmatpush1.bf16.msra.mxu0 0
  %4269 = vmatprep.subr.bf16.mxu0 0
  %4270 = vmatpush1.bf16.msra.mxu0 0
  %4271 = vmatprep.subr.bf16.mxu0 0
  %4272 = vmatpush1.bf16.msra.mxu0 0
  %4273 = vmatprep.subr.bf16.mxu0 0
  %4274 = vmatpush1.bf16.msra.mxu0 0
  %4275 = vmatprep.subr.bf16.mxu0 0
  %4276 = vmatpush1.bf16.msra.mxu0 0
  %4277 = vmatprep.subr.bf16.mxu0 0
  %4278 = vmatpush1.bf16.msra.mxu0 0
  %4279 = vmatprep.mubr.bf16.mxu0 0
  %4280 = vmatmul.mubr.bf16.gmra.mrb[0].mxu0 %v1954
  %v4281 = vpop.f32.mrb[0].mxu0
  %v4282 = vadd.f32 0.0, %v4281
  %v4283 = vpop.f32.mrb[0].mxu0
  %v4284 = vadd.f32 0.0, %v4283
  %v4285 = vpop.f32.mrb[0].mxu0
  %v4286 = vpop.f32.mrb[0].mxu0
  %4287 = vdwg.mxu0
  %v4288 = vadd.f32 %v4229, %v4282
  %v4289 = vadd.f32 %v4230, %v4284
  %4290 = vrot.lane.b32.xlu0 %v3293, 112
  %v4291 = vpop.permute.xlu0 %4290
  %4292 = vrot.lane.b32.xlu0 %v3294, 112
  %v4293 = vpop.permute.xlu0 %4292
  %v4294 = vsel %vm669, %v4291, %v4293
  %v4295 = vsel %vm669, %v4293, %v4291
  %v4296 = vsel %vm681, %v4294, 0.0
  %v4297 = vsel %vm682, %v4295, 0.0
  %v4298 = vpack.c.bf16 %v4296, %v4296
  %v4299 = vpack.c.bf16 %v4297, %v4297
  %v4301 = vsel %vm106, %v4298, 0
  %v4304 = vsel %vm106, %v4299, 0
  %4306 = vmatprep.subr.bf16.mxu0 %v4304
  %4307 = vmatpush1.bf16.msra.mxu0 %v4301
  %4308 = vmatprep.subr.bf16.mxu0 0
  %4309 = vmatpush1.bf16.msra.mxu0 0
  %4310 = vmatprep.subr.bf16.mxu0 0
  %4311 = vmatpush1.bf16.msra.mxu0 0
  %4312 = vmatprep.subr.bf16.mxu0 0
  %4313 = vmatpush1.bf16.msra.mxu0 0
  %4314 = vmatprep.subr.bf16.mxu0 0
  %4315 = vmatpush1.bf16.msra.mxu0 0
  %4316 = vmatprep.subr.bf16.mxu0 0
  %4317 = vmatpush1.bf16.msra.mxu0 0
  %4318 = vmatprep.subr.bf16.mxu0 0
  %4319 = vmatpush1.bf16.msra.mxu0 0
  %4320 = vmatprep.subr.bf16.mxu0 0
  %4321 = vmatpush1.bf16.msra.mxu0 0
  %4322 = vmatprep.subr.bf16.mxu0 0
  %4323 = vmatpush1.bf16.msra.mxu0 0
  %4324 = vmatprep.subr.bf16.mxu0 0
  %4325 = vmatpush1.bf16.msra.mxu0 0
  %4326 = vmatprep.subr.bf16.mxu0 0
  %4327 = vmatpush1.bf16.msra.mxu0 0
  %4328 = vmatprep.subr.bf16.mxu0 0
  %4329 = vmatpush1.bf16.msra.mxu0 0
  %4330 = vmatprep.subr.bf16.mxu0 0
  %4331 = vmatpush1.bf16.msra.mxu0 0
  %4332 = vmatprep.subr.bf16.mxu0 0
  %4333 = vmatpush1.bf16.msra.mxu0 0
  %4334 = vmatprep.subr.bf16.mxu0 0
  %4335 = vmatpush1.bf16.msra.mxu0 0
  %4336 = vmatprep.subr.bf16.mxu0 0
  %4337 = vmatpush1.bf16.msra.mxu0 0
  %4338 = vmatprep.mubr.bf16.mxu0 0
  %4339 = vmatmul.mubr.bf16.gmra.mrb[0].mxu0 %v2016
  %v4340 = vpop.f32.mrb[0].mxu0
  %v4341 = vadd.f32 0.0, %v4340
  %v4342 = vpop.f32.mrb[0].mxu0
  %v4343 = vadd.f32 0.0, %v4342
  %v4344 = vpop.f32.mrb[0].mxu0
  %v4345 = vpop.f32.mrb[0].mxu0
  %4346 = vdwg.mxu0
  %v4347 = vadd.f32 %v4288, %v4341
  %v4348 = vadd.f32 %v4289, %v4343
  %4349 = vrot.lane.b32.xlu0 %v3293, 111
  %v4350 = vpop.permute.xlu0 %4349
  %4351 = vrot.lane.b32.xlu0 %v3294, 111
  %v4352 = vpop.permute.xlu0 %4351
  %v4353 = vsel %vm743, %v4350, %v4352
  %v4354 = vsel %vm743, %v4352, %v4350
  %v4355 = vsel %vm756, %v4353, 0.0
  %v4356 = vsel %vm757, %v4354, 0.0
  %v4357 = vpack.c.bf16 %v4355, %v4355
  %v4358 = vpack.c.bf16 %v4356, %v4356
  %v4360 = vsel %vm106, %v4357, 0
  %v4363 = vsel %vm106, %v4358, 0
  %4365 = vmatprep.subr.bf16.mxu0 %v4363
  %4366 = vmatpush1.bf16.msra.mxu0 %v4360
  %4367 = vmatprep.subr.bf16.mxu0 0
  %4368 = vmatpush1.bf16.msra.mxu0 0
  %4369 = vmatprep.subr.bf16.mxu0 0
  %4370 = vmatpush1.bf16.msra.mxu0 0
  %4371 = vmatprep.subr.bf16.mxu0 0
  %4372 = vmatpush1.bf16.msra.mxu0 0
  %4373 = vmatprep.subr.bf16.mxu0 0
  %4374 = vmatpush1.bf16.msra.mxu0 0
  %4375 = vmatprep.subr.bf16.mxu0 0
  %4376 = vmatpush1.bf16.msra.mxu0 0
  %4377 = vmatprep.subr.bf16.mxu0 0
  %4378 = vmatpush1.bf16.msra.mxu0 0
  %4379 = vmatprep.subr.bf16.mxu0 0
  %4380 = vmatpush1.bf16.msra.mxu0 0
  %4381 = vmatprep.subr.bf16.mxu0 0
  %4382 = vmatpush1.bf16.msra.mxu0 0
  %4383 = vmatprep.subr.bf16.mxu0 0
  %4384 = vmatpush1.bf16.msra.mxu0 0
  %4385 = vmatprep.subr.bf16.mxu0 0
  %4386 = vmatpush1.bf16.msra.mxu0 0
  %4387 = vmatprep.subr.bf16.mxu0 0
  %4388 = vmatpush1.bf16.msra.mxu0 0
  %4389 = vmatprep.subr.bf16.mxu0 0
  %4390 = vmatpush1.bf16.msra.mxu0 0
  %4391 = vmatprep.subr.bf16.mxu0 0
  %4392 = vmatpush1.bf16.msra.mxu0 0
  %4393 = vmatprep.subr.bf16.mxu0 0
  %4394 = vmatpush1.bf16.msra.mxu0 0
  %4395 = vmatprep.subr.bf16.mxu0 0
  %4396 = vmatpush1.bf16.msra.mxu0 0
  %4397 = vmatprep.mubr.bf16.mxu0 0
  %4398 = vmatmul.mubr.bf16.gmra.mrb[0].mxu0 %v2078
  %v4399 = vpop.f32.mrb[0].mxu0
  %v4400 = vadd.f32 0.0, %v4399
  %v4401 = vpop.f32.mrb[0].mxu0
  %v4402 = vadd.f32 0.0, %v4401
  %v4403 = vpop.f32.mrb[0].mxu0
  %v4404 = vpop.f32.mrb[0].mxu0
  %4405 = vdwg.mxu0
  %v4406 = vadd.f32 %v4347, %v4400
  %v4407 = vadd.f32 %v4348, %v4402
  %4408 = vrot.lane.b32.xlu0 %v3293, 110
  %v4409 = vpop.permute.xlu0 %4408
  %4410 = vrot.lane.b32.xlu0 %v3294, 110
  %v4411 = vpop.permute.xlu0 %4410
  %v4412 = vsel %vm2133, %v4409, %v4411
  %v4413 = vsel %vm2133, %v4411, %v4409
  %v4414 = vsel %vm2146, %v4412, 0.0
  %v4415 = vsel %vm2147, %v4413, 0.0
  %v4416 = vpack.c.bf16 %v4414, %v4414
  %v4417 = vpack.c.bf16 %v4415, %v4415
  %v4419 = vsel %vm106, %v4416, 0
  %v4422 = vsel %vm106, %v4417, 0
  %4424 = vmatprep.subr.bf16.mxu0 %v4422
  %4425 = vmatpush1.bf16.msra.mxu0 %v4419
  %4426 = vmatprep.subr.bf16.mxu0 0
  %4427 = vmatpush1.bf16.msra.mxu0 0
  %4428 = vmatprep.subr.bf16.mxu0 0
  %4429 = vmatpush1.bf16.msra.mxu0 0
  %4430 = vmatprep.subr.bf16.mxu0 0
  %4431 = vmatpush1.bf16.msra.mxu0 0
  %4432 = vmatprep.subr.bf16.mxu0 0
  %4433 = vmatpush1.bf16.msra.mxu0 0
  %4434 = vmatprep.subr.bf16.mxu0 0
  %4435 = vmatpush1.bf16.msra.mxu0 0
  %4436 = vmatprep.subr.bf16.mxu0 0
  %4437 = vmatpush1.bf16.msra.mxu0 0
  %4438 = vmatprep.subr.bf16.mxu0 0
  %4439 = vmatpush1.bf16.msra.mxu0 0
  %4440 = vmatprep.subr.bf16.mxu0 0
  %4441 = vmatpush1.bf16.msra.mxu0 0
  %4442 = vmatprep.subr.bf16.mxu0 0
  %4443 = vmatpush1.bf16.msra.mxu0 0
  %4444 = vmatprep.subr.bf16.mxu0 0
  %4445 = vmatpush1.bf16.msra.mxu0 0
  %4446 = vmatprep.subr.bf16.mxu0 0
  %4447 = vmatpush1.bf16.msra.mxu0 0
  %4448 = vmatprep.subr.bf16.mxu0 0
  %4449 = vmatpush1.bf16.msra.mxu0 0
  %4450 = vmatprep.subr.bf16.mxu0 0
  %4451 = vmatpush1.bf16.msra.mxu0 0
  %4452 = vmatprep.subr.bf16.mxu0 0
  %4453 = vmatpush1.bf16.msra.mxu0 0
  %4454 = vmatprep.subr.bf16.mxu0 0
  %4455 = vmatpush1.bf16.msra.mxu0 0
  %4456 = vmatprep.mubr.bf16.mxu0 0
  %4457 = vmatmul.mubr.bf16.gmra.mrb[0].mxu0 %v2153
  %v4458 = vpop.f32.mrb[0].mxu0
  %v4459 = vadd.f32 0.0, %v4458
  %v4460 = vpop.f32.mrb[0].mxu0
  %v4461 = vadd.f32 0.0, %v4460
  %v4462 = vpop.f32.mrb[0].mxu0
  %v4463 = vpop.f32.mrb[0].mxu0
  %4464 = vdwg.mxu0
  %v4465 = vadd.f32 %v4406, %v4459
  %v4466 = vadd.f32 %v4407, %v4461
  %4467 = vrot.lane.b32.xlu0 %v3293, 98
  %v4468 = vpop.permute.xlu0 %4467
  %4469 = vrot.lane.b32.xlu0 %v3294, 98
  %v4470 = vpop.permute.xlu0 %4469
  %v4471 = vsel %vm2208, %v4468, %v4470
  %v4472 = vsel %vm2208, %v4470, %v4468
  %v4473 = vsel %vm2222, %v4471, 0.0
  %v4474 = vsel %vm2223, %v4472, 0.0
  %v4475 = vpack.c.bf16 %v4473, %v4473
  %v4476 = vpack.c.bf16 %v4474, %v4474
  %v4478 = vsel %vm106, %v4475, 0
  %v4481 = vsel %vm106, %v4476, 0
  %4483 = vmatprep.subr.bf16.mxu0 %v4481
  %4484 = vmatpush1.bf16.msra.mxu0 %v4478
  %4485 = vmatprep.subr.bf16.mxu0 0
  %4486 = vmatpush1.bf16.msra.mxu0 0
  %4487 = vmatprep.subr.bf16.mxu0 0
  %4488 = vmatpush1.bf16.msra.mxu0 0
  %4489 = vmatprep.subr.bf16.mxu0 0
  %4490 = vmatpush1.bf16.msra.mxu0 0
  %4491 = vmatprep.subr.bf16.mxu0 0
  %4492 = vmatpush1.bf16.msra.mxu0 0
  %4493 = vmatprep.subr.bf16.mxu0 0
  %4494 = vmatpush1.bf16.msra.mxu0 0
  %4495 = vmatprep.subr.bf16.mxu0 0
  %4496 = vmatpush1.bf16.msra.mxu0 0
  %4497 = vmatprep.subr.bf16.mxu0 0
  %4498 = vmatpush1.bf16.msra.mxu0 0
  %4499 = vmatprep.subr.bf16.mxu0 0
  %4500 = vmatpush1.bf16.msra.mxu0 0
  %4501 = vmatprep.subr.bf16.mxu0 0
  %4502 = vmatpush1.bf16.msra.mxu0 0
  %4503 = vmatprep.subr.bf16.mxu0 0
  %4504 = vmatpush1.bf16.msra.mxu0 0
  %4505 = vmatprep.subr.bf16.mxu0 0
  %4506 = vmatpush1.bf16.msra.mxu0 0
  %4507 = vmatprep.subr.bf16.mxu0 0
  %4508 = vmatpush1.bf16.msra.mxu0 0
  %4509 = vmatprep.subr.bf16.mxu0 0
  %4510 = vmatpush1.bf16.msra.mxu0 0
  %4511 = vmatprep.subr.bf16.mxu0 0
  %4512 = vmatpush1.bf16.msra.mxu0 0
  %4513 = vmatprep.subr.bf16.mxu0 0
  %4514 = vmatpush1.bf16.msra.mxu0 0
  %4515 = vmatprep.mubr.bf16.mxu0 0
  %4516 = vmatmul.mubr.bf16.gmra.mrb[0].mxu0 %v2229
  %v4517 = vpop.f32.mrb[0].mxu0
  %v4518 = vadd.f32 0.0, %v4517
  %v4519 = vpop.f32.mrb[0].mxu0
  %v4520 = vadd.f32 0.0, %v4519
  %v4521 = vpop.f32.mrb[0].mxu0
  %v4522 = vpop.f32.mrb[0].mxu0
  %4523 = vdwg.mxu0
  %v4524 = vadd.f32 %v4465, %v4518
  %v4525 = vadd.f32 %v4466, %v4520
  %4526 = vrot.lane.b32.xlu0 %v3293, 97
  %v4527 = vpop.permute.xlu0 %4526
  %4528 = vrot.lane.b32.xlu0 %v3294, 97
  %v4529 = vpop.permute.xlu0 %4528
  %v4530 = vsel %vm2284, %v4527, %v4529
  %v4531 = vsel %vm2284, %v4529, %v4527
  %v4532 = vsel %vm2297, %v4530, 0.0
  %v4533 = vsel %vm2298, %v4531, 0.0
  %v4534 = vpack.c.bf16 %v4532, %v4532
  %v4535 = vpack.c.bf16 %v4533, %v4533
  %v4537 = vsel %vm106, %v4534, 0
  %v4540 = vsel %vm106, %v4535, 0
  %4542 = vmatprep.subr.bf16.mxu0 %v4540
  %4543 = vmatpush1.bf16.msra.mxu0 %v4537
  %4544 = vmatprep.subr.bf16.mxu0 0
  %4545 = vmatpush1.bf16.msra.mxu0 0
  %4546 = vmatprep.subr.bf16.mxu0 0
  %4547 = vmatpush1.bf16.msra.mxu0 0
  %4548 = vmatprep.subr.bf16.mxu0 0
  %4549 = vmatpush1.bf16.msra.mxu0 0
  %4550 = vmatprep.subr.bf16.mxu0 0
  %4551 = vmatpush1.bf16.msra.mxu0 0
  %4552 = vmatprep.subr.bf16.mxu0 0
  %4553 = vmatpush1.bf16.msra.mxu0 0
  %4554 = vmatprep.subr.bf16.mxu0 0
  %4555 = vmatpush1.bf16.msra.mxu0 0
  %4556 = vmatprep.subr.bf16.mxu0 0
  %4557 = vmatpush1.bf16.msra.mxu0 0
  %4558 = vmatprep.subr.bf16.mxu0 0
  %4559 = vmatpush1.bf16.msra.mxu0 0
  %4560 = vmatprep.subr.bf16.mxu0 0
  %4561 = vmatpush1.bf16.msra.mxu0 0
  %4562 = vmatprep.subr.bf16.mxu0 0
  %4563 = vmatpush1.bf16.msra.mxu0 0
  %4564 = vmatprep.subr.bf16.mxu0 0
  %4565 = vmatpush1.bf16.msra.mxu0 0
  %4566 = vmatprep.subr.bf16.mxu0 0
  %4567 = vmatpush1.bf16.msra.mxu0 0
  %4568 = vmatprep.subr.bf16.mxu0 0
  %4569 = vmatpush1.bf16.msra.mxu0 0
  %4570 = vmatprep.subr.bf16.mxu0 0
  %4571 = vmatpush1.bf16.msra.mxu0 0
  %4572 = vmatprep.subr.bf16.mxu0 0
  %4573 = vmatpush1.bf16.msra.mxu0 0
  %4574 = vmatprep.mubr.bf16.mxu0 0
  %4575 = vmatmul.mubr.bf16.gmra.mrb[0].mxu0 %v2304
  %v4576 = vpop.f32.mrb[0].mxu0
  %v4577 = vadd.f32 0.0, %v4576
  %v4578 = vpop.f32.mrb[0].mxu0
  %v4579 = vadd.f32 0.0, %v4578
  %v4580 = vpop.f32.mrb[0].mxu0
  %v4581 = vpop.f32.mrb[0].mxu0
  %4582 = vdwg.mxu0
  %v4583 = vadd.f32 %v4524, %v4577
  %v4584 = vadd.f32 %v4525, %v4579
  %4585 = vrot.lane.b32.xlu0 %v3293, 96
  %v4586 = vpop.permute.xlu0 %4585
  %4587 = vrot.lane.b32.xlu0 %v3294, 96
  %v4588 = vpop.permute.xlu0 %4587
  %v4589 = vsel %vm2359, %v4586, %v4588
  %v4590 = vsel %vm2359, %v4588, %v4586
  %v4591 = vsel %vm2371, %v4589, 0.0
  %v4592 = vsel %vm2372, %v4590, 0.0
  %v4593 = vpack.c.bf16 %v4591, %v4591
  %v4594 = vpack.c.bf16 %v4592, %v4592
  %v4596 = vsel %vm106, %v4593, 0
  %v4599 = vsel %vm106, %v4594, 0
  %4601 = vmatprep.subr.bf16.mxu0 %v4599
  %4602 = vmatpush1.bf16.msra.mxu0 %v4596
  %4603 = vmatprep.subr.bf16.mxu0 0
  %4604 = vmatpush1.bf16.msra.mxu0 0
  %4605 = vmatprep.subr.bf16.mxu0 0
  %4606 = vmatpush1.bf16.msra.mxu0 0
  %4607 = vmatprep.subr.bf16.mxu0 0
  %4608 = vmatpush1.bf16.msra.mxu0 0
  %4609 = vmatprep.subr.bf16.mxu0 0
  %4610 = vmatpush1.bf16.msra.mxu0 0
  %4611 = vmatprep.subr.bf16.mxu0 0
  %4612 = vmatpush1.bf16.msra.mxu0 0
  %4613 = vmatprep.subr.bf16.mxu0 0
  %4614 = vmatpush1.bf16.msra.mxu0 0
  %4615 = vmatprep.subr.bf16.mxu0 0
  %4616 = vmatpush1.bf16.msra.mxu0 0
  %4617 = vmatprep.subr.bf16.mxu0 0
  %4618 = vmatpush1.bf16.msra.mxu0 0
  %4619 = vmatprep.subr.bf16.mxu0 0
  %4620 = vmatpush1.bf16.msra.mxu0 0
  %4621 = vmatprep.subr.bf16.mxu0 0
  %4622 = vmatpush1.bf16.msra.mxu0 0
  %4623 = vmatprep.subr.bf16.mxu0 0
  %4624 = vmatpush1.bf16.msra.mxu0 0
  %4625 = vmatprep.subr.bf16.mxu0 0
  %4626 = vmatpush1.bf16.msra.mxu0 0
  %4627 = vmatprep.subr.bf16.mxu0 0
  %4628 = vmatpush1.bf16.msra.mxu0 0
  %4629 = vmatprep.subr.bf16.mxu0 0
  %4630 = vmatpush1.bf16.msra.mxu0 0
  %4631 = vmatprep.subr.bf16.mxu0 0
  %4632 = vmatpush1.bf16.msra.mxu0 0
  %4633 = vmatprep.mubr.bf16.mxu0 0
  %4634 = vmatmul.mubr.bf16.gmra.mrb[0].mxu0 %v2378
  %v4635 = vpop.f32.mrb[0].mxu0
  %v4636 = vadd.f32 0.0, %v4635
  %v4637 = vpop.f32.mrb[0].mxu0
  %v4638 = vadd.f32 0.0, %v4637
  %v4639 = vpop.f32.mrb[0].mxu0
  %v4640 = vpop.f32.mrb[0].mxu0
  %4641 = vdwg.mxu0
  %v4642 = vadd.f32 %v4583, %v4636
  %v4643 = vadd.f32 %v4584, %v4638
  %4644 = vrot.lane.b32.xlu0 %v3293, 95
  %v4645 = vpop.permute.xlu0 %4644
  %4646 = vrot.lane.b32.xlu0 %v3294, 95
  %v4647 = vpop.permute.xlu0 %4646
  %v4648 = vsel %vm2433, %v4645, %v4647
  %v4649 = vsel %vm2433, %v4647, %v4645
  %v4650 = vsel %vm2446, %v4648, 0.0
  %v4651 = vsel %vm2447, %v4649, 0.0
  %v4652 = vpack.c.bf16 %v4650, %v4650
  %v4653 = vpack.c.bf16 %v4651, %v4651
  %v4655 = vsel %vm106, %v4652, 0
  %v4658 = vsel %vm106, %v4653, 0
  %4660 = vmatprep.subr.bf16.mxu0 %v4658
  %4661 = vmatpush1.bf16.msra.mxu0 %v4655
  %4662 = vmatprep.subr.bf16.mxu0 0
  %4663 = vmatpush1.bf16.msra.mxu0 0
  %4664 = vmatprep.subr.bf16.mxu0 0
  %4665 = vmatpush1.bf16.msra.mxu0 0
  %4666 = vmatprep.subr.bf16.mxu0 0
  %4667 = vmatpush1.bf16.msra.mxu0 0
  %4668 = vmatprep.subr.bf16.mxu0 0
  %4669 = vmatpush1.bf16.msra.mxu0 0
  %4670 = vmatprep.subr.bf16.mxu0 0
  %4671 = vmatpush1.bf16.msra.mxu0 0
  %4672 = vmatprep.subr.bf16.mxu0 0
  %4673 = vmatpush1.bf16.msra.mxu0 0
  %4674 = vmatprep.subr.bf16.mxu0 0
  %4675 = vmatpush1.bf16.msra.mxu0 0
  %4676 = vmatprep.subr.bf16.mxu0 0
  %4677 = vmatpush1.bf16.msra.mxu0 0
  %4678 = vmatprep.subr.bf16.mxu0 0
  %4679 = vmatpush1.bf16.msra.mxu0 0
  %4680 = vmatprep.subr.bf16.mxu0 0
  %4681 = vmatpush1.bf16.msra.mxu0 0
  %4682 = vmatprep.subr.bf16.mxu0 0
  %4683 = vmatpush1.bf16.msra.mxu0 0
  %4684 = vmatprep.subr.bf16.mxu0 0
  %4685 = vmatpush1.bf16.msra.mxu0 0
  %4686 = vmatprep.subr.bf16.mxu0 0
  %4687 = vmatpush1.bf16.msra.mxu0 0
  %4688 = vmatprep.subr.bf16.mxu0 0
  %4689 = vmatpush1.bf16.msra.mxu0 0
  %4690 = vmatprep.subr.bf16.mxu0 0
  %4691 = vmatpush1.bf16.msra.mxu0 0
  %4692 = vmatprep.mubr.bf16.mxu0 0
  %4693 = vmatmul.mubr.bf16.gmra.mrb[0].mxu0 %v2453
  %v4694 = vpop.f32.mrb[0].mxu0
  %v4695 = vadd.f32 0.0, %v4694
  %v4696 = vpop.f32.mrb[0].mxu0
  %v4697 = vadd.f32 0.0, %v4696
  %v4698 = vpop.f32.mrb[0].mxu0
  %v4699 = vpop.f32.mrb[0].mxu0
  %4700 = vdwg.mxu0
  %v4701 = vadd.f32 %v4642, %v4695
  %v4702 = vadd.f32 %v4643, %v4697
  %4703 = vrot.lane.b32.xlu0 %v3293, 94
  %v4704 = vpop.permute.xlu0 %4703
  %4705 = vrot.lane.b32.xlu0 %v3294, 94
  %v4706 = vpop.permute.xlu0 %4705
  %v4707 = vsel %vm2508, %v4704, %v4706
  %v4708 = vsel %vm2508, %v4706, %v4704
  %v4709 = vsel %vm2521, %v4707, 0.0
  %v4710 = vsel %vm2522, %v4708, 0.0
  %v4711 = vpack.c.bf16 %v4709, %v4709
  %v4712 = vpack.c.bf16 %v4710, %v4710
  %v4714 = vsel %vm106, %v4711, 0
  %v4717 = vsel %vm106, %v4712, 0
  %4719 = vmatprep.subr.bf16.mxu0 %v4717
  %4720 = vmatpush1.bf16.msra.mxu0 %v4714
  %4721 = vmatprep.subr.bf16.mxu0 0
  %4722 = vmatpush1.bf16.msra.mxu0 0
  %4723 = vmatprep.subr.bf16.mxu0 0
  %4724 = vmatpush1.bf16.msra.mxu0 0
  %4725 = vmatprep.subr.bf16.mxu0 0
  %4726 = vmatpush1.bf16.msra.mxu0 0
  %4727 = vmatprep.subr.bf16.mxu0 0
  %4728 = vmatpush1.bf16.msra.mxu0 0
  %4729 = vmatprep.subr.bf16.mxu0 0
  %4730 = vmatpush1.bf16.msra.mxu0 0
  %4731 = vmatprep.subr.bf16.mxu0 0
  %4732 = vmatpush1.bf16.msra.mxu0 0
  %4733 = vmatprep.subr.bf16.mxu0 0
  %4734 = vmatpush1.bf16.msra.mxu0 0
  %4735 = vmatprep.subr.bf16.mxu0 0
  %4736 = vmatpush1.bf16.msra.mxu0 0
  %4737 = vmatprep.subr.bf16.mxu0 0
  %4738 = vmatpush1.bf16.msra.mxu0 0
  %4739 = vmatprep.subr.bf16.mxu0 0
  %4740 = vmatpush1.bf16.msra.mxu0 0
  %4741 = vmatprep.subr.bf16.mxu0 0
  %4742 = vmatpush1.bf16.msra.mxu0 0
  %4743 = vmatprep.subr.bf16.mxu0 0
  %4744 = vmatpush1.bf16.msra.mxu0 0
  %4745 = vmatprep.subr.bf16.mxu0 0
  %4746 = vmatpush1.bf16.msra.mxu0 0
  %4747 = vmatprep.subr.bf16.mxu0 0
  %4748 = vmatpush1.bf16.msra.mxu0 0
  %4749 = vmatprep.subr.bf16.mxu0 0
  %4750 = vmatpush1.bf16.msra.mxu0 0
  %4751 = vmatprep.mubr.bf16.mxu0 0
  %4752 = vmatmul.mubr.bf16.gmra.mrb[0].mxu0 %v2528
  %v4753 = vpop.f32.mrb[0].mxu0
  %v4754 = vadd.f32 0.0, %v4753
  %v4755 = vpop.f32.mrb[0].mxu0
  %v4756 = vadd.f32 0.0, %v4755
  %v4757 = vpop.f32.mrb[0].mxu0
  %v4758 = vpop.f32.mrb[0].mxu0
  %4759 = vdwg.mxu0
  %v4760 = vadd.f32 %v4701, %v4754
  %v4761 = vadd.f32 %v4702, %v4756
  %v4762 = vadd.f32 %v4760, %v2582
  %v4763 = vadd.f32 %v4761, %v2582
  %v4764 = vmax.f32 %v4762, 0.0
  %v4765 = vmax.f32 %v4763, 0.0
  %4766 = vst [vmem:[%s2763 + $0x20] sm:$0xff] %v4764
  %4767 = vst [vmem:[%s2763 + $0x28] sm:$0xff] %v4765
  %4768 = vrot.lane.b32.xlu0 %v2704, 16
  %v4769 = vpop.permute.xlu0 %4768
  %4770 = vrot.lane.b32.xlu0 %v2706, 16
  %v4771 = vpop.permute.xlu0 %4770
  %v4772 = vsel %vm193, %v4769, %v4771
  %v4773 = vsel %vm193, %v4771, %v4769
  %v4774 = vsel %vm205, %v4773, %v2704
  %v4775 = vsel %vm206, %v4772, %v2706
  %4776 = vrot.lane.b32.xlu0 %v2704, 112
  %v4777 = vpop.permute.xlu0 %4776
  %4778 = vrot.lane.b32.xlu0 %v2706, 112
  %v4779 = vpop.permute.xlu0 %4778
  %v4780 = vsel %vm669, %v4777, %v4779
  %v4781 = vsel %vm669, %v4779, %v4777
  %v4782 = vsel %vm681, %v4780, %v2704
  %v4783 = vsel %vm682, %v4781, %v2706
  %v4784 = vmax.f32 %v4774, %v4782
  %v4785 = vmax.f32 %v4775, %v4783
  %v4788 = vcombine.low %v4784, %v4785
  %v4790 = vmax.f32 %v2704, %v4788
  %v4792 = vcombine.high %v4790, %v4790
  %4794 = vrot.lane.b32.xlu0 %v4790, 1
  %v4795 = vpop.permute.xlu0 %4794
  %4796 = vrot.lane.b32.xlu0 %v4792, 1
  %v4797 = vpop.permute.xlu0 %4796
  %v4798 = vsel %vm391, %v4795, %v4797
  %v4799 = vsel %vm391, %v4797, %v4795
  %v4800 = vsel %vm403, %v4799, %v4790
  %v4801 = vsel %vm404, %v4798, %v4792
  %4802 = vrot.lane.b32.xlu0 %v4790, 127
  %v4803 = vpop.permute.xlu0 %4802
  %4804 = vrot.lane.b32.xlu0 %v4792, 127
  %v4805 = vpop.permute.xlu0 %4804
  %v4806 = vsel %vm519, %v4803, %v4805
  %v4807 = vsel %vm519, %v4805, %v4803
  %v4808 = vsel %vm531, %v4806, %v4790
  %v4809 = vsel %vm532, %v4807, %v4792
  %v4810 = vmax.f32 %v4800, %v4808
  %v4811 = vmax.f32 %v4801, %v4809
  %v4814 = vcombine.low %v4810, %v4811
  %v4816 = vmax.f32 %v4790, %v4814
  %v4818 = vcombine.high %v4816, %v4816
  %v4820 = vpack.c.bf16 %v4816, %v4816
  %v4821 = vpack.c.bf16 %v4818, %v4818
  %v4823 = vsel %vm106, %v4820, 0
  %v4826 = vsel %vm106, %v4821, 0
  %4828 = vmatprep.subr.bf16.mxu0 %v4826
  %4829 = vmatpush1.bf16.msra.mxu0 %v4823
  %4830 = vmatprep.subr.bf16.mxu0 0
  %4831 = vmatpush1.bf16.msra.mxu0 0
  %4832 = vmatprep.subr.bf16.mxu0 0
  %4833 = vmatpush1.bf16.msra.mxu0 0
  %4834 = vmatprep.subr.bf16.mxu0 0
  %4835 = vmatpush1.bf16.msra.mxu0 0
  %4836 = vmatprep.subr.bf16.mxu0 0
  %4837 = vmatpush1.bf16.msra.mxu0 0
  %4838 = vmatprep.subr.bf16.mxu0 0
  %4839 = vmatpush1.bf16.msra.mxu0 0
  %4840 = vmatprep.subr.bf16.mxu0 0
  %4841 = vmatpush1.bf16.msra.mxu0 0
  %4842 = vmatprep.subr.bf16.mxu0 0
  %4843 = vmatpush1.bf16.msra.mxu0 0
  %4844 = vmatprep.subr.bf16.mxu0 0
  %4845 = vmatpush1.bf16.msra.mxu0 0
  %4846 = vmatprep.subr.bf16.mxu0 0
  %4847 = vmatpush1.bf16.msra.mxu0 0
  %4848 = vmatprep.subr.bf16.mxu0 0
  %4849 = vmatpush1.bf16.msra.mxu0 0
  %4850 = vmatprep.subr.bf16.mxu0 0
  %4851 = vmatpush1.bf16.msra.mxu0 0
  %4852 = vmatprep.subr.bf16.mxu0 0
  %4853 = vmatpush1.bf16.msra.mxu0 0
  %4854 = vmatprep.subr.bf16.mxu0 0
  %4855 = vmatpush1.bf16.msra.mxu0 0
  %4856 = vmatprep.subr.bf16.mxu0 0
  %4857 = vmatpush1.bf16.msra.mxu0 0
  %4858 = vmatprep.subr.bf16.mxu0 0
  %4859 = vmatpush1.bf16.msra.mxu0 0
  %4860 = vmatprep.mubr.bf16.mxu0 0
  %4861 = vmatmul.mubr.bf16.gmra.mrb[0].mxu0 %v2650
  %v4862 = vpop.f32.mrb[0].mxu0
  %v4863 = vadd.f32 %v2647, %v4862
  %v4864 = vpop.f32.mrb[0].mxu0
  %v4865 = vadd.f32 %v2647, %v4864
  %v4866 = vpop.f32.mrb[0].mxu0
  %v4867 = vpop.f32.mrb[0].mxu0
  %4868 = vdwg.mxu0
  %v4869 = vmax.f32 %v4863, 0.0
  %v4870 = vmax.f32 %v4865, 0.0
  %4871 = vst [vmem:[%s2763 + $0x30] sm:$0xff] %v4869
  %4872 = vst [vmem:[%s2763 + $0x38] sm:$0xff] %v4870
  // Predicated region
  $region42: #{inception_forward.1} parent=0 // pred_check
    _
  $region43: #{inception_forward.1} parent=0 // pred_check_branch
    %4874 = sbr.rel (0) target = $region45
  $region44: #{inception_forward.1} parent=0 // pred_region
    _
  $region45: #{inception_forward.1} parent=0 // pred_fallthru
    _
  // Predicated region
  $region46: #{inception_forward.1} parent=0 // pred_check
    _
  $region47: #{inception_forward.1} parent=0 // pred_check_branch
    %4876 = sbr.rel (0) target = $region49
  $region48: #{inception_forward.1} parent=0 // pred_region
    _
  $region49: #{inception_forward.1} parent=0 // pred_fallthru
    _

</llo_original>
